<compile_context>
chip_gen: v5e
topology: v5e:2x2
jax: 0.10.0
libtpu: 0.0.40
codegen_flags: <defaults>
</compile_context>

<pallas_src>
import functools
import math

import jax
import jax.numpy as jnp
from jax.experimental import pallas as pl
from jax.experimental.pallas import tpu as pltpu


HALO = 4            # receptive-field halo of the 4 stacked 3x3 convs
LRELU_SLOPE = 0.1   # TODO(synk): PS-FCN convention (PyTorch default would be 0.01)


def _round_up(v, m):
    return ((v + m - 1) // m) * m


def _pick_row_tile(h, w):
    # ~8K output pixels per block keeps per-block VMEM (bf16 im2col + f32
    # features + f32 accumulator + double-buffered input tiles) in the
    # 10-25 MiB range -> fits v7x's 64 MiB physical VMEM with headroom.
    tr = (8192 // max(w, 1)) // 8 * 8
    tr = max(16, tr)
    return min(_round_up(h, 8), tr)


# ---------------------------------------------------------------------------
# In-kernel helpers
# ---------------------------------------------------------------------------
def _im2col_conv3x3(f, wmat, bias, *, width_padded, lrelu, slope):
    """3x3 'same' conv as im2col + one MXU matmul.

    f: (R, Wp, Cin) f32.  If width_padded, Wp == W+2 with zero border columns;
    otherwise zeros are added here.  Output has R-2 rows (caller supplies the
    +-1 row halo).  wmat: (9*Cin, Cout) bf16, flattened (dh, dw, cin)-major.
    bias: (1, Cout) f32.
    """
    r_in, w_in, c_in = f.shape
    c_out = wmat.shape[1]
    fb = f.astype(jnp.bfloat16)          # cast ONCE, before the 9x replication
    if width_padded:
        w_out = w_in - 2
        fp = fb
    else:
        w_out = w_in
        zcol = jnp.zeros((r_in, 1, c_in), jnp.bfloat16)
        fp = jnp.concatenate([zcol, fb, zcol], axis=1)
    r_out = r_in - 2
    # Build the 9 shifted taps once, concatenated on the channel (lane) axis,
    # then a single big matmul (K = 9*Cin) instead of 9 tiny-K dots.
    taps = [fp[dh:dh + r_out, dw:dw + w_out, :]
            for dh in range(3) for dw in range(3)]
    patches = jnp.concatenate(taps, axis=-1).reshape(r_out * w_out, 9 * c_in)
    acc = jnp.dot(patches, wmat, preferred_element_type=jnp.float32)
    acc = acc + bias
    if lrelu:
        acc = jnp.maximum(acc, acc * slope)   # LeakyReLU, slope in (0,1)
    return acc.reshape(r_out, w_out, c_out)


def _zero_rows_outside(f, row0, img_h):
    """Zero feature rows whose image row (row0 + i) is outside [0, img_h)."""
    rows = f.shape[0]
    ridx = row0 + jax.lax.broadcasted_iota(jnp.int32, (rows, 1, 1), 0)
    inside = jnp.logical_and(ridx >= 0, ridx < img_h)
    return jnp.where(inside, f, 0.0)


def _l2_normalize_c3(v):
    """Channel L2 normalize of a (..., 3) array; matches torch F.normalize eps."""
    sq = (v[:, :, 0:1] * v[:, :, 0:1]
          + v[:, :, 1:2] * v[:, :, 1:2]
          + v[:, :, 2:3] * v[:, :, 2:3])
    return v * jax.lax.rsqrt(jnp.maximum(sq, 1e-24))


def _stage_kernel(*refs, has_normal, img_h, row_tile, slope):
    if has_normal:
        (x_ref, nrm_ref, m_ref,
         w1_ref, b1_ref, w2_ref, b2_ref,
         w3_ref, b3_ref, w4_ref, b4_ref,
         o_ref, agg_ref) = refs
    else:
        (x_ref, m_ref,
         w1_ref, b1_ref, w2_ref, b2_ref,
         w3_ref, b3_ref, w4_ref, b4_ref,
         o_ref, agg_ref) = refs

    n = pl.program_id(2)
    row0 = pl.program_id(1) * row_tile   # image row of this block's first output row

    # ---- per-image feature extractor: c1 -> c2, max-accumulate over images ----
    x = x_ref[0]                                        # (TR+8, W+2, Cimg) f32
    if has_normal:
        # normalize the upsampled previous-scale normal per pixel and concat in VMEM
        nrm = _l2_normalize_c3(nrm_ref[0])
        x = jnp.concatenate([x, nrm], axis=-1)

    f1 = _im2col_conv3x3(x, w1_ref[...], b1_ref[...],
                         width_padded=True, lrelu=True, slope=slope)   # (TR+6, W, F)
    f1 = _zero_rows_outside(f1, row0 - 3, img_h)   # emulate per-conv zero row pad
    f2 = _im2col_conv3x3(f1, w2_ref[...], b2_ref[...],
                         width_padded=False, lrelu=True, slope=slope)  # (TR+4, W, F)
    f2 = _zero_rows_outside(f2, row0 - 2, img_h)

    @pl.when(n == 0)
    def _first():
        agg_ref[...] = f2            # direct write: no -inf fill / extra read

    @pl.when(n > 0)
    def _accum():
        agg_ref[...] = jnp.maximum(agg_ref[...], f2)

    # ---- regressor + mask + L2-normalize once all images are aggregated ----
    @pl.when(n == pl.num_programs(2) - 1)
    def _finalize():
        r1 = _im2col_conv3x3(agg_ref[...], w3_ref[...], b3_ref[...],
                             width_padded=False, lrelu=True, slope=slope)  # (TR+2, W, F)
        r1 = _zero_rows_outside(r1, row0 - 1, img_h)
        r2 = _im2col_conv3x3(r1, w4_ref[...], b4_ref[...],
                             width_padded=False, lrelu=False, slope=slope)  # (TR, W, 3)
        o_ref[0] = _l2_normalize_c3(r2 * m_ref[0][:, :, None])


# ---------------------------------------------------------------------------
# One fused NENet stage (single pallas_call)
# ---------------------------------------------------------------------------
def _nenet_stage(params, x_nchw, mask_nchw, prev_normal_nchw=None, *,
                 slope=LRELU_SLOPE):
    x_nchw = x_nchw.astype(jnp.float32)
    n_img, bsz, c_img, h, w = x_nchw.shape
    has_normal = prev_normal_nchw is not None
    feat = params["c2_w"].shape[-1]

    tr = _pick_row_tile(h, w)
    hp = _round_up(h, tr)
    rbc = hp // tr

    # layout prep once per stage: NHWC, pad rows (halo) + width (+1), unfold row blocks
    x_h = jnp.transpose(x_nchw, (0, 1, 3, 4, 2))
    x_p = jnp.pad(x_h, ((0, 0), (0, 0), (HALO, HALO + hp - h), (1, 1), (0, 0)))
    x_b = jnp.stack([x_p[:, :, r * tr:r * tr + tr + 2 * HALO]
                     for r in range(rbc)], axis=2)
    x_b = x_b.reshape(n_img * bsz * rbc, tr + 2 * HALO, w + 2, c_img)

    # mask as a lane-dense (B*rb, TR, W) slab (no trailing size-1 lane dim)
    m_h = mask_nchw.astype(jnp.float32)[:, 0]          # (B, H, W)
    m_p = jnp.pad(m_h, ((0, 0), (0, hp - h), (0, 0)))
    m_b = m_p.reshape(bsz * rbc, tr, w)

    arrays = [x_b]
    if has_normal:
        nr_h = jnp.transpose(prev_normal_nchw.astype(jnp.float32), (0, 2, 3, 1))
        nr_p = jnp.pad(nr_h, ((0, 0), (HALO, HALO + hp - h), (1, 1), (0, 0)))
        nr_b = jnp.stack([nr_p[:, r * tr:r * tr + tr + 2 * HALO]
                          for r in range(rbc)], axis=1)
        nr_b = nr_b.reshape(bsz * rbc, tr + 2 * HALO, w + 2, 3)
        arrays.append(nr_b)
    arrays.append(m_b)

    # weights: (3,3,Cin,Cout) -> (9*Cin, Cout) bf16 (matches tap order), f32 bias
    def _wmat(wgt):
        return wgt.reshape(9 * wgt.shape[2], wgt.shape[3]).astype(jnp.bfloat16)

    def _bvec(bias):
        return bias.reshape(1, -1).astype(jnp.float32)

    w_list = [_wmat(params["c1_w"]), _bvec(params["c1_b"]),
              _wmat(params["c2_w"]), _bvec(params["c2_b"]),
              _wmat(params["r1_w"]), _bvec(params["r1_b"]),
              _wmat(params["r2_w"]), _bvec(params["r2_b"])]
    arrays += w_list

    def _const_spec(shape):
        nd = len(shape)
        return pl.BlockSpec(shape, lambda b, r, n: (0,) * nd)

    in_specs = [pl.BlockSpec(
        (1, tr + 2 * HALO, w + 2, c_img),
        lambda b, r, n: (n * bsz * rbc + b * rbc + r, 0, 0, 0))]
    if has_normal:
        in_specs.append(pl.BlockSpec(
            (1, tr + 2 * HALO, w + 2, 3),
            lambda b, r, n: (b * rbc + r, 0, 0, 0)))
    in_specs.append(pl.BlockSpec((1, tr, w),
                                 lambda b, r, n: (b * rbc + r, 0, 0)))
    in_specs += [_const_spec(a.shape) for a in w_list]

    out_spec = pl.BlockSpec((1, tr, w, 3),
                            lambda b, r, n: (b * rbc + r, 0, 0, 0))

    kernel = functools.partial(_stage_kernel, has_normal=has_normal,
                               img_h=h, row_tile=tr, slope=slope)

    out = pl.pallas_call(
        kernel,
        out_shape=jax.ShapeDtypeStruct((bsz * rbc, tr, w, 3), jnp.float32),
        grid=(bsz, rbc, n_img),
        in_specs=in_specs,
        out_specs=out_spec,
        scratch_shapes=[pltpu.VMEM((tr + 4, w, feat), jnp.float32)],
        compiler_params=pltpu.CompilerParams(
            dimension_semantics=("parallel", "parallel", "arbitrary"),
            vmem_limit_bytes=48 * 1024 * 1024),
    )(*arrays)

    out = out.reshape(bsz, hp, w, 3)[:, :h]
    return jnp.transpose(out, (0, 3, 1, 2))        # (B, 3, H, W)


# ---------------------------------------------------------------------------
# Plain-JAX glue: bilinear interpolation with align_corners=True (NCHW)
# ---------------------------------------------------------------------------
def bilinear_resize_align_corners(x, out_h, out_w):
    _, _, h, w = x.shape

    def coords(n_in, n_out):
        if n_out == 1 or n_in == 1:
            return jnp.zeros((n_out,), jnp.float32)
        return jnp.linspace(0.0, n_in - 1.0, n_out)

    ys = coords(h, out_h)
    xs = coords(w, out_w)
    y0 = jnp.floor(ys).astype(jnp.int32)
    y1 = jnp.minimum(y0 + 1, h - 1)
    wy = (ys - y0.astype(jnp.float32))[None, None, :, None]
    x0 = jnp.floor(xs).astype(jnp.int32)
    x1 = jnp.minimum(x0 + 1, w - 1)
    wx = (xs - x0.astype(jnp.float32))[None, None, None, :]

    top = x[:, :, y0, :]
    bot = x[:, :, y1, :]
    v = top * (1.0 - wy) + bot * wy
    left = v[:, :, :, x0]
    right = v[:, :, :, x1]
    return left * (1.0 - wx) + right * wx


# ---------------------------------------------------------------------------
# Parameters (synthesized NENet weights) and MPS_NET.forward
# ---------------------------------------------------------------------------
def init_nenet(key, c_in, feat=32):
    def conv_p(k, cin, cout):
        kw, kb = jax.random.split(k)
        wgt = jax.random.normal(kw, (3, 3, cin, cout), jnp.float32) * (
            1.0 / math.sqrt(9 * cin))
        bias = jax.random.normal(kb, (cout,), jnp.float32) * 0.01
        return wgt, bias

    k1, k2, k3, k4 = jax.random.split(key, 4)
    c1w, c1b = conv_p(k1, c_in, feat)
    c2w, c2b = conv_p(k2, feat, feat)
    r1w, r1b = conv_p(k3, feat, feat)
    r2w, r2b = conv_p(k4, feat, 3)
    return dict(c1_w=c1w, c1_b=c1b, c2_w=c2w, c2_b=c2b,
                r1_w=r1w, r1_b=r1b, r2_w=r2w, r2_b=r2b)


def mps_net_forward(params_first, params_stage, inputs, masks, all_in=True):
    # TODO(synk): `all_in` only changes batching of the max in the original;
    # the single fused max used here produces the same aggregation.
    normal = None
    for i, (x, m) in enumerate(zip(inputs, masks)):
        _, _, _, h, w = x.shape
        prev = None
        if i > 0:
            # upsample previous-scale normal; its re-normalization and the
            # channel concat with the images happen inside the stage kernel.
            prev = bilinear_resize_align_corners(normal, h, w)
        params = params_first if i == 0 else params_stage
        normal = _nenet_stage(params, x, m, prev)
    return normal


if __name__ == "__main__":
    key = jax.random.PRNGKey(0)
    kp1, kp2, kd = jax.random.split(key, 3)
    params_first = init_nenet(kp1, c_in=6)   # NENet(c_in=6)
    params_stage = init_nenet(kp2, c_in=9)   # NENet(c_in=9)

    # Small synthetic multi-scale photometric-stereo inputs:
    #   N_imgs=3 light images, batch B=2, 6 channels (rgb + light dirs),
    #   two scales 16x16 and 32x32.
    n_imgs, bsz = 3, 2
    shapes = [(16, 16), (32, 32)]
    kin = jax.random.split(kd, len(shapes))
    inputs = [jax.random.normal(kin[i], (n_imgs, bsz, 6, h, w), jnp.float32)
              for i, (h, w) in enumerate(shapes)]
    masks = [jnp.ones((bsz, 1, h, w), jnp.float32) for (h, w) in shapes]

    normal = mps_net_forward(params_first, params_stage, inputs, masks,
                             all_in=True)
    normal = jax.block_until_ready(normal)
    assert normal.shape == (bsz, 3, shapes[-1][0], shapes[-1][1]), normal.shape
    assert bool(jnp.all(jnp.isfinite(normal)))
    # normalized output: per-pixel channel norm must be <= 1 (up to fp error)
    assert bool(jnp.all(jnp.sum(normal * normal, axis=1) <= 1.01))
    print("KERNEL_OK")
</pallas_src>

<mosaic_0001>
module attributes {stable_mosaic.version = 11 : i64} {
  func.func @_stage_kernel(%arg0: i32, %arg1: i32, %arg2: i32, %arg3: memref<1x24x18x6xf32, #tpu.memory_space<vmem>>, %arg4: memref<1x16x16xf32, #tpu.memory_space<vmem>>, %arg5: memref<54x32xbf16, #tpu.memory_space<vmem>>, %arg6: memref<1x32xf32, #tpu.memory_space<vmem>>, %arg7: memref<288x32xbf16, #tpu.memory_space<vmem>>, %arg8: memref<1x32xf32, #tpu.memory_space<vmem>>, %arg9: memref<288x32xbf16, #tpu.memory_space<vmem>>, %arg10: memref<1x32xf32, #tpu.memory_space<vmem>>, %arg11: memref<288x3xbf16, #tpu.memory_space<vmem>>, %arg12: memref<1x3xf32, #tpu.memory_space<vmem>>, %arg13: memref<1x16x16x3xf32, #tpu.memory_space<vmem>>, %arg14: memref<20x16x32xf32, #tpu.memory_space<vmem>>) attributes {dimension_semantics = [#tpu.dimension_semantics<parallel>, #tpu.dimension_semantics<parallel>, #tpu.dimension_semantics<arbitrary>], iteration_bounds = array<i64: 2, 1, 3>, scalar_prefetch = 0 : i64, scratch_operands = 1 : i64, tpu.core_type = #tpu.core_type<tc>, window_params = [{transform_indices = @transform_0, window_bounds = array<i64: 1, 24, 18, 6>}, {transform_indices = @transform_1, window_bounds = array<i64: 1, 16, 16>}, {pipeline_mode = #tpu.pipeline_mode<synchronous>, transform_indices = @transform_2, window_bounds = array<i64: 54, 32>}, {pipeline_mode = #tpu.pipeline_mode<synchronous>, transform_indices = @transform_3, window_bounds = array<i64: 1, 32>}, {pipeline_mode = #tpu.pipeline_mode<synchronous>, transform_indices = @transform_4, window_bounds = array<i64: 288, 32>}, {pipeline_mode = #tpu.pipeline_mode<synchronous>, transform_indices = @transform_5, window_bounds = array<i64: 1, 32>}, {pipeline_mode = #tpu.pipeline_mode<synchronous>, transform_indices = @transform_6, window_bounds = array<i64: 288, 32>}, {pipeline_mode = #tpu.pipeline_mode<synchronous>, transform_indices = @transform_7, window_bounds = array<i64: 1, 32>}, {pipeline_mode = #tpu.pipeline_mode<synchronous>, transform_indices = @transform_8, window_bounds = array<i64: 288, 3>}, {pipeline_mode = #tpu.pipeline_mode<synchronous>, transform_indices = @transform_9, window_bounds = array<i64: 1, 3>}, {transform_indices = @transform_10, window_bounds = array<i64: 1, 16, 16, 3>}]} {
    %c16_i32 = arith.constant 16 : i32
    %0 = arith.muli %arg1, %c16_i32 : i32
    %c0 = arith.constant 0 : index
    %c0_0 = arith.constant 0 : index
    %c0_1 = arith.constant 0 : index
    %c0_2 = arith.constant 0 : index
    %1 = vector.load %arg3[%c0, %c0_0, %c0_1, %c0_2] : memref<1x24x18x6xf32, #tpu.memory_space<vmem>>, vector<1x24x18x6xf32>
    %2 = vector.shape_cast %1 : vector<1x24x18x6xf32> to vector<24x18x6xf32>
    %c0_3 = arith.constant 0 : index
    %c0_4 = arith.constant 0 : index
    %3 = vector.load %arg5[%c0_3, %c0_4] : memref<54x32xbf16, #tpu.memory_space<vmem>>, vector<54x32xbf16>
    %c0_5 = arith.constant 0 : index
    %c0_6 = arith.constant 0 : index
    %4 = vector.load %arg6[%c0_5, %c0_6] : memref<1x32xf32, #tpu.memory_space<vmem>>, vector<1x32xf32>
    %5 = arith.truncf %2 : vector<24x18x6xf32> to vector<24x18x6xbf16>
    %6 = vector.extract_strided_slice %5 {offsets = [0, 0, 0], sizes = [22, 16, 6], strides = [1, 1, 1]} : vector<24x18x6xbf16> to vector<22x16x6xbf16>
    %7 = vector.extract_strided_slice %5 {offsets = [0, 1, 0], sizes = [22, 16, 6], strides = [1, 1, 1]} : vector<24x18x6xbf16> to vector<22x16x6xbf16>
    %8 = vector.extract_strided_slice %5 {offsets = [0, 2, 0], sizes = [22, 16, 6], strides = [1, 1, 1]} : vector<24x18x6xbf16> to vector<22x16x6xbf16>
    %9 = vector.extract_strided_slice %5 {offsets = [1, 0, 0], sizes = [22, 16, 6], strides = [1, 1, 1]} : vector<24x18x6xbf16> to vector<22x16x6xbf16>
    %10 = vector.extract_strided_slice %5 {offsets = [1, 1, 0], sizes = [22, 16, 6], strides = [1, 1, 1]} : vector<24x18x6xbf16> to vector<22x16x6xbf16>
    %11 = vector.extract_strided_slice %5 {offsets = [1, 2, 0], sizes = [22, 16, 6], strides = [1, 1, 1]} : vector<24x18x6xbf16> to vector<22x16x6xbf16>
    %12 = vector.extract_strided_slice %5 {offsets = [2, 0, 0], sizes = [22, 16, 6], strides = [1, 1, 1]} : vector<24x18x6xbf16> to vector<22x16x6xbf16>
    %13 = vector.extract_strided_slice %5 {offsets = [2, 1, 0], sizes = [22, 16, 6], strides = [1, 1, 1]} : vector<24x18x6xbf16> to vector<22x16x6xbf16>
    %14 = vector.extract_strided_slice %5 {offsets = [2, 2, 0], sizes = [22, 16, 6], strides = [1, 1, 1]} : vector<24x18x6xbf16> to vector<22x16x6xbf16>
    %15 = tpu.concatenate %6, %7, %8, %9, %10, %11, %12, %13, %14 in 2 : vector<22x16x6xbf16>, vector<22x16x6xbf16>, vector<22x16x6xbf16>, vector<22x16x6xbf16>, vector<22x16x6xbf16>, vector<22x16x6xbf16>, vector<22x16x6xbf16>, vector<22x16x6xbf16>, vector<22x16x6xbf16> -> vector<22x16x54xbf16>
    %16 = vector.shape_cast %15 : vector<22x16x54xbf16> to vector<352x54xbf16>
    %cst = arith.constant dense<0.000000e+00> : vector<352x32xf32>
    %17 = tpu.matmul %16, %3, %cst {dimension_numbers = #tpu.dot_dimension_numbers<[1], [0], [0], [1], [0, 0, 1, 1], [], []>} : vector<352x54xbf16>, vector<54x32xbf16>, vector<352x32xf32> -> vector<352x32xf32>
    %18 = vector.broadcast %4 : vector<1x32xf32> to vector<352x32xf32>
    %19 = arith.addf %17, %18 : vector<352x32xf32>
    %cst_7 = arith.constant 1.000000e-01 : f32
    %20 = vector.broadcast %cst_7 : f32 to vector<352x32xf32>
    %21 = arith.mulf %19, %20 : vector<352x32xf32>
    %22 = arith.maximumf %19, %21 : vector<352x32xf32>
    %23 = vector.shape_cast %22 : vector<352x32xf32> to vector<22x16x32xf32>
    %c3_i32 = arith.constant 3 : i32
    %24 = arith.subi %0, %c3_i32 : i32
    %25 = tpu.iota {dimensions = array<i32: 0>} : vector<22x1x1xi32>
    %26 = vector.broadcast %24 : i32 to vector<22x1x1xi32>
    %27 = arith.addi %26, %25 : vector<22x1x1xi32>
    %c0_i32 = arith.constant 0 : i32
    %28 = vector.broadcast %c0_i32 : i32 to vector<22x1x1xi32>
    %29 = arith.cmpi sge, %27, %28 : vector<22x1x1xi32>
    %c16_i32_8 = arith.constant 16 : i32
    %30 = vector.broadcast %c16_i32_8 : i32 to vector<22x1x1xi32>
    %31 = arith.cmpi slt, %27, %30 : vector<22x1x1xi32>
    %32 = arith.andi %29, %31 : vector<22x1x1xi1>
    %cst_9 = arith.constant 0.000000e+00 : f32
    %33 = vector.shape_cast %32 : vector<22x1x1xi1> to vector<22x1x1xi1>
    %34 = vector.broadcast %33 : vector<22x1x1xi1> to vector<22x16x32xi1>
    %35 = vector.broadcast %cst_9 : f32 to vector<22x16x32xf32>
    %36 = arith.select %34, %23, %35 : vector<22x16x32xi1>, vector<22x16x32xf32>
    %c0_10 = arith.constant 0 : index
    %c0_11 = arith.constant 0 : index
    %37 = vector.load %arg7[%c0_10, %c0_11] : memref<288x32xbf16, #tpu.memory_space<vmem>>, vector<288x32xbf16>
    %c0_12 = arith.constant 0 : index
    %c0_13 = arith.constant 0 : index
    %38 = vector.load %arg8[%c0_12, %c0_13] : memref<1x32xf32, #tpu.memory_space<vmem>>, vector<1x32xf32>
    %39 = arith.truncf %36 : vector<22x16x32xf32> to vector<22x16x32xbf16>
    %cst_14 = arith.constant 0.000000e+00 : bf16
    %40 = vector.broadcast %cst_14 : bf16 to vector<22x1x32xbf16>
    %41 = tpu.concatenate %40, %39, %40 in 1 : vector<22x1x32xbf16>, vector<22x16x32xbf16>, vector<22x1x32xbf16> -> vector<22x18x32xbf16>
    %42 = vector.extract_strided_slice %41 {offsets = [0, 0, 0], sizes = [20, 16, 32], strides = [1, 1, 1]} : vector<22x18x32xbf16> to vector<20x16x32xbf16>
    %43 = vector.extract_strided_slice %41 {offsets = [0, 1, 0], sizes = [20, 16, 32], strides = [1, 1, 1]} : vector<22x18x32xbf16> to vector<20x16x32xbf16>
    %44 = vector.extract_strided_slice %41 {offsets = [0, 2, 0], sizes = [20, 16, 32], strides = [1, 1, 1]} : vector<22x18x32xbf16> to vector<20x16x32xbf16>
    %45 = vector.extract_strided_slice %41 {offsets = [1, 0, 0], sizes = [20, 16, 32], strides = [1, 1, 1]} : vector<22x18x32xbf16> to vector<20x16x32xbf16>
    %46 = vector.extract_strided_slice %41 {offsets = [1, 1, 0], sizes = [20, 16, 32], strides = [1, 1, 1]} : vector<22x18x32xbf16> to vector<20x16x32xbf16>
    %47 = vector.extract_strided_slice %41 {offsets = [1, 2, 0], sizes = [20, 16, 32], strides = [1, 1, 1]} : vector<22x18x32xbf16> to vector<20x16x32xbf16>
    %48 = vector.extract_strided_slice %41 {offsets = [2, 0, 0], sizes = [20, 16, 32], strides = [1, 1, 1]} : vector<22x18x32xbf16> to vector<20x16x32xbf16>
    %49 = vector.extract_strided_slice %41 {offsets = [2, 1, 0], sizes = [20, 16, 32], strides = [1, 1, 1]} : vector<22x18x32xbf16> to vector<20x16x32xbf16>
    %50 = vector.extract_strided_slice %41 {offsets = [2, 2, 0], sizes = [20, 16, 32], strides = [1, 1, 1]} : vector<22x18x32xbf16> to vector<20x16x32xbf16>
    %51 = tpu.concatenate %42, %43, %44, %45, %46, %47, %48, %49, %50 in 2 : vector<20x16x32xbf16>, vector<20x16x32xbf16>, vector<20x16x32xbf16>, vector<20x16x32xbf16>, vector<20x16x32xbf16>, vector<20x16x32xbf16>, vector<20x16x32xbf16>, vector<20x16x32xbf16>, vector<20x16x32xbf16> -> vector<20x16x288xbf16>
    %52 = vector.shape_cast %51 : vector<20x16x288xbf16> to vector<320x288xbf16>
    %cst_15 = arith.constant dense<0.000000e+00> : vector<320x32xf32>
    %53 = tpu.matmul %52, %37, %cst_15 {dimension_numbers = #tpu.dot_dimension_numbers<[1], [0], [0], [1], [0, 0, 1, 1], [], []>} : vector<320x288xbf16>, vector<288x32xbf16>, vector<320x32xf32> -> vector<320x32xf32>
    %54 = vector.broadcast %38 : vector<1x32xf32> to vector<320x32xf32>
    %55 = arith.addf %53, %54 : vector<320x32xf32>
    %cst_16 = arith.constant 1.000000e-01 : f32
    %56 = vector.broadcast %cst_16 : f32 to vector<320x32xf32>
    %57 = arith.mulf %55, %56 : vector<320x32xf32>
    %58 = arith.maximumf %55, %57 : vector<320x32xf32>
    %59 = vector.shape_cast %58 : vector<320x32xf32> to vector<20x16x32xf32>
    %c2_i32 = arith.constant 2 : i32
    %60 = arith.subi %0, %c2_i32 : i32
    %61 = tpu.iota {dimensions = array<i32: 0>} : vector<20x1x1xi32>
    %62 = vector.broadcast %60 : i32 to vector<20x1x1xi32>
    %63 = arith.addi %62, %61 : vector<20x1x1xi32>
    %c0_i32_17 = arith.constant 0 : i32
    %64 = vector.broadcast %c0_i32_17 : i32 to vector<20x1x1xi32>
    %65 = arith.cmpi sge, %63, %64 : vector<20x1x1xi32>
    %c16_i32_18 = arith.constant 16 : i32
    %66 = vector.broadcast %c16_i32_18 : i32 to vector<20x1x1xi32>
    %67 = arith.cmpi slt, %63, %66 : vector<20x1x1xi32>
    %68 = arith.andi %65, %67 : vector<20x1x1xi1>
    %cst_19 = arith.constant 0.000000e+00 : f32
    %69 = vector.shape_cast %68 : vector<20x1x1xi1> to vector<20x1x1xi1>
    %70 = vector.broadcast %69 : vector<20x1x1xi1> to vector<20x16x32xi1>
    %71 = vector.broadcast %cst_19 : f32 to vector<20x16x32xf32>
    %72 = arith.select %70, %59, %71 : vector<20x16x32xi1>, vector<20x16x32xf32>
    %c0_i32_20 = arith.constant 0 : i32
    %73 = arith.cmpi eq, %arg2, %c0_i32_20 : i32
    %74 = arith.extui %73 : i1 to i32
    %c0_i32_21 = arith.constant 0 : i32
    %75 = arith.cmpi ne, %74, %c0_i32_21 : i32
    scf.if %75 {
      %c0_26 = arith.constant 0 : index
      %c0_27 = arith.constant 0 : index
      %c0_28 = arith.constant 0 : index
      %82 = vector.load %arg14[%c0_26, %c0_27, %c0_28] : memref<20x16x32xf32, #tpu.memory_space<vmem>>, vector<20x16x32xf32>
      tpu.vector_store %arg14[%c0_26, %c0_27, %c0_28], %72 {strides = array<i32>} : memref<20x16x32xf32, #tpu.memory_space<vmem>>, vector<20x16x32xf32>,
    } else {
    }
    %c0_i32_22 = arith.constant 0 : i32
    %76 = arith.cmpi sgt, %arg2, %c0_i32_22 : i32
    %77 = arith.extui %76 : i1 to i32
    %c0_i32_23 = arith.constant 0 : i32
    %78 = arith.cmpi ne, %77, %c0_i32_23 : i32
    scf.if %78 {
      %c0_26 = arith.constant 0 : index
      %c0_27 = arith.constant 0 : index
      %c0_28 = arith.constant 0 : index
      %82 = vector.load %arg14[%c0_26, %c0_27, %c0_28] : memref<20x16x32xf32, #tpu.memory_space<vmem>>, vector<20x16x32xf32>
      %83 = arith.maximumf %82, %72 : vector<20x16x32xf32>
      %c0_29 = arith.constant 0 : index
      %c0_30 = arith.constant 0 : index
      %c0_31 = arith.constant 0 : index
      %84 = vector.load %arg14[%c0_29, %c0_30, %c0_31] : memref<20x16x32xf32, #tpu.memory_space<vmem>>, vector<20x16x32xf32>
      tpu.vector_store %arg14[%c0_29, %c0_30, %c0_31], %83 {strides = array<i32>} : memref<20x16x32xf32, #tpu.memory_space<vmem>>, vector<20x16x32xf32>,
    } else {
    }
    %c2_i32_24 = arith.constant 2 : i32
    %79 = arith.cmpi eq, %arg2, %c2_i32_24 : i32
    %80 = arith.extui %79 : i1 to i32
    %c0_i32_25 = arith.constant 0 : i32
    %81 = arith.cmpi ne, %80, %c0_i32_25 : i32
    scf.if %81 {
      %c0_26 = arith.constant 0 : index
      %c0_27 = arith.constant 0 : index
      %c0_28 = arith.constant 0 : index
      %82 = vector.load %arg14[%c0_26, %c0_27, %c0_28] : memref<20x16x32xf32, #tpu.memory_space<vmem>>, vector<20x16x32xf32>
      %c0_29 = arith.constant 0 : index
      %c0_30 = arith.constant 0 : index
      %83 = vector.load %arg9[%c0_29, %c0_30] : memref<288x32xbf16, #tpu.memory_space<vmem>>, vector<288x32xbf16>
      %c0_31 = arith.constant 0 : index
      %c0_32 = arith.constant 0 : index
      %84 = vector.load %arg10[%c0_31, %c0_32] : memref<1x32xf32, #tpu.memory_space<vmem>>, vector<1x32xf32>
      %85 = arith.truncf %82 : vector<20x16x32xf32> to vector<20x16x32xbf16>
      %cst_33 = arith.constant 0.000000e+00 : bf16
      %86 = vector.broadcast %cst_33 : bf16 to vector<20x1x32xbf16>
      %87 = tpu.concatenate %86, %85, %86 in 1 : vector<20x1x32xbf16>, vector<20x16x32xbf16>, vector<20x1x32xbf16> -> vector<20x18x32xbf16>
      %88 = vector.extract_strided_slice %87 {offsets = [0, 0, 0], sizes = [18, 16, 32], strides = [1, 1, 1]} : vector<20x18x32xbf16> to vector<18x16x32xbf16>
      %89 = vector.extract_strided_slice %87 {offsets = [0, 1, 0], sizes = [18, 16, 32], strides = [1, 1, 1]} : vector<20x18x32xbf16> to vector<18x16x32xbf16>
      %90 = vector.extract_strided_slice %87 {offsets = [0, 2, 0], sizes = [18, 16, 32], strides = [1, 1, 1]} : vector<20x18x32xbf16> to vector<18x16x32xbf16>
      %91 = vector.extract_strided_slice %87 {offsets = [1, 0, 0], sizes = [18, 16, 32], strides = [1, 1, 1]} : vector<20x18x32xbf16> to vector<18x16x32xbf16>
      %92 = vector.extract_strided_slice %87 {offsets = [1, 1, 0], sizes = [18, 16, 32], strides = [1, 1, 1]} : vector<20x18x32xbf16> to vector<18x16x32xbf16>
      %93 = vector.extract_strided_slice %87 {offsets = [1, 2, 0], sizes = [18, 16, 32], strides = [1, 1, 1]} : vector<20x18x32xbf16> to vector<18x16x32xbf16>
      %94 = vector.extract_strided_slice %87 {offsets = [2, 0, 0], sizes = [18, 16, 32], strides = [1, 1, 1]} : vector<20x18x32xbf16> to vector<18x16x32xbf16>
      %95 = vector.extract_strided_slice %87 {offsets = [2, 1, 0], sizes = [18, 16, 32], strides = [1, 1, 1]} : vector<20x18x32xbf16> to vector<18x16x32xbf16>
      %96 = vector.extract_strided_slice %87 {offsets = [2, 2, 0], sizes = [18, 16, 32], strides = [1, 1, 1]} : vector<20x18x32xbf16> to vector<18x16x32xbf16>
      %97 = tpu.concatenate %88, %89, %90, %91, %92, %93, %94, %95, %96 in 2 : vector<18x16x32xbf16>, vector<18x16x32xbf16>, vector<18x16x32xbf16>, vector<18x16x32xbf16>, vector<18x16x32xbf16>, vector<18x16x32xbf16>, vector<18x16x32xbf16>, vector<18x16x32xbf16>, vector<18x16x32xbf16> -> vector<18x16x288xbf16>
      %98 = vector.shape_cast %97 : vector<18x16x288xbf16> to vector<288x288xbf16>
      %cst_34 = arith.constant dense<0.000000e+00> : vector<288x32xf32>
      %99 = tpu.matmul %98, %83, %cst_34 {dimension_numbers = #tpu.dot_dimension_numbers<[1], [0], [0], [1], [0, 0, 1, 1], [], []>} : vector<288x288xbf16>, vector<288x32xbf16>, vector<288x32xf32> -> vector<288x32xf32>
      %100 = vector.broadcast %84 : vector<1x32xf32> to vector<288x32xf32>
      %101 = arith.addf %99, %100 : vector<288x32xf32>
      %cst_35 = arith.constant 1.000000e-01 : f32
      %102 = vector.broadcast %cst_35 : f32 to vector<288x32xf32>
      %103 = arith.mulf %101, %102 : vector<288x32xf32>
      %104 = arith.maximumf %101, %103 : vector<288x32xf32>
      %105 = vector.shape_cast %104 : vector<288x32xf32> to vector<18x16x32xf32>
      %c1_i32 = arith.constant 1 : i32
      %106 = arith.subi %0, %c1_i32 : i32
      %107 = tpu.iota {dimensions = array<i32: 0>} : vector<18x1x1xi32>
      %108 = vector.broadcast %106 : i32 to vector<18x1x1xi32>
      %109 = arith.addi %108, %107 : vector<18x1x1xi32>
      %c0_i32_36 = arith.constant 0 : i32
      %110 = vector.broadcast %c0_i32_36 : i32 to vector<18x1x1xi32>
      %111 = arith.cmpi sge, %109, %110 : vector<18x1x1xi32>
      %c16_i32_37 = arith.constant 16 : i32
      %112 = vector.broadcast %c16_i32_37 : i32 to vector<18x1x1xi32>
      %113 = arith.cmpi slt, %109, %112 : vector<18x1x1xi32>
      %114 = arith.andi %111, %113 : vector<18x1x1xi1>
      %cst_38 = arith.constant 0.000000e+00 : f32
      %115 = vector.shape_cast %114 : vector<18x1x1xi1> to vector<18x1x1xi1>
      %116 = vector.broadcast %115 : vector<18x1x1xi1> to vector<18x16x32xi1>
      %117 = vector.broadcast %cst_38 : f32 to vector<18x16x32xf32>
      %118 = arith.select %116, %105, %117 : vector<18x16x32xi1>, vector<18x16x32xf32>
      %c0_39 = arith.constant 0 : index
      %c0_40 = arith.constant 0 : index
      %119 = vector.load %arg11[%c0_39, %c0_40] : memref<288x3xbf16, #tpu.memory_space<vmem>>, vector<288x3xbf16>
      %c0_41 = arith.constant 0 : index
      %c0_42 = arith.constant 0 : index
      %120 = vector.load %arg12[%c0_41, %c0_42] : memref<1x3xf32, #tpu.memory_space<vmem>>, vector<1x3xf32>
      %121 = arith.truncf %118 : vector<18x16x32xf32> to vector<18x16x32xbf16>
      %cst_43 = arith.constant 0.000000e+00 : bf16
      %122 = vector.broadcast %cst_43 : bf16 to vector<18x1x32xbf16>
      %123 = tpu.concatenate %122, %121, %122 in 1 : vector<18x1x32xbf16>, vector<18x16x32xbf16>, vector<18x1x32xbf16> -> vector<18x18x32xbf16>
      %124 = vector.extract_strided_slice %123 {offsets = [0, 0, 0], sizes = [16, 16, 32], strides = [1, 1, 1]} : vector<18x18x32xbf16> to vector<16x16x32xbf16>
      %125 = vector.extract_strided_slice %123 {offsets = [0, 1, 0], sizes = [16, 16, 32], strides = [1, 1, 1]} : vector<18x18x32xbf16> to vector<16x16x32xbf16>
      %126 = vector.extract_strided_slice %123 {offsets = [0, 2, 0], sizes = [16, 16, 32], strides = [1, 1, 1]} : vector<18x18x32xbf16> to vector<16x16x32xbf16>
      %127 = vector.extract_strided_slice %123 {offsets = [1, 0, 0], sizes = [16, 16, 32], strides = [1, 1, 1]} : vector<18x18x32xbf16> to vector<16x16x32xbf16>
      %128 = vector.extract_strided_slice %123 {offsets = [1, 1, 0], sizes = [16, 16, 32], strides = [1, 1, 1]} : vector<18x18x32xbf16> to vector<16x16x32xbf16>
      %129 = vector.extract_strided_slice %123 {offsets = [1, 2, 0], sizes = [16, 16, 32], strides = [1, 1, 1]} : vector<18x18x32xbf16> to vector<16x16x32xbf16>
      %130 = vector.extract_strided_slice %123 {offsets = [2, 0, 0], sizes = [16, 16, 32], strides = [1, 1, 1]} : vector<18x18x32xbf16> to vector<16x16x32xbf16>
      %131 = vector.extract_strided_slice %123 {offsets = [2, 1, 0], sizes = [16, 16, 32], strides = [1, 1, 1]} : vector<18x18x32xbf16> to vector<16x16x32xbf16>
      %132 = vector.extract_strided_slice %123 {offsets = [2, 2, 0], sizes = [16, 16, 32], strides = [1, 1, 1]} : vector<18x18x32xbf16> to vector<16x16x32xbf16>
      %133 = tpu.concatenate %124, %125, %126, %127, %128, %129, %130, %131, %132 in 2 : vector<16x16x32xbf16>, vector<16x16x32xbf16>, vector<16x16x32xbf16>, vector<16x16x32xbf16>, vector<16x16x32xbf16>, vector<16x16x32xbf16>, vector<16x16x32xbf16>, vector<16x16x32xbf16>, vector<16x16x32xbf16> -> vector<16x16x288xbf16>
      %134 = vector.shape_cast %133 : vector<16x16x288xbf16> to vector<256x288xbf16>
      %cst_44 = arith.constant dense<0.000000e+00> : vector<256x3xf32>
      %135 = tpu.matmul %134, %119, %cst_44 {dimension_numbers = #tpu.dot_dimension_numbers<[1], [0], [0], [1], [0, 0, 1, 1], [], []>} : vector<256x288xbf16>, vector<288x3xbf16>, vector<256x3xf32> -> vector<256x3xf32>
      %136 = vector.broadcast %120 : vector<1x3xf32> to vector<256x3xf32>
      %137 = arith.addf %135, %136 : vector<256x3xf32>
      %138 = vector.shape_cast %137 : vector<256x3xf32> to vector<16x16x3xf32>
      %c0_45 = arith.constant 0 : index
      %c0_46 = arith.constant 0 : index
      %c0_47 = arith.constant 0 : index
      %139 = vector.load %arg4[%c0_45, %c0_46, %c0_47] : memref<1x16x16xf32, #tpu.memory_space<vmem>>, vector<1x16x16xf32>
      %140 = vector.shape_cast %139 : vector<1x16x16xf32> to vector<16x16xf32>
      %141 = vector.shape_cast %140 : vector<16x16xf32> to vector<16x16x1xf32>
      %142 = vector.broadcast %141 : vector<16x16x1xf32> to vector<16x16x3xf32>
      %143 = arith.mulf %138, %142 : vector<16x16x3xf32>
      %144 = vector.extract_strided_slice %143 {offsets = [0, 0, 0], sizes = [16, 16, 1], strides = [1, 1, 1]} : vector<16x16x3xf32> to vector<16x16x1xf32>
      %145 = vector.extract_strided_slice %143 {offsets = [0, 0, 0], sizes = [16, 16, 1], strides = [1, 1, 1]} : vector<16x16x3xf32> to vector<16x16x1xf32>
      %146 = arith.mulf %144, %145 : vector<16x16x1xf32>
      %147 = vector.extract_strided_slice %143 {offsets = [0, 0, 1], sizes = [16, 16, 1], strides = [1, 1, 1]} : vector<16x16x3xf32> to vector<16x16x1xf32>
      %148 = vector.extract_strided_slice %143 {offsets = [0, 0, 1], sizes = [16, 16, 1], strides = [1, 1, 1]} : vector<16x16x3xf32> to vector<16x16x1xf32>
      %149 = arith.mulf %147, %148 : vector<16x16x1xf32>
      %150 = arith.addf %146, %149 : vector<16x16x1xf32>
      %151 = vector.extract_strided_slice %143 {offsets = [0, 0, 2], sizes = [16, 16, 1], strides = [1, 1, 1]} : vector<16x16x3xf32> to vector<16x16x1xf32>
      %152 = vector.extract_strided_slice %143 {offsets = [0, 0, 2], sizes = [16, 16, 1], strides = [1, 1, 1]} : vector<16x16x3xf32> to vector<16x16x1xf32>
      %153 = arith.mulf %151, %152 : vector<16x16x1xf32>
      %154 = arith.addf %150, %153 : vector<16x16x1xf32>
      %cst_48 = arith.constant 1.000000e-24 : f32
      %155 = vector.broadcast %cst_48 : f32 to vector<16x16x1xf32>
      %156 = arith.maximumf %154, %155 : vector<16x16x1xf32>
      %157 = math.rsqrt %156 : vector<16x16x1xf32>
      %158 = vector.broadcast %157 : vector<16x16x1xf32> to vector<16x16x3xf32>
      %159 = arith.mulf %143, %158 : vector<16x16x3xf32>
      %c0_49 = arith.constant 0 : index
      %c0_50 = arith.constant 0 : index
      %c0_51 = arith.constant 0 : index
      %c0_52 = arith.constant 0 : index
      %160 = vector.load %arg13[%c0_49, %c0_50, %c0_51, %c0_52] : memref<1x16x16x3xf32, #tpu.memory_space<vmem>>, vector<1x16x16x3xf32>
      %161 = vector.shape_cast %160 : vector<1x16x16x3xf32> to vector<16x16x3xf32>
      %162 = vector.shape_cast %159 : vector<16x16x3xf32> to vector<1x16x16x3xf32>
      tpu.vector_store %arg13[%c0_49, %c0_50, %c0_51, %c0_52], %162 {strides = array<i32>} : memref<1x16x16x3xf32, #tpu.memory_space<vmem>>, vector<1x16x16x3xf32>,
    } else {
    }
    return
  }
  func.func @transform_0(%arg0: i32, %arg1: i32, %arg2: i32) -> (i32, i32, i32, i32) {
    %c2_i32 = arith.constant 2 : i32
    %0 = arith.muli %arg2, %c2_i32 : i32
    %c1_i32 = arith.constant 1 : i32
    %1 = arith.muli %0, %c1_i32 : i32
    %c1_i32_0 = arith.constant 1 : i32
    %2 = arith.muli %arg0, %c1_i32_0 : i32
    %3 = arith.addi %1, %2 : i32
    %4 = arith.addi %3, %arg1 : i32
    %c0_i32 = arith.constant 0 : i32
    %c0_i32_1 = arith.constant 0 : i32
    %c0_i32_2 = arith.constant 0 : i32
    %c0_i32_3 = arith.constant 0 : i32
    return %4, %c0_i32, %c0_i32_1, %c0_i32_2 : i32, i32, i32, i32
  }
  func.func @transform_1(%arg0: i32, %arg1: i32, %arg2: i32) -> (i32, i32, i32) {
    %c1_i32 = arith.constant 1 : i32
    %0 = arith.muli %arg0, %c1_i32 : i32
    %1 = arith.addi %0, %arg1 : i32
    %c0_i32 = arith.constant 0 : i32
    %c0_i32_0 = arith.constant 0 : i32
    %c0_i32_1 = arith.constant 0 : i32
    return %1, %c0_i32, %c0_i32_0 : i32, i32, i32
  }
  func.func @transform_2(%arg0: i32, %arg1: i32, %arg2: i32) -> (i32, i32) {
    %c0_i32 = arith.constant 0 : i32
    %c0_i32_0 = arith.constant 0 : i32
    %c0_i32_1 = arith.constant 0 : i32
    return %c0_i32, %c0_i32_0 : i32, i32
  }
  func.func @transform_3(%arg0: i32, %arg1: i32, %arg2: i32) -> (i32, i32) {
    %c0_i32 = arith.constant 0 : i32
    %c0_i32_0 = arith.constant 0 : i32
    %c0_i32_1 = arith.constant 0 : i32
    return %c0_i32, %c0_i32_0 : i32, i32
  }
  func.func @transform_4(%arg0: i32, %arg1: i32, %arg2: i32) -> (i32, i32) {
    %c0_i32 = arith.constant 0 : i32
    %c0_i32_0 = arith.constant 0 : i32
    %c0_i32_1 = arith.constant 0 : i32
    return %c0_i32, %c0_i32_0 : i32, i32
  }
  func.func @transform_5(%arg0: i32, %arg1: i32, %arg2: i32) -> (i32, i32) {
    %c0_i32 = arith.constant 0 : i32
    %c0_i32_0 = arith.constant 0 : i32
    %c0_i32_1 = arith.constant 0 : i32
    return %c0_i32, %c0_i32_0 : i32, i32
  }
  func.func @transform_6(%arg0: i32, %arg1: i32, %arg2: i32) -> (i32, i32) {
    %c0_i32 = arith.constant 0 : i32
    %c0_i32_0 = arith.constant 0 : i32
    %c0_i32_1 = arith.constant 0 : i32
    return %c0_i32, %c0_i32_0 : i32, i32
  }
  func.func @transform_7(%arg0: i32, %arg1: i32, %arg2: i32) -> (i32, i32) {
    %c0_i32 = arith.constant 0 : i32
    %c0_i32_0 = arith.constant 0 : i32
    %c0_i32_1 = arith.constant 0 : i32
    return %c0_i32, %c0_i32_0 : i32, i32
  }
  func.func @transform_8(%arg0: i32, %arg1: i32, %arg2: i32) -> (i32, i32) {
    %c0_i32 = arith.constant 0 : i32
    %c0_i32_0 = arith.constant 0 : i32
    %c0_i32_1 = arith.constant 0 : i32
    return %c0_i32, %c0_i32_0 : i32, i32
  }
  func.func @transform_9(%arg0: i32, %arg1: i32, %arg2: i32) -> (i32, i32) {
    %c0_i32 = arith.constant 0 : i32
    %c0_i32_0 = arith.constant 0 : i32
    %c0_i32_1 = arith.constant 0 : i32
    return %c0_i32, %c0_i32_0 : i32, i32
  }
  func.func @transform_10(%arg0: i32, %arg1: i32, %arg2: i32) -> (i32, i32, i32, i32) {
    %c1_i32 = arith.constant 1 : i32
    %0 = arith.muli %arg0, %c1_i32 : i32
    %1 = arith.addi %0, %arg1 : i32
    %c0_i32 = arith.constant 0 : i32
    %c0_i32_0 = arith.constant 0 : i32
    %c0_i32_1 = arith.constant 0 : i32
    %c0_i32_2 = arith.constant 0 : i32
    return %1, %c0_i32, %c0_i32_0, %c0_i32_1 : i32, i32, i32, i32
  }
}

</mosaic_0001>

<llo_original>
// kernel: tpu_custom_call.1
$region0: #{tpu_custom_call.1}
  #allocation0 [shape = 'u32[]', space=smem, size = 0x4, offset = 0x4, fixed_abs, tag = 'smem constant byte address 0x4 - core index']
  #allocation1 [shape = 'u32[72,128]{1,0:T(1,128)}', space=vmem, size = 0x9000, scoped, tag = 'internal scratch']
  #allocation2 [shape = 'f32[20,16,32]{2,1,0:T(8,128)}', space=vmem, size = 0x28000, scoped, tag = 'scratch operand']
  %s0 = inlined_call_operand.vmem [shape: f32[6,24,18,6], index: 0, kind: input, shape index: {}]
  %s1 = inlined_call_operand.vmem [shape: f32[2,16,16], index: 1, kind: input, shape index: {}]
  %s2 = inlined_call_operand.vmem [shape: bf16[54,32], index: 2, kind: input, shape index: {}]
  %s3 = inlined_call_operand.vmem [shape: f32[1,32], index: 3, kind: input, shape index: {}]
  %s4 = inlined_call_operand.vmem [shape: bf16[288,32], index: 4, kind: input, shape index: {}]
  %s5 = inlined_call_operand.vmem [shape: f32[1,32], index: 5, kind: input, shape index: {}]
  %s6 = inlined_call_operand.vmem [shape: bf16[288,32], index: 6, kind: input, shape index: {}]
  %s7 = inlined_call_operand.vmem [shape: f32[1,32], index: 7, kind: input, shape index: {}]
  %s8 = inlined_call_operand.vmem [shape: bf16[288,3], index: 8, kind: input, shape index: {}]
  %s9 = inlined_call_operand.vmem [shape: f32[1,3], index: 9, kind: input, shape index: {}]
  %s10 = inlined_call_operand.vmem [shape: f32[2,16,16,3], index: 10, kind: output, shape index: {}]
  %s11 = sld [smem:[#allocation0]]
  $region85: #{tpu_custom_call.1} parent=0
    _
  %s13 = ssub.s32 1, %s11
  %s14 = scalar_select 0, %s13, %s11
  loop: start=0, step=1, limit=8
  $region2: #{tpu_custom_call.1} parent=0 // loop_pre_header
    _
  $region3: #{tpu_custom_call.1} parent=0 // loop_header
    %s16 = sphi 0, %s20
    %p17 = scmp.ge.s32.totalorder %s16, 8
    %s23 = sphi 0, %s42
    %s24 = sphi 0, %s38
    %s25 = sphi 0, %s34
    %s26 = sphi 0, %s23
    %s27 = sphi 0, %s24
    %s28 = sphi 0, %s25
    %s29 = sphi 0, %s26
    %s30 = sphi 0, %s27
    %s31 = sphi 0, %s28
    %s51 = sphi 0, %s53
    %s54 = sphi 0, %s51
    %s55 = sphi 0, %s54
    %s71 = sphi 0, %s55
    %s79 = sphi 0, %s81
    %s82 = sphi 0, %s79
    %s83 = sphi 0, %s82
    %s99 = sphi 0, %s83
    %s103 = sphi 0, %s103
    %s105 = sphi 0, %s103
    %s106 = sphi 0, %s105
    %s120 = sphi 0, %s106
    %s124 = sphi 0, %s124
    %s126 = sphi 0, %s124
    %s127 = sphi 0, %s126
    %s141 = sphi 0, %s127
    %s145 = sphi 0, %s145
    %s147 = sphi 0, %s145
    %s148 = sphi 0, %s147
    %s162 = sphi 0, %s148
    %s166 = sphi 0, %s166
    %s168 = sphi 0, %s166
    %s169 = sphi 0, %s168
    %s183 = sphi 0, %s169
    %s187 = sphi 0, %s187
    %s189 = sphi 0, %s187
    %s190 = sphi 0, %s189
    %s204 = sphi 0, %s190
    %s208 = sphi 0, %s208
    %s210 = sphi 0, %s208
    %s211 = sphi 0, %s210
    %s225 = sphi 0, %s211
    %s229 = sphi 0, %s229
    %s231 = sphi 0, %s229
    %s232 = sphi 0, %s231
    %s246 = sphi 0, %s232
    %s250 = sphi 0, %s250
    %s252 = sphi 0, %s250
    %s253 = sphi 0, %s252
    %s267 = sphi 0, %s253
    %s275 = sphi 0, %s277
    %s278 = sphi 0, %s275
    %s279 = sphi 0, %s278
    %s295 = sphi 0, %s279
  $region4: #{tpu_custom_call.1} parent=0 // loop_header_branch
    %19 = sbr.rel (%p17) target = $region8
  $region5: #{tpu_custom_call.1} parent=0 // loop_body
    %s21 = ssub.s32 %s16, 1
    %s22 = ssub.s32 %s16, 2
    %s32 = sadd.s32 1, %s25
    %p33 = scmp.ge.s32.totalorder %s32, 3
    %s34 = scalar_select %p33, 0, %s32
    %s35 = sadd.s32 1, %s24
    %s36 = scalar_select %p33, %s35, %s24
    %p37 = scmp.ge.s32.totalorder %s36, 1
    %s38 = scalar_select %p37, 0, %s36
    %s39 = sadd.s32 1, %s23
    %s40 = scalar_select %p37, %s39, %s23
    %p41 = scmp.ge.s32.totalorder %s40, 2
    %s42 = scalar_select %p41, 0, %s40
    %s43 = smul.u32 %s25, 2
    %s44 = sadd.s32 %s43, %s23
    %s45 = sadd.s32 %s44, %s24
    %s46 = smul.u32 %s34, 2
    %s47 = sadd.s32 %s46, %s42
    %s48 = sadd.s32 %s47, %s38
    %s49 = ssub.s32 %s45, %s48
    %p50 = scmp.eq.s32.totalorder %s49, 0
    %s52 = sadd.s32 %s51, 1
    %s53 = scalar_select %p50, %s51, %s52
    %p56 = pneg %p50
    %p57 = scmp.eq.s32.totalorder %s16, 5
    %p58 = por %p56, %p57
    %p59 = scmp.ne.s32.totalorder %s51, %s54
    %p60 = scmp.eq.s32.totalorder %s16, 0
    %p61 = por %p59, %p60
    %p62 = scmp.ne.s32.totalorder %s51, %s54
    %p63 = scmp.eq.s32.totalorder %s21, 5
    %p64 = por %p62, %p63
    %p65 = scmp.ne.s32.totalorder %s54, %s55
    %p66 = scmp.eq.s32.totalorder %s21, 0
    %p67 = por %p65, %p66
    %p68 = scmp.ne.s32.totalorder %s54, %s55
    %p69 = scmp.eq.s32.totalorder %s22, 5
    %p70 = por %p68, %p69
    %p72 = scmp.ne.s32.totalorder %s55, %s71
    %p73 = scmp.eq.s32.totalorder %s22, 0
    %p74 = por %p72, %p73
    %s75 = sadd.s32 %s23, %s24
    %s76 = sadd.s32 %s42, %s38
    %s77 = ssub.s32 %s75, %s76
    %p78 = scmp.eq.s32.totalorder %s77, 0
    %s80 = sadd.s32 %s79, 1
    %s81 = scalar_select %p78, %s79, %s80
    %p84 = pneg %p78
    %p85 = scmp.eq.s32.totalorder %s16, 5
    %p86 = por %p84, %p85
    %p87 = scmp.ne.s32.totalorder %s79, %s82
    %p88 = scmp.eq.s32.totalorder %s16, 0
    %p89 = por %p87, %p88
    %p90 = scmp.ne.s32.totalorder %s79, %s82
    %p91 = scmp.eq.s32.totalorder %s21, 5
    %p92 = por %p90, %p91
    %p93 = scmp.ne.s32.totalorder %s82, %s83
    %p94 = scmp.eq.s32.totalorder %s21, 0
    %p95 = por %p93, %p94
    %p96 = scmp.ne.s32.totalorder %s82, %s83
    %p97 = scmp.eq.s32.totalorder %s22, 5
    %p98 = por %p96, %p97
    %p100 = scmp.ne.s32.totalorder %s83, %s99
    %p101 = scmp.eq.s32.totalorder %s22, 0
    %p102 = por %p100, %p101
    %s104 = sadd.s32 %s103, 1
    %p107 = scmp.eq.s32.totalorder %s16, 5
    %p108 = scmp.ne.s32.totalorder %s103, %s105
    %p109 = scmp.eq.s32.totalorder %s16, 0
    %p110 = por %p108, %p109
    %p111 = scmp.ne.s32.totalorder %s103, %s105
    %p112 = scmp.eq.s32.totalorder %s21, 5
    %p113 = por %p111, %p112
    %p114 = scmp.ne.s32.totalorder %s105, %s106
    %p115 = scmp.eq.s32.totalorder %s21, 0
    %p116 = por %p114, %p115
    %p117 = scmp.ne.s32.totalorder %s105, %s106
    %p118 = scmp.eq.s32.totalorder %s22, 5
    %p119 = por %p117, %p118
    %p121 = scmp.ne.s32.totalorder %s106, %s120
    %p122 = scmp.eq.s32.totalorder %s22, 0
    %p123 = por %p121, %p122
    %s125 = sadd.s32 %s124, 1
    %p128 = scmp.eq.s32.totalorder %s16, 5
    %p129 = scmp.ne.s32.totalorder %s124, %s126
    %p130 = scmp.eq.s32.totalorder %s16, 0
    %p131 = por %p129, %p130
    %p132 = scmp.ne.s32.totalorder %s124, %s126
    %p133 = scmp.eq.s32.totalorder %s21, 5
    %p134 = por %p132, %p133
    %p135 = scmp.ne.s32.totalorder %s126, %s127
    %p136 = scmp.eq.s32.totalorder %s21, 0
    %p137 = por %p135, %p136
    %p138 = scmp.ne.s32.totalorder %s126, %s127
    %p139 = scmp.eq.s32.totalorder %s22, 5
    %p140 = por %p138, %p139
    %p142 = scmp.ne.s32.totalorder %s127, %s141
    %p143 = scmp.eq.s32.totalorder %s22, 0
    %p144 = por %p142, %p143
    %s146 = sadd.s32 %s145, 1
    %p149 = scmp.eq.s32.totalorder %s16, 5
    %p150 = scmp.ne.s32.totalorder %s145, %s147
    %p151 = scmp.eq.s32.totalorder %s16, 0
    %p152 = por %p150, %p151
    %p153 = scmp.ne.s32.totalorder %s145, %s147
    %p154 = scmp.eq.s32.totalorder %s21, 5
    %p155 = por %p153, %p154
    %p156 = scmp.ne.s32.totalorder %s147, %s148
    %p157 = scmp.eq.s32.totalorder %s21, 0
    %p158 = por %p156, %p157
    %p159 = scmp.ne.s32.totalorder %s147, %s148
    %p160 = scmp.eq.s32.totalorder %s22, 5
    %p161 = por %p159, %p160
    %p163 = scmp.ne.s32.totalorder %s148, %s162
    %p164 = scmp.eq.s32.totalorder %s22, 0
    %p165 = por %p163, %p164
    %s167 = sadd.s32 %s166, 1
    %p170 = scmp.eq.s32.totalorder %s16, 5
    %p171 = scmp.ne.s32.totalorder %s166, %s168
    %p172 = scmp.eq.s32.totalorder %s16, 0
    %p173 = por %p171, %p172
    %p174 = scmp.ne.s32.totalorder %s166, %s168
    %p175 = scmp.eq.s32.totalorder %s21, 5
    %p176 = por %p174, %p175
    %p177 = scmp.ne.s32.totalorder %s168, %s169
    %p178 = scmp.eq.s32.totalorder %s21, 0
    %p179 = por %p177, %p178
    %p180 = scmp.ne.s32.totalorder %s168, %s169
    %p181 = scmp.eq.s32.totalorder %s22, 5
    %p182 = por %p180, %p181
    %p184 = scmp.ne.s32.totalorder %s169, %s183
    %p185 = scmp.eq.s32.totalorder %s22, 0
    %p186 = por %p184, %p185
    %s188 = sadd.s32 %s187, 1
    %p191 = scmp.eq.s32.totalorder %s16, 5
    %p192 = scmp.ne.s32.totalorder %s187, %s189
    %p193 = scmp.eq.s32.totalorder %s16, 0
    %p194 = por %p192, %p193
    %p195 = scmp.ne.s32.totalorder %s187, %s189
    %p196 = scmp.eq.s32.totalorder %s21, 5
    %p197 = por %p195, %p196
    %p198 = scmp.ne.s32.totalorder %s189, %s190
    %p199 = scmp.eq.s32.totalorder %s21, 0
    %p200 = por %p198, %p199
    %p201 = scmp.ne.s32.totalorder %s189, %s190
    %p202 = scmp.eq.s32.totalorder %s22, 5
    %p203 = por %p201, %p202
    %p205 = scmp.ne.s32.totalorder %s190, %s204
    %p206 = scmp.eq.s32.totalorder %s22, 0
    %p207 = por %p205, %p206
    %s209 = sadd.s32 %s208, 1
    %p212 = scmp.eq.s32.totalorder %s16, 5
    %p213 = scmp.ne.s32.totalorder %s208, %s210
    %p214 = scmp.eq.s32.totalorder %s16, 0
    %p215 = por %p213, %p214
    %p216 = scmp.ne.s32.totalorder %s208, %s210
    %p217 = scmp.eq.s32.totalorder %s21, 5
    %p218 = por %p216, %p217
    %p219 = scmp.ne.s32.totalorder %s210, %s211
    %p220 = scmp.eq.s32.totalorder %s21, 0
    %p221 = por %p219, %p220
    %p222 = scmp.ne.s32.totalorder %s210, %s211
    %p223 = scmp.eq.s32.totalorder %s22, 5
    %p224 = por %p222, %p223
    %p226 = scmp.ne.s32.totalorder %s211, %s225
    %p227 = scmp.eq.s32.totalorder %s22, 0
    %p228 = por %p226, %p227
    %s230 = sadd.s32 %s229, 1
    %p233 = scmp.eq.s32.totalorder %s16, 5
    %p234 = scmp.ne.s32.totalorder %s229, %s231
    %p235 = scmp.eq.s32.totalorder %s16, 0
    %p236 = por %p234, %p235
    %p237 = scmp.ne.s32.totalorder %s229, %s231
    %p238 = scmp.eq.s32.totalorder %s21, 5
    %p239 = por %p237, %p238
    %p240 = scmp.ne.s32.totalorder %s231, %s232
    %p241 = scmp.eq.s32.totalorder %s21, 0
    %p242 = por %p240, %p241
    %p243 = scmp.ne.s32.totalorder %s231, %s232
    %p244 = scmp.eq.s32.totalorder %s22, 5
    %p245 = por %p243, %p244
    %p247 = scmp.ne.s32.totalorder %s232, %s246
    %p248 = scmp.eq.s32.totalorder %s22, 0
    %p249 = por %p247, %p248
    %s251 = sadd.s32 %s250, 1
    %p254 = scmp.eq.s32.totalorder %s16, 5
    %p255 = scmp.ne.s32.totalorder %s250, %s252
    %p256 = scmp.eq.s32.totalorder %s16, 0
    %p257 = por %p255, %p256
    %p258 = scmp.ne.s32.totalorder %s250, %s252
    %p259 = scmp.eq.s32.totalorder %s21, 5
    %p260 = por %p258, %p259
    %p261 = scmp.ne.s32.totalorder %s252, %s253
    %p262 = scmp.eq.s32.totalorder %s21, 0
    %p263 = por %p261, %p262
    %p264 = scmp.ne.s32.totalorder %s252, %s253
    %p265 = scmp.eq.s32.totalorder %s22, 5
    %p266 = por %p264, %p265
    %p268 = scmp.ne.s32.totalorder %s253, %s267
    %p269 = scmp.eq.s32.totalorder %s22, 0
    %p270 = por %p268, %p269
    %s271 = sadd.s32 %s23, %s24
    %s272 = sadd.s32 %s42, %s38
    %s273 = ssub.s32 %s271, %s272
    %p274 = scmp.eq.s32.totalorder %s273, 0
    %s276 = sadd.s32 %s275, 1
    %s277 = scalar_select %p274, %s275, %s276
    %p280 = pneg %p274
    %p281 = scmp.eq.s32.totalorder %s16, 5
    %p282 = por %p280, %p281
    %p283 = scmp.ne.s32.totalorder %s275, %s278
    %p284 = scmp.eq.s32.totalorder %s16, 0
    %p285 = por %p283, %p284
    %p286 = scmp.ne.s32.totalorder %s275, %s278
    %p287 = scmp.eq.s32.totalorder %s21, 5
    %p288 = por %p286, %p287
    %p289 = scmp.ne.s32.totalorder %s278, %s279
    %p290 = scmp.eq.s32.totalorder %s21, 0
    %p291 = por %p289, %p290
    %p292 = scmp.ne.s32.totalorder %s278, %s279
    %p293 = scmp.eq.s32.totalorder %s22, 5
    %p294 = por %p292, %p293
    %p296 = scmp.ne.s32.totalorder %s279, %s295
    %p297 = scmp.eq.s32.totalorder %s22, 0
    %p298 = por %p296, %p297
    %p299 = scmp.le.s32.totalorder 1, %s16
    %p300 = scmp.lt.s32.totalorder %s16, 7
    %p301 = pnand %p299, %p300
    %p302 = pneg %p301
    // Predicated region
    $region9: #{tpu_custom_call.1} parent=5 // pred_check
      _
    $region10: #{tpu_custom_call.1} parent=5 // pred_check_branch
      %304 = sbr.rel (%p301) target = $region12
    $region11: #{tpu_custom_call.1} parent=5 // pred_region
      %s305 = ssub.s32 %s16, 1
      // Predicated region
      $region13: #{tpu_custom_call.1} parent=11 // pred_check
        %p306 = pneg %p116
      $region14: #{tpu_custom_call.1} parent=11 // pred_check_branch
        %308 = sbr.rel (%p306) target = $region16
      $region15: #{tpu_custom_call.1} parent=11 // pred_region
        _
      $region16: #{tpu_custom_call.1} parent=11 // pred_fallthru
        _
      // Predicated region
      $region17: #{tpu_custom_call.1} parent=11 // pred_check
        %p309 = pneg %p137
      $region18: #{tpu_custom_call.1} parent=11 // pred_check_branch
        %311 = sbr.rel (%p309) target = $region20
      $region19: #{tpu_custom_call.1} parent=11 // pred_region
        _
      $region20: #{tpu_custom_call.1} parent=11 // pred_fallthru
        _
      // Predicated region
      $region21: #{tpu_custom_call.1} parent=11 // pred_check
        %p312 = pneg %p158
      $region22: #{tpu_custom_call.1} parent=11 // pred_check_branch
        %314 = sbr.rel (%p312) target = $region24
      $region23: #{tpu_custom_call.1} parent=11 // pred_region
        _
      $region24: #{tpu_custom_call.1} parent=11 // pred_fallthru
        _
      // Predicated region
      $region25: #{tpu_custom_call.1} parent=11 // pred_check
        %p315 = pneg %p179
      $region26: #{tpu_custom_call.1} parent=11 // pred_check_branch
        %317 = sbr.rel (%p315) target = $region28
      $region27: #{tpu_custom_call.1} parent=11 // pred_region
        _
      $region28: #{tpu_custom_call.1} parent=11 // pred_fallthru
        _
      // Predicated region
      $region29: #{tpu_custom_call.1} parent=11 // pred_check
        %p318 = pneg %p200
      $region30: #{tpu_custom_call.1} parent=11 // pred_check_branch
        %320 = sbr.rel (%p318) target = $region32
      $region31: #{tpu_custom_call.1} parent=11 // pred_region
        _
      $region32: #{tpu_custom_call.1} parent=11 // pred_fallthru
        _
      // Predicated region
      $region33: #{tpu_custom_call.1} parent=11 // pred_check
        %p321 = pneg %p221
      $region34: #{tpu_custom_call.1} parent=11 // pred_check_branch
        %323 = sbr.rel (%p321) target = $region36
      $region35: #{tpu_custom_call.1} parent=11 // pred_region
        _
      $region36: #{tpu_custom_call.1} parent=11 // pred_fallthru
        _
      // Predicated region
      $region37: #{tpu_custom_call.1} parent=11 // pred_check
        %p324 = pneg %p242
      $region38: #{tpu_custom_call.1} parent=11 // pred_check_branch
        %326 = sbr.rel (%p324) target = $region40
      $region39: #{tpu_custom_call.1} parent=11 // pred_region
        _
      $region40: #{tpu_custom_call.1} parent=11 // pred_fallthru
        _
      // Predicated region
      $region41: #{tpu_custom_call.1} parent=11 // pred_check
        %p327 = pneg %p263
      $region42: #{tpu_custom_call.1} parent=11 // pred_check_branch
        %329 = sbr.rel (%p327) target = $region44
      $region43: #{tpu_custom_call.1} parent=11 // pred_region
        _
      $region44: #{tpu_custom_call.1} parent=11 // pred_fallthru
        _
    $region12: #{tpu_custom_call.1} parent=5 // pred_fallthru
      _
    %p330 = scmp.lt.s32.totalorder %s16, 6
    // Predicated region
    $region45: #{tpu_custom_call.1} parent=5 // pred_check
      %p331 = pneg %p330
    $region46: #{tpu_custom_call.1} parent=5 // pred_check_branch
      %333 = sbr.rel (%p331) target = $region48
    $region47: #{tpu_custom_call.1} parent=5 // pred_region
      // Predicated region
      $region49: #{tpu_custom_call.1} parent=47 // pred_check
        %p334 = pneg %p61
      $region50: #{tpu_custom_call.1} parent=47 // pred_check_branch
        %336 = sbr.rel (%p334) target = $region52
      $region51: #{tpu_custom_call.1} parent=47 // pred_region
        %s337 = smul.u32 %s25, 2
        %s338 = sadd.s32 %s337, %s23
        %s339 = sadd.s32 %s338, %s24
        %p340 = scmp.lt.s32.totalorder %s339, 5
        %s341 = scalar_select %p340, %s339, 5
        %s342 = smul.addr %s341, 72
        %s343 = smul.addr %s342, 8
        %s344 = scalar_lea.vmem %s0, %s343
        %s345 = smul.u32 %s25, 2
        %s346 = sadd.s32 %s345, %s23
        %s347 = sadd.s32 %s346, %s24
      $region52: #{tpu_custom_call.1} parent=47 // pred_fallthru
        _
      // Predicated region
      $region53: #{tpu_custom_call.1} parent=47 // pred_check
        %p348 = pneg %p89
      $region54: #{tpu_custom_call.1} parent=47 // pred_check_branch
        %350 = sbr.rel (%p348) target = $region56
      $region55: #{tpu_custom_call.1} parent=47 // pred_region
        %s351 = sadd.s32 %s23, %s24
        %p352 = scmp.lt.s32.totalorder %s351, 1
        %s353 = scalar_select %p352, %s351, 1
        %s354 = smul.addr %s353, 2
        %s355 = smul.addr %s354, 8
        %s356 = scalar_lea.vmem %s1, %s355
        %s357 = sadd.s32 %s23, %s24
      $region56: #{tpu_custom_call.1} parent=47 // pred_fallthru
        _
    $region48: #{tpu_custom_call.1} parent=5 // pred_fallthru
      _
    %p358 = scmp.le.s32.totalorder 1, %s16
    %p359 = scmp.lt.s32.totalorder %s16, 7
    %p360 = pnand %p358, %p359
    %p361 = pneg %p360
    // Predicated region
    $region57: #{tpu_custom_call.1} parent=5 // pred_check
      _
    $region58: #{tpu_custom_call.1} parent=5 // pred_check_branch
      %363 = sbr.rel (%p360) target = $region60
    $region59: #{tpu_custom_call.1} parent=5 // pred_region
      %s364 = ssub.s32 %s16, 1
      %s365 = smul.u32 %s28, 2
      %s366 = sadd.s32 %s365, %s26
      %s367 = sadd.s32 %s366, %s27
      %p368 = scmp.lt.s32.totalorder %s367, 5
      %s369 = scalar_select %p368, %s367, 5
      %s370 = smul.addr %s369, 72
      %s371 = smul.addr %s370, 8
      %s372 = scalar_lea.vmem %s0, %s371
      %p373 = pneg %p67
      %p374 = pneg %p64
      %s375 = sadd.s32 %s26, %s27
      %p376 = scmp.lt.s32.totalorder %s375, 1
      %s377 = scalar_select %p376, %s375, 1
      %s378 = smul.addr %s377, 2
      %s379 = smul.addr %s378, 8
      %s380 = scalar_lea.vmem %s1, %s379
      %p381 = pneg %p95
      %p382 = pneg %p92
      %p383 = pneg %p116
      %p384 = pneg %p113
      %p385 = pneg %p137
      %p386 = pneg %p134
      %p387 = pneg %p158
      %p388 = pneg %p155
      %p389 = pneg %p179
      %p390 = pneg %p176
      %p391 = pneg %p200
      %p392 = pneg %p197
      %p393 = pneg %p221
      %p394 = pneg %p218
      %p395 = pneg %p242
      %p396 = pneg %p239
      %p397 = pneg %p263
      %p398 = pneg %p260
      %p399 = pneg %p291
      %p400 = pneg %p288
      %s401 = sadd.s32 %s26, %s27
      %p402 = scmp.lt.s32.totalorder %s401, 1
      %s403 = scalar_select %p402, %s401, 1
      %s404 = smul.addr %s403, 32
      %s405 = smul.addr %s404, 8
      %s406 = scalar_lea.vmem %s10, %s405
      %s407 = smul.u32 %s28, 2
      %s408 = sadd.s32 %s407, %s26
      %s409 = sadd.s32 %s408, %s27
      %p410 = scmp.lt.s32.totalorder %s409, 5
      %s411 = scalar_select %p410, %s409, 5
      %s412 = smul.addr %s411, 72
      %s413 = smul.addr %s412, 8
      %s414 = scalar_lea.vmem %s0, %s413
      %s415 = smul.u32 %s28, 2
      %s416 = sadd.s32 %s415, %s26
      %s417 = sadd.s32 %s416, %s27
      %s418 = sadd.s32 %s26, %s27
      %p419 = scmp.lt.s32.totalorder %s418, 1
      %s420 = scalar_select %p419, %s418, 1
      %s421 = smul.addr %s420, 2
      %s422 = smul.addr %s421, 8
      %s423 = scalar_lea.vmem %s1, %s422
      %s424 = sadd.s32 %s26, %s27
      %s425 = sadd.s32 %s26, %s27
      %p426 = scmp.lt.s32.totalorder %s425, 1
      %s427 = scalar_select %p426, %s425, 1
      %s428 = smul.addr %s427, 32
      %s429 = smul.addr %s428, 8
      %s430 = scalar_lea.vmem %s10, %s429
      %s431 = sadd.s32 %s26, %s27
      %s433 = smul.u32 %s27, 16
      %v434 = vld [vmem:[%s414] sm:$0xff]
      %v435 = vld [vmem:[%s414 + $0x8] sm:$0xff]
      %v436 = vld [vmem:[%s414 + $0x10] sm:$0x3]
      %v437 = vld [vmem:[%s414 + $0x18] sm:$0xff]
      %v438 = vld [vmem:[%s414 + $0x20] sm:$0xff]
      %v439 = vld [vmem:[%s414 + $0x28] sm:$0x3]
      %v440 = vld [vmem:[%s414 + $0x30] sm:$0xff]
      %v441 = vld [vmem:[%s414 + $0x38] sm:$0xff]
      %v442 = vld [vmem:[%s414 + $0x40] sm:$0x3]
      %v443 = vld [vmem:[%s414 + $0x48] sm:$0xff]
      %v444 = vld [vmem:[%s414 + $0x50] sm:$0xff]
      %v445 = vld [vmem:[%s414 + $0x58] sm:$0x3]
      %v446 = vld [vmem:[%s414 + $0x60] sm:$0xff]
      %v447 = vld [vmem:[%s414 + $0x68] sm:$0xff]
      %v448 = vld [vmem:[%s414 + $0x70] sm:$0x3]
      %v449 = vld [vmem:[%s414 + $0x78] sm:$0xff]
      %v450 = vld [vmem:[%s414 + $0x80] sm:$0xff]
      %v451 = vld [vmem:[%s414 + $0x88] sm:$0x3]
      %v452 = vld [vmem:[%s414 + $0x90] sm:$0xff]
      %v453 = vld [vmem:[%s414 + $0x98] sm:$0xff]
      %v454 = vld [vmem:[%s414 + $0xa0] sm:$0x3]
      %v455 = vld [vmem:[%s414 + $0xa8] sm:$0xff]
      %v456 = vld [vmem:[%s414 + $0xb0] sm:$0xff]
      %v457 = vld [vmem:[%s414 + $0xb8] sm:$0x3]
      %v458 = vld [vmem:[%s414 + $0xc0] sm:$0xff]
      %v459 = vld [vmem:[%s414 + $0xc8] sm:$0xff]
      %v460 = vld [vmem:[%s414 + $0xd0] sm:$0x3]
      %v461 = vld [vmem:[%s414 + $0xd8] sm:$0xff]
      %v462 = vld [vmem:[%s414 + $0xe0] sm:$0xff]
      %v463 = vld [vmem:[%s414 + $0xe8] sm:$0x3]
      %v464 = vld [vmem:[%s414 + $0xf0] sm:$0xff]
      %v465 = vld [vmem:[%s414 + $0xf8] sm:$0xff]
      %v466 = vld [vmem:[%s414 + $0x100] sm:$0x3]
      %v467 = vld [vmem:[%s414 + $0x108] sm:$0xff]
      %v468 = vld [vmem:[%s414 + $0x110] sm:$0xff]
      %v469 = vld [vmem:[%s414 + $0x118] sm:$0x3]
      %v470 = vld [vmem:[%s414 + $0x120] sm:$0xff]
      %v471 = vld [vmem:[%s414 + $0x128] sm:$0xff]
      %v472 = vld [vmem:[%s414 + $0x130] sm:$0x3]
      %v473 = vld [vmem:[%s414 + $0x138] sm:$0xff]
      %v474 = vld [vmem:[%s414 + $0x140] sm:$0xff]
      %v475 = vld [vmem:[%s414 + $0x148] sm:$0x3]
      %v476 = vld [vmem:[%s414 + $0x150] sm:$0xff]
      %v477 = vld [vmem:[%s414 + $0x158] sm:$0xff]
      %v478 = vld [vmem:[%s414 + $0x160] sm:$0x3]
      %v479 = vld [vmem:[%s414 + $0x168] sm:$0xff]
      %v480 = vld [vmem:[%s414 + $0x170] sm:$0xff]
      %v481 = vld [vmem:[%s414 + $0x178] sm:$0x3]
      %v482 = vld [vmem:[%s414 + $0x180] sm:$0xff]
      %v483 = vld [vmem:[%s414 + $0x188] sm:$0xff]
      %v484 = vld [vmem:[%s414 + $0x190] sm:$0x3]
      %v485 = vld [vmem:[%s414 + $0x198] sm:$0xff]
      %v486 = vld [vmem:[%s414 + $0x1a0] sm:$0xff]
      %v487 = vld [vmem:[%s414 + $0x1a8] sm:$0x3]
      %v488 = vld [vmem:[%s414 + $0x1b0] sm:$0xff]
      %v489 = vld [vmem:[%s414 + $0x1b8] sm:$0xff]
      %v490 = vld [vmem:[%s414 + $0x1c0] sm:$0x3]
      %v491 = vld [vmem:[%s414 + $0x1c8] sm:$0xff]
      %v492 = vld [vmem:[%s414 + $0x1d0] sm:$0xff]
      %v493 = vld [vmem:[%s414 + $0x1d8] sm:$0x3]
      %v494 = vld [vmem:[%s414 + $0x1e0] sm:$0xff]
      %v495 = vld [vmem:[%s414 + $0x1e8] sm:$0xff]
      %v496 = vld [vmem:[%s414 + $0x1f0] sm:$0x3]
      %v497 = vld [vmem:[%s414 + $0x1f8] sm:$0xff]
      %v498 = vld [vmem:[%s414 + $0x200] sm:$0xff]
      %v499 = vld [vmem:[%s414 + $0x208] sm:$0x3]
      %v500 = vld [vmem:[%s414 + $0x210] sm:$0xff]
      %v501 = vld [vmem:[%s414 + $0x218] sm:$0xff]
      %v502 = vld [vmem:[%s414 + $0x220] sm:$0x3]
      %v503 = vld [vmem:[%s414 + $0x228] sm:$0xff]
      %v504 = vld [vmem:[%s414 + $0x230] sm:$0xff]
      %v505 = vld [vmem:[%s414 + $0x238] sm:$0x3]
      %v506 = vld [vmem:[%s2] sm:$0xf]
      %v507 = vld [vmem:[%s2 + $0x4] sm:$0xf]
      %v508 = vld [vmem:[%s2 + $0x8] sm:$0xf]
      %v509 = vld [vmem:[%s2 + $0xc] sm:$0xf]
      %v510 = vld [vmem:[%s2 + $0x10] sm:$0xf]
      %v511 = vld [vmem:[%s2 + $0x14] sm:$0xf]
      %v512 = vld [vmem:[%s2 + $0x18] sm:$0x7]
      %v513 = vld [vmem:[%s3] sm:$0x1]
      %v514 = vpack.c.bf16 %v434, %v434
      %v515 = vpack.c.bf16 %v435, %v435
      %v516 = vpack.c.bf16 %v436, %v436
      %v517 = vpack.c.bf16 %v437, %v437
      %v518 = vpack.c.bf16 %v438, %v438
      %v519 = vpack.c.bf16 %v439, %v439
      %v520 = vpack.c.bf16 %v440, %v440
      %v521 = vpack.c.bf16 %v441, %v441
      %v522 = vpack.c.bf16 %v442, %v442
      %v523 = vpack.c.bf16 %v443, %v443
      %v524 = vpack.c.bf16 %v444, %v444
      %v525 = vpack.c.bf16 %v445, %v445
      %v526 = vpack.c.bf16 %v446, %v446
      %v527 = vpack.c.bf16 %v447, %v447
      %v528 = vpack.c.bf16 %v448, %v448
      %v529 = vpack.c.bf16 %v449, %v449
      %v530 = vpack.c.bf16 %v450, %v450
      %v531 = vpack.c.bf16 %v451, %v451
      %v532 = vpack.c.bf16 %v452, %v452
      %v533 = vpack.c.bf16 %v453, %v453
      %v534 = vpack.c.bf16 %v454, %v454
      %v535 = vpack.c.bf16 %v455, %v455
      %v536 = vpack.c.bf16 %v456, %v456
      %v537 = vpack.c.bf16 %v457, %v457
      %v538 = vpack.c.bf16 %v458, %v458
      %v539 = vpack.c.bf16 %v459, %v459
      %v540 = vpack.c.bf16 %v460, %v460
      %v541 = vpack.c.bf16 %v461, %v461
      %v542 = vpack.c.bf16 %v462, %v462
      %v543 = vpack.c.bf16 %v463, %v463
      %v544 = vpack.c.bf16 %v464, %v464
      %v545 = vpack.c.bf16 %v465, %v465
      %v546 = vpack.c.bf16 %v466, %v466
      %v547 = vpack.c.bf16 %v467, %v467
      %v548 = vpack.c.bf16 %v468, %v468
      %v549 = vpack.c.bf16 %v469, %v469
      %v550 = vpack.c.bf16 %v470, %v470
      %v551 = vpack.c.bf16 %v471, %v471
      %v552 = vpack.c.bf16 %v472, %v472
      %v553 = vpack.c.bf16 %v473, %v473
      %v554 = vpack.c.bf16 %v474, %v474
      %v555 = vpack.c.bf16 %v475, %v475
      %v556 = vpack.c.bf16 %v476, %v476
      %v557 = vpack.c.bf16 %v477, %v477
      %v558 = vpack.c.bf16 %v478, %v478
      %v559 = vpack.c.bf16 %v479, %v479
      %v560 = vpack.c.bf16 %v480, %v480
      %v561 = vpack.c.bf16 %v481, %v481
      %v562 = vpack.c.bf16 %v482, %v482
      %v563 = vpack.c.bf16 %v483, %v483
      %v564 = vpack.c.bf16 %v484, %v484
      %v565 = vpack.c.bf16 %v485, %v485
      %v566 = vpack.c.bf16 %v486, %v486
      %v567 = vpack.c.bf16 %v487, %v487
      %v568 = vpack.c.bf16 %v488, %v488
      %v569 = vpack.c.bf16 %v489, %v489
      %v570 = vpack.c.bf16 %v490, %v490
      %v571 = vpack.c.bf16 %v491, %v491
      %v572 = vpack.c.bf16 %v492, %v492
      %v573 = vpack.c.bf16 %v493, %v493
      %v574 = vpack.c.bf16 %v494, %v494
      %v575 = vpack.c.bf16 %v495, %v495
      %v576 = vpack.c.bf16 %v496, %v496
      %v577 = vpack.c.bf16 %v497, %v497
      %v578 = vpack.c.bf16 %v498, %v498
      %v579 = vpack.c.bf16 %v499, %v499
      %v580 = vpack.c.bf16 %v500, %v500
      %v581 = vpack.c.bf16 %v501, %v501
      %v582 = vpack.c.bf16 %v502, %v502
      %v583 = vpack.c.bf16 %v503, %v503
      %v584 = vpack.c.bf16 %v504, %v504
      %v585 = vpack.c.bf16 %v505, %v505
      %v630 = vunpack.c.l.b16 %v514
      %v631 = vunpack.c.l.b16 %v515
      %v632 = vunpack.c.l.b16 %v517
      %v633 = vunpack.c.l.b16 %v518
      %v634 = vunpack.c.l.b16 %v520
      %v635 = vunpack.c.l.b16 %v521
      %v636 = vunpack.c.l.b16 %v523
      %v637 = vunpack.c.l.b16 %v524
      %v638 = vunpack.c.l.b16 %v526
      %v639 = vunpack.c.l.b16 %v527
      %v640 = vunpack.c.l.b16 %v529
      %v641 = vunpack.c.l.b16 %v530
      %v642 = vunpack.c.l.b16 %v532
      %v643 = vunpack.c.l.b16 %v533
      %v644 = vunpack.c.l.b16 %v535
      %v645 = vunpack.c.l.b16 %v536
      %v646 = vunpack.c.l.b16 %v538
      %v647 = vunpack.c.l.b16 %v539
      %v648 = vunpack.c.l.b16 %v541
      %v649 = vunpack.c.l.b16 %v542
      %v650 = vunpack.c.l.b16 %v544
      %v651 = vunpack.c.l.b16 %v545
      %v652 = vunpack.c.l.b16 %v547
      %v653 = vunpack.c.l.b16 %v548
      %v654 = vunpack.c.l.b16 %v550
      %v655 = vunpack.c.l.b16 %v551
      %v656 = vunpack.c.l.b16 %v553
      %v657 = vunpack.c.l.b16 %v554
      %v658 = vunpack.c.l.b16 %v556
      %v659 = vunpack.c.l.b16 %v557
      %v660 = vunpack.c.l.b16 %v559
      %v661 = vunpack.c.l.b16 %v560
      %v662 = vunpack.c.l.b16 %v562
      %v663 = vunpack.c.l.b16 %v563
      %v664 = vunpack.c.l.b16 %v565
      %v665 = vunpack.c.l.b16 %v566
      %v666 = vunpack.c.l.b16 %v568
      %v667 = vunpack.c.l.b16 %v569
      %v668 = vunpack.c.l.b16 %v571
      %v669 = vunpack.c.l.b16 %v572
      %v670 = vunpack.c.l.b16 %v574
      %v671 = vunpack.c.l.b16 %v575
      %v672 = vunpack.c.l.b16 %v577
      %v673 = vunpack.c.l.b16 %v578
      %v674 = vpack.c.b16 %v631, %v630
      %v675 = vpack.c.b16 %v633, %v632
      %v676 = vpack.c.b16 %v635, %v634
      %v677 = vpack.c.b16 %v637, %v636
      %v678 = vpack.c.b16 %v639, %v638
      %v679 = vpack.c.b16 %v641, %v640
      %v680 = vpack.c.b16 %v643, %v642
      %v681 = vpack.c.b16 %v645, %v644
      %v682 = vpack.c.b16 %v647, %v646
      %v683 = vpack.c.b16 %v649, %v648
      %v684 = vpack.c.b16 %v651, %v650
      %v685 = vpack.c.b16 %v653, %v652
      %v686 = vpack.c.b16 %v655, %v654
      %v687 = vpack.c.b16 %v657, %v656
      %v688 = vpack.c.b16 %v659, %v658
      %v689 = vpack.c.b16 %v661, %v660
      %v690 = vpack.c.b16 %v663, %v662
      %v691 = vpack.c.b16 %v665, %v664
      %v692 = vpack.c.b16 %v667, %v666
      %v693 = vpack.c.b16 %v669, %v668
      %v694 = vpack.c.b16 %v671, %v670
      %v695 = vpack.c.b16 %v673, %v672
      %v718 = vunpack.c.l.b16 %v516
      %v719 = vunpack.c.l.b16 %v519
      %v720 = vunpack.c.l.b16 %v522
      %v721 = vunpack.c.l.b16 %v525
      %v722 = vunpack.c.l.b16 %v528
      %v723 = vunpack.c.l.b16 %v531
      %v724 = vunpack.c.l.b16 %v534
      %v725 = vunpack.c.l.b16 %v537
      %v726 = vunpack.c.l.b16 %v540
      %v727 = vunpack.c.l.b16 %v543
      %v728 = vunpack.c.l.b16 %v546
      %v729 = vunpack.c.l.b16 %v549
      %v730 = vunpack.c.l.b16 %v552
      %v731 = vunpack.c.l.b16 %v555
      %v732 = vunpack.c.l.b16 %v558
      %v733 = vunpack.c.l.b16 %v561
      %v734 = vunpack.c.l.b16 %v564
      %v735 = vunpack.c.l.b16 %v567
      %v736 = vunpack.c.l.b16 %v570
      %v737 = vunpack.c.l.b16 %v573
      %v738 = vunpack.c.l.b16 %v576
      %v739 = vunpack.c.l.b16 %v579
      %v740 = vpack.c.b16 %v718, %v718
      %v741 = vpack.c.b16 %v719, %v719
      %v742 = vpack.c.b16 %v720, %v720
      %v743 = vpack.c.b16 %v721, %v721
      %v744 = vpack.c.b16 %v722, %v722
      %v745 = vpack.c.b16 %v723, %v723
      %v746 = vpack.c.b16 %v724, %v724
      %v747 = vpack.c.b16 %v725, %v725
      %v748 = vpack.c.b16 %v726, %v726
      %v749 = vpack.c.b16 %v727, %v727
      %v750 = vpack.c.b16 %v728, %v728
      %v751 = vpack.c.b16 %v729, %v729
      %v752 = vpack.c.b16 %v730, %v730
      %v753 = vpack.c.b16 %v731, %v731
      %v754 = vpack.c.b16 %v732, %v732
      %v755 = vpack.c.b16 %v733, %v733
      %v756 = vpack.c.b16 %v734, %v734
      %v757 = vpack.c.b16 %v735, %v735
      %v758 = vpack.c.b16 %v736, %v736
      %v759 = vpack.c.b16 %v737, %v737
      %v760 = vpack.c.b16 %v738, %v738
      %v761 = vpack.c.b16 %v739, %v739
      %vm762 = vsmask.f32 7424
      %v764 = vshrl.u32 %v674, 16
      %v766 = vshll.u32 %v674, 16
      %v768 = vrot.slane %v766, 1
      %v769 = vor.u32 %v764, %v768
      %v771 = vshll.u32 %v740, 16
      %v773 = vrot.slane %v771, 1
      %v774 = vsel %vm762, %v769, %v773
      %v776 = vshrl.u32 %v675, 16
      %v778 = vshll.u32 %v675, 16
      %v780 = vrot.slane %v778, 1
      %v781 = vor.u32 %v776, %v780
      %v783 = vshll.u32 %v741, 16
      %v785 = vrot.slane %v783, 1
      %v786 = vsel %vm762, %v781, %v785
      %v788 = vshrl.u32 %v676, 16
      %v790 = vshll.u32 %v676, 16
      %v792 = vrot.slane %v790, 1
      %v793 = vor.u32 %v788, %v792
      %v795 = vshll.u32 %v742, 16
      %v797 = vrot.slane %v795, 1
      %v798 = vsel %vm762, %v793, %v797
      %v800 = vshrl.u32 %v677, 16
      %v802 = vshll.u32 %v677, 16
      %v804 = vrot.slane %v802, 1
      %v805 = vor.u32 %v800, %v804
      %v807 = vshll.u32 %v743, 16
      %v809 = vrot.slane %v807, 1
      %v810 = vsel %vm762, %v805, %v809
      %v812 = vshrl.u32 %v678, 16
      %v814 = vshll.u32 %v678, 16
      %v816 = vrot.slane %v814, 1
      %v817 = vor.u32 %v812, %v816
      %v819 = vshll.u32 %v744, 16
      %v821 = vrot.slane %v819, 1
      %v822 = vsel %vm762, %v817, %v821
      %v824 = vshrl.u32 %v679, 16
      %v826 = vshll.u32 %v679, 16
      %v828 = vrot.slane %v826, 1
      %v829 = vor.u32 %v824, %v828
      %v831 = vshll.u32 %v745, 16
      %v833 = vrot.slane %v831, 1
      %v834 = vsel %vm762, %v829, %v833
      %v836 = vshrl.u32 %v680, 16
      %v838 = vshll.u32 %v680, 16
      %v840 = vrot.slane %v838, 1
      %v841 = vor.u32 %v836, %v840
      %v843 = vshll.u32 %v746, 16
      %v845 = vrot.slane %v843, 1
      %v846 = vsel %vm762, %v841, %v845
      %v848 = vshrl.u32 %v681, 16
      %v850 = vshll.u32 %v681, 16
      %v852 = vrot.slane %v850, 1
      %v853 = vor.u32 %v848, %v852
      %v855 = vshll.u32 %v747, 16
      %v857 = vrot.slane %v855, 1
      %v858 = vsel %vm762, %v853, %v857
      %v860 = vshrl.u32 %v682, 16
      %v862 = vshll.u32 %v682, 16
      %v864 = vrot.slane %v862, 1
      %v865 = vor.u32 %v860, %v864
      %v867 = vshll.u32 %v748, 16
      %v869 = vrot.slane %v867, 1
      %v870 = vsel %vm762, %v865, %v869
      %v872 = vshrl.u32 %v683, 16
      %v874 = vshll.u32 %v683, 16
      %v876 = vrot.slane %v874, 1
      %v877 = vor.u32 %v872, %v876
      %v879 = vshll.u32 %v749, 16
      %v881 = vrot.slane %v879, 1
      %v882 = vsel %vm762, %v877, %v881
      %v884 = vshrl.u32 %v684, 16
      %v886 = vshll.u32 %v684, 16
      %v888 = vrot.slane %v886, 1
      %v889 = vor.u32 %v884, %v888
      %v891 = vshll.u32 %v750, 16
      %v893 = vrot.slane %v891, 1
      %v894 = vsel %vm762, %v889, %v893
      %v896 = vshrl.u32 %v685, 16
      %v898 = vshll.u32 %v685, 16
      %v900 = vrot.slane %v898, 1
      %v901 = vor.u32 %v896, %v900
      %v903 = vshll.u32 %v751, 16
      %v905 = vrot.slane %v903, 1
      %v906 = vsel %vm762, %v901, %v905
      %v908 = vshrl.u32 %v686, 16
      %v910 = vshll.u32 %v686, 16
      %v912 = vrot.slane %v910, 1
      %v913 = vor.u32 %v908, %v912
      %v915 = vshll.u32 %v752, 16
      %v917 = vrot.slane %v915, 1
      %v918 = vsel %vm762, %v913, %v917
      %v920 = vshrl.u32 %v687, 16
      %v922 = vshll.u32 %v687, 16
      %v924 = vrot.slane %v922, 1
      %v925 = vor.u32 %v920, %v924
      %v927 = vshll.u32 %v753, 16
      %v929 = vrot.slane %v927, 1
      %v930 = vsel %vm762, %v925, %v929
      %v932 = vshrl.u32 %v688, 16
      %v934 = vshll.u32 %v688, 16
      %v936 = vrot.slane %v934, 1
      %v937 = vor.u32 %v932, %v936
      %v939 = vshll.u32 %v754, 16
      %v941 = vrot.slane %v939, 1
      %v942 = vsel %vm762, %v937, %v941
      %v944 = vshrl.u32 %v689, 16
      %v946 = vshll.u32 %v689, 16
      %v948 = vrot.slane %v946, 1
      %v949 = vor.u32 %v944, %v948
      %v951 = vshll.u32 %v755, 16
      %v953 = vrot.slane %v951, 1
      %v954 = vsel %vm762, %v949, %v953
      %v956 = vshrl.u32 %v690, 16
      %v958 = vshll.u32 %v690, 16
      %v960 = vrot.slane %v958, 1
      %v961 = vor.u32 %v956, %v960
      %v963 = vshll.u32 %v756, 16
      %v965 = vrot.slane %v963, 1
      %v966 = vsel %vm762, %v961, %v965
      %v968 = vshrl.u32 %v691, 16
      %v970 = vshll.u32 %v691, 16
      %v972 = vrot.slane %v970, 1
      %v973 = vor.u32 %v968, %v972
      %v975 = vshll.u32 %v757, 16
      %v977 = vrot.slane %v975, 1
      %v978 = vsel %vm762, %v973, %v977
      %v980 = vshrl.u32 %v692, 16
      %v982 = vshll.u32 %v692, 16
      %v984 = vrot.slane %v982, 1
      %v985 = vor.u32 %v980, %v984
      %v987 = vshll.u32 %v758, 16
      %v989 = vrot.slane %v987, 1
      %v990 = vsel %vm762, %v985, %v989
      %v992 = vshrl.u32 %v693, 16
      %v994 = vshll.u32 %v693, 16
      %v996 = vrot.slane %v994, 1
      %v997 = vor.u32 %v992, %v996
      %v999 = vshll.u32 %v759, 16
      %v1001 = vrot.slane %v999, 1
      %v1002 = vsel %vm762, %v997, %v1001
      %v1004 = vshrl.u32 %v694, 16
      %v1006 = vshll.u32 %v694, 16
      %v1008 = vrot.slane %v1006, 1
      %v1009 = vor.u32 %v1004, %v1008
      %v1011 = vshll.u32 %v760, 16
      %v1013 = vrot.slane %v1011, 1
      %v1014 = vsel %vm762, %v1009, %v1013
      %v1016 = vshrl.u32 %v695, 16
      %v1018 = vshll.u32 %v695, 16
      %v1020 = vrot.slane %v1018, 1
      %v1021 = vor.u32 %v1016, %v1020
      %v1023 = vshll.u32 %v761, 16
      %v1025 = vrot.slane %v1023, 1
      %v1026 = vsel %vm762, %v1021, %v1025
      %1027 = vrot.lane.b32.xlu0 %v774, 6
      %v1028 = vpop.permute.xlu0 %1027
      %1029 = vrot.lane.b32.xlu0 %v786, 6
      %v1030 = vpop.permute.xlu0 %1029
      %1031 = vrot.lane.b32.xlu0 %v798, 6
      %v1032 = vpop.permute.xlu0 %1031
      %1033 = vrot.lane.b32.xlu0 %v810, 6
      %v1034 = vpop.permute.xlu0 %1033
      %1035 = vrot.lane.b32.xlu0 %v822, 6
      %v1036 = vpop.permute.xlu0 %1035
      %1037 = vrot.lane.b32.xlu0 %v834, 6
      %v1038 = vpop.permute.xlu0 %1037
      %1039 = vrot.lane.b32.xlu0 %v846, 6
      %v1040 = vpop.permute.xlu0 %1039
      %1041 = vrot.lane.b32.xlu0 %v858, 6
      %v1042 = vpop.permute.xlu0 %1041
      %1043 = vrot.lane.b32.xlu0 %v870, 6
      %v1044 = vpop.permute.xlu0 %1043
      %1045 = vrot.lane.b32.xlu0 %v882, 6
      %v1046 = vpop.permute.xlu0 %1045
      %1047 = vrot.lane.b32.xlu0 %v894, 6
      %v1048 = vpop.permute.xlu0 %1047
      %1049 = vrot.lane.b32.xlu0 %v906, 6
      %v1050 = vpop.permute.xlu0 %1049
      %1051 = vrot.lane.b32.xlu0 %v918, 6
      %v1052 = vpop.permute.xlu0 %1051
      %1053 = vrot.lane.b32.xlu0 %v930, 6
      %v1054 = vpop.permute.xlu0 %1053
      %1055 = vrot.lane.b32.xlu0 %v942, 6
      %v1056 = vpop.permute.xlu0 %1055
      %1057 = vrot.lane.b32.xlu0 %v954, 6
      %v1058 = vpop.permute.xlu0 %1057
      %1059 = vrot.lane.b32.xlu0 %v966, 6
      %v1060 = vpop.permute.xlu0 %1059
      %1061 = vrot.lane.b32.xlu0 %v978, 6
      %v1062 = vpop.permute.xlu0 %1061
      %1063 = vrot.lane.b32.xlu0 %v990, 6
      %v1064 = vpop.permute.xlu0 %1063
      %1065 = vrot.lane.b32.xlu0 %v1002, 6
      %v1066 = vpop.permute.xlu0 %1065
      %1067 = vrot.lane.b32.xlu0 %v1014, 6
      %v1068 = vpop.permute.xlu0 %1067
      %1069 = vrot.lane.b32.xlu0 %v1026, 6
      %v1070 = vpop.permute.xlu0 %1069
      %vm1071 = vcmask 1046528
      %v1072 = vrot.slane %v674, 1
      %v1073 = vrot.slane %v740, 1
      %v1074 = vsel %vm1071, %v1072, %v1073
      %v1075 = vrot.slane %v675, 1
      %v1076 = vrot.slane %v741, 1
      %v1077 = vsel %vm1071, %v1075, %v1076
      %v1078 = vrot.slane %v676, 1
      %v1079 = vrot.slane %v742, 1
      %v1080 = vsel %vm1071, %v1078, %v1079
      %v1081 = vrot.slane %v677, 1
      %v1082 = vrot.slane %v743, 1
      %v1083 = vsel %vm1071, %v1081, %v1082
      %v1084 = vrot.slane %v678, 1
      %v1085 = vrot.slane %v744, 1
      %v1086 = vsel %vm1071, %v1084, %v1085
      %v1087 = vrot.slane %v679, 1
      %v1088 = vrot.slane %v745, 1
      %v1089 = vsel %vm1071, %v1087, %v1088
      %v1090 = vrot.slane %v680, 1
      %v1091 = vrot.slane %v746, 1
      %v1092 = vsel %vm1071, %v1090, %v1091
      %v1093 = vrot.slane %v681, 1
      %v1094 = vrot.slane %v747, 1
      %v1095 = vsel %vm1071, %v1093, %v1094
      %v1096 = vrot.slane %v682, 1
      %v1097 = vrot.slane %v748, 1
      %v1098 = vsel %vm1071, %v1096, %v1097
      %v1099 = vrot.slane %v683, 1
      %v1100 = vrot.slane %v749, 1
      %v1101 = vsel %vm1071, %v1099, %v1100
      %v1102 = vrot.slane %v684, 1
      %v1103 = vrot.slane %v750, 1
      %v1104 = vsel %vm1071, %v1102, %v1103
      %v1105 = vrot.slane %v685, 1
      %v1106 = vrot.slane %v751, 1
      %v1107 = vsel %vm1071, %v1105, %v1106
      %v1108 = vrot.slane %v686, 1
      %v1109 = vrot.slane %v752, 1
      %v1110 = vsel %vm1071, %v1108, %v1109
      %v1111 = vrot.slane %v687, 1
      %v1112 = vrot.slane %v753, 1
      %v1113 = vsel %vm1071, %v1111, %v1112
      %v1114 = vrot.slane %v688, 1
      %v1115 = vrot.slane %v754, 1
      %v1116 = vsel %vm1071, %v1114, %v1115
      %v1117 = vrot.slane %v689, 1
      %v1118 = vrot.slane %v755, 1
      %v1119 = vsel %vm1071, %v1117, %v1118
      %v1120 = vrot.slane %v690, 1
      %v1121 = vrot.slane %v756, 1
      %v1122 = vsel %vm1071, %v1120, %v1121
      %v1123 = vrot.slane %v691, 1
      %v1124 = vrot.slane %v757, 1
      %v1125 = vsel %vm1071, %v1123, %v1124
      %v1126 = vrot.slane %v692, 1
      %v1127 = vrot.slane %v758, 1
      %v1128 = vsel %vm1071, %v1126, %v1127
      %v1129 = vrot.slane %v693, 1
      %v1130 = vrot.slane %v759, 1
      %v1131 = vsel %vm1071, %v1129, %v1130
      %v1132 = vrot.slane %v694, 1
      %v1133 = vrot.slane %v760, 1
      %v1134 = vsel %vm1071, %v1132, %v1133
      %v1135 = vrot.slane %v695, 1
      %v1136 = vrot.slane %v761, 1
      %v1137 = vsel %vm1071, %v1135, %v1136
      %1138 = vrot.lane.b32.xlu0 %v1074, 12
      %v1139 = vpop.permute.xlu0 %1138
      %1140 = vrot.lane.b32.xlu0 %v1077, 12
      %v1141 = vpop.permute.xlu0 %1140
      %1142 = vrot.lane.b32.xlu0 %v1080, 12
      %v1143 = vpop.permute.xlu0 %1142
      %1144 = vrot.lane.b32.xlu0 %v1083, 12
      %v1145 = vpop.permute.xlu0 %1144
      %1146 = vrot.lane.b32.xlu0 %v1086, 12
      %v1147 = vpop.permute.xlu0 %1146
      %1148 = vrot.lane.b32.xlu0 %v1089, 12
      %v1149 = vpop.permute.xlu0 %1148
      %1150 = vrot.lane.b32.xlu0 %v1092, 12
      %v1151 = vpop.permute.xlu0 %1150
      %1152 = vrot.lane.b32.xlu0 %v1095, 12
      %v1153 = vpop.permute.xlu0 %1152
      %1154 = vrot.lane.b32.xlu0 %v1098, 12
      %v1155 = vpop.permute.xlu0 %1154
      %1156 = vrot.lane.b32.xlu0 %v1101, 12
      %v1157 = vpop.permute.xlu0 %1156
      %1158 = vrot.lane.b32.xlu0 %v1104, 12
      %v1159 = vpop.permute.xlu0 %1158
      %1160 = vrot.lane.b32.xlu0 %v1107, 12
      %v1161 = vpop.permute.xlu0 %1160
      %1162 = vrot.lane.b32.xlu0 %v1110, 12
      %v1163 = vpop.permute.xlu0 %1162
      %1164 = vrot.lane.b32.xlu0 %v1113, 12
      %v1165 = vpop.permute.xlu0 %1164
      %1166 = vrot.lane.b32.xlu0 %v1116, 12
      %v1167 = vpop.permute.xlu0 %1166
      %1168 = vrot.lane.b32.xlu0 %v1119, 12
      %v1169 = vpop.permute.xlu0 %1168
      %1170 = vrot.lane.b32.xlu0 %v1122, 12
      %v1171 = vpop.permute.xlu0 %1170
      %1172 = vrot.lane.b32.xlu0 %v1125, 12
      %v1173 = vpop.permute.xlu0 %1172
      %1174 = vrot.lane.b32.xlu0 %v1128, 12
      %v1175 = vpop.permute.xlu0 %1174
      %1176 = vrot.lane.b32.xlu0 %v1131, 12
      %v1177 = vpop.permute.xlu0 %1176
      %1178 = vrot.lane.b32.xlu0 %v1134, 12
      %v1179 = vpop.permute.xlu0 %1178
      %1180 = vrot.lane.b32.xlu0 %v1137, 12
      %v1181 = vpop.permute.xlu0 %1180
      %v1184 = vunpack.c.l.b16 %v580
      %v1185 = vunpack.c.l.b16 %v581
      %v1186 = vpack.c.b16 %v1185, %v1184
      %1187 = vrot.lane.b32.xlu0 %v675, 18
      %v1188 = vpop.permute.xlu0 %1187
      %1189 = vrot.lane.b32.xlu0 %v676, 18
      %v1190 = vpop.permute.xlu0 %1189
      %1191 = vrot.lane.b32.xlu0 %v677, 18
      %v1192 = vpop.permute.xlu0 %1191
      %1193 = vrot.lane.b32.xlu0 %v678, 18
      %v1194 = vpop.permute.xlu0 %1193
      %1195 = vrot.lane.b32.xlu0 %v679, 18
      %v1196 = vpop.permute.xlu0 %1195
      %1197 = vrot.lane.b32.xlu0 %v680, 18
      %v1198 = vpop.permute.xlu0 %1197
      %1199 = vrot.lane.b32.xlu0 %v681, 18
      %v1200 = vpop.permute.xlu0 %1199
      %1201 = vrot.lane.b32.xlu0 %v682, 18
      %v1202 = vpop.permute.xlu0 %1201
      %1203 = vrot.lane.b32.xlu0 %v683, 18
      %v1204 = vpop.permute.xlu0 %1203
      %1205 = vrot.lane.b32.xlu0 %v684, 18
      %v1206 = vpop.permute.xlu0 %1205
      %1207 = vrot.lane.b32.xlu0 %v685, 18
      %v1208 = vpop.permute.xlu0 %1207
      %1209 = vrot.lane.b32.xlu0 %v686, 18
      %v1210 = vpop.permute.xlu0 %1209
      %1211 = vrot.lane.b32.xlu0 %v687, 18
      %v1212 = vpop.permute.xlu0 %1211
      %1213 = vrot.lane.b32.xlu0 %v688, 18
      %v1214 = vpop.permute.xlu0 %1213
      %1215 = vrot.lane.b32.xlu0 %v689, 18
      %v1216 = vpop.permute.xlu0 %1215
      %1217 = vrot.lane.b32.xlu0 %v690, 18
      %v1218 = vpop.permute.xlu0 %1217
      %1219 = vrot.lane.b32.xlu0 %v691, 18
      %v1220 = vpop.permute.xlu0 %1219
      %1221 = vrot.lane.b32.xlu0 %v692, 18
      %v1222 = vpop.permute.xlu0 %1221
      %1223 = vrot.lane.b32.xlu0 %v693, 18
      %v1224 = vpop.permute.xlu0 %1223
      %1225 = vrot.lane.b32.xlu0 %v694, 18
      %v1226 = vpop.permute.xlu0 %1225
      %1227 = vrot.lane.b32.xlu0 %v695, 18
      %v1228 = vpop.permute.xlu0 %1227
      %1229 = vrot.lane.b32.xlu0 %v1186, 18
      %v1230 = vpop.permute.xlu0 %1229
      %v1232 = vunpack.c.l.b16 %v582
      %v1233 = vpack.c.b16 %v1232, %v1232
      %v1235 = vshrl.u32 %v1186, 16
      %v1237 = vshll.u32 %v1186, 16
      %v1239 = vrot.slane %v1237, 1
      %v1240 = vor.u32 %v1235, %v1239
      %v1242 = vshll.u32 %v1233, 16
      %v1244 = vrot.slane %v1242, 1
      %v1245 = vsel %vm762, %v1240, %v1244
      %1246 = vrot.lane.b32.xlu0 %v786, 24
      %v1247 = vpop.permute.xlu0 %1246
      %1248 = vrot.lane.b32.xlu0 %v798, 24
      %v1249 = vpop.permute.xlu0 %1248
      %1250 = vrot.lane.b32.xlu0 %v810, 24
      %v1251 = vpop.permute.xlu0 %1250
      %1252 = vrot.lane.b32.xlu0 %v822, 24
      %v1253 = vpop.permute.xlu0 %1252
      %1254 = vrot.lane.b32.xlu0 %v834, 24
      %v1255 = vpop.permute.xlu0 %1254
      %1256 = vrot.lane.b32.xlu0 %v846, 24
      %v1257 = vpop.permute.xlu0 %1256
      %1258 = vrot.lane.b32.xlu0 %v858, 24
      %v1259 = vpop.permute.xlu0 %1258
      %1260 = vrot.lane.b32.xlu0 %v870, 24
      %v1261 = vpop.permute.xlu0 %1260
      %1262 = vrot.lane.b32.xlu0 %v882, 24
      %v1263 = vpop.permute.xlu0 %1262
      %1264 = vrot.lane.b32.xlu0 %v894, 24
      %v1265 = vpop.permute.xlu0 %1264
      %1266 = vrot.lane.b32.xlu0 %v906, 24
      %v1267 = vpop.permute.xlu0 %1266
      %1268 = vrot.lane.b32.xlu0 %v918, 24
      %v1269 = vpop.permute.xlu0 %1268
      %1270 = vrot.lane.b32.xlu0 %v930, 24
      %v1271 = vpop.permute.xlu0 %1270
      %1272 = vrot.lane.b32.xlu0 %v942, 24
      %v1273 = vpop.permute.xlu0 %1272
      %1274 = vrot.lane.b32.xlu0 %v954, 24
      %v1275 = vpop.permute.xlu0 %1274
      %1276 = vrot.lane.b32.xlu0 %v966, 24
      %v1277 = vpop.permute.xlu0 %1276
      %1278 = vrot.lane.b32.xlu0 %v978, 24
      %v1279 = vpop.permute.xlu0 %1278
      %1280 = vrot.lane.b32.xlu0 %v990, 24
      %v1281 = vpop.permute.xlu0 %1280
      %1282 = vrot.lane.b32.xlu0 %v1002, 24
      %v1283 = vpop.permute.xlu0 %1282
      %1284 = vrot.lane.b32.xlu0 %v1014, 24
      %v1285 = vpop.permute.xlu0 %1284
      %1286 = vrot.lane.b32.xlu0 %v1026, 24
      %v1287 = vpop.permute.xlu0 %1286
      %1288 = vrot.lane.b32.xlu0 %v1245, 24
      %v1289 = vpop.permute.xlu0 %1288
      %v1290 = vrot.slane %v1186, 1
      %v1291 = vrot.slane %v1233, 1
      %v1292 = vsel %vm1071, %v1290, %v1291
      %1293 = vrot.lane.b32.xlu0 %v1077, 30
      %v1294 = vpop.permute.xlu0 %1293
      %1295 = vrot.lane.b32.xlu0 %v1080, 30
      %v1296 = vpop.permute.xlu0 %1295
      %1297 = vrot.lane.b32.xlu0 %v1083, 30
      %v1298 = vpop.permute.xlu0 %1297
      %1299 = vrot.lane.b32.xlu0 %v1086, 30
      %v1300 = vpop.permute.xlu0 %1299
      %1301 = vrot.lane.b32.xlu0 %v1089, 30
      %v1302 = vpop.permute.xlu0 %1301
      %1303 = vrot.lane.b32.xlu0 %v1092, 30
      %v1304 = vpop.permute.xlu0 %1303
      %1305 = vrot.lane.b32.xlu0 %v1095, 30
      %v1306 = vpop.permute.xlu0 %1305
      %1307 = vrot.lane.b32.xlu0 %v1098, 30
      %v1308 = vpop.permute.xlu0 %1307
      %1309 = vrot.lane.b32.xlu0 %v1101, 30
      %v1310 = vpop.permute.xlu0 %1309
      %1311 = vrot.lane.b32.xlu0 %v1104, 30
      %v1312 = vpop.permute.xlu0 %1311
      %1313 = vrot.lane.b32.xlu0 %v1107, 30
      %v1314 = vpop.permute.xlu0 %1313
      %1315 = vrot.lane.b32.xlu0 %v1110, 30
      %v1316 = vpop.permute.xlu0 %1315
      %1317 = vrot.lane.b32.xlu0 %v1113, 30
      %v1318 = vpop.permute.xlu0 %1317
      %1319 = vrot.lane.b32.xlu0 %v1116, 30
      %v1320 = vpop.permute.xlu0 %1319
      %1321 = vrot.lane.b32.xlu0 %v1119, 30
      %v1322 = vpop.permute.xlu0 %1321
      %1323 = vrot.lane.b32.xlu0 %v1122, 30
      %v1324 = vpop.permute.xlu0 %1323
      %1325 = vrot.lane.b32.xlu0 %v1125, 30
      %v1326 = vpop.permute.xlu0 %1325
      %1327 = vrot.lane.b32.xlu0 %v1128, 30
      %v1328 = vpop.permute.xlu0 %1327
      %1329 = vrot.lane.b32.xlu0 %v1131, 30
      %v1330 = vpop.permute.xlu0 %1329
      %1331 = vrot.lane.b32.xlu0 %v1134, 30
      %v1332 = vpop.permute.xlu0 %1331
      %1333 = vrot.lane.b32.xlu0 %v1137, 30
      %v1334 = vpop.permute.xlu0 %1333
      %1335 = vrot.lane.b32.xlu0 %v1292, 30
      %v1336 = vpop.permute.xlu0 %1335
      %v1339 = vunpack.c.l.b16 %v583
      %v1340 = vunpack.c.l.b16 %v584
      %v1341 = vpack.c.b16 %v1340, %v1339
      %1342 = vrot.lane.b32.xlu0 %v676, 36
      %v1343 = vpop.permute.xlu0 %1342
      %1344 = vrot.lane.b32.xlu0 %v677, 36
      %v1345 = vpop.permute.xlu0 %1344
      %1346 = vrot.lane.b32.xlu0 %v678, 36
      %v1347 = vpop.permute.xlu0 %1346
      %1348 = vrot.lane.b32.xlu0 %v679, 36
      %v1349 = vpop.permute.xlu0 %1348
      %1350 = vrot.lane.b32.xlu0 %v680, 36
      %v1351 = vpop.permute.xlu0 %1350
      %1352 = vrot.lane.b32.xlu0 %v681, 36
      %v1353 = vpop.permute.xlu0 %1352
      %1354 = vrot.lane.b32.xlu0 %v682, 36
      %v1355 = vpop.permute.xlu0 %1354
      %1356 = vrot.lane.b32.xlu0 %v683, 36
      %v1357 = vpop.permute.xlu0 %1356
      %1358 = vrot.lane.b32.xlu0 %v684, 36
      %v1359 = vpop.permute.xlu0 %1358
      %1360 = vrot.lane.b32.xlu0 %v685, 36
      %v1361 = vpop.permute.xlu0 %1360
      %1362 = vrot.lane.b32.xlu0 %v686, 36
      %v1363 = vpop.permute.xlu0 %1362
      %1364 = vrot.lane.b32.xlu0 %v687, 36
      %v1365 = vpop.permute.xlu0 %1364
      %1366 = vrot.lane.b32.xlu0 %v688, 36
      %v1367 = vpop.permute.xlu0 %1366
      %1368 = vrot.lane.b32.xlu0 %v689, 36
      %v1369 = vpop.permute.xlu0 %1368
      %1370 = vrot.lane.b32.xlu0 %v690, 36
      %v1371 = vpop.permute.xlu0 %1370
      %1372 = vrot.lane.b32.xlu0 %v691, 36
      %v1373 = vpop.permute.xlu0 %1372
      %1374 = vrot.lane.b32.xlu0 %v692, 36
      %v1375 = vpop.permute.xlu0 %1374
      %1376 = vrot.lane.b32.xlu0 %v693, 36
      %v1377 = vpop.permute.xlu0 %1376
      %1378 = vrot.lane.b32.xlu0 %v694, 36
      %v1379 = vpop.permute.xlu0 %1378
      %1380 = vrot.lane.b32.xlu0 %v695, 36
      %v1381 = vpop.permute.xlu0 %1380
      %1382 = vrot.lane.b32.xlu0 %v1186, 36
      %v1383 = vpop.permute.xlu0 %1382
      %1384 = vrot.lane.b32.xlu0 %v1341, 36
      %v1385 = vpop.permute.xlu0 %1384
      %v1387 = vunpack.c.l.b16 %v585
      %v1388 = vpack.c.b16 %v1387, %v1387
      %v1390 = vshrl.u32 %v1341, 16
      %v1392 = vshll.u32 %v1341, 16
      %v1394 = vrot.slane %v1392, 1
      %v1395 = vor.u32 %v1390, %v1394
      %v1397 = vshll.u32 %v1388, 16
      %v1399 = vrot.slane %v1397, 1
      %v1400 = vsel %vm762, %v1395, %v1399
      %1401 = vrot.lane.b32.xlu0 %v798, 42
      %v1402 = vpop.permute.xlu0 %1401
      %1403 = vrot.lane.b32.xlu0 %v810, 42
      %v1404 = vpop.permute.xlu0 %1403
      %1405 = vrot.lane.b32.xlu0 %v822, 42
      %v1406 = vpop.permute.xlu0 %1405
      %1407 = vrot.lane.b32.xlu0 %v834, 42
      %v1408 = vpop.permute.xlu0 %1407
      %1409 = vrot.lane.b32.xlu0 %v846, 42
      %v1410 = vpop.permute.xlu0 %1409
      %1411 = vrot.lane.b32.xlu0 %v858, 42
      %v1412 = vpop.permute.xlu0 %1411
      %1413 = vrot.lane.b32.xlu0 %v870, 42
      %v1414 = vpop.permute.xlu0 %1413
      %1415 = vrot.lane.b32.xlu0 %v882, 42
      %v1416 = vpop.permute.xlu0 %1415
      %1417 = vrot.lane.b32.xlu0 %v894, 42
      %v1418 = vpop.permute.xlu0 %1417
      %1419 = vrot.lane.b32.xlu0 %v906, 42
      %v1420 = vpop.permute.xlu0 %1419
      %1421 = vrot.lane.b32.xlu0 %v918, 42
      %v1422 = vpop.permute.xlu0 %1421
      %1423 = vrot.lane.b32.xlu0 %v930, 42
      %v1424 = vpop.permute.xlu0 %1423
      %1425 = vrot.lane.b32.xlu0 %v942, 42
      %v1426 = vpop.permute.xlu0 %1425
      %1427 = vrot.lane.b32.xlu0 %v954, 42
      %v1428 = vpop.permute.xlu0 %1427
      %1429 = vrot.lane.b32.xlu0 %v966, 42
      %v1430 = vpop.permute.xlu0 %1429
      %1431 = vrot.lane.b32.xlu0 %v978, 42
      %v1432 = vpop.permute.xlu0 %1431
      %1433 = vrot.lane.b32.xlu0 %v990, 42
      %v1434 = vpop.permute.xlu0 %1433
      %1435 = vrot.lane.b32.xlu0 %v1002, 42
      %v1436 = vpop.permute.xlu0 %1435
      %1437 = vrot.lane.b32.xlu0 %v1014, 42
      %v1438 = vpop.permute.xlu0 %1437
      %1439 = vrot.lane.b32.xlu0 %v1026, 42
      %v1440 = vpop.permute.xlu0 %1439
      %1441 = vrot.lane.b32.xlu0 %v1245, 42
      %v1442 = vpop.permute.xlu0 %1441
      %1443 = vrot.lane.b32.xlu0 %v1400, 42
      %v1444 = vpop.permute.xlu0 %1443
      %v1445 = vrot.slane %v1341, 1
      %v1446 = vrot.slane %v1388, 1
      %v1447 = vsel %vm1071, %v1445, %v1446
      %1448 = vrot.lane.b32.xlu0 %v1080, 48
      %v1449 = vpop.permute.xlu0 %1448
      %1450 = vrot.lane.b32.xlu0 %v1083, 48
      %v1451 = vpop.permute.xlu0 %1450
      %1452 = vrot.lane.b32.xlu0 %v1086, 48
      %v1453 = vpop.permute.xlu0 %1452
      %1454 = vrot.lane.b32.xlu0 %v1089, 48
      %v1455 = vpop.permute.xlu0 %1454
      %1456 = vrot.lane.b32.xlu0 %v1092, 48
      %v1457 = vpop.permute.xlu0 %1456
      %1458 = vrot.lane.b32.xlu0 %v1095, 48
      %v1459 = vpop.permute.xlu0 %1458
      %1460 = vrot.lane.b32.xlu0 %v1098, 48
      %v1461 = vpop.permute.xlu0 %1460
      %1462 = vrot.lane.b32.xlu0 %v1101, 48
      %v1463 = vpop.permute.xlu0 %1462
      %1464 = vrot.lane.b32.xlu0 %v1104, 48
      %v1465 = vpop.permute.xlu0 %1464
      %1466 = vrot.lane.b32.xlu0 %v1107, 48
      %v1467 = vpop.permute.xlu0 %1466
      %1468 = vrot.lane.b32.xlu0 %v1110, 48
      %v1469 = vpop.permute.xlu0 %1468
      %1470 = vrot.lane.b32.xlu0 %v1113, 48
      %v1471 = vpop.permute.xlu0 %1470
      %1472 = vrot.lane.b32.xlu0 %v1116, 48
      %v1473 = vpop.permute.xlu0 %1472
      %1474 = vrot.lane.b32.xlu0 %v1119, 48
      %v1475 = vpop.permute.xlu0 %1474
      %1476 = vrot.lane.b32.xlu0 %v1122, 48
      %v1477 = vpop.permute.xlu0 %1476
      %1478 = vrot.lane.b32.xlu0 %v1125, 48
      %v1479 = vpop.permute.xlu0 %1478
      %1480 = vrot.lane.b32.xlu0 %v1128, 48
      %v1481 = vpop.permute.xlu0 %1480
      %1482 = vrot.lane.b32.xlu0 %v1131, 48
      %v1483 = vpop.permute.xlu0 %1482
      %1484 = vrot.lane.b32.xlu0 %v1134, 48
      %v1485 = vpop.permute.xlu0 %1484
      %1486 = vrot.lane.b32.xlu0 %v1137, 48
      %v1487 = vpop.permute.xlu0 %1486
      %1488 = vrot.lane.b32.xlu0 %v1292, 48
      %v1489 = vpop.permute.xlu0 %1488
      %1490 = vrot.lane.b32.xlu0 %v1447, 48
      %v1491 = vpop.permute.xlu0 %1490
      %vm1492 = vcmask 48128
      %v1494 = vsel %vm1492, %v674, %v1028
      %v1496 = vsel %vm1492, %v675, %v1030
      %v1498 = vsel %vm1492, %v676, %v1032
      %v1500 = vsel %vm1492, %v677, %v1034
      %v1502 = vsel %vm1492, %v678, %v1036
      %v1504 = vsel %vm1492, %v679, %v1038
      %v1506 = vsel %vm1492, %v680, %v1040
      %v1508 = vsel %vm1492, %v681, %v1042
      %v1510 = vsel %vm1492, %v682, %v1044
      %v1512 = vsel %vm1492, %v683, %v1046
      %v1514 = vsel %vm1492, %v684, %v1048
      %v1516 = vsel %vm1492, %v685, %v1050
      %v1518 = vsel %vm1492, %v686, %v1052
      %v1520 = vsel %vm1492, %v687, %v1054
      %v1522 = vsel %vm1492, %v688, %v1056
      %v1524 = vsel %vm1492, %v689, %v1058
      %v1526 = vsel %vm1492, %v690, %v1060
      %v1528 = vsel %vm1492, %v691, %v1062
      %v1530 = vsel %vm1492, %v692, %v1064
      %v1532 = vsel %vm1492, %v693, %v1066
      %v1534 = vsel %vm1492, %v694, %v1068
      %v1536 = vsel %vm1492, %v695, %v1070
      %vm1537 = vcmask 97280
      %v1539 = vsel %vm1537, %v1494, %v1139
      %v1541 = vsel %vm1537, %v1496, %v1141
      %v1543 = vsel %vm1537, %v1498, %v1143
      %v1545 = vsel %vm1537, %v1500, %v1145
      %v1547 = vsel %vm1537, %v1502, %v1147
      %v1549 = vsel %vm1537, %v1504, %v1149
      %v1551 = vsel %vm1537, %v1506, %v1151
      %v1553 = vsel %vm1537, %v1508, %v1153
      %v1555 = vsel %vm1537, %v1510, %v1155
      %v1557 = vsel %vm1537, %v1512, %v1157
      %v1559 = vsel %vm1537, %v1514, %v1159
      %v1561 = vsel %vm1537, %v1516, %v1161
      %v1563 = vsel %vm1537, %v1518, %v1163
      %v1565 = vsel %vm1537, %v1520, %v1165
      %v1567 = vsel %vm1537, %v1522, %v1167
      %v1569 = vsel %vm1537, %v1524, %v1169
      %v1571 = vsel %vm1537, %v1526, %v1171
      %v1573 = vsel %vm1537, %v1528, %v1173
      %v1575 = vsel %vm1537, %v1530, %v1175
      %v1577 = vsel %vm1537, %v1532, %v1177
      %v1579 = vsel %vm1537, %v1534, %v1179
      %v1581 = vsel %vm1537, %v1536, %v1181
      %vm1582 = vcmask 146432
      %v1584 = vsel %vm1582, %v1539, %v1188
      %v1586 = vsel %vm1582, %v1541, %v1190
      %v1588 = vsel %vm1582, %v1543, %v1192
      %v1590 = vsel %vm1582, %v1545, %v1194
      %v1592 = vsel %vm1582, %v1547, %v1196
      %v1594 = vsel %vm1582, %v1549, %v1198
      %v1596 = vsel %vm1582, %v1551, %v1200
      %v1598 = vsel %vm1582, %v1553, %v1202
      %v1600 = vsel %vm1582, %v1555, %v1204
      %v1602 = vsel %vm1582, %v1557, %v1206
      %v1604 = vsel %vm1582, %v1559, %v1208
      %v1606 = vsel %vm1582, %v1561, %v1210
      %v1608 = vsel %vm1582, %v1563, %v1212
      %v1610 = vsel %vm1582, %v1565, %v1214
      %v1612 = vsel %vm1582, %v1567, %v1216
      %v1614 = vsel %vm1582, %v1569, %v1218
      %v1616 = vsel %vm1582, %v1571, %v1220
      %v1618 = vsel %vm1582, %v1573, %v1222
      %v1620 = vsel %vm1582, %v1575, %v1224
      %v1622 = vsel %vm1582, %v1577, %v1226
      %v1624 = vsel %vm1582, %v1579, %v1228
      %v1626 = vsel %vm1582, %v1581, %v1230
      %vm1627 = vcmask 195584
      %v1629 = vsel %vm1627, %v1584, %v1247
      %v1631 = vsel %vm1627, %v1586, %v1249
      %v1633 = vsel %vm1627, %v1588, %v1251
      %v1635 = vsel %vm1627, %v1590, %v1253
      %v1637 = vsel %vm1627, %v1592, %v1255
      %v1639 = vsel %vm1627, %v1594, %v1257
      %v1641 = vsel %vm1627, %v1596, %v1259
      %v1643 = vsel %vm1627, %v1598, %v1261
      %v1645 = vsel %vm1627, %v1600, %v1263
      %v1647 = vsel %vm1627, %v1602, %v1265
      %v1649 = vsel %vm1627, %v1604, %v1267
      %v1651 = vsel %vm1627, %v1606, %v1269
      %v1653 = vsel %vm1627, %v1608, %v1271
      %v1655 = vsel %vm1627, %v1610, %v1273
      %v1657 = vsel %vm1627, %v1612, %v1275
      %v1659 = vsel %vm1627, %v1614, %v1277
      %v1661 = vsel %vm1627, %v1616, %v1279
      %v1663 = vsel %vm1627, %v1618, %v1281
      %v1665 = vsel %vm1627, %v1620, %v1283
      %v1667 = vsel %vm1627, %v1622, %v1285
      %v1669 = vsel %vm1627, %v1624, %v1287
      %v1671 = vsel %vm1627, %v1626, %v1289
      %vm1672 = vcmask 244736
      %v1674 = vsel %vm1672, %v1629, %v1294
      %v1676 = vsel %vm1672, %v1631, %v1296
      %v1678 = vsel %vm1672, %v1633, %v1298
      %v1680 = vsel %vm1672, %v1635, %v1300
      %v1682 = vsel %vm1672, %v1637, %v1302
      %v1684 = vsel %vm1672, %v1639, %v1304
      %v1686 = vsel %vm1672, %v1641, %v1306
      %v1688 = vsel %vm1672, %v1643, %v1308
      %v1690 = vsel %vm1672, %v1645, %v1310
      %v1692 = vsel %vm1672, %v1647, %v1312
      %v1694 = vsel %vm1672, %v1649, %v1314
      %v1696 = vsel %vm1672, %v1651, %v1316
      %v1698 = vsel %vm1672, %v1653, %v1318
      %v1700 = vsel %vm1672, %v1655, %v1320
      %v1702 = vsel %vm1672, %v1657, %v1322
      %v1704 = vsel %vm1672, %v1659, %v1324
      %v1706 = vsel %vm1672, %v1661, %v1326
      %v1708 = vsel %vm1672, %v1663, %v1328
      %v1710 = vsel %vm1672, %v1665, %v1330
      %v1712 = vsel %vm1672, %v1667, %v1332
      %v1714 = vsel %vm1672, %v1669, %v1334
      %v1716 = vsel %vm1672, %v1671, %v1336
      %vm1717 = vcmask 293888
      %v1719 = vsel %vm1717, %v1674, %v1343
      %v1721 = vsel %vm1717, %v1676, %v1345
      %v1723 = vsel %vm1717, %v1678, %v1347
      %v1725 = vsel %vm1717, %v1680, %v1349
      %v1727 = vsel %vm1717, %v1682, %v1351
      %v1729 = vsel %vm1717, %v1684, %v1353
      %v1731 = vsel %vm1717, %v1686, %v1355
      %v1733 = vsel %vm1717, %v1688, %v1357
      %v1735 = vsel %vm1717, %v1690, %v1359
      %v1737 = vsel %vm1717, %v1692, %v1361
      %v1739 = vsel %vm1717, %v1694, %v1363
      %v1741 = vsel %vm1717, %v1696, %v1365
      %v1743 = vsel %vm1717, %v1698, %v1367
      %v1745 = vsel %vm1717, %v1700, %v1369
      %v1747 = vsel %vm1717, %v1702, %v1371
      %v1749 = vsel %vm1717, %v1704, %v1373
      %v1751 = vsel %vm1717, %v1706, %v1375
      %v1753 = vsel %vm1717, %v1708, %v1377
      %v1755 = vsel %vm1717, %v1710, %v1379
      %v1757 = vsel %vm1717, %v1712, %v1381
      %v1759 = vsel %vm1717, %v1714, %v1383
      %v1761 = vsel %vm1717, %v1716, %v1385
      %vm1762 = vcmask 343040
      %v1764 = vsel %vm1762, %v1719, %v1402
      %v1766 = vsel %vm1762, %v1721, %v1404
      %v1768 = vsel %vm1762, %v1723, %v1406
      %v1770 = vsel %vm1762, %v1725, %v1408
      %v1772 = vsel %vm1762, %v1727, %v1410
      %v1774 = vsel %vm1762, %v1729, %v1412
      %v1776 = vsel %vm1762, %v1731, %v1414
      %v1778 = vsel %vm1762, %v1733, %v1416
      %v1780 = vsel %vm1762, %v1735, %v1418
      %v1782 = vsel %vm1762, %v1737, %v1420
      %v1784 = vsel %vm1762, %v1739, %v1422
      %v1786 = vsel %vm1762, %v1741, %v1424
      %v1788 = vsel %vm1762, %v1743, %v1426
      %v1790 = vsel %vm1762, %v1745, %v1428
      %v1792 = vsel %vm1762, %v1747, %v1430
      %v1794 = vsel %vm1762, %v1749, %v1432
      %v1796 = vsel %vm1762, %v1751, %v1434
      %v1798 = vsel %vm1762, %v1753, %v1436
      %v1800 = vsel %vm1762, %v1755, %v1438
      %v1802 = vsel %vm1762, %v1757, %v1440
      %v1804 = vsel %vm1762, %v1759, %v1442
      %v1806 = vsel %vm1762, %v1761, %v1444
      %vm1807 = vcmask 392192
      %v1809 = vsel %vm1807, %v1764, %v1449
      %v1811 = vsel %vm1807, %v1766, %v1451
      %v1813 = vsel %vm1807, %v1768, %v1453
      %v1815 = vsel %vm1807, %v1770, %v1455
      %v1817 = vsel %vm1807, %v1772, %v1457
      %v1819 = vsel %vm1807, %v1774, %v1459
      %v1821 = vsel %vm1807, %v1776, %v1461
      %v1823 = vsel %vm1807, %v1778, %v1463
      %v1825 = vsel %vm1807, %v1780, %v1465
      %v1827 = vsel %vm1807, %v1782, %v1467
      %v1829 = vsel %vm1807, %v1784, %v1469
      %v1831 = vsel %vm1807, %v1786, %v1471
      %v1833 = vsel %vm1807, %v1788, %v1473
      %v1835 = vsel %vm1807, %v1790, %v1475
      %v1837 = vsel %vm1807, %v1792, %v1477
      %v1839 = vsel %vm1807, %v1794, %v1479
      %v1841 = vsel %vm1807, %v1796, %v1481
      %v1843 = vsel %vm1807, %v1798, %v1483
      %v1845 = vsel %vm1807, %v1800, %v1485
      %v1847 = vsel %vm1807, %v1802, %v1487
      %v1849 = vsel %vm1807, %v1804, %v1489
      %v1851 = vsel %vm1807, %v1806, %v1491
      %v1853 = vperm.slane %v513, 0
      %v1862 = vunpack.c.l.b16 %v506
      %v1863 = vunpack.c.l.b16 %v507
      %v1864 = vunpack.c.l.b16 %v508
      %v1865 = vunpack.c.l.b16 %v509
      %v1866 = vunpack.c.l.b16 %v510
      %v1867 = vunpack.c.l.b16 %v511
      %v1868 = vunpack.c.l.b16 %v512
      %v1869 = vpack.c.b16 %v1863, %v1862
      %v1870 = vpack.c.b16 %v1865, %v1864
      %v1871 = vpack.c.b16 %v1867, %v1866
      %v1872 = vpack.c.b16 %v1868, %v1868
      %vm1876 = vcmask 441344
      %v1877 = vsel %vm1876, %v1809, 0
      %v1879 = vsel %vm1876, %v1811, 0
      %v1881 = vsel %vm1876, %v1813, 0
      %v1883 = vsel %vm1876, %v1815, 0
      %v1885 = vsel %vm1876, %v1817, 0
      %v1887 = vsel %vm1876, %v1819, 0
      %v1889 = vsel %vm1876, %v1821, 0
      %v1891 = vsel %vm1876, %v1823, 0
      %v1893 = vsel %vm1876, %v1825, 0
      %v1895 = vsel %vm1876, %v1827, 0
      %v1897 = vsel %vm1876, %v1829, 0
      %v1899 = vsel %vm1876, %v1831, 0
      %v1901 = vsel %vm1876, %v1833, 0
      %v1903 = vsel %vm1876, %v1835, 0
      %v1905 = vsel %vm1876, %v1837, 0
      %v1907 = vsel %vm1876, %v1839, 0
      %v1909 = vsel %vm1876, %v1841, 0
      %v1911 = vsel %vm1876, %v1843, 0
      %v1913 = vsel %vm1876, %v1845, 0
      %v1915 = vsel %vm1876, %v1847, 0
      %v1917 = vsel %vm1876, %v1849, 0
      %v1919 = vsel %vm1876, %v1851, 0
      %vm1921 = vcmask 1042432
      %v1923 = vsel %vm1921, %v1872, 0
      %1925 = vmatpush.bf16.msra.mxu0 0
      %1926 = vmatpush.bf16.msra.mxu0 0
      %1927 = vmatpush.bf16.msra.mxu0 0
      %1928 = vmatpush.bf16.msra.mxu0 0
      %1929 = vmatpush.bf16.msra.mxu0 %v1923
      %1930 = vmatpush.bf16.msra.mxu0 %v1871
      %1931 = vmatpush.bf16.msra.mxu0 %v1870
      %1932 = vmatpush.bf16.msra.mxu0 %v1869
      %1933 = vmatmul.bf16.gmra.mxu0 %v1877
      %v1934 = vpop.f32.mrf.mxu0
      %v1935 = vadd.f32 %v1853, %v1934
      %v1936 = vpop.f32.mrf.mxu0
      %v1937 = vadd.f32 %v1853, %v1936
      %1938 = vmatmul.bf16.gmra.mxu0 %v1879
      %v1939 = vpop.f32.mrf.mxu0
      %v1940 = vadd.f32 %v1853, %v1939
      %v1941 = vpop.f32.mrf.mxu0
      %v1942 = vadd.f32 %v1853, %v1941
      %1943 = vmatmul.bf16.gmra.mxu0 %v1881
      %v1944 = vpop.f32.mrf.mxu0
      %v1945 = vadd.f32 %v1853, %v1944
      %v1946 = vpop.f32.mrf.mxu0
      %v1947 = vadd.f32 %v1853, %v1946
      %1948 = vmatmul.bf16.gmra.mxu0 %v1883
      %v1949 = vpop.f32.mrf.mxu0
      %v1950 = vadd.f32 %v1853, %v1949
      %v1951 = vpop.f32.mrf.mxu0
      %v1952 = vadd.f32 %v1853, %v1951
      %1953 = vmatmul.bf16.gmra.mxu0 %v1885
      %v1954 = vpop.f32.mrf.mxu0
      %v1955 = vadd.f32 %v1853, %v1954
      %v1956 = vpop.f32.mrf.mxu0
      %v1957 = vadd.f32 %v1853, %v1956
      %1958 = vmatmul.bf16.gmra.mxu0 %v1887
      %v1959 = vpop.f32.mrf.mxu0
      %v1960 = vadd.f32 %v1853, %v1959
      %v1961 = vpop.f32.mrf.mxu0
      %v1962 = vadd.f32 %v1853, %v1961
      %1963 = vmatmul.bf16.gmra.mxu0 %v1889
      %v1964 = vpop.f32.mrf.mxu0
      %v1965 = vadd.f32 %v1853, %v1964
      %v1966 = vpop.f32.mrf.mxu0
      %v1967 = vadd.f32 %v1853, %v1966
      %1968 = vmatmul.bf16.gmra.mxu0 %v1891
      %v1969 = vpop.f32.mrf.mxu0
      %v1970 = vadd.f32 %v1853, %v1969
      %v1971 = vpop.f32.mrf.mxu0
      %v1972 = vadd.f32 %v1853, %v1971
      %1973 = vmatmul.bf16.gmra.mxu0 %v1893
      %v1974 = vpop.f32.mrf.mxu0
      %v1975 = vadd.f32 %v1853, %v1974
      %v1976 = vpop.f32.mrf.mxu0
      %v1977 = vadd.f32 %v1853, %v1976
      %1978 = vmatmul.bf16.gmra.mxu0 %v1895
      %v1979 = vpop.f32.mrf.mxu0
      %v1980 = vadd.f32 %v1853, %v1979
      %v1981 = vpop.f32.mrf.mxu0
      %v1982 = vadd.f32 %v1853, %v1981
      %1983 = vmatmul.bf16.gmra.mxu0 %v1897
      %v1984 = vpop.f32.mrf.mxu0
      %v1985 = vadd.f32 %v1853, %v1984
      %v1986 = vpop.f32.mrf.mxu0
      %v1987 = vadd.f32 %v1853, %v1986
      %1988 = vmatmul.bf16.gmra.mxu0 %v1899
      %v1989 = vpop.f32.mrf.mxu0
      %v1990 = vadd.f32 %v1853, %v1989
      %v1991 = vpop.f32.mrf.mxu0
      %v1992 = vadd.f32 %v1853, %v1991
      %1993 = vmatmul.bf16.gmra.mxu0 %v1901
      %v1994 = vpop.f32.mrf.mxu0
      %v1995 = vadd.f32 %v1853, %v1994
      %v1996 = vpop.f32.mrf.mxu0
      %v1997 = vadd.f32 %v1853, %v1996
      %1998 = vmatmul.bf16.gmra.mxu0 %v1903
      %v1999 = vpop.f32.mrf.mxu0
      %v2000 = vadd.f32 %v1853, %v1999
      %v2001 = vpop.f32.mrf.mxu0
      %v2002 = vadd.f32 %v1853, %v2001
      %2003 = vmatmul.bf16.gmra.mxu0 %v1905
      %v2004 = vpop.f32.mrf.mxu0
      %v2005 = vadd.f32 %v1853, %v2004
      %v2006 = vpop.f32.mrf.mxu0
      %v2007 = vadd.f32 %v1853, %v2006
      %2008 = vmatmul.bf16.gmra.mxu0 %v1907
      %v2009 = vpop.f32.mrf.mxu0
      %v2010 = vadd.f32 %v1853, %v2009
      %v2011 = vpop.f32.mrf.mxu0
      %v2012 = vadd.f32 %v1853, %v2011
      %2013 = vmatmul.bf16.gmra.mxu0 %v1909
      %v2014 = vpop.f32.mrf.mxu0
      %v2015 = vadd.f32 %v1853, %v2014
      %v2016 = vpop.f32.mrf.mxu0
      %v2017 = vadd.f32 %v1853, %v2016
      %2018 = vmatmul.bf16.gmra.mxu0 %v1911
      %v2019 = vpop.f32.mrf.mxu0
      %v2020 = vadd.f32 %v1853, %v2019
      %v2021 = vpop.f32.mrf.mxu0
      %v2022 = vadd.f32 %v1853, %v2021
      %2023 = vmatmul.bf16.gmra.mxu0 %v1913
      %v2024 = vpop.f32.mrf.mxu0
      %v2025 = vadd.f32 %v1853, %v2024
      %v2026 = vpop.f32.mrf.mxu0
      %v2027 = vadd.f32 %v1853, %v2026
      %2028 = vmatmul.bf16.gmra.mxu0 %v1915
      %v2029 = vpop.f32.mrf.mxu0
      %v2030 = vadd.f32 %v1853, %v2029
      %v2031 = vpop.f32.mrf.mxu0
      %v2032 = vadd.f32 %v1853, %v2031
      %2033 = vmatmul.bf16.gmra.mxu0 %v1917
      %v2034 = vpop.f32.mrf.mxu0
      %v2035 = vadd.f32 %v1853, %v2034
      %v2036 = vpop.f32.mrf.mxu0
      %v2037 = vadd.f32 %v1853, %v2036
      %2038 = vmatmul.bf16.gmra.mxu0 %v1919
      %v2039 = vpop.f32.mrf.mxu0
      %v2040 = vadd.f32 %v1853, %v2039
      %v2041 = vpop.f32.mrf.mxu0
      %v2042 = vadd.f32 %v1853, %v2041
      %2043 = vdwg.mxu0
      %v2044 = vmul.f32 %v1935, 0.1
      %v2045 = vmul.f32 %v1937, 0.1
      %v2046 = vmul.f32 %v1940, 0.1
      %v2047 = vmul.f32 %v1942, 0.1
      %v2048 = vmul.f32 %v1945, 0.1
      %v2049 = vmul.f32 %v1947, 0.1
      %v2050 = vmul.f32 %v1950, 0.1
      %v2051 = vmul.f32 %v1952, 0.1
      %v2052 = vmul.f32 %v1955, 0.1
      %v2053 = vmul.f32 %v1957, 0.1
      %v2054 = vmul.f32 %v1960, 0.1
      %v2055 = vmul.f32 %v1962, 0.1
      %v2056 = vmul.f32 %v1965, 0.1
      %v2057 = vmul.f32 %v1967, 0.1
      %v2058 = vmul.f32 %v1970, 0.1
      %v2059 = vmul.f32 %v1972, 0.1
      %v2060 = vmul.f32 %v1975, 0.1
      %v2061 = vmul.f32 %v1977, 0.1
      %v2062 = vmul.f32 %v1980, 0.1
      %v2063 = vmul.f32 %v1982, 0.1
      %v2064 = vmul.f32 %v1985, 0.1
      %v2065 = vmul.f32 %v1987, 0.1
      %v2066 = vmul.f32 %v1990, 0.1
      %v2067 = vmul.f32 %v1992, 0.1
      %v2068 = vmul.f32 %v1995, 0.1
      %v2069 = vmul.f32 %v1997, 0.1
      %v2070 = vmul.f32 %v2000, 0.1
      %v2071 = vmul.f32 %v2002, 0.1
      %v2072 = vmul.f32 %v2005, 0.1
      %v2073 = vmul.f32 %v2007, 0.1
      %v2074 = vmul.f32 %v2010, 0.1
      %v2075 = vmul.f32 %v2012, 0.1
      %v2076 = vmul.f32 %v2015, 0.1
      %v2077 = vmul.f32 %v2017, 0.1
      %v2078 = vmul.f32 %v2020, 0.1
      %v2079 = vmul.f32 %v2022, 0.1
      %v2080 = vmul.f32 %v2025, 0.1
      %v2081 = vmul.f32 %v2027, 0.1
      %v2082 = vmul.f32 %v2030, 0.1
      %v2083 = vmul.f32 %v2032, 0.1
      %v2084 = vmul.f32 %v2035, 0.1
      %v2085 = vmul.f32 %v2037, 0.1
      %v2086 = vmul.f32 %v2040, 0.1
      %v2087 = vmul.f32 %v2042, 0.1
      %v2088 = vmax.f32 %v1935, %v2044
      %v2089 = vmax.f32 %v1937, %v2045
      %v2090 = vmax.f32 %v1940, %v2046
      %v2091 = vmax.f32 %v1942, %v2047
      %v2092 = vmax.f32 %v1945, %v2048
      %v2093 = vmax.f32 %v1947, %v2049
      %v2094 = vmax.f32 %v1950, %v2050
      %v2095 = vmax.f32 %v1952, %v2051
      %v2096 = vmax.f32 %v1955, %v2052
      %v2097 = vmax.f32 %v1957, %v2053
      %v2098 = vmax.f32 %v1960, %v2054
      %v2099 = vmax.f32 %v1962, %v2055
      %v2100 = vmax.f32 %v1965, %v2056
      %v2101 = vmax.f32 %v1967, %v2057
      %v2102 = vmax.f32 %v1970, %v2058
      %v2103 = vmax.f32 %v1972, %v2059
      %v2104 = vmax.f32 %v1975, %v2060
      %v2105 = vmax.f32 %v1977, %v2061
      %v2106 = vmax.f32 %v1980, %v2062
      %v2107 = vmax.f32 %v1982, %v2063
      %v2108 = vmax.f32 %v1985, %v2064
      %v2109 = vmax.f32 %v1987, %v2065
      %v2110 = vmax.f32 %v1990, %v2066
      %v2111 = vmax.f32 %v1992, %v2067
      %v2112 = vmax.f32 %v1995, %v2068
      %v2113 = vmax.f32 %v1997, %v2069
      %v2114 = vmax.f32 %v2000, %v2070
      %v2115 = vmax.f32 %v2002, %v2071
      %v2116 = vmax.f32 %v2005, %v2072
      %v2117 = vmax.f32 %v2007, %v2073
      %v2118 = vmax.f32 %v2010, %v2074
      %v2119 = vmax.f32 %v2012, %v2075
      %v2120 = vmax.f32 %v2015, %v2076
      %v2121 = vmax.f32 %v2017, %v2077
      %v2122 = vmax.f32 %v2020, %v2078
      %v2123 = vmax.f32 %v2022, %v2079
      %v2124 = vmax.f32 %v2025, %v2080
      %v2125 = vmax.f32 %v2027, %v2081
      %v2126 = vmax.f32 %v2030, %v2082
      %v2127 = vmax.f32 %v2032, %v2083
      %v2128 = vmax.f32 %v2035, %v2084
      %v2129 = vmax.f32 %v2037, %v2085
      %v2130 = vmax.f32 %v2040, %v2086
      %v2131 = vmax.f32 %v2042, %v2087
      %s2132 = ssub.s32 %s433, 3
      %v2133 = vstv %s2132
      %v2134 = vadd.s32 %v2133, 1
      %v2135 = vadd.s32 %v2133, 2
      %v2136 = vadd.s32 %v2133, 3
      %v2137 = vadd.s32 %v2133, 4
      %v2138 = vadd.s32 %v2133, 5
      %v2139 = vadd.s32 %v2133, 6
      %v2140 = vadd.s32 %v2133, 7
      %v2141 = vadd.s32 %v2133, 8
      %v2142 = vadd.s32 %v2133, 9
      %v2143 = vadd.s32 %v2133, 10
      %v2144 = vadd.s32 %v2133, 11
      %v2145 = vadd.s32 %v2133, 12
      %v2146 = vadd.s32 %v2133, 13
      %v2147 = vadd.s32 %v2133, 14
      %v2148 = vadd.s32 %v2133, 15
      %v2149 = vadd.s32 %v2133, 16
      %v2150 = vadd.s32 %v2133, 17
      %v2151 = vadd.s32 %v2133, 18
      %v2152 = vadd.s32 %v2133, 19
      %v2153 = vadd.s32 %v2133, 20
      %v2154 = vadd.s32 %v2133, 21
      %vm2155 = vcmp.ge.s32.totalorder %v2133, 0
      %vm2156 = vcmp.ge.s32.totalorder %v2134, 0
      %vm2157 = vcmp.ge.s32.totalorder %v2135, 0
      %vm2158 = vcmp.ge.s32.totalorder %v2136, 0
      %vm2159 = vcmp.ge.s32.totalorder %v2137, 0
      %vm2160 = vcmp.ge.s32.totalorder %v2138, 0
      %vm2161 = vcmp.ge.s32.totalorder %v2139, 0
      %vm2162 = vcmp.ge.s32.totalorder %v2140, 0
      %vm2163 = vcmp.ge.s32.totalorder %v2141, 0
      %vm2164 = vcmp.ge.s32.totalorder %v2142, 0
      %vm2165 = vcmp.ge.s32.totalorder %v2143, 0
      %vm2166 = vcmp.ge.s32.totalorder %v2144, 0
      %vm2167 = vcmp.ge.s32.totalorder %v2145, 0
      %vm2168 = vcmp.ge.s32.totalorder %v2146, 0
      %vm2169 = vcmp.ge.s32.totalorder %v2147, 0
      %vm2170 = vcmp.ge.s32.totalorder %v2148, 0
      %vm2171 = vcmp.ge.s32.totalorder %v2149, 0
      %vm2172 = vcmp.ge.s32.totalorder %v2150, 0
      %vm2173 = vcmp.ge.s32.totalorder %v2151, 0
      %vm2174 = vcmp.ge.s32.totalorder %v2152, 0
      %vm2175 = vcmp.ge.s32.totalorder %v2153, 0
      %vm2176 = vcmp.ge.s32.totalorder %v2154, 0
      %vm2177 = vcmp.lt.s32.totalorder %v2133, 16
      %vm2178 = vcmp.lt.s32.totalorder %v2134, 16
      %vm2179 = vcmp.lt.s32.totalorder %v2135, 16
      %vm2180 = vcmp.lt.s32.totalorder %v2136, 16
      %vm2181 = vcmp.lt.s32.totalorder %v2137, 16
      %vm2182 = vcmp.lt.s32.totalorder %v2138, 16
      %vm2183 = vcmp.lt.s32.totalorder %v2139, 16
      %vm2184 = vcmp.lt.s32.totalorder %v2140, 16
      %vm2185 = vcmp.lt.s32.totalorder %v2141, 16
      %vm2186 = vcmp.lt.s32.totalorder %v2142, 16
      %vm2187 = vcmp.lt.s32.totalorder %v2143, 16
      %vm2188 = vcmp.lt.s32.totalorder %v2144, 16
      %vm2189 = vcmp.lt.s32.totalorder %v2145, 16
      %vm2190 = vcmp.lt.s32.totalorder %v2146, 16
      %vm2191 = vcmp.lt.s32.totalorder %v2147, 16
      %vm2192 = vcmp.lt.s32.totalorder %v2148, 16
      %vm2193 = vcmp.lt.s32.totalorder %v2149, 16
      %vm2194 = vcmp.lt.s32.totalorder %v2150, 16
      %vm2195 = vcmp.lt.s32.totalorder %v2151, 16
      %vm2196 = vcmp.lt.s32.totalorder %v2152, 16
      %vm2197 = vcmp.lt.s32.totalorder %v2153, 16
      %vm2198 = vcmp.lt.s32.totalorder %v2154, 16
      %vm2199 = vmand %vm2155, %vm2177
      %vm2200 = vmand %vm2156, %vm2178
      %vm2201 = vmand %vm2157, %vm2179
      %vm2202 = vmand %vm2158, %vm2180
      %vm2203 = vmand %vm2159, %vm2181
      %vm2204 = vmand %vm2160, %vm2182
      %vm2205 = vmand %vm2161, %vm2183
      %vm2206 = vmand %vm2162, %vm2184
      %vm2207 = vmand %vm2163, %vm2185
      %vm2208 = vmand %vm2164, %vm2186
      %vm2209 = vmand %vm2165, %vm2187
      %vm2210 = vmand %vm2166, %vm2188
      %vm2211 = vmand %vm2167, %vm2189
      %vm2212 = vmand %vm2168, %vm2190
      %vm2213 = vmand %vm2169, %vm2191
      %vm2214 = vmand %vm2170, %vm2192
      %vm2215 = vmand %vm2171, %vm2193
      %vm2216 = vmand %vm2172, %vm2194
      %vm2217 = vmand %vm2173, %vm2195
      %vm2218 = vmand %vm2174, %vm2196
      %vm2219 = vmand %vm2175, %vm2197
      %vm2220 = vmand %vm2176, %vm2198
      %v2221 = vsel %vm2199, 1, 0
      %v2222 = vsel %vm2200, 1, 0
      %v2223 = vsel %vm2201, 1, 0
      %v2224 = vsel %vm2202, 1, 0
      %v2225 = vsel %vm2203, 1, 0
      %v2226 = vsel %vm2204, 1, 0
      %v2227 = vsel %vm2205, 1, 0
      %v2228 = vsel %vm2206, 1, 0
      %v2229 = vsel %vm2207, 1, 0
      %v2230 = vsel %vm2208, 1, 0
      %v2231 = vsel %vm2209, 1, 0
      %v2232 = vsel %vm2210, 1, 0
      %v2233 = vsel %vm2211, 1, 0
      %v2234 = vsel %vm2212, 1, 0
      %v2235 = vsel %vm2213, 1, 0
      %v2236 = vsel %vm2214, 1, 0
      %v2237 = vsel %vm2215, 1, 0
      %v2238 = vsel %vm2216, 1, 0
      %v2239 = vsel %vm2217, 1, 0
      %v2240 = vsel %vm2218, 1, 0
      %v2241 = vsel %vm2219, 1, 0
      %v2242 = vsel %vm2220, 1, 0
      %vm2243 = vcmp.eq.s32.totalorder %v2221, 1
      %vm2244 = vcmp.eq.s32.totalorder %v2222, 1
      %vm2245 = vcmp.eq.s32.totalorder %v2223, 1
      %vm2246 = vcmp.eq.s32.totalorder %v2224, 1
      %vm2247 = vcmp.eq.s32.totalorder %v2225, 1
      %vm2248 = vcmp.eq.s32.totalorder %v2226, 1
      %vm2249 = vcmp.eq.s32.totalorder %v2227, 1
      %vm2250 = vcmp.eq.s32.totalorder %v2228, 1
      %vm2251 = vcmp.eq.s32.totalorder %v2229, 1
      %vm2252 = vcmp.eq.s32.totalorder %v2230, 1
      %vm2253 = vcmp.eq.s32.totalorder %v2231, 1
      %vm2254 = vcmp.eq.s32.totalorder %v2232, 1
      %vm2255 = vcmp.eq.s32.totalorder %v2233, 1
      %vm2256 = vcmp.eq.s32.totalorder %v2234, 1
      %vm2257 = vcmp.eq.s32.totalorder %v2235, 1
      %vm2258 = vcmp.eq.s32.totalorder %v2236, 1
      %vm2259 = vcmp.eq.s32.totalorder %v2237, 1
      %vm2260 = vcmp.eq.s32.totalorder %v2238, 1
      %vm2261 = vcmp.eq.s32.totalorder %v2239, 1
      %vm2262 = vcmp.eq.s32.totalorder %v2240, 1
      %vm2263 = vcmp.eq.s32.totalorder %v2241, 1
      %vm2264 = vcmp.eq.s32.totalorder %v2242, 1
      %v2265 = vsel %vm2243, %v2088, 0.0
      %v2266 = vsel %vm2243, %v2089, 0.0
      %v2267 = vsel %vm2244, %v2090, 0.0
      %v2268 = vsel %vm2244, %v2091, 0.0
      %v2269 = vsel %vm2245, %v2092, 0.0
      %v2270 = vsel %vm2245, %v2093, 0.0
      %v2271 = vsel %vm2246, %v2094, 0.0
      %v2272 = vsel %vm2246, %v2095, 0.0
      %v2273 = vsel %vm2247, %v2096, 0.0
      %v2274 = vsel %vm2247, %v2097, 0.0
      %v2275 = vsel %vm2248, %v2098, 0.0
      %v2276 = vsel %vm2248, %v2099, 0.0
      %v2277 = vsel %vm2249, %v2100, 0.0
      %v2278 = vsel %vm2249, %v2101, 0.0
      %v2279 = vsel %vm2250, %v2102, 0.0
      %v2280 = vsel %vm2250, %v2103, 0.0
      %v2281 = vsel %vm2251, %v2104, 0.0
      %v2282 = vsel %vm2251, %v2105, 0.0
      %v2283 = vsel %vm2252, %v2106, 0.0
      %v2284 = vsel %vm2252, %v2107, 0.0
      %v2285 = vsel %vm2253, %v2108, 0.0
      %v2286 = vsel %vm2253, %v2109, 0.0
      %v2287 = vsel %vm2254, %v2110, 0.0
      %v2288 = vsel %vm2254, %v2111, 0.0
      %v2289 = vsel %vm2255, %v2112, 0.0
      %v2290 = vsel %vm2255, %v2113, 0.0
      %v2291 = vsel %vm2256, %v2114, 0.0
      %v2292 = vsel %vm2256, %v2115, 0.0
      %v2293 = vsel %vm2257, %v2116, 0.0
      %v2294 = vsel %vm2257, %v2117, 0.0
      %v2295 = vsel %vm2258, %v2118, 0.0
      %v2296 = vsel %vm2258, %v2119, 0.0
      %v2297 = vsel %vm2259, %v2120, 0.0
      %v2298 = vsel %vm2259, %v2121, 0.0
      %v2299 = vsel %vm2260, %v2122, 0.0
      %v2300 = vsel %vm2260, %v2123, 0.0
      %v2301 = vsel %vm2261, %v2124, 0.0
      %v2302 = vsel %vm2261, %v2125, 0.0
      %v2303 = vsel %vm2262, %v2126, 0.0
      %v2304 = vsel %vm2262, %v2127, 0.0
      %v2305 = vsel %vm2263, %v2128, 0.0
      %v2306 = vsel %vm2263, %v2129, 0.0
      %v2307 = vsel %vm2264, %v2130, 0.0
      %v2308 = vsel %vm2264, %v2131, 0.0
      %v2309 = vld [vmem:[%s4] sm:$0xf]
      %v2310 = vld [vmem:[%s4 + $0x4] sm:$0xf]
      %v2311 = vld [vmem:[%s4 + $0x8] sm:$0xf]
      %v2312 = vld [vmem:[%s4 + $0xc] sm:$0xf]
      %v2313 = vld [vmem:[%s4 + $0x10] sm:$0xf]
      %v2314 = vld [vmem:[%s4 + $0x14] sm:$0xf]
      %v2315 = vld [vmem:[%s4 + $0x18] sm:$0xf]
      %v2316 = vld [vmem:[%s4 + $0x1c] sm:$0xf]
      %v2317 = vld [vmem:[%s4 + $0x20] sm:$0xf]
      %v2318 = vld [vmem:[%s4 + $0x24] sm:$0xf]
      %v2319 = vld [vmem:[%s4 + $0x28] sm:$0xf]
      %v2320 = vld [vmem:[%s4 + $0x2c] sm:$0xf]
      %v2321 = vld [vmem:[%s4 + $0x30] sm:$0xf]
      %v2322 = vld [vmem:[%s4 + $0x34] sm:$0xf]
      %v2323 = vld [vmem:[%s4 + $0x38] sm:$0xf]
      %v2324 = vld [vmem:[%s4 + $0x3c] sm:$0xf]
      %v2325 = vld [vmem:[%s4 + $0x40] sm:$0xf]
      %v2326 = vld [vmem:[%s4 + $0x44] sm:$0xf]
      %v2327 = vld [vmem:[%s4 + $0x48] sm:$0xf]
      %v2328 = vld [vmem:[%s4 + $0x4c] sm:$0xf]
      %v2329 = vld [vmem:[%s4 + $0x50] sm:$0xf]
      %v2330 = vld [vmem:[%s4 + $0x54] sm:$0xf]
      %v2331 = vld [vmem:[%s4 + $0x58] sm:$0xf]
      %v2332 = vld [vmem:[%s4 + $0x5c] sm:$0xf]
      %v2333 = vld [vmem:[%s4 + $0x60] sm:$0xf]
      %v2334 = vld [vmem:[%s4 + $0x64] sm:$0xf]
      %v2335 = vld [vmem:[%s4 + $0x68] sm:$0xf]
      %v2336 = vld [vmem:[%s4 + $0x6c] sm:$0xf]
      %v2337 = vld [vmem:[%s4 + $0x70] sm:$0xf]
      %v2338 = vld [vmem:[%s4 + $0x74] sm:$0xf]
      %v2339 = vld [vmem:[%s4 + $0x78] sm:$0xf]
      %v2340 = vld [vmem:[%s4 + $0x7c] sm:$0xf]
      %v2341 = vld [vmem:[%s4 + $0x80] sm:$0xf]
      %v2342 = vld [vmem:[%s4 + $0x84] sm:$0xf]
      %v2343 = vld [vmem:[%s4 + $0x88] sm:$0xf]
      %v2344 = vld [vmem:[%s4 + $0x8c] sm:$0xf]
      %v2345 = vld [vmem:[%s5] sm:$0x1]
      %v2346 = vpack.c.bf16 %v2265, %v2265
      %v2347 = vpack.c.bf16 %v2266, %v2266
      %v2348 = vpack.c.bf16 %v2267, %v2267
      %v2349 = vpack.c.bf16 %v2268, %v2268
      %v2350 = vpack.c.bf16 %v2269, %v2269
      %v2351 = vpack.c.bf16 %v2270, %v2270
      %v2352 = vpack.c.bf16 %v2271, %v2271
      %v2353 = vpack.c.bf16 %v2272, %v2272
      %v2354 = vpack.c.bf16 %v2273, %v2273
      %v2355 = vpack.c.bf16 %v2274, %v2274
      %v2356 = vpack.c.bf16 %v2275, %v2275
      %v2357 = vpack.c.bf16 %v2276, %v2276
      %v2358 = vpack.c.bf16 %v2277, %v2277
      %v2359 = vpack.c.bf16 %v2278, %v2278
      %v2360 = vpack.c.bf16 %v2279, %v2279
      %v2361 = vpack.c.bf16 %v2280, %v2280
      %v2362 = vpack.c.bf16 %v2281, %v2281
      %v2363 = vpack.c.bf16 %v2282, %v2282
      %v2364 = vpack.c.bf16 %v2283, %v2283
      %v2365 = vpack.c.bf16 %v2284, %v2284
      %v2366 = vpack.c.bf16 %v2285, %v2285
      %v2367 = vpack.c.bf16 %v2286, %v2286
      %v2368 = vpack.c.bf16 %v2287, %v2287
      %v2369 = vpack.c.bf16 %v2288, %v2288
      %v2370 = vpack.c.bf16 %v2289, %v2289
      %v2371 = vpack.c.bf16 %v2290, %v2290
      %v2372 = vpack.c.bf16 %v2291, %v2291
      %v2373 = vpack.c.bf16 %v2292, %v2292
      %v2374 = vpack.c.bf16 %v2293, %v2293
      %v2375 = vpack.c.bf16 %v2294, %v2294
      %v2376 = vpack.c.bf16 %v2295, %v2295
      %v2377 = vpack.c.bf16 %v2296, %v2296
      %v2378 = vpack.c.bf16 %v2297, %v2297
      %v2379 = vpack.c.bf16 %v2298, %v2298
      %v2380 = vpack.c.bf16 %v2299, %v2299
      %v2381 = vpack.c.bf16 %v2300, %v2300
      %v2382 = vpack.c.bf16 %v2301, %v2301
      %v2383 = vpack.c.bf16 %v2302, %v2302
      %v2384 = vpack.c.bf16 %v2303, %v2303
      %v2385 = vpack.c.bf16 %v2304, %v2304
      %v2386 = vpack.c.bf16 %v2305, %v2305
      %v2387 = vpack.c.bf16 %v2306, %v2306
      %v2388 = vpack.c.bf16 %v2307, %v2307
      %v2389 = vpack.c.bf16 %v2308, %v2308
      %v2434 = vunpack.c.l.b16 %v2346
      %v2435 = vunpack.c.l.b16 %v2347
      %v2436 = vunpack.c.l.b16 %v2348
      %v2437 = vunpack.c.l.b16 %v2349
      %v2438 = vunpack.c.l.b16 %v2350
      %v2439 = vunpack.c.l.b16 %v2351
      %v2440 = vunpack.c.l.b16 %v2352
      %v2441 = vunpack.c.l.b16 %v2353
      %v2442 = vunpack.c.l.b16 %v2354
      %v2443 = vunpack.c.l.b16 %v2355
      %v2444 = vunpack.c.l.b16 %v2356
      %v2445 = vunpack.c.l.b16 %v2357
      %v2446 = vunpack.c.l.b16 %v2358
      %v2447 = vunpack.c.l.b16 %v2359
      %v2448 = vunpack.c.l.b16 %v2360
      %v2449 = vunpack.c.l.b16 %v2361
      %v2450 = vunpack.c.l.b16 %v2362
      %v2451 = vunpack.c.l.b16 %v2363
      %v2452 = vunpack.c.l.b16 %v2364
      %v2453 = vunpack.c.l.b16 %v2365
      %v2454 = vunpack.c.l.b16 %v2366
      %v2455 = vunpack.c.l.b16 %v2367
      %v2456 = vunpack.c.l.b16 %v2368
      %v2457 = vunpack.c.l.b16 %v2369
      %v2458 = vunpack.c.l.b16 %v2370
      %v2459 = vunpack.c.l.b16 %v2371
      %v2460 = vunpack.c.l.b16 %v2372
      %v2461 = vunpack.c.l.b16 %v2373
      %v2462 = vunpack.c.l.b16 %v2374
      %v2463 = vunpack.c.l.b16 %v2375
      %v2464 = vunpack.c.l.b16 %v2376
      %v2465 = vunpack.c.l.b16 %v2377
      %v2466 = vunpack.c.l.b16 %v2378
      %v2467 = vunpack.c.l.b16 %v2379
      %v2468 = vunpack.c.l.b16 %v2380
      %v2469 = vunpack.c.l.b16 %v2381
      %v2470 = vunpack.c.l.b16 %v2382
      %v2471 = vunpack.c.l.b16 %v2383
      %v2472 = vunpack.c.l.b16 %v2384
      %v2473 = vunpack.c.l.b16 %v2385
      %v2474 = vunpack.c.l.b16 %v2386
      %v2475 = vunpack.c.l.b16 %v2387
      %v2476 = vunpack.c.l.b16 %v2388
      %v2477 = vunpack.c.l.b16 %v2389
      %v2478 = vpack.c.b16 %v2435, %v2434
      %v2479 = vpack.c.b16 %v2437, %v2436
      %v2480 = vpack.c.b16 %v2439, %v2438
      %v2481 = vpack.c.b16 %v2441, %v2440
      %v2482 = vpack.c.b16 %v2443, %v2442
      %v2483 = vpack.c.b16 %v2445, %v2444
      %v2484 = vpack.c.b16 %v2447, %v2446
      %v2485 = vpack.c.b16 %v2449, %v2448
      %v2486 = vpack.c.b16 %v2451, %v2450
      %v2487 = vpack.c.b16 %v2453, %v2452
      %v2488 = vpack.c.b16 %v2455, %v2454
      %v2489 = vpack.c.b16 %v2457, %v2456
      %v2490 = vpack.c.b16 %v2459, %v2458
      %v2491 = vpack.c.b16 %v2461, %v2460
      %v2492 = vpack.c.b16 %v2463, %v2462
      %v2493 = vpack.c.b16 %v2465, %v2464
      %v2494 = vpack.c.b16 %v2467, %v2466
      %v2495 = vpack.c.b16 %v2469, %v2468
      %v2496 = vpack.c.b16 %v2471, %v2470
      %v2497 = vpack.c.b16 %v2473, %v2472
      %v2498 = vpack.c.b16 %v2475, %v2474
      %v2499 = vpack.c.b16 %v2477, %v2476
      %v2501 = vshrl.u32 %v2478, 16
      %v2503 = vrot.slane %v2501, 7
      %v2504 = vshll.u32 %v2478, 16
      %v2506 = vor.u32 %v2503, %v2504
      %v2508 = vshrl.u32 %v2479, 16
      %v2510 = vrot.slane %v2508, 7
      %v2511 = vshll.u32 %v2479, 16
      %v2513 = vor.u32 %v2510, %v2511
      %v2515 = vshrl.u32 %v2480, 16
      %v2517 = vrot.slane %v2515, 7
      %v2518 = vshll.u32 %v2480, 16
      %v2520 = vor.u32 %v2517, %v2518
      %v2522 = vshrl.u32 %v2481, 16
      %v2524 = vrot.slane %v2522, 7
      %v2525 = vshll.u32 %v2481, 16
      %v2527 = vor.u32 %v2524, %v2525
      %v2529 = vshrl.u32 %v2482, 16
      %v2531 = vrot.slane %v2529, 7
      %v2532 = vshll.u32 %v2482, 16
      %v2534 = vor.u32 %v2531, %v2532
      %v2536 = vshrl.u32 %v2483, 16
      %v2538 = vrot.slane %v2536, 7
      %v2539 = vshll.u32 %v2483, 16
      %v2541 = vor.u32 %v2538, %v2539
      %v2543 = vshrl.u32 %v2484, 16
      %v2545 = vrot.slane %v2543, 7
      %v2546 = vshll.u32 %v2484, 16
      %v2548 = vor.u32 %v2545, %v2546
      %v2550 = vshrl.u32 %v2485, 16
      %v2552 = vrot.slane %v2550, 7
      %v2553 = vshll.u32 %v2485, 16
      %v2555 = vor.u32 %v2552, %v2553
      %v2557 = vshrl.u32 %v2486, 16
      %v2559 = vrot.slane %v2557, 7
      %v2560 = vshll.u32 %v2486, 16
      %v2562 = vor.u32 %v2559, %v2560
      %v2564 = vshrl.u32 %v2487, 16
      %v2566 = vrot.slane %v2564, 7
      %v2567 = vshll.u32 %v2487, 16
      %v2569 = vor.u32 %v2566, %v2567
      %v2571 = vshrl.u32 %v2488, 16
      %v2573 = vrot.slane %v2571, 7
      %v2574 = vshll.u32 %v2488, 16
      %v2576 = vor.u32 %v2573, %v2574
      %v2578 = vshrl.u32 %v2489, 16
      %v2580 = vrot.slane %v2578, 7
      %v2581 = vshll.u32 %v2489, 16
      %v2583 = vor.u32 %v2580, %v2581
      %v2585 = vshrl.u32 %v2490, 16
      %v2587 = vrot.slane %v2585, 7
      %v2588 = vshll.u32 %v2490, 16
      %v2590 = vor.u32 %v2587, %v2588
      %v2592 = vshrl.u32 %v2491, 16
      %v2594 = vrot.slane %v2592, 7
      %v2595 = vshll.u32 %v2491, 16
      %v2597 = vor.u32 %v2594, %v2595
      %v2599 = vshrl.u32 %v2492, 16
      %v2601 = vrot.slane %v2599, 7
      %v2602 = vshll.u32 %v2492, 16
      %v2604 = vor.u32 %v2601, %v2602
      %v2606 = vshrl.u32 %v2493, 16
      %v2608 = vrot.slane %v2606, 7
      %v2609 = vshll.u32 %v2493, 16
      %v2611 = vor.u32 %v2608, %v2609
      %v2613 = vshrl.u32 %v2494, 16
      %v2615 = vrot.slane %v2613, 7
      %v2616 = vshll.u32 %v2494, 16
      %v2618 = vor.u32 %v2615, %v2616
      %v2620 = vshrl.u32 %v2495, 16
      %v2622 = vrot.slane %v2620, 7
      %v2623 = vshll.u32 %v2495, 16
      %v2625 = vor.u32 %v2622, %v2623
      %v2627 = vshrl.u32 %v2496, 16
      %v2629 = vrot.slane %v2627, 7
      %v2630 = vshll.u32 %v2496, 16
      %v2632 = vor.u32 %v2629, %v2630
      %v2634 = vshrl.u32 %v2497, 16
      %v2636 = vrot.slane %v2634, 7
      %v2637 = vshll.u32 %v2497, 16
      %v2639 = vor.u32 %v2636, %v2637
      %v2641 = vshrl.u32 %v2498, 16
      %v2643 = vrot.slane %v2641, 7
      %v2644 = vshll.u32 %v2498, 16
      %v2646 = vor.u32 %v2643, %v2644
      %v2648 = vshrl.u32 %v2499, 16
      %v2650 = vrot.slane %v2648, 7
      %v2651 = vshll.u32 %v2499, 16
      %v2653 = vor.u32 %v2650, %v2651
      %vm2698 = vcmask 1040384
      %vm2699 = vsmask.f32 256
      %vm2700 = vmand %vm2698, %vm2699
      %v2701 = vsel %vm2700, 0, %v2506
      %v2702 = vsel %vm2700, 0, %v2513
      %v2703 = vsel %vm2700, 0, %v2520
      %v2704 = vsel %vm2700, 0, %v2527
      %v2705 = vsel %vm2700, 0, %v2534
      %v2706 = vsel %vm2700, 0, %v2541
      %v2707 = vsel %vm2700, 0, %v2548
      %v2708 = vsel %vm2700, 0, %v2555
      %v2709 = vsel %vm2700, 0, %v2562
      %v2710 = vsel %vm2700, 0, %v2569
      %v2711 = vsel %vm2700, 0, %v2576
      %v2712 = vsel %vm2700, 0, %v2583
      %v2713 = vsel %vm2700, 0, %v2590
      %v2714 = vsel %vm2700, 0, %v2597
      %v2715 = vsel %vm2700, 0, %v2604
      %v2716 = vsel %vm2700, 0, %v2611
      %v2717 = vsel %vm2700, 0, %v2618
      %v2718 = vsel %vm2700, 0, %v2625
      %v2719 = vsel %vm2700, 0, %v2632
      %v2720 = vsel %vm2700, 0, %v2639
      %v2721 = vsel %vm2700, 0, %v2646
      %v2722 = vsel %vm2700, 0, %v2653
      %v2723 = vsel %vm2700, %v2503, 0
      %v2724 = vsel %vm2700, %v2510, 0
      %v2725 = vsel %vm2700, %v2517, 0
      %v2726 = vsel %vm2700, %v2524, 0
      %v2727 = vsel %vm2700, %v2531, 0
      %v2728 = vsel %vm2700, %v2538, 0
      %v2729 = vsel %vm2700, %v2545, 0
      %v2730 = vsel %vm2700, %v2552, 0
      %v2731 = vsel %vm2700, %v2559, 0
      %v2732 = vsel %vm2700, %v2566, 0
      %v2733 = vsel %vm2700, %v2573, 0
      %v2734 = vsel %vm2700, %v2580, 0
      %v2735 = vsel %vm2700, %v2587, 0
      %v2736 = vsel %vm2700, %v2594, 0
      %v2737 = vsel %vm2700, %v2601, 0
      %v2738 = vsel %vm2700, %v2608, 0
      %v2739 = vsel %vm2700, %v2615, 0
      %v2740 = vsel %vm2700, %v2622, 0
      %v2741 = vsel %vm2700, %v2629, 0
      %v2742 = vsel %vm2700, %v2636, 0
      %v2743 = vsel %vm2700, %v2643, 0
      %v2744 = vsel %vm2700, %v2650, 0
      %v2746 = vshrl.u32 %v2701, 16
      %v2748 = vshll.u32 %v2701, 16
      %v2750 = vrot.slane %v2748, 1
      %v2751 = vor.u32 %v2746, %v2750
      %v2753 = vshll.u32 %v2723, 16
      %v2755 = vrot.slane %v2753, 1
      %v2756 = vsel %vm762, %v2751, %v2755
      %v2758 = vshrl.u32 %v2702, 16
      %v2760 = vshll.u32 %v2702, 16
      %v2762 = vrot.slane %v2760, 1
      %v2763 = vor.u32 %v2758, %v2762
      %v2765 = vshll.u32 %v2724, 16
      %v2767 = vrot.slane %v2765, 1
      %v2768 = vsel %vm762, %v2763, %v2767
      %v2770 = vshrl.u32 %v2703, 16
      %v2772 = vshll.u32 %v2703, 16
      %v2774 = vrot.slane %v2772, 1
      %v2775 = vor.u32 %v2770, %v2774
      %v2777 = vshll.u32 %v2725, 16
      %v2779 = vrot.slane %v2777, 1
      %v2780 = vsel %vm762, %v2775, %v2779
      %v2782 = vshrl.u32 %v2704, 16
      %v2784 = vshll.u32 %v2704, 16
      %v2786 = vrot.slane %v2784, 1
      %v2787 = vor.u32 %v2782, %v2786
      %v2789 = vshll.u32 %v2726, 16
      %v2791 = vrot.slane %v2789, 1
      %v2792 = vsel %vm762, %v2787, %v2791
      %v2794 = vshrl.u32 %v2705, 16
      %v2796 = vshll.u32 %v2705, 16
      %v2798 = vrot.slane %v2796, 1
      %v2799 = vor.u32 %v2794, %v2798
      %v2801 = vshll.u32 %v2727, 16
      %v2803 = vrot.slane %v2801, 1
      %v2804 = vsel %vm762, %v2799, %v2803
      %v2806 = vshrl.u32 %v2706, 16
      %v2808 = vshll.u32 %v2706, 16
      %v2810 = vrot.slane %v2808, 1
      %v2811 = vor.u32 %v2806, %v2810
      %v2813 = vshll.u32 %v2728, 16
      %v2815 = vrot.slane %v2813, 1
      %v2816 = vsel %vm762, %v2811, %v2815
      %v2818 = vshrl.u32 %v2707, 16
      %v2820 = vshll.u32 %v2707, 16
      %v2822 = vrot.slane %v2820, 1
      %v2823 = vor.u32 %v2818, %v2822
      %v2825 = vshll.u32 %v2729, 16
      %v2827 = vrot.slane %v2825, 1
      %v2828 = vsel %vm762, %v2823, %v2827
      %v2830 = vshrl.u32 %v2708, 16
      %v2832 = vshll.u32 %v2708, 16
      %v2834 = vrot.slane %v2832, 1
      %v2835 = vor.u32 %v2830, %v2834
      %v2837 = vshll.u32 %v2730, 16
      %v2839 = vrot.slane %v2837, 1
      %v2840 = vsel %vm762, %v2835, %v2839
      %v2842 = vshrl.u32 %v2709, 16
      %v2844 = vshll.u32 %v2709, 16
      %v2846 = vrot.slane %v2844, 1
      %v2847 = vor.u32 %v2842, %v2846
      %v2849 = vshll.u32 %v2731, 16
      %v2851 = vrot.slane %v2849, 1
      %v2852 = vsel %vm762, %v2847, %v2851
      %v2854 = vshrl.u32 %v2710, 16
      %v2856 = vshll.u32 %v2710, 16
      %v2858 = vrot.slane %v2856, 1
      %v2859 = vor.u32 %v2854, %v2858
      %v2861 = vshll.u32 %v2732, 16
      %v2863 = vrot.slane %v2861, 1
      %v2864 = vsel %vm762, %v2859, %v2863
      %v2866 = vshrl.u32 %v2711, 16
      %v2868 = vshll.u32 %v2711, 16
      %v2870 = vrot.slane %v2868, 1
      %v2871 = vor.u32 %v2866, %v2870
      %v2873 = vshll.u32 %v2733, 16
      %v2875 = vrot.slane %v2873, 1
      %v2876 = vsel %vm762, %v2871, %v2875
      %v2878 = vshrl.u32 %v2712, 16
      %v2880 = vshll.u32 %v2712, 16
      %v2882 = vrot.slane %v2880, 1
      %v2883 = vor.u32 %v2878, %v2882
      %v2885 = vshll.u32 %v2734, 16
      %v2887 = vrot.slane %v2885, 1
      %v2888 = vsel %vm762, %v2883, %v2887
      %v2890 = vshrl.u32 %v2713, 16
      %v2892 = vshll.u32 %v2713, 16
      %v2894 = vrot.slane %v2892, 1
      %v2895 = vor.u32 %v2890, %v2894
      %v2897 = vshll.u32 %v2735, 16
      %v2899 = vrot.slane %v2897, 1
      %v2900 = vsel %vm762, %v2895, %v2899
      %v2902 = vshrl.u32 %v2714, 16
      %v2904 = vshll.u32 %v2714, 16
      %v2906 = vrot.slane %v2904, 1
      %v2907 = vor.u32 %v2902, %v2906
      %v2909 = vshll.u32 %v2736, 16
      %v2911 = vrot.slane %v2909, 1
      %v2912 = vsel %vm762, %v2907, %v2911
      %v2914 = vshrl.u32 %v2715, 16
      %v2916 = vshll.u32 %v2715, 16
      %v2918 = vrot.slane %v2916, 1
      %v2919 = vor.u32 %v2914, %v2918
      %v2921 = vshll.u32 %v2737, 16
      %v2923 = vrot.slane %v2921, 1
      %v2924 = vsel %vm762, %v2919, %v2923
      %v2926 = vshrl.u32 %v2716, 16
      %v2928 = vshll.u32 %v2716, 16
      %v2930 = vrot.slane %v2928, 1
      %v2931 = vor.u32 %v2926, %v2930
      %v2933 = vshll.u32 %v2738, 16
      %v2935 = vrot.slane %v2933, 1
      %v2936 = vsel %vm762, %v2931, %v2935
      %v2938 = vshrl.u32 %v2717, 16
      %v2940 = vshll.u32 %v2717, 16
      %v2942 = vrot.slane %v2940, 1
      %v2943 = vor.u32 %v2938, %v2942
      %v2945 = vshll.u32 %v2739, 16
      %v2947 = vrot.slane %v2945, 1
      %v2948 = vsel %vm762, %v2943, %v2947
      %v2950 = vshrl.u32 %v2718, 16
      %v2952 = vshll.u32 %v2718, 16
      %v2954 = vrot.slane %v2952, 1
      %v2955 = vor.u32 %v2950, %v2954
      %v2957 = vshll.u32 %v2740, 16
      %v2959 = vrot.slane %v2957, 1
      %v2960 = vsel %vm762, %v2955, %v2959
      %v2962 = vshrl.u32 %v2719, 16
      %v2964 = vshll.u32 %v2719, 16
      %v2966 = vrot.slane %v2964, 1
      %v2967 = vor.u32 %v2962, %v2966
      %v2969 = vshll.u32 %v2741, 16
      %v2971 = vrot.slane %v2969, 1
      %v2972 = vsel %vm762, %v2967, %v2971
      %v2974 = vshrl.u32 %v2720, 16
      %v2976 = vshll.u32 %v2720, 16
      %v2978 = vrot.slane %v2976, 1
      %v2979 = vor.u32 %v2974, %v2978
      %v2981 = vshll.u32 %v2742, 16
      %v2983 = vrot.slane %v2981, 1
      %v2984 = vsel %vm762, %v2979, %v2983
      %2985 = vrot.lane.b32.xlu0 %v2756, 32
      %v2986 = vpop.permute.xlu0 %2985
      %2987 = vrot.lane.b32.xlu0 %v2768, 32
      %v2988 = vpop.permute.xlu0 %2987
      %2989 = vrot.lane.b32.xlu0 %v2780, 32
      %v2990 = vpop.permute.xlu0 %2989
      %2991 = vrot.lane.b32.xlu0 %v2792, 32
      %v2992 = vpop.permute.xlu0 %2991
      %2993 = vrot.lane.b32.xlu0 %v2804, 32
      %v2994 = vpop.permute.xlu0 %2993
      %2995 = vrot.lane.b32.xlu0 %v2816, 32
      %v2996 = vpop.permute.xlu0 %2995
      %2997 = vrot.lane.b32.xlu0 %v2828, 32
      %v2998 = vpop.permute.xlu0 %2997
      %2999 = vrot.lane.b32.xlu0 %v2840, 32
      %v3000 = vpop.permute.xlu0 %2999
      %3001 = vrot.lane.b32.xlu0 %v2852, 32
      %v3002 = vpop.permute.xlu0 %3001
      %3003 = vrot.lane.b32.xlu0 %v2864, 32
      %v3004 = vpop.permute.xlu0 %3003
      %3005 = vrot.lane.b32.xlu0 %v2876, 32
      %v3006 = vpop.permute.xlu0 %3005
      %3007 = vrot.lane.b32.xlu0 %v2888, 32
      %v3008 = vpop.permute.xlu0 %3007
      %3009 = vrot.lane.b32.xlu0 %v2900, 32
      %v3010 = vpop.permute.xlu0 %3009
      %3011 = vrot.lane.b32.xlu0 %v2912, 32
      %v3012 = vpop.permute.xlu0 %3011
      %3013 = vrot.lane.b32.xlu0 %v2924, 32
      %v3014 = vpop.permute.xlu0 %3013
      %3015 = vrot.lane.b32.xlu0 %v2936, 32
      %v3016 = vpop.permute.xlu0 %3015
      %3017 = vrot.lane.b32.xlu0 %v2948, 32
      %v3018 = vpop.permute.xlu0 %3017
      %3019 = vrot.lane.b32.xlu0 %v2960, 32
      %v3020 = vpop.permute.xlu0 %3019
      %3021 = vrot.lane.b32.xlu0 %v2972, 32
      %v3022 = vpop.permute.xlu0 %3021
      %3023 = vrot.lane.b32.xlu0 %v2984, 32
      %v3024 = vpop.permute.xlu0 %3023
      %v3065 = vrot.slane %v2701, 1
      %v3066 = vrot.slane %v2723, 1
      %v3067 = vsel %vm1071, %v3065, %v3066
      %v3068 = vrot.slane %v2702, 1
      %v3069 = vrot.slane %v2724, 1
      %v3070 = vsel %vm1071, %v3068, %v3069
      %v3071 = vrot.slane %v2703, 1
      %v3072 = vrot.slane %v2725, 1
      %v3073 = vsel %vm1071, %v3071, %v3072
      %v3074 = vrot.slane %v2704, 1
      %v3075 = vrot.slane %v2726, 1
      %v3076 = vsel %vm1071, %v3074, %v3075
      %v3077 = vrot.slane %v2705, 1
      %v3078 = vrot.slane %v2727, 1
      %v3079 = vsel %vm1071, %v3077, %v3078
      %v3080 = vrot.slane %v2706, 1
      %v3081 = vrot.slane %v2728, 1
      %v3082 = vsel %vm1071, %v3080, %v3081
      %v3083 = vrot.slane %v2707, 1
      %v3084 = vrot.slane %v2729, 1
      %v3085 = vsel %vm1071, %v3083, %v3084
      %v3086 = vrot.slane %v2708, 1
      %v3087 = vrot.slane %v2730, 1
      %v3088 = vsel %vm1071, %v3086, %v3087
      %v3089 = vrot.slane %v2709, 1
      %v3090 = vrot.slane %v2731, 1
      %v3091 = vsel %vm1071, %v3089, %v3090
      %v3092 = vrot.slane %v2710, 1
      %v3093 = vrot.slane %v2732, 1
      %v3094 = vsel %vm1071, %v3092, %v3093
      %v3095 = vrot.slane %v2711, 1
      %v3096 = vrot.slane %v2733, 1
      %v3097 = vsel %vm1071, %v3095, %v3096
      %v3098 = vrot.slane %v2712, 1
      %v3099 = vrot.slane %v2734, 1
      %v3100 = vsel %vm1071, %v3098, %v3099
      %v3101 = vrot.slane %v2713, 1
      %v3102 = vrot.slane %v2735, 1
      %v3103 = vsel %vm1071, %v3101, %v3102
      %v3104 = vrot.slane %v2714, 1
      %v3105 = vrot.slane %v2736, 1
      %v3106 = vsel %vm1071, %v3104, %v3105
      %v3107 = vrot.slane %v2715, 1
      %v3108 = vrot.slane %v2737, 1
      %v3109 = vsel %vm1071, %v3107, %v3108
      %v3110 = vrot.slane %v2716, 1
      %v3111 = vrot.slane %v2738, 1
      %v3112 = vsel %vm1071, %v3110, %v3111
      %v3113 = vrot.slane %v2717, 1
      %v3114 = vrot.slane %v2739, 1
      %v3115 = vsel %vm1071, %v3113, %v3114
      %v3116 = vrot.slane %v2718, 1
      %v3117 = vrot.slane %v2740, 1
      %v3118 = vsel %vm1071, %v3116, %v3117
      %v3119 = vrot.slane %v2719, 1
      %v3120 = vrot.slane %v2741, 1
      %v3121 = vsel %vm1071, %v3119, %v3120
      %v3122 = vrot.slane %v2720, 1
      %v3123 = vrot.slane %v2742, 1
      %v3124 = vsel %vm1071, %v3122, %v3123
      %3125 = vrot.lane.b32.xlu0 %v3067, 64
      %v3126 = vpop.permute.xlu0 %3125
      %3127 = vrot.lane.b32.xlu0 %v3070, 64
      %v3128 = vpop.permute.xlu0 %3127
      %3129 = vrot.lane.b32.xlu0 %v3073, 64
      %v3130 = vpop.permute.xlu0 %3129
      %3131 = vrot.lane.b32.xlu0 %v3076, 64
      %v3132 = vpop.permute.xlu0 %3131
      %3133 = vrot.lane.b32.xlu0 %v3079, 64
      %v3134 = vpop.permute.xlu0 %3133
      %3135 = vrot.lane.b32.xlu0 %v3082, 64
      %v3136 = vpop.permute.xlu0 %3135
      %3137 = vrot.lane.b32.xlu0 %v3085, 64
      %v3138 = vpop.permute.xlu0 %3137
      %3139 = vrot.lane.b32.xlu0 %v3088, 64
      %v3140 = vpop.permute.xlu0 %3139
      %3141 = vrot.lane.b32.xlu0 %v3091, 64
      %v3142 = vpop.permute.xlu0 %3141
      %3143 = vrot.lane.b32.xlu0 %v3094, 64
      %v3144 = vpop.permute.xlu0 %3143
      %3145 = vrot.lane.b32.xlu0 %v3097, 64
      %v3146 = vpop.permute.xlu0 %3145
      %3147 = vrot.lane.b32.xlu0 %v3100, 64
      %v3148 = vpop.permute.xlu0 %3147
      %3149 = vrot.lane.b32.xlu0 %v3103, 64
      %v3150 = vpop.permute.xlu0 %3149
      %3151 = vrot.lane.b32.xlu0 %v3106, 64
      %v3152 = vpop.permute.xlu0 %3151
      %3153 = vrot.lane.b32.xlu0 %v3109, 64
      %v3154 = vpop.permute.xlu0 %3153
      %3155 = vrot.lane.b32.xlu0 %v3112, 64
      %v3156 = vpop.permute.xlu0 %3155
      %3157 = vrot.lane.b32.xlu0 %v3115, 64
      %v3158 = vpop.permute.xlu0 %3157
      %3159 = vrot.lane.b32.xlu0 %v3118, 64
      %v3160 = vpop.permute.xlu0 %3159
      %3161 = vrot.lane.b32.xlu0 %v3121, 64
      %v3162 = vpop.permute.xlu0 %3161
      %3163 = vrot.lane.b32.xlu0 %v3124, 64
      %v3164 = vpop.permute.xlu0 %3163
      %3166 = vrot.lane.b32.xlu0 %v2702, 96
      %v3167 = vpop.permute.xlu0 %3166
      %3168 = vrot.lane.b32.xlu0 %v2703, 96
      %v3169 = vpop.permute.xlu0 %3168
      %3170 = vrot.lane.b32.xlu0 %v2704, 96
      %v3171 = vpop.permute.xlu0 %3170
      %3172 = vrot.lane.b32.xlu0 %v2705, 96
      %v3173 = vpop.permute.xlu0 %3172
      %3174 = vrot.lane.b32.xlu0 %v2706, 96
      %v3175 = vpop.permute.xlu0 %3174
      %3176 = vrot.lane.b32.xlu0 %v2707, 96
      %v3177 = vpop.permute.xlu0 %3176
      %3178 = vrot.lane.b32.xlu0 %v2708, 96
      %v3179 = vpop.permute.xlu0 %3178
      %3180 = vrot.lane.b32.xlu0 %v2709, 96
      %v3181 = vpop.permute.xlu0 %3180
      %3182 = vrot.lane.b32.xlu0 %v2710, 96
      %v3183 = vpop.permute.xlu0 %3182
      %3184 = vrot.lane.b32.xlu0 %v2711, 96
      %v3185 = vpop.permute.xlu0 %3184
      %3186 = vrot.lane.b32.xlu0 %v2712, 96
      %v3187 = vpop.permute.xlu0 %3186
      %3188 = vrot.lane.b32.xlu0 %v2713, 96
      %v3189 = vpop.permute.xlu0 %3188
      %3190 = vrot.lane.b32.xlu0 %v2714, 96
      %v3191 = vpop.permute.xlu0 %3190
      %3192 = vrot.lane.b32.xlu0 %v2715, 96
      %v3193 = vpop.permute.xlu0 %3192
      %3194 = vrot.lane.b32.xlu0 %v2716, 96
      %v3195 = vpop.permute.xlu0 %3194
      %3196 = vrot.lane.b32.xlu0 %v2717, 96
      %v3197 = vpop.permute.xlu0 %3196
      %3198 = vrot.lane.b32.xlu0 %v2718, 96
      %v3199 = vpop.permute.xlu0 %3198
      %3200 = vrot.lane.b32.xlu0 %v2719, 96
      %v3201 = vpop.permute.xlu0 %3200
      %3202 = vrot.lane.b32.xlu0 %v2720, 96
      %v3203 = vpop.permute.xlu0 %3202
      %3204 = vrot.lane.b32.xlu0 %v2721, 96
      %v3205 = vpop.permute.xlu0 %3204
      %v3207 = vshrl.u32 %v2721, 16
      %v3209 = vshll.u32 %v2721, 16
      %v3211 = vrot.slane %v3209, 1
      %v3212 = vor.u32 %v3207, %v3211
      %v3214 = vshll.u32 %v2743, 16
      %v3216 = vrot.slane %v3214, 1
      %v3217 = vsel %vm762, %v3212, %v3216
      %v3219 = vrot.slane %v2721, 1
      %v3220 = vrot.slane %v2743, 1
      %v3221 = vsel %vm1071, %v3219, %v3220
      %3222 = vrot.lane.b32.xlu0 %v3070, 32
      %v3223 = vpop.permute.xlu0 %3222
      %3224 = vrot.lane.b32.xlu0 %v3073, 32
      %v3225 = vpop.permute.xlu0 %3224
      %3226 = vrot.lane.b32.xlu0 %v3076, 32
      %v3227 = vpop.permute.xlu0 %3226
      %3228 = vrot.lane.b32.xlu0 %v3079, 32
      %v3229 = vpop.permute.xlu0 %3228
      %3230 = vrot.lane.b32.xlu0 %v3082, 32
      %v3231 = vpop.permute.xlu0 %3230
      %3232 = vrot.lane.b32.xlu0 %v3085, 32
      %v3233 = vpop.permute.xlu0 %3232
      %3234 = vrot.lane.b32.xlu0 %v3088, 32
      %v3235 = vpop.permute.xlu0 %3234
      %3236 = vrot.lane.b32.xlu0 %v3091, 32
      %v3237 = vpop.permute.xlu0 %3236
      %3238 = vrot.lane.b32.xlu0 %v3094, 32
      %v3239 = vpop.permute.xlu0 %3238
      %3240 = vrot.lane.b32.xlu0 %v3097, 32
      %v3241 = vpop.permute.xlu0 %3240
      %3242 = vrot.lane.b32.xlu0 %v3100, 32
      %v3243 = vpop.permute.xlu0 %3242
      %3244 = vrot.lane.b32.xlu0 %v3103, 32
      %v3245 = vpop.permute.xlu0 %3244
      %3246 = vrot.lane.b32.xlu0 %v3106, 32
      %v3247 = vpop.permute.xlu0 %3246
      %3248 = vrot.lane.b32.xlu0 %v3109, 32
      %v3249 = vpop.permute.xlu0 %3248
      %3250 = vrot.lane.b32.xlu0 %v3112, 32
      %v3251 = vpop.permute.xlu0 %3250
      %3252 = vrot.lane.b32.xlu0 %v3115, 32
      %v3253 = vpop.permute.xlu0 %3252
      %3254 = vrot.lane.b32.xlu0 %v3118, 32
      %v3255 = vpop.permute.xlu0 %3254
      %3256 = vrot.lane.b32.xlu0 %v3121, 32
      %v3257 = vpop.permute.xlu0 %3256
      %3258 = vrot.lane.b32.xlu0 %v3124, 32
      %v3259 = vpop.permute.xlu0 %3258
      %3260 = vrot.lane.b32.xlu0 %v3221, 32
      %v3261 = vpop.permute.xlu0 %3260
      %3263 = vrot.lane.b32.xlu0 %v2703, 64
      %v3264 = vpop.permute.xlu0 %3263
      %3265 = vrot.lane.b32.xlu0 %v2704, 64
      %v3266 = vpop.permute.xlu0 %3265
      %3267 = vrot.lane.b32.xlu0 %v2705, 64
      %v3268 = vpop.permute.xlu0 %3267
      %3269 = vrot.lane.b32.xlu0 %v2706, 64
      %v3270 = vpop.permute.xlu0 %3269
      %3271 = vrot.lane.b32.xlu0 %v2707, 64
      %v3272 = vpop.permute.xlu0 %3271
      %3273 = vrot.lane.b32.xlu0 %v2708, 64
      %v3274 = vpop.permute.xlu0 %3273
      %3275 = vrot.lane.b32.xlu0 %v2709, 64
      %v3276 = vpop.permute.xlu0 %3275
      %3277 = vrot.lane.b32.xlu0 %v2710, 64
      %v3278 = vpop.permute.xlu0 %3277
      %3279 = vrot.lane.b32.xlu0 %v2711, 64
      %v3280 = vpop.permute.xlu0 %3279
      %3281 = vrot.lane.b32.xlu0 %v2712, 64
      %v3282 = vpop.permute.xlu0 %3281
      %3283 = vrot.lane.b32.xlu0 %v2713, 64
      %v3284 = vpop.permute.xlu0 %3283
      %3285 = vrot.lane.b32.xlu0 %v2714, 64
      %v3286 = vpop.permute.xlu0 %3285
      %3287 = vrot.lane.b32.xlu0 %v2715, 64
      %v3288 = vpop.permute.xlu0 %3287
      %3289 = vrot.lane.b32.xlu0 %v2716, 64
      %v3290 = vpop.permute.xlu0 %3289
      %3291 = vrot.lane.b32.xlu0 %v2717, 64
      %v3292 = vpop.permute.xlu0 %3291
      %3293 = vrot.lane.b32.xlu0 %v2718, 64
      %v3294 = vpop.permute.xlu0 %3293
      %3295 = vrot.lane.b32.xlu0 %v2719, 64
      %v3296 = vpop.permute.xlu0 %3295
      %3297 = vrot.lane.b32.xlu0 %v2720, 64
      %v3298 = vpop.permute.xlu0 %3297
      %3299 = vrot.lane.b32.xlu0 %v2721, 64
      %v3300 = vpop.permute.xlu0 %3299
      %3301 = vrot.lane.b32.xlu0 %v2722, 64
      %v3302 = vpop.permute.xlu0 %3301
      %v3304 = vshrl.u32 %v2722, 16
      %v3306 = vshll.u32 %v2722, 16
      %v3308 = vrot.slane %v3306, 1
      %v3309 = vor.u32 %v3304, %v3308
      %v3311 = vshll.u32 %v2744, 16
      %v3313 = vrot.slane %v3311, 1
      %v3314 = vsel %vm762, %v3309, %v3313
      %3315 = vrot.lane.b32.xlu0 %v2780, 96
      %v3316 = vpop.permute.xlu0 %3315
      %3317 = vrot.lane.b32.xlu0 %v2792, 96
      %v3318 = vpop.permute.xlu0 %3317
      %3319 = vrot.lane.b32.xlu0 %v2804, 96
      %v3320 = vpop.permute.xlu0 %3319
      %3321 = vrot.lane.b32.xlu0 %v2816, 96
      %v3322 = vpop.permute.xlu0 %3321
      %3323 = vrot.lane.b32.xlu0 %v2828, 96
      %v3324 = vpop.permute.xlu0 %3323
      %3325 = vrot.lane.b32.xlu0 %v2840, 96
      %v3326 = vpop.permute.xlu0 %3325
      %3327 = vrot.lane.b32.xlu0 %v2852, 96
      %v3328 = vpop.permute.xlu0 %3327
      %3329 = vrot.lane.b32.xlu0 %v2864, 96
      %v3330 = vpop.permute.xlu0 %3329
      %3331 = vrot.lane.b32.xlu0 %v2876, 96
      %v3332 = vpop.permute.xlu0 %3331
      %3333 = vrot.lane.b32.xlu0 %v2888, 96
      %v3334 = vpop.permute.xlu0 %3333
      %3335 = vrot.lane.b32.xlu0 %v2900, 96
      %v3336 = vpop.permute.xlu0 %3335
      %3337 = vrot.lane.b32.xlu0 %v2912, 96
      %v3338 = vpop.permute.xlu0 %3337
      %3339 = vrot.lane.b32.xlu0 %v2924, 96
      %v3340 = vpop.permute.xlu0 %3339
      %3341 = vrot.lane.b32.xlu0 %v2936, 96
      %v3342 = vpop.permute.xlu0 %3341
      %3343 = vrot.lane.b32.xlu0 %v2948, 96
      %v3344 = vpop.permute.xlu0 %3343
      %3345 = vrot.lane.b32.xlu0 %v2960, 96
      %v3346 = vpop.permute.xlu0 %3345
      %3347 = vrot.lane.b32.xlu0 %v2972, 96
      %v3348 = vpop.permute.xlu0 %3347
      %3349 = vrot.lane.b32.xlu0 %v2984, 96
      %v3350 = vpop.permute.xlu0 %3349
      %3351 = vrot.lane.b32.xlu0 %v3217, 96
      %v3352 = vpop.permute.xlu0 %3351
      %3353 = vrot.lane.b32.xlu0 %v3314, 96
      %v3354 = vpop.permute.xlu0 %3353
      %v3356 = vrot.slane %v2722, 1
      %v3357 = vrot.slane %v2744, 1
      %v3358 = vsel %vm1071, %v3356, %v3357
      %vm3359 = vcmask 261120
      %v3361 = vsel %vm3359, %v2701, %v2986
      %v3363 = vsel %vm3359, %v2702, %v2988
      %v3365 = vsel %vm3359, %v2703, %v2990
      %v3367 = vsel %vm3359, %v2704, %v2992
      %v3369 = vsel %vm3359, %v2705, %v2994
      %v3371 = vsel %vm3359, %v2706, %v2996
      %v3373 = vsel %vm3359, %v2707, %v2998
      %v3375 = vsel %vm3359, %v2708, %v3000
      %v3377 = vsel %vm3359, %v2709, %v3002
      %v3379 = vsel %vm3359, %v2710, %v3004
      %v3381 = vsel %vm3359, %v2711, %v3006
      %v3383 = vsel %vm3359, %v2712, %v3008
      %v3385 = vsel %vm3359, %v2713, %v3010
      %v3387 = vsel %vm3359, %v2714, %v3012
      %v3389 = vsel %vm3359, %v2715, %v3014
      %v3391 = vsel %vm3359, %v2716, %v3016
      %v3393 = vsel %vm3359, %v2717, %v3018
      %v3395 = vsel %vm3359, %v2718, %v3020
      %v3397 = vsel %vm3359, %v2719, %v3022
      %v3399 = vsel %vm3359, %v2720, %v3024
      %vm3400 = vcmask 523264
      %v3402 = vsel %vm3400, %v3361, %v3126
      %v3404 = vsel %vm3400, %v3363, %v3128
      %v3406 = vsel %vm3400, %v3365, %v3130
      %v3408 = vsel %vm3400, %v3367, %v3132
      %v3410 = vsel %vm3400, %v3369, %v3134
      %v3412 = vsel %vm3400, %v3371, %v3136
      %v3414 = vsel %vm3400, %v3373, %v3138
      %v3416 = vsel %vm3400, %v3375, %v3140
      %v3418 = vsel %vm3400, %v3377, %v3142
      %v3420 = vsel %vm3400, %v3379, %v3144
      %v3422 = vsel %vm3400, %v3381, %v3146
      %v3424 = vsel %vm3400, %v3383, %v3148
      %v3426 = vsel %vm3400, %v3385, %v3150
      %v3428 = vsel %vm3400, %v3387, %v3152
      %v3430 = vsel %vm3400, %v3389, %v3154
      %v3432 = vsel %vm3400, %v3391, %v3156
      %v3434 = vsel %vm3400, %v3393, %v3158
      %v3436 = vsel %vm3400, %v3395, %v3160
      %v3438 = vsel %vm3400, %v3397, %v3162
      %v3440 = vsel %vm3400, %v3399, %v3164
      %vm3441 = vcmask 785408
      %v3443 = vsel %vm3441, %v3402, %v3167
      %v3446 = vsel %vm3441, %v3404, %v3169
      %v3449 = vsel %vm3441, %v3406, %v3171
      %v3452 = vsel %vm3441, %v3408, %v3173
      %v3455 = vsel %vm3441, %v3410, %v3175
      %v3458 = vsel %vm3441, %v3412, %v3177
      %v3461 = vsel %vm3441, %v3414, %v3179
      %v3464 = vsel %vm3441, %v3416, %v3181
      %v3467 = vsel %vm3441, %v3418, %v3183
      %v3470 = vsel %vm3441, %v3420, %v3185
      %v3473 = vsel %vm3441, %v3422, %v3187
      %v3476 = vsel %vm3441, %v3424, %v3189
      %v3479 = vsel %vm3441, %v3426, %v3191
      %v3482 = vsel %vm3441, %v3428, %v3193
      %v3485 = vsel %vm3441, %v3430, %v3195
      %v3488 = vsel %vm3441, %v3432, %v3197
      %v3491 = vsel %vm3441, %v3434, %v3199
      %v3494 = vsel %vm3441, %v3436, %v3201
      %v3497 = vsel %vm3441, %v3438, %v3203
      %v3500 = vsel %vm3441, %v3440, %v3205
      %v3504 = vsel %vm3359, %v2768, %v3223
      %v3507 = vsel %vm3359, %v2780, %v3225
      %v3510 = vsel %vm3359, %v2792, %v3227
      %v3513 = vsel %vm3359, %v2804, %v3229
      %v3516 = vsel %vm3359, %v2816, %v3231
      %v3519 = vsel %vm3359, %v2828, %v3233
      %v3522 = vsel %vm3359, %v2840, %v3235
      %v3525 = vsel %vm3359, %v2852, %v3237
      %v3528 = vsel %vm3359, %v2864, %v3239
      %v3531 = vsel %vm3359, %v2876, %v3241
      %v3534 = vsel %vm3359, %v2888, %v3243
      %v3537 = vsel %vm3359, %v2900, %v3245
      %v3540 = vsel %vm3359, %v2912, %v3247
      %v3543 = vsel %vm3359, %v2924, %v3249
      %v3546 = vsel %vm3359, %v2936, %v3251
      %v3549 = vsel %vm3359, %v2948, %v3253
      %v3552 = vsel %vm3359, %v2960, %v3255
      %v3555 = vsel %vm3359, %v2972, %v3257
      %v3558 = vsel %vm3359, %v2984, %v3259
      %v3561 = vsel %vm3359, %v3217, %v3261
      %v3563 = vsel %vm3400, %v3504, %v3264
      %v3565 = vsel %vm3400, %v3507, %v3266
      %v3567 = vsel %vm3400, %v3510, %v3268
      %v3569 = vsel %vm3400, %v3513, %v3270
      %v3571 = vsel %vm3400, %v3516, %v3272
      %v3573 = vsel %vm3400, %v3519, %v3274
      %v3575 = vsel %vm3400, %v3522, %v3276
      %v3577 = vsel %vm3400, %v3525, %v3278
      %v3579 = vsel %vm3400, %v3528, %v3280
      %v3581 = vsel %vm3400, %v3531, %v3282
      %v3583 = vsel %vm3400, %v3534, %v3284
      %v3585 = vsel %vm3400, %v3537, %v3286
      %v3587 = vsel %vm3400, %v3540, %v3288
      %v3589 = vsel %vm3400, %v3543, %v3290
      %v3591 = vsel %vm3400, %v3546, %v3292
      %v3593 = vsel %vm3400, %v3549, %v3294
      %v3595 = vsel %vm3400, %v3552, %v3296
      %v3597 = vsel %vm3400, %v3555, %v3298
      %v3599 = vsel %vm3400, %v3558, %v3300
      %v3601 = vsel %vm3400, %v3561, %v3302
      %v3603 = vsel %vm3441, %v3563, %v3316
      %v3606 = vsel %vm3441, %v3565, %v3318
      %v3609 = vsel %vm3441, %v3567, %v3320
      %v3612 = vsel %vm3441, %v3569, %v3322
      %v3615 = vsel %vm3441, %v3571, %v3324
      %v3618 = vsel %vm3441, %v3573, %v3326
      %v3621 = vsel %vm3441, %v3575, %v3328
      %v3624 = vsel %vm3441, %v3577, %v3330
      %v3627 = vsel %vm3441, %v3579, %v3332
      %v3630 = vsel %vm3441, %v3581, %v3334
      %v3633 = vsel %vm3441, %v3583, %v3336
      %v3636 = vsel %vm3441, %v3585, %v3338
      %v3639 = vsel %vm3441, %v3587, %v3340
      %v3642 = vsel %vm3441, %v3589, %v3342
      %v3645 = vsel %vm3441, %v3591, %v3344
      %v3648 = vsel %vm3441, %v3593, %v3346
      %v3651 = vsel %vm3441, %v3595, %v3348
      %v3654 = vsel %vm3441, %v3597, %v3350
      %v3657 = vsel %vm3441, %v3599, %v3352
      %v3660 = vsel %vm3441, %v3601, %v3354
      %v3663 = vperm.slane %v2345, 0
      %v3701 = vunpack.c.l.b16 %v2309
      %v3702 = vunpack.c.l.b16 %v2310
      %v3703 = vunpack.c.l.b16 %v2311
      %v3704 = vunpack.c.l.b16 %v2312
      %v3705 = vunpack.c.l.b16 %v2313
      %v3706 = vunpack.c.l.b16 %v2314
      %v3707 = vunpack.c.l.b16 %v2315
      %v3708 = vunpack.c.l.b16 %v2316
      %v3709 = vunpack.c.l.b16 %v2317
      %v3710 = vunpack.c.l.b16 %v2318
      %v3711 = vunpack.c.l.b16 %v2319
      %v3712 = vunpack.c.l.b16 %v2320
      %v3713 = vunpack.c.l.b16 %v2321
      %v3714 = vunpack.c.l.b16 %v2322
      %v3715 = vunpack.c.l.b16 %v2323
      %v3716 = vunpack.c.l.b16 %v2324
      %v3717 = vunpack.c.l.b16 %v2325
      %v3718 = vunpack.c.l.b16 %v2326
      %v3719 = vunpack.c.l.b16 %v2327
      %v3720 = vunpack.c.l.b16 %v2328
      %v3721 = vunpack.c.l.b16 %v2329
      %v3722 = vunpack.c.l.b16 %v2330
      %v3723 = vunpack.c.l.b16 %v2331
      %v3724 = vunpack.c.l.b16 %v2332
      %v3725 = vunpack.c.l.b16 %v2333
      %v3726 = vunpack.c.l.b16 %v2334
      %v3727 = vunpack.c.l.b16 %v2335
      %v3728 = vunpack.c.l.b16 %v2336
      %v3729 = vunpack.c.l.b16 %v2337
      %v3730 = vunpack.c.l.b16 %v2338
      %v3731 = vunpack.c.l.b16 %v2339
      %v3732 = vunpack.c.l.b16 %v2340
      %v3733 = vunpack.c.l.b16 %v2341
      %v3734 = vunpack.c.l.b16 %v2342
      %v3735 = vunpack.c.l.b16 %v2343
      %v3736 = vunpack.c.l.b16 %v2344
      %v3737 = vpack.c.b16 %v3702, %v3701
      %v3738 = vpack.c.b16 %v3704, %v3703
      %v3739 = vpack.c.b16 %v3706, %v3705
      %v3740 = vpack.c.b16 %v3708, %v3707
      %v3741 = vpack.c.b16 %v3710, %v3709
      %v3742 = vpack.c.b16 %v3712, %v3711
      %v3743 = vpack.c.b16 %v3714, %v3713
      %v3744 = vpack.c.b16 %v3716, %v3715
      %v3745 = vpack.c.b16 %v3718, %v3717
      %v3746 = vpack.c.b16 %v3720, %v3719
      %v3747 = vpack.c.b16 %v3722, %v3721
      %v3748 = vpack.c.b16 %v3724, %v3723
      %v3749 = vpack.c.b16 %v3726, %v3725
      %v3750 = vpack.c.b16 %v3728, %v3727
      %v3751 = vpack.c.b16 %v3730, %v3729
      %v3752 = vpack.c.b16 %v3732, %v3731
      %v3753 = vpack.c.b16 %v3734, %v3733
      %v3754 = vpack.c.b16 %v3736, %v3735
      %v3774 = vsel %vm3359, %v3073, 0
      %v3777 = vsel %vm3359, %v3076, 0
      %v3780 = vsel %vm3359, %v3079, 0
      %v3783 = vsel %vm3359, %v3082, 0
      %v3786 = vsel %vm3359, %v3085, 0
      %v3789 = vsel %vm3359, %v3088, 0
      %v3792 = vsel %vm3359, %v3091, 0
      %v3795 = vsel %vm3359, %v3094, 0
      %v3798 = vsel %vm3359, %v3097, 0
      %v3801 = vsel %vm3359, %v3100, 0
      %v3804 = vsel %vm3359, %v3103, 0
      %v3807 = vsel %vm3359, %v3106, 0
      %v3810 = vsel %vm3359, %v3109, 0
      %v3813 = vsel %vm3359, %v3112, 0
      %v3816 = vsel %vm3359, %v3115, 0
      %v3819 = vsel %vm3359, %v3118, 0
      %v3822 = vsel %vm3359, %v3121, 0
      %v3825 = vsel %vm3359, %v3124, 0
      %v3828 = vsel %vm3359, %v3221, 0
      %v3831 = vsel %vm3359, %v3358, 0
      %3833 = vmatpush.bf16.msra.mxu0 %v3744
      %3834 = vmatpush.bf16.msra.mxu0 %v3743
      %3835 = vmatpush.bf16.msra.mxu0 %v3742
      %3836 = vmatpush.bf16.msra.mxu0 %v3741
      %3837 = vmatpush.bf16.msra.mxu0 %v3740
      %3838 = vmatpush.bf16.msra.mxu0 %v3739
      %3839 = vmatpush.bf16.msra.mxu0 %v3738
      %3840 = vmatpush.bf16.msra.mxu0 %v3737
      %3841 = vmatmul.bf16.gmra.mxu0 %v3443
      %v3842 = vpop.f32.mrf.mxu0
      %v3843 = vadd.f32 %v3663, %v3842
      %v3844 = vpop.f32.mrf.mxu0
      %v3845 = vadd.f32 %v3663, %v3844
      %3846 = vmatmul.bf16.gmra.mxu0 %v3446
      %v3847 = vpop.f32.mrf.mxu0
      %v3848 = vadd.f32 %v3663, %v3847
      %v3849 = vpop.f32.mrf.mxu0
      %v3850 = vadd.f32 %v3663, %v3849
      %3851 = vmatmul.bf16.gmra.mxu0 %v3449
      %v3852 = vpop.f32.mrf.mxu0
      %v3853 = vadd.f32 %v3663, %v3852
      %v3854 = vpop.f32.mrf.mxu0
      %v3855 = vadd.f32 %v3663, %v3854
      %3856 = vmatmul.bf16.gmra.mxu0 %v3452
      %v3857 = vpop.f32.mrf.mxu0
      %v3858 = vadd.f32 %v3663, %v3857
      %v3859 = vpop.f32.mrf.mxu0
      %v3860 = vadd.f32 %v3663, %v3859
      %3861 = vmatmul.bf16.gmra.mxu0 %v3455
      %v3862 = vpop.f32.mrf.mxu0
      %v3863 = vadd.f32 %v3663, %v3862
      %v3864 = vpop.f32.mrf.mxu0
      %v3865 = vadd.f32 %v3663, %v3864
      %3866 = vmatmul.bf16.gmra.mxu0 %v3458
      %v3867 = vpop.f32.mrf.mxu0
      %v3868 = vadd.f32 %v3663, %v3867
      %v3869 = vpop.f32.mrf.mxu0
      %v3870 = vadd.f32 %v3663, %v3869
      %3871 = vmatmul.bf16.gmra.mxu0 %v3461
      %v3872 = vpop.f32.mrf.mxu0
      %v3873 = vadd.f32 %v3663, %v3872
      %v3874 = vpop.f32.mrf.mxu0
      %v3875 = vadd.f32 %v3663, %v3874
      %3876 = vmatmul.bf16.gmra.mxu0 %v3464
      %v3877 = vpop.f32.mrf.mxu0
      %v3878 = vadd.f32 %v3663, %v3877
      %v3879 = vpop.f32.mrf.mxu0
      %v3880 = vadd.f32 %v3663, %v3879
      %3881 = vmatmul.bf16.gmra.mxu0 %v3467
      %v3882 = vpop.f32.mrf.mxu0
      %v3883 = vadd.f32 %v3663, %v3882
      %v3884 = vpop.f32.mrf.mxu0
      %v3885 = vadd.f32 %v3663, %v3884
      %3886 = vmatmul.bf16.gmra.mxu0 %v3470
      %v3887 = vpop.f32.mrf.mxu0
      %v3888 = vadd.f32 %v3663, %v3887
      %v3889 = vpop.f32.mrf.mxu0
      %v3890 = vadd.f32 %v3663, %v3889
      %3891 = vmatmul.bf16.gmra.mxu0 %v3473
      %v3892 = vpop.f32.mrf.mxu0
      %v3893 = vadd.f32 %v3663, %v3892
      %v3894 = vpop.f32.mrf.mxu0
      %v3895 = vadd.f32 %v3663, %v3894
      %3896 = vmatmul.bf16.gmra.mxu0 %v3476
      %v3897 = vpop.f32.mrf.mxu0
      %v3898 = vadd.f32 %v3663, %v3897
      %v3899 = vpop.f32.mrf.mxu0
      %v3900 = vadd.f32 %v3663, %v3899
      %3901 = vmatmul.bf16.gmra.mxu0 %v3479
      %v3902 = vpop.f32.mrf.mxu0
      %v3903 = vadd.f32 %v3663, %v3902
      %v3904 = vpop.f32.mrf.mxu0
      %v3905 = vadd.f32 %v3663, %v3904
      %3906 = vmatmul.bf16.gmra.mxu0 %v3482
      %v3907 = vpop.f32.mrf.mxu0
      %v3908 = vadd.f32 %v3663, %v3907
      %v3909 = vpop.f32.mrf.mxu0
      %v3910 = vadd.f32 %v3663, %v3909
      %3911 = vmatmul.bf16.gmra.mxu0 %v3485
      %v3912 = vpop.f32.mrf.mxu0
      %v3913 = vadd.f32 %v3663, %v3912
      %v3914 = vpop.f32.mrf.mxu0
      %v3915 = vadd.f32 %v3663, %v3914
      %3916 = vmatmul.bf16.gmra.mxu0 %v3488
      %v3917 = vpop.f32.mrf.mxu0
      %v3918 = vadd.f32 %v3663, %v3917
      %v3919 = vpop.f32.mrf.mxu0
      %v3920 = vadd.f32 %v3663, %v3919
      %3921 = vmatmul.bf16.gmra.mxu0 %v3491
      %v3922 = vpop.f32.mrf.mxu0
      %v3923 = vadd.f32 %v3663, %v3922
      %v3924 = vpop.f32.mrf.mxu0
      %v3925 = vadd.f32 %v3663, %v3924
      %3926 = vmatmul.bf16.gmra.mxu0 %v3494
      %v3927 = vpop.f32.mrf.mxu0
      %v3928 = vadd.f32 %v3663, %v3927
      %v3929 = vpop.f32.mrf.mxu0
      %v3930 = vadd.f32 %v3663, %v3929
      %3931 = vmatmul.bf16.gmra.mxu0 %v3497
      %v3932 = vpop.f32.mrf.mxu0
      %v3933 = vadd.f32 %v3663, %v3932
      %v3934 = vpop.f32.mrf.mxu0
      %v3935 = vadd.f32 %v3663, %v3934
      %3936 = vmatmul.bf16.gmra.mxu0 %v3500
      %v3937 = vpop.f32.mrf.mxu0
      %v3938 = vadd.f32 %v3663, %v3937
      %v3939 = vpop.f32.mrf.mxu0
      %v3940 = vadd.f32 %v3663, %v3939
      %3941 = vdwg.mxu0
      %3942 = vmatpush.bf16.msra.mxu0 %v3752
      %3943 = vmatpush.bf16.msra.mxu0 %v3751
      %3944 = vmatpush.bf16.msra.mxu0 %v3750
      %3945 = vmatpush.bf16.msra.mxu0 %v3749
      %3946 = vmatpush.bf16.msra.mxu0 %v3748
      %3947 = vmatpush.bf16.msra.mxu0 %v3747
      %3948 = vmatpush.bf16.msra.mxu0 %v3746
      %3949 = vmatpush.bf16.msra.mxu0 %v3745
      %3950 = vmatmul.bf16.gmra.mxu0 %v3603
      %v3951 = vpop.f32.mrf.mxu0
      %v3952 = vadd.f32 %v3843, %v3951
      %v3953 = vpop.f32.mrf.mxu0
      %v3954 = vadd.f32 %v3845, %v3953
      %3955 = vmatmul.bf16.gmra.mxu0 %v3606
      %v3956 = vpop.f32.mrf.mxu0
      %v3957 = vadd.f32 %v3848, %v3956
      %v3958 = vpop.f32.mrf.mxu0
      %v3959 = vadd.f32 %v3850, %v3958
      %3960 = vmatmul.bf16.gmra.mxu0 %v3609
      %v3961 = vpop.f32.mrf.mxu0
      %v3962 = vadd.f32 %v3853, %v3961
      %v3963 = vpop.f32.mrf.mxu0
      %v3964 = vadd.f32 %v3855, %v3963
      %3965 = vmatmul.bf16.gmra.mxu0 %v3612
      %v3966 = vpop.f32.mrf.mxu0
      %v3967 = vadd.f32 %v3858, %v3966
      %v3968 = vpop.f32.mrf.mxu0
      %v3969 = vadd.f32 %v3860, %v3968
      %3970 = vmatmul.bf16.gmra.mxu0 %v3615
      %v3971 = vpop.f32.mrf.mxu0
      %v3972 = vadd.f32 %v3863, %v3971
      %v3973 = vpop.f32.mrf.mxu0
      %v3974 = vadd.f32 %v3865, %v3973
      %3975 = vmatmul.bf16.gmra.mxu0 %v3618
      %v3976 = vpop.f32.mrf.mxu0
      %v3977 = vadd.f32 %v3868, %v3976
      %v3978 = vpop.f32.mrf.mxu0
      %v3979 = vadd.f32 %v3870, %v3978
      %3980 = vmatmul.bf16.gmra.mxu0 %v3621
      %v3981 = vpop.f32.mrf.mxu0
      %v3982 = vadd.f32 %v3873, %v3981
      %v3983 = vpop.f32.mrf.mxu0
      %v3984 = vadd.f32 %v3875, %v3983
      %3985 = vmatmul.bf16.gmra.mxu0 %v3624
      %v3986 = vpop.f32.mrf.mxu0
      %v3987 = vadd.f32 %v3878, %v3986
      %v3988 = vpop.f32.mrf.mxu0
      %v3989 = vadd.f32 %v3880, %v3988
      %3990 = vmatmul.bf16.gmra.mxu0 %v3627
      %v3991 = vpop.f32.mrf.mxu0
      %v3992 = vadd.f32 %v3883, %v3991
      %v3993 = vpop.f32.mrf.mxu0
      %v3994 = vadd.f32 %v3885, %v3993
      %3995 = vmatmul.bf16.gmra.mxu0 %v3630
      %v3996 = vpop.f32.mrf.mxu0
      %v3997 = vadd.f32 %v3888, %v3996
      %v3998 = vpop.f32.mrf.mxu0
      %v3999 = vadd.f32 %v3890, %v3998
      %4000 = vmatmul.bf16.gmra.mxu0 %v3633
      %v4001 = vpop.f32.mrf.mxu0
      %v4002 = vadd.f32 %v3893, %v4001
      %v4003 = vpop.f32.mrf.mxu0
      %v4004 = vadd.f32 %v3895, %v4003
      %4005 = vmatmul.bf16.gmra.mxu0 %v3636
      %v4006 = vpop.f32.mrf.mxu0
      %v4007 = vadd.f32 %v3898, %v4006
      %v4008 = vpop.f32.mrf.mxu0
      %v4009 = vadd.f32 %v3900, %v4008
      %4010 = vmatmul.bf16.gmra.mxu0 %v3639
      %v4011 = vpop.f32.mrf.mxu0
      %v4012 = vadd.f32 %v3903, %v4011
      %v4013 = vpop.f32.mrf.mxu0
      %v4014 = vadd.f32 %v3905, %v4013
      %4015 = vmatmul.bf16.gmra.mxu0 %v3642
      %v4016 = vpop.f32.mrf.mxu0
      %v4017 = vadd.f32 %v3908, %v4016
      %v4018 = vpop.f32.mrf.mxu0
      %v4019 = vadd.f32 %v3910, %v4018
      %4020 = vmatmul.bf16.gmra.mxu0 %v3645
      %v4021 = vpop.f32.mrf.mxu0
      %v4022 = vadd.f32 %v3913, %v4021
      %v4023 = vpop.f32.mrf.mxu0
      %v4024 = vadd.f32 %v3915, %v4023
      %4025 = vmatmul.bf16.gmra.mxu0 %v3648
      %v4026 = vpop.f32.mrf.mxu0
      %v4027 = vadd.f32 %v3918, %v4026
      %v4028 = vpop.f32.mrf.mxu0
      %v4029 = vadd.f32 %v3920, %v4028
      %4030 = vmatmul.bf16.gmra.mxu0 %v3651
      %v4031 = vpop.f32.mrf.mxu0
      %v4032 = vadd.f32 %v3923, %v4031
      %v4033 = vpop.f32.mrf.mxu0
      %v4034 = vadd.f32 %v3925, %v4033
      %4035 = vmatmul.bf16.gmra.mxu0 %v3654
      %v4036 = vpop.f32.mrf.mxu0
      %v4037 = vadd.f32 %v3928, %v4036
      %v4038 = vpop.f32.mrf.mxu0
      %v4039 = vadd.f32 %v3930, %v4038
      %4040 = vmatmul.bf16.gmra.mxu0 %v3657
      %v4041 = vpop.f32.mrf.mxu0
      %v4042 = vadd.f32 %v3933, %v4041
      %v4043 = vpop.f32.mrf.mxu0
      %v4044 = vadd.f32 %v3935, %v4043
      %4045 = vmatmul.bf16.gmra.mxu0 %v3660
      %v4046 = vpop.f32.mrf.mxu0
      %v4047 = vadd.f32 %v3938, %v4046
      %v4048 = vpop.f32.mrf.mxu0
      %v4049 = vadd.f32 %v3940, %v4048
      %4050 = vdwg.mxu0
      %4051 = vmatpush.bf16.msra.mxu0 0
      %4052 = vmatpush.bf16.msra.mxu0 0
      %4053 = vmatpush.bf16.msra.mxu0 0
      %4054 = vmatpush.bf16.msra.mxu0 0
      %4055 = vmatpush.bf16.msra.mxu0 0
      %4056 = vmatpush.bf16.msra.mxu0 0
      %4057 = vmatpush.bf16.msra.mxu0 %v3754
      %4058 = vmatpush.bf16.msra.mxu0 %v3753
      %4059 = vmatmul.bf16.gmra.mxu0 %v3774
      %v4060 = vpop.f32.mrf.mxu0
      %v4061 = vadd.f32 %v3952, %v4060
      %v4062 = vpop.f32.mrf.mxu0
      %v4063 = vadd.f32 %v3954, %v4062
      %4064 = vmatmul.bf16.gmra.mxu0 %v3777
      %v4065 = vpop.f32.mrf.mxu0
      %v4066 = vadd.f32 %v3957, %v4065
      %v4067 = vpop.f32.mrf.mxu0
      %v4068 = vadd.f32 %v3959, %v4067
      %4069 = vmatmul.bf16.gmra.mxu0 %v3780
      %v4070 = vpop.f32.mrf.mxu0
      %v4071 = vadd.f32 %v3962, %v4070
      %v4072 = vpop.f32.mrf.mxu0
      %v4073 = vadd.f32 %v3964, %v4072
      %4074 = vmatmul.bf16.gmra.mxu0 %v3783
      %v4075 = vpop.f32.mrf.mxu0
      %v4076 = vadd.f32 %v3967, %v4075
      %v4077 = vpop.f32.mrf.mxu0
      %v4078 = vadd.f32 %v3969, %v4077
      %4079 = vmatmul.bf16.gmra.mxu0 %v3786
      %v4080 = vpop.f32.mrf.mxu0
      %v4081 = vadd.f32 %v3972, %v4080
      %v4082 = vpop.f32.mrf.mxu0
      %v4083 = vadd.f32 %v3974, %v4082
      %4084 = vmatmul.bf16.gmra.mxu0 %v3789
      %v4085 = vpop.f32.mrf.mxu0
      %v4086 = vadd.f32 %v3977, %v4085
      %v4087 = vpop.f32.mrf.mxu0
      %v4088 = vadd.f32 %v3979, %v4087
      %4089 = vmatmul.bf16.gmra.mxu0 %v3792
      %v4090 = vpop.f32.mrf.mxu0
      %v4091 = vadd.f32 %v3982, %v4090
      %v4092 = vpop.f32.mrf.mxu0
      %v4093 = vadd.f32 %v3984, %v4092
      %4094 = vmatmul.bf16.gmra.mxu0 %v3795
      %v4095 = vpop.f32.mrf.mxu0
      %v4096 = vadd.f32 %v3987, %v4095
      %v4097 = vpop.f32.mrf.mxu0
      %v4098 = vadd.f32 %v3989, %v4097
      %4099 = vmatmul.bf16.gmra.mxu0 %v3798
      %v4100 = vpop.f32.mrf.mxu0
      %v4101 = vadd.f32 %v3992, %v4100
      %v4102 = vpop.f32.mrf.mxu0
      %v4103 = vadd.f32 %v3994, %v4102
      %4104 = vmatmul.bf16.gmra.mxu0 %v3801
      %v4105 = vpop.f32.mrf.mxu0
      %v4106 = vadd.f32 %v3997, %v4105
      %v4107 = vpop.f32.mrf.mxu0
      %v4108 = vadd.f32 %v3999, %v4107
      %4109 = vmatmul.bf16.gmra.mxu0 %v3804
      %v4110 = vpop.f32.mrf.mxu0
      %v4111 = vadd.f32 %v4002, %v4110
      %v4112 = vpop.f32.mrf.mxu0
      %v4113 = vadd.f32 %v4004, %v4112
      %4114 = vmatmul.bf16.gmra.mxu0 %v3807
      %v4115 = vpop.f32.mrf.mxu0
      %v4116 = vadd.f32 %v4007, %v4115
      %v4117 = vpop.f32.mrf.mxu0
      %v4118 = vadd.f32 %v4009, %v4117
      %4119 = vmatmul.bf16.gmra.mxu0 %v3810
      %v4120 = vpop.f32.mrf.mxu0
      %v4121 = vadd.f32 %v4012, %v4120
      %v4122 = vpop.f32.mrf.mxu0
      %v4123 = vadd.f32 %v4014, %v4122
      %4124 = vmatmul.bf16.gmra.mxu0 %v3813
      %v4125 = vpop.f32.mrf.mxu0
      %v4126 = vadd.f32 %v4017, %v4125
      %v4127 = vpop.f32.mrf.mxu0
      %v4128 = vadd.f32 %v4019, %v4127
      %4129 = vmatmul.bf16.gmra.mxu0 %v3816
      %v4130 = vpop.f32.mrf.mxu0
      %v4131 = vadd.f32 %v4022, %v4130
      %v4132 = vpop.f32.mrf.mxu0
      %v4133 = vadd.f32 %v4024, %v4132
      %4134 = vmatmul.bf16.gmra.mxu0 %v3819
      %v4135 = vpop.f32.mrf.mxu0
      %v4136 = vadd.f32 %v4027, %v4135
      %v4137 = vpop.f32.mrf.mxu0
      %v4138 = vadd.f32 %v4029, %v4137
      %4139 = vmatmul.bf16.gmra.mxu0 %v3822
      %v4140 = vpop.f32.mrf.mxu0
      %v4141 = vadd.f32 %v4032, %v4140
      %v4142 = vpop.f32.mrf.mxu0
      %v4143 = vadd.f32 %v4034, %v4142
      %4144 = vmatmul.bf16.gmra.mxu0 %v3825
      %v4145 = vpop.f32.mrf.mxu0
      %v4146 = vadd.f32 %v4037, %v4145
      %v4147 = vpop.f32.mrf.mxu0
      %v4148 = vadd.f32 %v4039, %v4147
      %4149 = vmatmul.bf16.gmra.mxu0 %v3828
      %v4150 = vpop.f32.mrf.mxu0
      %v4151 = vadd.f32 %v4042, %v4150
      %v4152 = vpop.f32.mrf.mxu0
      %v4153 = vadd.f32 %v4044, %v4152
      %4154 = vmatmul.bf16.gmra.mxu0 %v3831
      %v4155 = vpop.f32.mrf.mxu0
      %v4156 = vadd.f32 %v4047, %v4155
      %v4157 = vpop.f32.mrf.mxu0
      %v4158 = vadd.f32 %v4049, %v4157
      %4159 = vdwg.mxu0
      %v4160 = vmul.f32 %v4061, 0.1
      %v4161 = vmul.f32 %v4063, 0.1
      %v4162 = vmul.f32 %v4066, 0.1
      %v4163 = vmul.f32 %v4068, 0.1
      %v4164 = vmul.f32 %v4071, 0.1
      %v4165 = vmul.f32 %v4073, 0.1
      %v4166 = vmul.f32 %v4076, 0.1
      %v4167 = vmul.f32 %v4078, 0.1
      %v4168 = vmul.f32 %v4081, 0.1
      %v4169 = vmul.f32 %v4083, 0.1
      %v4170 = vmul.f32 %v4086, 0.1
      %v4171 = vmul.f32 %v4088, 0.1
      %v4172 = vmul.f32 %v4091, 0.1
      %v4173 = vmul.f32 %v4093, 0.1
      %v4174 = vmul.f32 %v4096, 0.1
      %v4175 = vmul.f32 %v4098, 0.1
      %v4176 = vmul.f32 %v4101, 0.1
      %v4177 = vmul.f32 %v4103, 0.1
      %v4178 = vmul.f32 %v4106, 0.1
      %v4179 = vmul.f32 %v4108, 0.1
      %v4180 = vmul.f32 %v4111, 0.1
      %v4181 = vmul.f32 %v4113, 0.1
      %v4182 = vmul.f32 %v4116, 0.1
      %v4183 = vmul.f32 %v4118, 0.1
      %v4184 = vmul.f32 %v4121, 0.1
      %v4185 = vmul.f32 %v4123, 0.1
      %v4186 = vmul.f32 %v4126, 0.1
      %v4187 = vmul.f32 %v4128, 0.1
      %v4188 = vmul.f32 %v4131, 0.1
      %v4189 = vmul.f32 %v4133, 0.1
      %v4190 = vmul.f32 %v4136, 0.1
      %v4191 = vmul.f32 %v4138, 0.1
      %v4192 = vmul.f32 %v4141, 0.1
      %v4193 = vmul.f32 %v4143, 0.1
      %v4194 = vmul.f32 %v4146, 0.1
      %v4195 = vmul.f32 %v4148, 0.1
      %v4196 = vmul.f32 %v4151, 0.1
      %v4197 = vmul.f32 %v4153, 0.1
      %v4198 = vmul.f32 %v4156, 0.1
      %v4199 = vmul.f32 %v4158, 0.1
      %v4200 = vmax.f32 %v4061, %v4160
      %v4201 = vmax.f32 %v4063, %v4161
      %v4202 = vmax.f32 %v4066, %v4162
      %v4203 = vmax.f32 %v4068, %v4163
      %v4204 = vmax.f32 %v4071, %v4164
      %v4205 = vmax.f32 %v4073, %v4165
      %v4206 = vmax.f32 %v4076, %v4166
      %v4207 = vmax.f32 %v4078, %v4167
      %v4208 = vmax.f32 %v4081, %v4168
      %v4209 = vmax.f32 %v4083, %v4169
      %v4210 = vmax.f32 %v4086, %v4170
      %v4211 = vmax.f32 %v4088, %v4171
      %v4212 = vmax.f32 %v4091, %v4172
      %v4213 = vmax.f32 %v4093, %v4173
      %v4214 = vmax.f32 %v4096, %v4174
      %v4215 = vmax.f32 %v4098, %v4175
      %v4216 = vmax.f32 %v4101, %v4176
      %v4217 = vmax.f32 %v4103, %v4177
      %v4218 = vmax.f32 %v4106, %v4178
      %v4219 = vmax.f32 %v4108, %v4179
      %v4220 = vmax.f32 %v4111, %v4180
      %v4221 = vmax.f32 %v4113, %v4181
      %v4222 = vmax.f32 %v4116, %v4182
      %v4223 = vmax.f32 %v4118, %v4183
      %v4224 = vmax.f32 %v4121, %v4184
      %v4225 = vmax.f32 %v4123, %v4185
      %v4226 = vmax.f32 %v4126, %v4186
      %v4227 = vmax.f32 %v4128, %v4187
      %v4228 = vmax.f32 %v4131, %v4188
      %v4229 = vmax.f32 %v4133, %v4189
      %v4230 = vmax.f32 %v4136, %v4190
      %v4231 = vmax.f32 %v4138, %v4191
      %v4232 = vmax.f32 %v4141, %v4192
      %v4233 = vmax.f32 %v4143, %v4193
      %v4234 = vmax.f32 %v4146, %v4194
      %v4235 = vmax.f32 %v4148, %v4195
      %v4236 = vmax.f32 %v4151, %v4196
      %v4237 = vmax.f32 %v4153, %v4197
      %v4238 = vmax.f32 %v4156, %v4198
      %v4239 = vmax.f32 %v4158, %v4199
      %s4240 = ssub.s32 %s433, 2
      %v4241 = vstv %s4240
      %v4242 = vadd.s32 %v4241, 1
      %v4243 = vadd.s32 %v4241, 2
      %v4244 = vadd.s32 %v4241, 3
      %v4245 = vadd.s32 %v4241, 4
      %v4246 = vadd.s32 %v4241, 5
      %v4247 = vadd.s32 %v4241, 6
      %v4248 = vadd.s32 %v4241, 7
      %v4249 = vadd.s32 %v4241, 8
      %v4250 = vadd.s32 %v4241, 9
      %v4251 = vadd.s32 %v4241, 10
      %v4252 = vadd.s32 %v4241, 11
      %v4253 = vadd.s32 %v4241, 12
      %v4254 = vadd.s32 %v4241, 13
      %v4255 = vadd.s32 %v4241, 14
      %v4256 = vadd.s32 %v4241, 15
      %v4257 = vadd.s32 %v4241, 16
      %v4258 = vadd.s32 %v4241, 17
      %v4259 = vadd.s32 %v4241, 18
      %v4260 = vadd.s32 %v4241, 19
      %vm4261 = vcmp.ge.s32.totalorder %v4241, 0
      %vm4262 = vcmp.ge.s32.totalorder %v4242, 0
      %vm4263 = vcmp.ge.s32.totalorder %v4243, 0
      %vm4264 = vcmp.ge.s32.totalorder %v4244, 0
      %vm4265 = vcmp.ge.s32.totalorder %v4245, 0
      %vm4266 = vcmp.ge.s32.totalorder %v4246, 0
      %vm4267 = vcmp.ge.s32.totalorder %v4247, 0
      %vm4268 = vcmp.ge.s32.totalorder %v4248, 0
      %vm4269 = vcmp.ge.s32.totalorder %v4249, 0
      %vm4270 = vcmp.ge.s32.totalorder %v4250, 0
      %vm4271 = vcmp.ge.s32.totalorder %v4251, 0
      %vm4272 = vcmp.ge.s32.totalorder %v4252, 0
      %vm4273 = vcmp.ge.s32.totalorder %v4253, 0
      %vm4274 = vcmp.ge.s32.totalorder %v4254, 0
      %vm4275 = vcmp.ge.s32.totalorder %v4255, 0
      %vm4276 = vcmp.ge.s32.totalorder %v4256, 0
      %vm4277 = vcmp.ge.s32.totalorder %v4257, 0
      %vm4278 = vcmp.ge.s32.totalorder %v4258, 0
      %vm4279 = vcmp.ge.s32.totalorder %v4259, 0
      %vm4280 = vcmp.ge.s32.totalorder %v4260, 0
      %vm4281 = vcmp.lt.s32.totalorder %v4241, 16
      %vm4282 = vcmp.lt.s32.totalorder %v4242, 16
      %vm4283 = vcmp.lt.s32.totalorder %v4243, 16
      %vm4284 = vcmp.lt.s32.totalorder %v4244, 16
      %vm4285 = vcmp.lt.s32.totalorder %v4245, 16
      %vm4286 = vcmp.lt.s32.totalorder %v4246, 16
      %vm4287 = vcmp.lt.s32.totalorder %v4247, 16
      %vm4288 = vcmp.lt.s32.totalorder %v4248, 16
      %vm4289 = vcmp.lt.s32.totalorder %v4249, 16
      %vm4290 = vcmp.lt.s32.totalorder %v4250, 16
      %vm4291 = vcmp.lt.s32.totalorder %v4251, 16
      %vm4292 = vcmp.lt.s32.totalorder %v4252, 16
      %vm4293 = vcmp.lt.s32.totalorder %v4253, 16
      %vm4294 = vcmp.lt.s32.totalorder %v4254, 16
      %vm4295 = vcmp.lt.s32.totalorder %v4255, 16
      %vm4296 = vcmp.lt.s32.totalorder %v4256, 16
      %vm4297 = vcmp.lt.s32.totalorder %v4257, 16
      %vm4298 = vcmp.lt.s32.totalorder %v4258, 16
      %vm4299 = vcmp.lt.s32.totalorder %v4259, 16
      %vm4300 = vcmp.lt.s32.totalorder %v4260, 16
      %vm4301 = vmand %vm4261, %vm4281
      %vm4302 = vmand %vm4262, %vm4282
      %vm4303 = vmand %vm4263, %vm4283
      %vm4304 = vmand %vm4264, %vm4284
      %vm4305 = vmand %vm4265, %vm4285
      %vm4306 = vmand %vm4266, %vm4286
      %vm4307 = vmand %vm4267, %vm4287
      %vm4308 = vmand %vm4268, %vm4288
      %vm4309 = vmand %vm4269, %vm4289
      %vm4310 = vmand %vm4270, %vm4290
      %vm4311 = vmand %vm4271, %vm4291
      %vm4312 = vmand %vm4272, %vm4292
      %vm4313 = vmand %vm4273, %vm4293
      %vm4314 = vmand %vm4274, %vm4294
      %vm4315 = vmand %vm4275, %vm4295
      %vm4316 = vmand %vm4276, %vm4296
      %vm4317 = vmand %vm4277, %vm4297
      %vm4318 = vmand %vm4278, %vm4298
      %vm4319 = vmand %vm4279, %vm4299
      %vm4320 = vmand %vm4280, %vm4300
      %v4321 = vsel %vm4301, 1, 0
      %v4322 = vsel %vm4302, 1, 0
      %v4323 = vsel %vm4303, 1, 0
      %v4324 = vsel %vm4304, 1, 0
      %v4325 = vsel %vm4305, 1, 0
      %v4326 = vsel %vm4306, 1, 0
      %v4327 = vsel %vm4307, 1, 0
      %v4328 = vsel %vm4308, 1, 0
      %v4329 = vsel %vm4309, 1, 0
      %v4330 = vsel %vm4310, 1, 0
      %v4331 = vsel %vm4311, 1, 0
      %v4332 = vsel %vm4312, 1, 0
      %v4333 = vsel %vm4313, 1, 0
      %v4334 = vsel %vm4314, 1, 0
      %v4335 = vsel %vm4315, 1, 0
      %v4336 = vsel %vm4316, 1, 0
      %v4337 = vsel %vm4317, 1, 0
      %v4338 = vsel %vm4318, 1, 0
      %v4339 = vsel %vm4319, 1, 0
      %v4340 = vsel %vm4320, 1, 0
      %vm4341 = vcmp.eq.s32.totalorder %v4321, 1
      %vm4342 = vcmp.eq.s32.totalorder %v4322, 1
      %vm4343 = vcmp.eq.s32.totalorder %v4323, 1
      %vm4344 = vcmp.eq.s32.totalorder %v4324, 1
      %vm4345 = vcmp.eq.s32.totalorder %v4325, 1
      %vm4346 = vcmp.eq.s32.totalorder %v4326, 1
      %vm4347 = vcmp.eq.s32.totalorder %v4327, 1
      %vm4348 = vcmp.eq.s32.totalorder %v4328, 1
      %vm4349 = vcmp.eq.s32.totalorder %v4329, 1
      %vm4350 = vcmp.eq.s32.totalorder %v4330, 1
      %vm4351 = vcmp.eq.s32.totalorder %v4331, 1
      %vm4352 = vcmp.eq.s32.totalorder %v4332, 1
      %vm4353 = vcmp.eq.s32.totalorder %v4333, 1
      %vm4354 = vcmp.eq.s32.totalorder %v4334, 1
      %vm4355 = vcmp.eq.s32.totalorder %v4335, 1
      %vm4356 = vcmp.eq.s32.totalorder %v4336, 1
      %vm4357 = vcmp.eq.s32.totalorder %v4337, 1
      %vm4358 = vcmp.eq.s32.totalorder %v4338, 1
      %vm4359 = vcmp.eq.s32.totalorder %v4339, 1
      %vm4360 = vcmp.eq.s32.totalorder %v4340, 1
      %v4361 = vsel %vm4341, %v4200, 0.0
      %v4362 = vsel %vm4341, %v4201, 0.0
      %v4363 = vsel %vm4342, %v4202, 0.0
      %v4364 = vsel %vm4342, %v4203, 0.0
      %v4365 = vsel %vm4343, %v4204, 0.0
      %v4366 = vsel %vm4343, %v4205, 0.0
      %v4367 = vsel %vm4344, %v4206, 0.0
      %v4368 = vsel %vm4344, %v4207, 0.0
      %v4369 = vsel %vm4345, %v4208, 0.0
      %v4370 = vsel %vm4345, %v4209, 0.0
      %v4371 = vsel %vm4346, %v4210, 0.0
      %v4372 = vsel %vm4346, %v4211, 0.0
      %v4373 = vsel %vm4347, %v4212, 0.0
      %v4374 = vsel %vm4347, %v4213, 0.0
      %v4375 = vsel %vm4348, %v4214, 0.0
      %v4376 = vsel %vm4348, %v4215, 0.0
      %v4377 = vsel %vm4349, %v4216, 0.0
      %v4378 = vsel %vm4349, %v4217, 0.0
      %v4379 = vsel %vm4350, %v4218, 0.0
      %v4380 = vsel %vm4350, %v4219, 0.0
      %v4381 = vsel %vm4351, %v4220, 0.0
      %v4382 = vsel %vm4351, %v4221, 0.0
      %v4383 = vsel %vm4352, %v4222, 0.0
      %v4384 = vsel %vm4352, %v4223, 0.0
      %v4385 = vsel %vm4353, %v4224, 0.0
      %v4386 = vsel %vm4353, %v4225, 0.0
      %v4387 = vsel %vm4354, %v4226, 0.0
      %v4388 = vsel %vm4354, %v4227, 0.0
      %v4389 = vsel %vm4355, %v4228, 0.0
      %v4390 = vsel %vm4355, %v4229, 0.0
      %v4391 = vsel %vm4356, %v4230, 0.0
      %v4392 = vsel %vm4356, %v4231, 0.0
      %v4393 = vsel %vm4357, %v4232, 0.0
      %v4394 = vsel %vm4357, %v4233, 0.0
      %v4395 = vsel %vm4358, %v4234, 0.0
      %v4396 = vsel %vm4358, %v4235, 0.0
      %v4397 = vsel %vm4359, %v4236, 0.0
      %v4398 = vsel %vm4359, %v4237, 0.0
      %v4399 = vsel %vm4360, %v4238, 0.0
      %v4400 = vsel %vm4360, %v4239, 0.0
      %p4401 = scmp.eq.s32.totalorder %s28, 0
      // Predicated region
      $region61: #{tpu_custom_call.1} parent=59 // pred_check
        %p4402 = pneg %p4401
      $region62: #{tpu_custom_call.1} parent=59 // pred_check_branch
        %4404 = sbr.rel (%p4402) target = $region64
      $region63: #{tpu_custom_call.1} parent=59 // pred_region
        %4405 = vst.msk [vmem:[#allocation2] sm:$0xff] %vm3359, %v4361
        %4406 = vst.msk [vmem:[#allocation2 + $0x8] sm:$0xff] %vm3359, %v4362
        %4407 = vst.msk [vmem:[#allocation2 + $0x10] sm:$0xff] %vm3359, %v4363
        %4408 = vst.msk [vmem:[#allocation2 + $0x18] sm:$0xff] %vm3359, %v4364
        %4409 = vst.msk [vmem:[#allocation2 + $0x20] sm:$0xff] %vm3359, %v4365
        %4410 = vst.msk [vmem:[#allocation2 + $0x28] sm:$0xff] %vm3359, %v4366
        %4411 = vst.msk [vmem:[#allocation2 + $0x30] sm:$0xff] %vm3359, %v4367
        %4412 = vst.msk [vmem:[#allocation2 + $0x38] sm:$0xff] %vm3359, %v4368
        %4413 = vst.msk [vmem:[#allocation2 + $0x40] sm:$0xff] %vm3359, %v4369
        %4414 = vst.msk [vmem:[#allocation2 + $0x48] sm:$0xff] %vm3359, %v4370
        %4415 = vst.msk [vmem:[#allocation2 + $0x50] sm:$0xff] %vm3359, %v4371
        %4416 = vst.msk [vmem:[#allocation2 + $0x58] sm:$0xff] %vm3359, %v4372
        %4417 = vst.msk [vmem:[#allocation2 + $0x60] sm:$0xff] %vm3359, %v4373
        %4418 = vst.msk [vmem:[#allocation2 + $0x68] sm:$0xff] %vm3359, %v4374
        %4419 = vst.msk [vmem:[#allocation2 + $0x70] sm:$0xff] %vm3359, %v4375
        %4420 = vst.msk [vmem:[#allocation2 + $0x78] sm:$0xff] %vm3359, %v4376
        %4421 = vst.msk [vmem:[#allocation2 + $0x80] sm:$0xff] %vm3359, %v4377
        %4422 = vst.msk [vmem:[#allocation2 + $0x88] sm:$0xff] %vm3359, %v4378
        %4423 = vst.msk [vmem:[#allocation2 + $0x90] sm:$0xff] %vm3359, %v4379
        %4424 = vst.msk [vmem:[#allocation2 + $0x98] sm:$0xff] %vm3359, %v4380
        %4425 = vst.msk [vmem:[#allocation2 + $0xa0] sm:$0xff] %vm3359, %v4381
        %4426 = vst.msk [vmem:[#allocation2 + $0xa8] sm:$0xff] %vm3359, %v4382
        %4427 = vst.msk [vmem:[#allocation2 + $0xb0] sm:$0xff] %vm3359, %v4383
        %4428 = vst.msk [vmem:[#allocation2 + $0xb8] sm:$0xff] %vm3359, %v4384
        %4429 = vst.msk [vmem:[#allocation2 + $0xc0] sm:$0xff] %vm3359, %v4385
        %4430 = vst.msk [vmem:[#allocation2 + $0xc8] sm:$0xff] %vm3359, %v4386
        %4431 = vst.msk [vmem:[#allocation2 + $0xd0] sm:$0xff] %vm3359, %v4387
        %4432 = vst.msk [vmem:[#allocation2 + $0xd8] sm:$0xff] %vm3359, %v4388
        %4433 = vst.msk [vmem:[#allocation2 + $0xe0] sm:$0xff] %vm3359, %v4389
        %4434 = vst.msk [vmem:[#allocation2 + $0xe8] sm:$0xff] %vm3359, %v4390
        %4435 = vst.msk [vmem:[#allocation2 + $0xf0] sm:$0xff] %vm3359, %v4391
        %4436 = vst.msk [vmem:[#allocation2 + $0xf8] sm:$0xff] %vm3359, %v4392
        %4437 = vst.msk [vmem:[#allocation2 + $0x100] sm:$0xff] %vm3359, %v4393
        %4438 = vst.msk [vmem:[#allocation2 + $0x108] sm:$0xff] %vm3359, %v4394
        %4439 = vst.msk [vmem:[#allocation2 + $0x110] sm:$0xff] %vm3359, %v4395
        %4440 = vst.msk [vmem:[#allocation2 + $0x118] sm:$0xff] %vm3359, %v4396
        %4441 = vst.msk [vmem:[#allocation2 + $0x120] sm:$0xff] %vm3359, %v4397
        %4442 = vst.msk [vmem:[#allocation2 + $0x128] sm:$0xff] %vm3359, %v4398
        %4443 = vst.msk [vmem:[#allocation2 + $0x130] sm:$0xff] %vm3359, %v4399
        %4444 = vst.msk [vmem:[#allocation2 + $0x138] sm:$0xff] %vm3359, %v4400
      $region64: #{tpu_custom_call.1} parent=59 // pred_fallthru
        _
      %p4445 = scmp.gt.s32.totalorder %s28, 0
      // Predicated region
      $region65: #{tpu_custom_call.1} parent=59 // pred_check
        %p4446 = pneg %p4445
      $region66: #{tpu_custom_call.1} parent=59 // pred_check_branch
        %4448 = sbr.rel (%p4446) target = $region68
      $region67: #{tpu_custom_call.1} parent=59 // pred_region
        %v4449 = vld [vmem:[#allocation2] sm:$0xff]
        %v4450 = vld [vmem:[#allocation2 + $0x8] sm:$0xff]
        %v4451 = vld [vmem:[#allocation2 + $0x10] sm:$0xff]
        %v4452 = vld [vmem:[#allocation2 + $0x18] sm:$0xff]
        %v4453 = vld [vmem:[#allocation2 + $0x20] sm:$0xff]
        %v4454 = vld [vmem:[#allocation2 + $0x28] sm:$0xff]
        %v4455 = vld [vmem:[#allocation2 + $0x30] sm:$0xff]
        %v4456 = vld [vmem:[#allocation2 + $0x38] sm:$0xff]
        %v4457 = vld [vmem:[#allocation2 + $0x40] sm:$0xff]
        %v4458 = vld [vmem:[#allocation2 + $0x48] sm:$0xff]
        %v4459 = vld [vmem:[#allocation2 + $0x50] sm:$0xff]
        %v4460 = vld [vmem:[#allocation2 + $0x58] sm:$0xff]
        %v4461 = vld [vmem:[#allocation2 + $0x60] sm:$0xff]
        %v4462 = vld [vmem:[#allocation2 + $0x68] sm:$0xff]
        %v4463 = vld [vmem:[#allocation2 + $0x70] sm:$0xff]
        %v4464 = vld [vmem:[#allocation2 + $0x78] sm:$0xff]
        %v4465 = vld [vmem:[#allocation2 + $0x80] sm:$0xff]
        %v4466 = vld [vmem:[#allocation2 + $0x88] sm:$0xff]
        %v4467 = vld [vmem:[#allocation2 + $0x90] sm:$0xff]
        %v4468 = vld [vmem:[#allocation2 + $0x98] sm:$0xff]
        %v4469 = vld [vmem:[#allocation2 + $0xa0] sm:$0xff]
        %v4470 = vld [vmem:[#allocation2 + $0xa8] sm:$0xff]
        %v4471 = vld [vmem:[#allocation2 + $0xb0] sm:$0xff]
        %v4472 = vld [vmem:[#allocation2 + $0xb8] sm:$0xff]
        %v4473 = vld [vmem:[#allocation2 + $0xc0] sm:$0xff]
        %v4474 = vld [vmem:[#allocation2 + $0xc8] sm:$0xff]
        %v4475 = vld [vmem:[#allocation2 + $0xd0] sm:$0xff]
        %v4476 = vld [vmem:[#allocation2 + $0xd8] sm:$0xff]
        %v4477 = vld [vmem:[#allocation2 + $0xe0] sm:$0xff]
        %v4478 = vld [vmem:[#allocation2 + $0xe8] sm:$0xff]
        %v4479 = vld [vmem:[#allocation2 + $0xf0] sm:$0xff]
        %v4480 = vld [vmem:[#allocation2 + $0xf8] sm:$0xff]
        %v4481 = vld [vmem:[#allocation2 + $0x100] sm:$0xff]
        %v4482 = vld [vmem:[#allocation2 + $0x108] sm:$0xff]
        %v4483 = vld [vmem:[#allocation2 + $0x110] sm:$0xff]
        %v4484 = vld [vmem:[#allocation2 + $0x118] sm:$0xff]
        %v4485 = vld [vmem:[#allocation2 + $0x120] sm:$0xff]
        %v4486 = vld [vmem:[#allocation2 + $0x128] sm:$0xff]
        %v4487 = vld [vmem:[#allocation2 + $0x130] sm:$0xff]
        %v4488 = vld [vmem:[#allocation2 + $0x138] sm:$0xff]
        %v4489 = vmax.f32 %v4449, %v4361
        %v4490 = vmax.f32 %v4450, %v4362
        %v4491 = vmax.f32 %v4451, %v4363
        %v4492 = vmax.f32 %v4452, %v4364
        %v4493 = vmax.f32 %v4453, %v4365
        %v4494 = vmax.f32 %v4454, %v4366
        %v4495 = vmax.f32 %v4455, %v4367
        %v4496 = vmax.f32 %v4456, %v4368
        %v4497 = vmax.f32 %v4457, %v4369
        %v4498 = vmax.f32 %v4458, %v4370
        %v4499 = vmax.f32 %v4459, %v4371
        %v4500 = vmax.f32 %v4460, %v4372
        %v4501 = vmax.f32 %v4461, %v4373
        %v4502 = vmax.f32 %v4462, %v4374
        %v4503 = vmax.f32 %v4463, %v4375
        %v4504 = vmax.f32 %v4464, %v4376
        %v4505 = vmax.f32 %v4465, %v4377
        %v4506 = vmax.f32 %v4466, %v4378
        %v4507 = vmax.f32 %v4467, %v4379
        %v4508 = vmax.f32 %v4468, %v4380
        %v4509 = vmax.f32 %v4469, %v4381
        %v4510 = vmax.f32 %v4470, %v4382
        %v4511 = vmax.f32 %v4471, %v4383
        %v4512 = vmax.f32 %v4472, %v4384
        %v4513 = vmax.f32 %v4473, %v4385
        %v4514 = vmax.f32 %v4474, %v4386
        %v4515 = vmax.f32 %v4475, %v4387
        %v4516 = vmax.f32 %v4476, %v4388
        %v4517 = vmax.f32 %v4477, %v4389
        %v4518 = vmax.f32 %v4478, %v4390
        %v4519 = vmax.f32 %v4479, %v4391
        %v4520 = vmax.f32 %v4480, %v4392
        %v4521 = vmax.f32 %v4481, %v4393
        %v4522 = vmax.f32 %v4482, %v4394
        %v4523 = vmax.f32 %v4483, %v4395
        %v4524 = vmax.f32 %v4484, %v4396
        %v4525 = vmax.f32 %v4485, %v4397
        %v4526 = vmax.f32 %v4486, %v4398
        %v4527 = vmax.f32 %v4487, %v4399
        %v4528 = vmax.f32 %v4488, %v4400
        %4529 = vst.msk [vmem:[#allocation2] sm:$0xff] %vm3359, %v4489
        %4530 = vst.msk [vmem:[#allocation2 + $0x8] sm:$0xff] %vm3359, %v4490
        %4531 = vst.msk [vmem:[#allocation2 + $0x10] sm:$0xff] %vm3359, %v4491
        %4532 = vst.msk [vmem:[#allocation2 + $0x18] sm:$0xff] %vm3359, %v4492
        %4533 = vst.msk [vmem:[#allocation2 + $0x20] sm:$0xff] %vm3359, %v4493
        %4534 = vst.msk [vmem:[#allocation2 + $0x28] sm:$0xff] %vm3359, %v4494
        %4535 = vst.msk [vmem:[#allocation2 + $0x30] sm:$0xff] %vm3359, %v4495
        %4536 = vst.msk [vmem:[#allocation2 + $0x38] sm:$0xff] %vm3359, %v4496
        %4537 = vst.msk [vmem:[#allocation2 + $0x40] sm:$0xff] %vm3359, %v4497
        %4538 = vst.msk [vmem:[#allocation2 + $0x48] sm:$0xff] %vm3359, %v4498
        %4539 = vst.msk [vmem:[#allocation2 + $0x50] sm:$0xff] %vm3359, %v4499
        %4540 = vst.msk [vmem:[#allocation2 + $0x58] sm:$0xff] %vm3359, %v4500
        %4541 = vst.msk [vmem:[#allocation2 + $0x60] sm:$0xff] %vm3359, %v4501
        %4542 = vst.msk [vmem:[#allocation2 + $0x68] sm:$0xff] %vm3359, %v4502
        %4543 = vst.msk [vmem:[#allocation2 + $0x70] sm:$0xff] %vm3359, %v4503
        %4544 = vst.msk [vmem:[#allocation2 + $0x78] sm:$0xff] %vm3359, %v4504
        %4545 = vst.msk [vmem:[#allocation2 + $0x80] sm:$0xff] %vm3359, %v4505
        %4546 = vst.msk [vmem:[#allocation2 + $0x88] sm:$0xff] %vm3359, %v4506
        %4547 = vst.msk [vmem:[#allocation2 + $0x90] sm:$0xff] %vm3359, %v4507
        %4548 = vst.msk [vmem:[#allocation2 + $0x98] sm:$0xff] %vm3359, %v4508
        %4549 = vst.msk [vmem:[#allocation2 + $0xa0] sm:$0xff] %vm3359, %v4509
        %4550 = vst.msk [vmem:[#allocation2 + $0xa8] sm:$0xff] %vm3359, %v4510
        %4551 = vst.msk [vmem:[#allocation2 + $0xb0] sm:$0xff] %vm3359, %v4511
        %4552 = vst.msk [vmem:[#allocation2 + $0xb8] sm:$0xff] %vm3359, %v4512
        %4553 = vst.msk [vmem:[#allocation2 + $0xc0] sm:$0xff] %vm3359, %v4513
        %4554 = vst.msk [vmem:[#allocation2 + $0xc8] sm:$0xff] %vm3359, %v4514
        %4555 = vst.msk [vmem:[#allocation2 + $0xd0] sm:$0xff] %vm3359, %v4515
        %4556 = vst.msk [vmem:[#allocation2 + $0xd8] sm:$0xff] %vm3359, %v4516
        %4557 = vst.msk [vmem:[#allocation2 + $0xe0] sm:$0xff] %vm3359, %v4517
        %4558 = vst.msk [vmem:[#allocation2 + $0xe8] sm:$0xff] %vm3359, %v4518
        %4559 = vst.msk [vmem:[#allocation2 + $0xf0] sm:$0xff] %vm3359, %v4519
        %4560 = vst.msk [vmem:[#allocation2 + $0xf8] sm:$0xff] %vm3359, %v4520
        %4561 = vst.msk [vmem:[#allocation2 + $0x100] sm:$0xff] %vm3359, %v4521
        %4562 = vst.msk [vmem:[#allocation2 + $0x108] sm:$0xff] %vm3359, %v4522
        %4563 = vst.msk [vmem:[#allocation2 + $0x110] sm:$0xff] %vm3359, %v4523
        %4564 = vst.msk [vmem:[#allocation2 + $0x118] sm:$0xff] %vm3359, %v4524
        %4565 = vst.msk [vmem:[#allocation2 + $0x120] sm:$0xff] %vm3359, %v4525
        %4566 = vst.msk [vmem:[#allocation2 + $0x128] sm:$0xff] %vm3359, %v4526
        %4567 = vst.msk [vmem:[#allocation2 + $0x130] sm:$0xff] %vm3359, %v4527
        %4568 = vst.msk [vmem:[#allocation2 + $0x138] sm:$0xff] %vm3359, %v4528
      $region68: #{tpu_custom_call.1} parent=59 // pred_fallthru
        _
      %p4569 = scmp.eq.s32.totalorder %s28, 2
      // Predicated region
      $region69: #{tpu_custom_call.1} parent=59 // pred_check
        %p4570 = pneg %p4569
      $region70: #{tpu_custom_call.1} parent=59 // pred_check_branch
        %4572 = sbr.rel (%p4570) target = $region72
      $region71: #{tpu_custom_call.1} parent=59 // pred_region
        %v4573 = vld [vmem:[#allocation2] sm:$0xff]
        %v4574 = vld [vmem:[#allocation2 + $0x8] sm:$0xff]
        %v4575 = vld [vmem:[#allocation2 + $0x10] sm:$0xff]
        %v4576 = vld [vmem:[#allocation2 + $0x18] sm:$0xff]
        %v4577 = vld [vmem:[#allocation2 + $0x20] sm:$0xff]
        %v4578 = vld [vmem:[#allocation2 + $0x28] sm:$0xff]
        %v4579 = vld [vmem:[#allocation2 + $0x30] sm:$0xff]
        %v4580 = vld [vmem:[#allocation2 + $0x38] sm:$0xff]
        %v4581 = vld [vmem:[#allocation2 + $0x40] sm:$0xff]
        %v4582 = vld [vmem:[#allocation2 + $0x48] sm:$0xff]
        %v4583 = vld [vmem:[#allocation2 + $0x50] sm:$0xff]
        %v4584 = vld [vmem:[#allocation2 + $0x58] sm:$0xff]
        %v4585 = vld [vmem:[#allocation2 + $0x60] sm:$0xff]
        %v4586 = vld [vmem:[#allocation2 + $0x68] sm:$0xff]
        %v4587 = vld [vmem:[#allocation2 + $0x70] sm:$0xff]
        %v4588 = vld [vmem:[#allocation2 + $0x78] sm:$0xff]
        %v4589 = vld [vmem:[#allocation2 + $0x80] sm:$0xff]
        %v4590 = vld [vmem:[#allocation2 + $0x88] sm:$0xff]
        %v4591 = vld [vmem:[#allocation2 + $0x90] sm:$0xff]
        %v4592 = vld [vmem:[#allocation2 + $0x98] sm:$0xff]
        %v4593 = vld [vmem:[#allocation2 + $0xa0] sm:$0xff]
        %v4594 = vld [vmem:[#allocation2 + $0xa8] sm:$0xff]
        %v4595 = vld [vmem:[#allocation2 + $0xb0] sm:$0xff]
        %v4596 = vld [vmem:[#allocation2 + $0xb8] sm:$0xff]
        %v4597 = vld [vmem:[#allocation2 + $0xc0] sm:$0xff]
        %v4598 = vld [vmem:[#allocation2 + $0xc8] sm:$0xff]
        %v4599 = vld [vmem:[#allocation2 + $0xd0] sm:$0xff]
        %v4600 = vld [vmem:[#allocation2 + $0xd8] sm:$0xff]
        %v4601 = vld [vmem:[#allocation2 + $0xe0] sm:$0xff]
        %v4602 = vld [vmem:[#allocation2 + $0xe8] sm:$0xff]
        %v4603 = vld [vmem:[#allocation2 + $0xf0] sm:$0xff]
        %v4604 = vld [vmem:[#allocation2 + $0xf8] sm:$0xff]
        %v4605 = vld [vmem:[#allocation2 + $0x100] sm:$0xff]
        %v4606 = vld [vmem:[#allocation2 + $0x108] sm:$0xff]
        %v4607 = vld [vmem:[#allocation2 + $0x110] sm:$0xff]
        %v4608 = vld [vmem:[#allocation2 + $0x118] sm:$0xff]
        %v4609 = vld [vmem:[#allocation2 + $0x120] sm:$0xff]
        %v4610 = vld [vmem:[#allocation2 + $0x128] sm:$0xff]
        %v4611 = vld [vmem:[#allocation2 + $0x130] sm:$0xff]
        %v4612 = vld [vmem:[#allocation2 + $0x138] sm:$0xff]
        %v4613 = vld [vmem:[%s6] sm:$0xf]
        %v4614 = vld [vmem:[%s6 + $0x4] sm:$0xf]
        %v4615 = vld [vmem:[%s6 + $0x8] sm:$0xf]
        %v4616 = vld [vmem:[%s6 + $0xc] sm:$0xf]
        %v4617 = vld [vmem:[%s6 + $0x10] sm:$0xf]
        %v4618 = vld [vmem:[%s6 + $0x14] sm:$0xf]
        %v4619 = vld [vmem:[%s6 + $0x18] sm:$0xf]
        %v4620 = vld [vmem:[%s6 + $0x1c] sm:$0xf]
        %v4621 = vld [vmem:[%s6 + $0x20] sm:$0xf]
        %v4622 = vld [vmem:[%s6 + $0x24] sm:$0xf]
        %v4623 = vld [vmem:[%s6 + $0x28] sm:$0xf]
        %v4624 = vld [vmem:[%s6 + $0x2c] sm:$0xf]
        %v4625 = vld [vmem:[%s6 + $0x30] sm:$0xf]
        %v4626 = vld [vmem:[%s6 + $0x34] sm:$0xf]
        %v4627 = vld [vmem:[%s6 + $0x38] sm:$0xf]
        %v4628 = vld [vmem:[%s6 + $0x3c] sm:$0xf]
        %v4629 = vld [vmem:[%s6 + $0x40] sm:$0xf]
        %v4630 = vld [vmem:[%s6 + $0x44] sm:$0xf]
        %v4631 = vld [vmem:[%s6 + $0x48] sm:$0xf]
        %v4632 = vld [vmem:[%s6 + $0x4c] sm:$0xf]
        %v4633 = vld [vmem:[%s6 + $0x50] sm:$0xf]
        %v4634 = vld [vmem:[%s6 + $0x54] sm:$0xf]
        %v4635 = vld [vmem:[%s6 + $0x58] sm:$0xf]
        %v4636 = vld [vmem:[%s6 + $0x5c] sm:$0xf]
        %v4637 = vld [vmem:[%s6 + $0x60] sm:$0xf]
        %v4638 = vld [vmem:[%s6 + $0x64] sm:$0xf]
        %v4639 = vld [vmem:[%s6 + $0x68] sm:$0xf]
        %v4640 = vld [vmem:[%s6 + $0x6c] sm:$0xf]
        %v4641 = vld [vmem:[%s6 + $0x70] sm:$0xf]
        %v4642 = vld [vmem:[%s6 + $0x74] sm:$0xf]
        %v4643 = vld [vmem:[%s6 + $0x78] sm:$0xf]
        %v4644 = vld [vmem:[%s6 + $0x7c] sm:$0xf]
        %v4645 = vld [vmem:[%s6 + $0x80] sm:$0xf]
        %v4646 = vld [vmem:[%s6 + $0x84] sm:$0xf]
        %v4647 = vld [vmem:[%s6 + $0x88] sm:$0xf]
        %v4648 = vld [vmem:[%s6 + $0x8c] sm:$0xf]
        %v4649 = vld [vmem:[%s7] sm:$0x1]
        %v4650 = vpack.c.bf16 %v4573, %v4573
        %v4651 = vpack.c.bf16 %v4574, %v4574
        %v4652 = vpack.c.bf16 %v4575, %v4575
        %v4653 = vpack.c.bf16 %v4576, %v4576
        %v4654 = vpack.c.bf16 %v4577, %v4577
        %v4655 = vpack.c.bf16 %v4578, %v4578
        %v4656 = vpack.c.bf16 %v4579, %v4579
        %v4657 = vpack.c.bf16 %v4580, %v4580
        %v4658 = vpack.c.bf16 %v4581, %v4581
        %v4659 = vpack.c.bf16 %v4582, %v4582
        %v4660 = vpack.c.bf16 %v4583, %v4583
        %v4661 = vpack.c.bf16 %v4584, %v4584
        %v4662 = vpack.c.bf16 %v4585, %v4585
        %v4663 = vpack.c.bf16 %v4586, %v4586
        %v4664 = vpack.c.bf16 %v4587, %v4587
        %v4665 = vpack.c.bf16 %v4588, %v4588
        %v4666 = vpack.c.bf16 %v4589, %v4589
        %v4667 = vpack.c.bf16 %v4590, %v4590
        %v4668 = vpack.c.bf16 %v4591, %v4591
        %v4669 = vpack.c.bf16 %v4592, %v4592
        %v4670 = vpack.c.bf16 %v4593, %v4593
        %v4671 = vpack.c.bf16 %v4594, %v4594
        %v4672 = vpack.c.bf16 %v4595, %v4595
        %v4673 = vpack.c.bf16 %v4596, %v4596
        %v4674 = vpack.c.bf16 %v4597, %v4597
        %v4675 = vpack.c.bf16 %v4598, %v4598
        %v4676 = vpack.c.bf16 %v4599, %v4599
        %v4677 = vpack.c.bf16 %v4600, %v4600
        %v4678 = vpack.c.bf16 %v4601, %v4601
        %v4679 = vpack.c.bf16 %v4602, %v4602
        %v4680 = vpack.c.bf16 %v4603, %v4603
        %v4681 = vpack.c.bf16 %v4604, %v4604
        %v4682 = vpack.c.bf16 %v4605, %v4605
        %v4683 = vpack.c.bf16 %v4606, %v4606
        %v4684 = vpack.c.bf16 %v4607, %v4607
        %v4685 = vpack.c.bf16 %v4608, %v4608
        %v4686 = vpack.c.bf16 %v4609, %v4609
        %v4687 = vpack.c.bf16 %v4610, %v4610
        %v4688 = vpack.c.bf16 %v4611, %v4611
        %v4689 = vpack.c.bf16 %v4612, %v4612
        %v4730 = vunpack.c.l.b16 %v4650
        %v4731 = vunpack.c.l.b16 %v4651
        %v4732 = vunpack.c.l.b16 %v4652
        %v4733 = vunpack.c.l.b16 %v4653
        %v4734 = vunpack.c.l.b16 %v4654
        %v4735 = vunpack.c.l.b16 %v4655
        %v4736 = vunpack.c.l.b16 %v4656
        %v4737 = vunpack.c.l.b16 %v4657
        %v4738 = vunpack.c.l.b16 %v4658
        %v4739 = vunpack.c.l.b16 %v4659
        %v4740 = vunpack.c.l.b16 %v4660
        %v4741 = vunpack.c.l.b16 %v4661
        %v4742 = vunpack.c.l.b16 %v4662
        %v4743 = vunpack.c.l.b16 %v4663
        %v4744 = vunpack.c.l.b16 %v4664
        %v4745 = vunpack.c.l.b16 %v4665
        %v4746 = vunpack.c.l.b16 %v4666
        %v4747 = vunpack.c.l.b16 %v4667
        %v4748 = vunpack.c.l.b16 %v4668
        %v4749 = vunpack.c.l.b16 %v4669
        %v4750 = vunpack.c.l.b16 %v4670
        %v4751 = vunpack.c.l.b16 %v4671
        %v4752 = vunpack.c.l.b16 %v4672
        %v4753 = vunpack.c.l.b16 %v4673
        %v4754 = vunpack.c.l.b16 %v4674
        %v4755 = vunpack.c.l.b16 %v4675
        %v4756 = vunpack.c.l.b16 %v4676
        %v4757 = vunpack.c.l.b16 %v4677
        %v4758 = vunpack.c.l.b16 %v4678
        %v4759 = vunpack.c.l.b16 %v4679
        %v4760 = vunpack.c.l.b16 %v4680
        %v4761 = vunpack.c.l.b16 %v4681
        %v4762 = vunpack.c.l.b16 %v4682
        %v4763 = vunpack.c.l.b16 %v4683
        %v4764 = vunpack.c.l.b16 %v4684
        %v4765 = vunpack.c.l.b16 %v4685
        %v4766 = vunpack.c.l.b16 %v4686
        %v4767 = vunpack.c.l.b16 %v4687
        %v4768 = vunpack.c.l.b16 %v4688
        %v4769 = vunpack.c.l.b16 %v4689
        %v4770 = vpack.c.b16 %v4731, %v4730
        %v4771 = vpack.c.b16 %v4733, %v4732
        %v4772 = vpack.c.b16 %v4735, %v4734
        %v4773 = vpack.c.b16 %v4737, %v4736
        %v4774 = vpack.c.b16 %v4739, %v4738
        %v4775 = vpack.c.b16 %v4741, %v4740
        %v4776 = vpack.c.b16 %v4743, %v4742
        %v4777 = vpack.c.b16 %v4745, %v4744
        %v4778 = vpack.c.b16 %v4747, %v4746
        %v4779 = vpack.c.b16 %v4749, %v4748
        %v4780 = vpack.c.b16 %v4751, %v4750
        %v4781 = vpack.c.b16 %v4753, %v4752
        %v4782 = vpack.c.b16 %v4755, %v4754
        %v4783 = vpack.c.b16 %v4757, %v4756
        %v4784 = vpack.c.b16 %v4759, %v4758
        %v4785 = vpack.c.b16 %v4761, %v4760
        %v4786 = vpack.c.b16 %v4763, %v4762
        %v4787 = vpack.c.b16 %v4765, %v4764
        %v4788 = vpack.c.b16 %v4767, %v4766
        %v4789 = vpack.c.b16 %v4769, %v4768
        %v4791 = vshrl.u32 %v4770, 16
        %v4793 = vrot.slane %v4791, 7
        %v4794 = vshll.u32 %v4770, 16
        %v4796 = vor.u32 %v4793, %v4794
        %v4798 = vshrl.u32 %v4771, 16
        %v4800 = vrot.slane %v4798, 7
        %v4801 = vshll.u32 %v4771, 16
        %v4803 = vor.u32 %v4800, %v4801
        %v4805 = vshrl.u32 %v4772, 16
        %v4807 = vrot.slane %v4805, 7
        %v4808 = vshll.u32 %v4772, 16
        %v4810 = vor.u32 %v4807, %v4808
        %v4812 = vshrl.u32 %v4773, 16
        %v4814 = vrot.slane %v4812, 7
        %v4815 = vshll.u32 %v4773, 16
        %v4817 = vor.u32 %v4814, %v4815
        %v4819 = vshrl.u32 %v4774, 16
        %v4821 = vrot.slane %v4819, 7
        %v4822 = vshll.u32 %v4774, 16
        %v4824 = vor.u32 %v4821, %v4822
        %v4826 = vshrl.u32 %v4775, 16
        %v4828 = vrot.slane %v4826, 7
        %v4829 = vshll.u32 %v4775, 16
        %v4831 = vor.u32 %v4828, %v4829
        %v4833 = vshrl.u32 %v4776, 16
        %v4835 = vrot.slane %v4833, 7
        %v4836 = vshll.u32 %v4776, 16
        %v4838 = vor.u32 %v4835, %v4836
        %v4840 = vshrl.u32 %v4777, 16
        %v4842 = vrot.slane %v4840, 7
        %v4843 = vshll.u32 %v4777, 16
        %v4845 = vor.u32 %v4842, %v4843
        %v4847 = vshrl.u32 %v4778, 16
        %v4849 = vrot.slane %v4847, 7
        %v4850 = vshll.u32 %v4778, 16
        %v4852 = vor.u32 %v4849, %v4850
        %v4854 = vshrl.u32 %v4779, 16
        %v4856 = vrot.slane %v4854, 7
        %v4857 = vshll.u32 %v4779, 16
        %v4859 = vor.u32 %v4856, %v4857
        %v4861 = vshrl.u32 %v4780, 16
        %v4863 = vrot.slane %v4861, 7
        %v4864 = vshll.u32 %v4780, 16
        %v4866 = vor.u32 %v4863, %v4864
        %v4868 = vshrl.u32 %v4781, 16
        %v4870 = vrot.slane %v4868, 7
        %v4871 = vshll.u32 %v4781, 16
        %v4873 = vor.u32 %v4870, %v4871
        %v4875 = vshrl.u32 %v4782, 16
        %v4877 = vrot.slane %v4875, 7
        %v4878 = vshll.u32 %v4782, 16
        %v4880 = vor.u32 %v4877, %v4878
        %v4882 = vshrl.u32 %v4783, 16
        %v4884 = vrot.slane %v4882, 7
        %v4885 = vshll.u32 %v4783, 16
        %v4887 = vor.u32 %v4884, %v4885
        %v4889 = vshrl.u32 %v4784, 16
        %v4891 = vrot.slane %v4889, 7
        %v4892 = vshll.u32 %v4784, 16
        %v4894 = vor.u32 %v4891, %v4892
        %v4896 = vshrl.u32 %v4785, 16
        %v4898 = vrot.slane %v4896, 7
        %v4899 = vshll.u32 %v4785, 16
        %v4901 = vor.u32 %v4898, %v4899
        %v4903 = vshrl.u32 %v4786, 16
        %v4905 = vrot.slane %v4903, 7
        %v4906 = vshll.u32 %v4786, 16
        %v4908 = vor.u32 %v4905, %v4906
        %v4910 = vshrl.u32 %v4787, 16
        %v4912 = vrot.slane %v4910, 7
        %v4913 = vshll.u32 %v4787, 16
        %v4915 = vor.u32 %v4912, %v4913
        %v4917 = vshrl.u32 %v4788, 16
        %v4919 = vrot.slane %v4917, 7
        %v4920 = vshll.u32 %v4788, 16
        %v4922 = vor.u32 %v4919, %v4920
        %v4924 = vshrl.u32 %v4789, 16
        %v4926 = vrot.slane %v4924, 7
        %v4927 = vshll.u32 %v4789, 16
        %v4929 = vor.u32 %v4926, %v4927
        %v4970 = vsel %vm2700, 0, %v4796
        %v4971 = vsel %vm2700, 0, %v4803
        %v4972 = vsel %vm2700, 0, %v4810
        %v4973 = vsel %vm2700, 0, %v4817
        %v4974 = vsel %vm2700, 0, %v4824
        %v4975 = vsel %vm2700, 0, %v4831
        %v4976 = vsel %vm2700, 0, %v4838
        %v4977 = vsel %vm2700, 0, %v4845
        %v4978 = vsel %vm2700, 0, %v4852
        %v4979 = vsel %vm2700, 0, %v4859
        %v4980 = vsel %vm2700, 0, %v4866
        %v4981 = vsel %vm2700, 0, %v4873
        %v4982 = vsel %vm2700, 0, %v4880
        %v4983 = vsel %vm2700, 0, %v4887
        %v4984 = vsel %vm2700, 0, %v4894
        %v4985 = vsel %vm2700, 0, %v4901
        %v4986 = vsel %vm2700, 0, %v4908
        %v4987 = vsel %vm2700, 0, %v4915
        %v4988 = vsel %vm2700, 0, %v4922
        %v4989 = vsel %vm2700, 0, %v4929
        %v4990 = vsel %vm2700, %v4793, 0
        %v4991 = vsel %vm2700, %v4800, 0
        %v4992 = vsel %vm2700, %v4807, 0
        %v4993 = vsel %vm2700, %v4814, 0
        %v4994 = vsel %vm2700, %v4821, 0
        %v4995 = vsel %vm2700, %v4828, 0
        %v4996 = vsel %vm2700, %v4835, 0
        %v4997 = vsel %vm2700, %v4842, 0
        %v4998 = vsel %vm2700, %v4849, 0
        %v4999 = vsel %vm2700, %v4856, 0
        %v5000 = vsel %vm2700, %v4863, 0
        %v5001 = vsel %vm2700, %v4870, 0
        %v5002 = vsel %vm2700, %v4877, 0
        %v5003 = vsel %vm2700, %v4884, 0
        %v5004 = vsel %vm2700, %v4891, 0
        %v5005 = vsel %vm2700, %v4898, 0
        %v5006 = vsel %vm2700, %v4905, 0
        %v5007 = vsel %vm2700, %v4912, 0
        %v5008 = vsel %vm2700, %v4919, 0
        %v5009 = vsel %vm2700, %v4926, 0
        %v5011 = vshrl.u32 %v4970, 16
        %v5013 = vshll.u32 %v4970, 16
        %v5015 = vrot.slane %v5013, 1
        %v5016 = vor.u32 %v5011, %v5015
        %v5018 = vshll.u32 %v4990, 16
        %v5020 = vrot.slane %v5018, 1
        %v5021 = vsel %vm762, %v5016, %v5020
        %v5023 = vshrl.u32 %v4971, 16
        %v5025 = vshll.u32 %v4971, 16
        %v5027 = vrot.slane %v5025, 1
        %v5028 = vor.u32 %v5023, %v5027
        %v5030 = vshll.u32 %v4991, 16
        %v5032 = vrot.slane %v5030, 1
        %v5033 = vsel %vm762, %v5028, %v5032
        %v5035 = vshrl.u32 %v4972, 16
        %v5037 = vshll.u32 %v4972, 16
        %v5039 = vrot.slane %v5037, 1
        %v5040 = vor.u32 %v5035, %v5039
        %v5042 = vshll.u32 %v4992, 16
        %v5044 = vrot.slane %v5042, 1
        %v5045 = vsel %vm762, %v5040, %v5044
        %v5047 = vshrl.u32 %v4973, 16
        %v5049 = vshll.u32 %v4973, 16
        %v5051 = vrot.slane %v5049, 1
        %v5052 = vor.u32 %v5047, %v5051
        %v5054 = vshll.u32 %v4993, 16
        %v5056 = vrot.slane %v5054, 1
        %v5057 = vsel %vm762, %v5052, %v5056
        %v5059 = vshrl.u32 %v4974, 16
        %v5061 = vshll.u32 %v4974, 16
        %v5063 = vrot.slane %v5061, 1
        %v5064 = vor.u32 %v5059, %v5063
        %v5066 = vshll.u32 %v4994, 16
        %v5068 = vrot.slane %v5066, 1
        %v5069 = vsel %vm762, %v5064, %v5068
        %v5071 = vshrl.u32 %v4975, 16
        %v5073 = vshll.u32 %v4975, 16
        %v5075 = vrot.slane %v5073, 1
        %v5076 = vor.u32 %v5071, %v5075
        %v5078 = vshll.u32 %v4995, 16
        %v5080 = vrot.slane %v5078, 1
        %v5081 = vsel %vm762, %v5076, %v5080
        %v5083 = vshrl.u32 %v4976, 16
        %v5085 = vshll.u32 %v4976, 16
        %v5087 = vrot.slane %v5085, 1
        %v5088 = vor.u32 %v5083, %v5087
        %v5090 = vshll.u32 %v4996, 16
        %v5092 = vrot.slane %v5090, 1
        %v5093 = vsel %vm762, %v5088, %v5092
        %v5095 = vshrl.u32 %v4977, 16
        %v5097 = vshll.u32 %v4977, 16
        %v5099 = vrot.slane %v5097, 1
        %v5100 = vor.u32 %v5095, %v5099
        %v5102 = vshll.u32 %v4997, 16
        %v5104 = vrot.slane %v5102, 1
        %v5105 = vsel %vm762, %v5100, %v5104
        %v5107 = vshrl.u32 %v4978, 16
        %v5109 = vshll.u32 %v4978, 16
        %v5111 = vrot.slane %v5109, 1
        %v5112 = vor.u32 %v5107, %v5111
        %v5114 = vshll.u32 %v4998, 16
        %v5116 = vrot.slane %v5114, 1
        %v5117 = vsel %vm762, %v5112, %v5116
        %v5119 = vshrl.u32 %v4979, 16
        %v5121 = vshll.u32 %v4979, 16
        %v5123 = vrot.slane %v5121, 1
        %v5124 = vor.u32 %v5119, %v5123
        %v5126 = vshll.u32 %v4999, 16
        %v5128 = vrot.slane %v5126, 1
        %v5129 = vsel %vm762, %v5124, %v5128
        %v5131 = vshrl.u32 %v4980, 16
        %v5133 = vshll.u32 %v4980, 16
        %v5135 = vrot.slane %v5133, 1
        %v5136 = vor.u32 %v5131, %v5135
        %v5138 = vshll.u32 %v5000, 16
        %v5140 = vrot.slane %v5138, 1
        %v5141 = vsel %vm762, %v5136, %v5140
        %v5143 = vshrl.u32 %v4981, 16
        %v5145 = vshll.u32 %v4981, 16
        %v5147 = vrot.slane %v5145, 1
        %v5148 = vor.u32 %v5143, %v5147
        %v5150 = vshll.u32 %v5001, 16
        %v5152 = vrot.slane %v5150, 1
        %v5153 = vsel %vm762, %v5148, %v5152
        %v5155 = vshrl.u32 %v4982, 16
        %v5157 = vshll.u32 %v4982, 16
        %v5159 = vrot.slane %v5157, 1
        %v5160 = vor.u32 %v5155, %v5159
        %v5162 = vshll.u32 %v5002, 16
        %v5164 = vrot.slane %v5162, 1
        %v5165 = vsel %vm762, %v5160, %v5164
        %v5167 = vshrl.u32 %v4983, 16
        %v5169 = vshll.u32 %v4983, 16
        %v5171 = vrot.slane %v5169, 1
        %v5172 = vor.u32 %v5167, %v5171
        %v5174 = vshll.u32 %v5003, 16
        %v5176 = vrot.slane %v5174, 1
        %v5177 = vsel %vm762, %v5172, %v5176
        %v5179 = vshrl.u32 %v4984, 16
        %v5181 = vshll.u32 %v4984, 16
        %v5183 = vrot.slane %v5181, 1
        %v5184 = vor.u32 %v5179, %v5183
        %v5186 = vshll.u32 %v5004, 16
        %v5188 = vrot.slane %v5186, 1
        %v5189 = vsel %vm762, %v5184, %v5188
        %v5191 = vshrl.u32 %v4985, 16
        %v5193 = vshll.u32 %v4985, 16
        %v5195 = vrot.slane %v5193, 1
        %v5196 = vor.u32 %v5191, %v5195
        %v5198 = vshll.u32 %v5005, 16
        %v5200 = vrot.slane %v5198, 1
        %v5201 = vsel %vm762, %v5196, %v5200
        %v5203 = vshrl.u32 %v4986, 16
        %v5205 = vshll.u32 %v4986, 16
        %v5207 = vrot.slane %v5205, 1
        %v5208 = vor.u32 %v5203, %v5207
        %v5210 = vshll.u32 %v5006, 16
        %v5212 = vrot.slane %v5210, 1
        %v5213 = vsel %vm762, %v5208, %v5212
        %v5215 = vshrl.u32 %v4987, 16
        %v5217 = vshll.u32 %v4987, 16
        %v5219 = vrot.slane %v5217, 1
        %v5220 = vor.u32 %v5215, %v5219
        %v5222 = vshll.u32 %v5007, 16
        %v5224 = vrot.slane %v5222, 1
        %v5225 = vsel %vm762, %v5220, %v5224
        %5226 = vrot.lane.b32.xlu0 %v5021, 32
        %v5227 = vpop.permute.xlu0 %5226
        %5228 = vrot.lane.b32.xlu0 %v5033, 32
        %v5229 = vpop.permute.xlu0 %5228
        %5230 = vrot.lane.b32.xlu0 %v5045, 32
        %v5231 = vpop.permute.xlu0 %5230
        %5232 = vrot.lane.b32.xlu0 %v5057, 32
        %v5233 = vpop.permute.xlu0 %5232
        %5234 = vrot.lane.b32.xlu0 %v5069, 32
        %v5235 = vpop.permute.xlu0 %5234
        %5236 = vrot.lane.b32.xlu0 %v5081, 32
        %v5237 = vpop.permute.xlu0 %5236
        %5238 = vrot.lane.b32.xlu0 %v5093, 32
        %v5239 = vpop.permute.xlu0 %5238
        %5240 = vrot.lane.b32.xlu0 %v5105, 32
        %v5241 = vpop.permute.xlu0 %5240
        %5242 = vrot.lane.b32.xlu0 %v5117, 32
        %v5243 = vpop.permute.xlu0 %5242
        %5244 = vrot.lane.b32.xlu0 %v5129, 32
        %v5245 = vpop.permute.xlu0 %5244
        %5246 = vrot.lane.b32.xlu0 %v5141, 32
        %v5247 = vpop.permute.xlu0 %5246
        %5248 = vrot.lane.b32.xlu0 %v5153, 32
        %v5249 = vpop.permute.xlu0 %5248
        %5250 = vrot.lane.b32.xlu0 %v5165, 32
        %v5251 = vpop.permute.xlu0 %5250
        %5252 = vrot.lane.b32.xlu0 %v5177, 32
        %v5253 = vpop.permute.xlu0 %5252
        %5254 = vrot.lane.b32.xlu0 %v5189, 32
        %v5255 = vpop.permute.xlu0 %5254
        %5256 = vrot.lane.b32.xlu0 %v5201, 32
        %v5257 = vpop.permute.xlu0 %5256
        %5258 = vrot.lane.b32.xlu0 %v5213, 32
        %v5259 = vpop.permute.xlu0 %5258
        %5260 = vrot.lane.b32.xlu0 %v5225, 32
        %v5261 = vpop.permute.xlu0 %5260
        %v5298 = vrot.slane %v4970, 1
        %v5299 = vrot.slane %v4990, 1
        %v5300 = vsel %vm1071, %v5298, %v5299
        %v5301 = vrot.slane %v4971, 1
        %v5302 = vrot.slane %v4991, 1
        %v5303 = vsel %vm1071, %v5301, %v5302
        %v5304 = vrot.slane %v4972, 1
        %v5305 = vrot.slane %v4992, 1
        %v5306 = vsel %vm1071, %v5304, %v5305
        %v5307 = vrot.slane %v4973, 1
        %v5308 = vrot.slane %v4993, 1
        %v5309 = vsel %vm1071, %v5307, %v5308
        %v5310 = vrot.slane %v4974, 1
        %v5311 = vrot.slane %v4994, 1
        %v5312 = vsel %vm1071, %v5310, %v5311
        %v5313 = vrot.slane %v4975, 1
        %v5314 = vrot.slane %v4995, 1
        %v5315 = vsel %vm1071, %v5313, %v5314
        %v5316 = vrot.slane %v4976, 1
        %v5317 = vrot.slane %v4996, 1
        %v5318 = vsel %vm1071, %v5316, %v5317
        %v5319 = vrot.slane %v4977, 1
        %v5320 = vrot.slane %v4997, 1
        %v5321 = vsel %vm1071, %v5319, %v5320
        %v5322 = vrot.slane %v4978, 1
        %v5323 = vrot.slane %v4998, 1
        %v5324 = vsel %vm1071, %v5322, %v5323
        %v5325 = vrot.slane %v4979, 1
        %v5326 = vrot.slane %v4999, 1
        %v5327 = vsel %vm1071, %v5325, %v5326
        %v5328 = vrot.slane %v4980, 1
        %v5329 = vrot.slane %v5000, 1
        %v5330 = vsel %vm1071, %v5328, %v5329
        %v5331 = vrot.slane %v4981, 1
        %v5332 = vrot.slane %v5001, 1
        %v5333 = vsel %vm1071, %v5331, %v5332
        %v5334 = vrot.slane %v4982, 1
        %v5335 = vrot.slane %v5002, 1
        %v5336 = vsel %vm1071, %v5334, %v5335
        %v5337 = vrot.slane %v4983, 1
        %v5338 = vrot.slane %v5003, 1
        %v5339 = vsel %vm1071, %v5337, %v5338
        %v5340 = vrot.slane %v4984, 1
        %v5341 = vrot.slane %v5004, 1
        %v5342 = vsel %vm1071, %v5340, %v5341
        %v5343 = vrot.slane %v4985, 1
        %v5344 = vrot.slane %v5005, 1
        %v5345 = vsel %vm1071, %v5343, %v5344
        %v5346 = vrot.slane %v4986, 1
        %v5347 = vrot.slane %v5006, 1
        %v5348 = vsel %vm1071, %v5346, %v5347
        %v5349 = vrot.slane %v4987, 1
        %v5350 = vrot.slane %v5007, 1
        %v5351 = vsel %vm1071, %v5349, %v5350
        %5352 = vrot.lane.b32.xlu0 %v5300, 64
        %v5353 = vpop.permute.xlu0 %5352
        %5354 = vrot.lane.b32.xlu0 %v5303, 64
        %v5355 = vpop.permute.xlu0 %5354
        %5356 = vrot.lane.b32.xlu0 %v5306, 64
        %v5357 = vpop.permute.xlu0 %5356
        %5358 = vrot.lane.b32.xlu0 %v5309, 64
        %v5359 = vpop.permute.xlu0 %5358
        %5360 = vrot.lane.b32.xlu0 %v5312, 64
        %v5361 = vpop.permute.xlu0 %5360
        %5362 = vrot.lane.b32.xlu0 %v5315, 64
        %v5363 = vpop.permute.xlu0 %5362
        %5364 = vrot.lane.b32.xlu0 %v5318, 64
        %v5365 = vpop.permute.xlu0 %5364
        %5366 = vrot.lane.b32.xlu0 %v5321, 64
        %v5367 = vpop.permute.xlu0 %5366
        %5368 = vrot.lane.b32.xlu0 %v5324, 64
        %v5369 = vpop.permute.xlu0 %5368
        %5370 = vrot.lane.b32.xlu0 %v5327, 64
        %v5371 = vpop.permute.xlu0 %5370
        %5372 = vrot.lane.b32.xlu0 %v5330, 64
        %v5373 = vpop.permute.xlu0 %5372
        %5374 = vrot.lane.b32.xlu0 %v5333, 64
        %v5375 = vpop.permute.xlu0 %5374
        %5376 = vrot.lane.b32.xlu0 %v5336, 64
        %v5377 = vpop.permute.xlu0 %5376
        %5378 = vrot.lane.b32.xlu0 %v5339, 64
        %v5379 = vpop.permute.xlu0 %5378
        %5380 = vrot.lane.b32.xlu0 %v5342, 64
        %v5381 = vpop.permute.xlu0 %5380
        %5382 = vrot.lane.b32.xlu0 %v5345, 64
        %v5383 = vpop.permute.xlu0 %5382
        %5384 = vrot.lane.b32.xlu0 %v5348, 64
        %v5385 = vpop.permute.xlu0 %5384
        %5386 = vrot.lane.b32.xlu0 %v5351, 64
        %v5387 = vpop.permute.xlu0 %5386
        %5389 = vrot.lane.b32.xlu0 %v4971, 96
        %v5390 = vpop.permute.xlu0 %5389
        %5391 = vrot.lane.b32.xlu0 %v4972, 96
        %v5392 = vpop.permute.xlu0 %5391
        %5393 = vrot.lane.b32.xlu0 %v4973, 96
        %v5394 = vpop.permute.xlu0 %5393
        %5395 = vrot.lane.b32.xlu0 %v4974, 96
        %v5396 = vpop.permute.xlu0 %5395
        %5397 = vrot.lane.b32.xlu0 %v4975, 96
        %v5398 = vpop.permute.xlu0 %5397
        %5399 = vrot.lane.b32.xlu0 %v4976, 96
        %v5400 = vpop.permute.xlu0 %5399
        %5401 = vrot.lane.b32.xlu0 %v4977, 96
        %v5402 = vpop.permute.xlu0 %5401
        %5403 = vrot.lane.b32.xlu0 %v4978, 96
        %v5404 = vpop.permute.xlu0 %5403
        %5405 = vrot.lane.b32.xlu0 %v4979, 96
        %v5406 = vpop.permute.xlu0 %5405
        %5407 = vrot.lane.b32.xlu0 %v4980, 96
        %v5408 = vpop.permute.xlu0 %5407
        %5409 = vrot.lane.b32.xlu0 %v4981, 96
        %v5410 = vpop.permute.xlu0 %5409
        %5411 = vrot.lane.b32.xlu0 %v4982, 96
        %v5412 = vpop.permute.xlu0 %5411
        %5413 = vrot.lane.b32.xlu0 %v4983, 96
        %v5414 = vpop.permute.xlu0 %5413
        %5415 = vrot.lane.b32.xlu0 %v4984, 96
        %v5416 = vpop.permute.xlu0 %5415
        %5417 = vrot.lane.b32.xlu0 %v4985, 96
        %v5418 = vpop.permute.xlu0 %5417
        %5419 = vrot.lane.b32.xlu0 %v4986, 96
        %v5420 = vpop.permute.xlu0 %5419
        %5421 = vrot.lane.b32.xlu0 %v4987, 96
        %v5422 = vpop.permute.xlu0 %5421
        %5423 = vrot.lane.b32.xlu0 %v4988, 96
        %v5424 = vpop.permute.xlu0 %5423
        %v5426 = vshrl.u32 %v4988, 16
        %v5428 = vshll.u32 %v4988, 16
        %v5430 = vrot.slane %v5428, 1
        %v5431 = vor.u32 %v5426, %v5430
        %v5433 = vshll.u32 %v5008, 16
        %v5435 = vrot.slane %v5433, 1
        %v5436 = vsel %vm762, %v5431, %v5435
        %v5438 = vrot.slane %v4988, 1
        %v5439 = vrot.slane %v5008, 1
        %v5440 = vsel %vm1071, %v5438, %v5439
        %5441 = vrot.lane.b32.xlu0 %v5303, 32
        %v5442 = vpop.permute.xlu0 %5441
        %5443 = vrot.lane.b32.xlu0 %v5306, 32
        %v5444 = vpop.permute.xlu0 %5443
        %5445 = vrot.lane.b32.xlu0 %v5309, 32
        %v5446 = vpop.permute.xlu0 %5445
        %5447 = vrot.lane.b32.xlu0 %v5312, 32
        %v5448 = vpop.permute.xlu0 %5447
        %5449 = vrot.lane.b32.xlu0 %v5315, 32
        %v5450 = vpop.permute.xlu0 %5449
        %5451 = vrot.lane.b32.xlu0 %v5318, 32
        %v5452 = vpop.permute.xlu0 %5451
        %5453 = vrot.lane.b32.xlu0 %v5321, 32
        %v5454 = vpop.permute.xlu0 %5453
        %5455 = vrot.lane.b32.xlu0 %v5324, 32
        %v5456 = vpop.permute.xlu0 %5455
        %5457 = vrot.lane.b32.xlu0 %v5327, 32
        %v5458 = vpop.permute.xlu0 %5457
        %5459 = vrot.lane.b32.xlu0 %v5330, 32
        %v5460 = vpop.permute.xlu0 %5459
        %5461 = vrot.lane.b32.xlu0 %v5333, 32
        %v5462 = vpop.permute.xlu0 %5461
        %5463 = vrot.lane.b32.xlu0 %v5336, 32
        %v5464 = vpop.permute.xlu0 %5463
        %5465 = vrot.lane.b32.xlu0 %v5339, 32
        %v5466 = vpop.permute.xlu0 %5465
        %5467 = vrot.lane.b32.xlu0 %v5342, 32
        %v5468 = vpop.permute.xlu0 %5467
        %5469 = vrot.lane.b32.xlu0 %v5345, 32
        %v5470 = vpop.permute.xlu0 %5469
        %5471 = vrot.lane.b32.xlu0 %v5348, 32
        %v5472 = vpop.permute.xlu0 %5471
        %5473 = vrot.lane.b32.xlu0 %v5351, 32
        %v5474 = vpop.permute.xlu0 %5473
        %5475 = vrot.lane.b32.xlu0 %v5440, 32
        %v5476 = vpop.permute.xlu0 %5475
        %5478 = vrot.lane.b32.xlu0 %v4972, 64
        %v5479 = vpop.permute.xlu0 %5478
        %5480 = vrot.lane.b32.xlu0 %v4973, 64
        %v5481 = vpop.permute.xlu0 %5480
        %5482 = vrot.lane.b32.xlu0 %v4974, 64
        %v5483 = vpop.permute.xlu0 %5482
        %5484 = vrot.lane.b32.xlu0 %v4975, 64
        %v5485 = vpop.permute.xlu0 %5484
        %5486 = vrot.lane.b32.xlu0 %v4976, 64
        %v5487 = vpop.permute.xlu0 %5486
        %5488 = vrot.lane.b32.xlu0 %v4977, 64
        %v5489 = vpop.permute.xlu0 %5488
        %5490 = vrot.lane.b32.xlu0 %v4978, 64
        %v5491 = vpop.permute.xlu0 %5490
        %5492 = vrot.lane.b32.xlu0 %v4979, 64
        %v5493 = vpop.permute.xlu0 %5492
        %5494 = vrot.lane.b32.xlu0 %v4980, 64
        %v5495 = vpop.permute.xlu0 %5494
        %5496 = vrot.lane.b32.xlu0 %v4981, 64
        %v5497 = vpop.permute.xlu0 %5496
        %5498 = vrot.lane.b32.xlu0 %v4982, 64
        %v5499 = vpop.permute.xlu0 %5498
        %5500 = vrot.lane.b32.xlu0 %v4983, 64
        %v5501 = vpop.permute.xlu0 %5500
        %5502 = vrot.lane.b32.xlu0 %v4984, 64
        %v5503 = vpop.permute.xlu0 %5502
        %5504 = vrot.lane.b32.xlu0 %v4985, 64
        %v5505 = vpop.permute.xlu0 %5504
        %5506 = vrot.lane.b32.xlu0 %v4986, 64
        %v5507 = vpop.permute.xlu0 %5506
        %5508 = vrot.lane.b32.xlu0 %v4987, 64
        %v5509 = vpop.permute.xlu0 %5508
        %5510 = vrot.lane.b32.xlu0 %v4988, 64
        %v5511 = vpop.permute.xlu0 %5510
        %5512 = vrot.lane.b32.xlu0 %v4989, 64
        %v5513 = vpop.permute.xlu0 %5512
        %v5515 = vshrl.u32 %v4989, 16
        %v5517 = vshll.u32 %v4989, 16
        %v5519 = vrot.slane %v5517, 1
        %v5520 = vor.u32 %v5515, %v5519
        %v5522 = vshll.u32 %v5009, 16
        %v5524 = vrot.slane %v5522, 1
        %v5525 = vsel %vm762, %v5520, %v5524
        %5526 = vrot.lane.b32.xlu0 %v5045, 96
        %v5527 = vpop.permute.xlu0 %5526
        %5528 = vrot.lane.b32.xlu0 %v5057, 96
        %v5529 = vpop.permute.xlu0 %5528
        %5530 = vrot.lane.b32.xlu0 %v5069, 96
        %v5531 = vpop.permute.xlu0 %5530
        %5532 = vrot.lane.b32.xlu0 %v5081, 96
        %v5533 = vpop.permute.xlu0 %5532
        %5534 = vrot.lane.b32.xlu0 %v5093, 96
        %v5535 = vpop.permute.xlu0 %5534
        %5536 = vrot.lane.b32.xlu0 %v5105, 96
        %v5537 = vpop.permute.xlu0 %5536
        %5538 = vrot.lane.b32.xlu0 %v5117, 96
        %v5539 = vpop.permute.xlu0 %5538
        %5540 = vrot.lane.b32.xlu0 %v5129, 96
        %v5541 = vpop.permute.xlu0 %5540
        %5542 = vrot.lane.b32.xlu0 %v5141, 96
        %v5543 = vpop.permute.xlu0 %5542
        %5544 = vrot.lane.b32.xlu0 %v5153, 96
        %v5545 = vpop.permute.xlu0 %5544
        %5546 = vrot.lane.b32.xlu0 %v5165, 96
        %v5547 = vpop.permute.xlu0 %5546
        %5548 = vrot.lane.b32.xlu0 %v5177, 96
        %v5549 = vpop.permute.xlu0 %5548
        %5550 = vrot.lane.b32.xlu0 %v5189, 96
        %v5551 = vpop.permute.xlu0 %5550
        %5552 = vrot.lane.b32.xlu0 %v5201, 96
        %v5553 = vpop.permute.xlu0 %5552
        %5554 = vrot.lane.b32.xlu0 %v5213, 96
        %v5555 = vpop.permute.xlu0 %5554
        %5556 = vrot.lane.b32.xlu0 %v5225, 96
        %v5557 = vpop.permute.xlu0 %5556
        %5558 = vrot.lane.b32.xlu0 %v5436, 96
        %v5559 = vpop.permute.xlu0 %5558
        %5560 = vrot.lane.b32.xlu0 %v5525, 96
        %v5561 = vpop.permute.xlu0 %5560
        %v5563 = vrot.slane %v4989, 1
        %v5564 = vrot.slane %v5009, 1
        %v5565 = vsel %vm1071, %v5563, %v5564
        %v5567 = vsel %vm3359, %v4970, %v5227
        %v5569 = vsel %vm3359, %v4971, %v5229
        %v5571 = vsel %vm3359, %v4972, %v5231
        %v5573 = vsel %vm3359, %v4973, %v5233
        %v5575 = vsel %vm3359, %v4974, %v5235
        %v5577 = vsel %vm3359, %v4975, %v5237
        %v5579 = vsel %vm3359, %v4976, %v5239
        %v5581 = vsel %vm3359, %v4977, %v5241
        %v5583 = vsel %vm3359, %v4978, %v5243
        %v5585 = vsel %vm3359, %v4979, %v5245
        %v5587 = vsel %vm3359, %v4980, %v5247
        %v5589 = vsel %vm3359, %v4981, %v5249
        %v5591 = vsel %vm3359, %v4982, %v5251
        %v5593 = vsel %vm3359, %v4983, %v5253
        %v5595 = vsel %vm3359, %v4984, %v5255
        %v5597 = vsel %vm3359, %v4985, %v5257
        %v5599 = vsel %vm3359, %v4986, %v5259
        %v5601 = vsel %vm3359, %v4987, %v5261
        %v5603 = vsel %vm3400, %v5567, %v5353
        %v5605 = vsel %vm3400, %v5569, %v5355
        %v5607 = vsel %vm3400, %v5571, %v5357
        %v5609 = vsel %vm3400, %v5573, %v5359
        %v5611 = vsel %vm3400, %v5575, %v5361
        %v5613 = vsel %vm3400, %v5577, %v5363
        %v5615 = vsel %vm3400, %v5579, %v5365
        %v5617 = vsel %vm3400, %v5581, %v5367
        %v5619 = vsel %vm3400, %v5583, %v5369
        %v5621 = vsel %vm3400, %v5585, %v5371
        %v5623 = vsel %vm3400, %v5587, %v5373
        %v5625 = vsel %vm3400, %v5589, %v5375
        %v5627 = vsel %vm3400, %v5591, %v5377
        %v5629 = vsel %vm3400, %v5593, %v5379
        %v5631 = vsel %vm3400, %v5595, %v5381
        %v5633 = vsel %vm3400, %v5597, %v5383
        %v5635 = vsel %vm3400, %v5599, %v5385
        %v5637 = vsel %vm3400, %v5601, %v5387
        %v5639 = vsel %vm3441, %v5603, %v5390
        %v5642 = vsel %vm3441, %v5605, %v5392
        %v5645 = vsel %vm3441, %v5607, %v5394
        %v5648 = vsel %vm3441, %v5609, %v5396
        %v5651 = vsel %vm3441, %v5611, %v5398
        %v5654 = vsel %vm3441, %v5613, %v5400
        %v5657 = vsel %vm3441, %v5615, %v5402
        %v5660 = vsel %vm3441, %v5617, %v5404
        %v5663 = vsel %vm3441, %v5619, %v5406
        %v5666 = vsel %vm3441, %v5621, %v5408
        %v5669 = vsel %vm3441, %v5623, %v5410
        %v5672 = vsel %vm3441, %v5625, %v5412
        %v5675 = vsel %vm3441, %v5627, %v5414
        %v5678 = vsel %vm3441, %v5629, %v5416
        %v5681 = vsel %vm3441, %v5631, %v5418
        %v5684 = vsel %vm3441, %v5633, %v5420
        %v5687 = vsel %vm3441, %v5635, %v5422
        %v5690 = vsel %vm3441, %v5637, %v5424
        %v5694 = vsel %vm3359, %v5033, %v5442
        %v5697 = vsel %vm3359, %v5045, %v5444
        %v5700 = vsel %vm3359, %v5057, %v5446
        %v5703 = vsel %vm3359, %v5069, %v5448
        %v5706 = vsel %vm3359, %v5081, %v5450
        %v5709 = vsel %vm3359, %v5093, %v5452
        %v5712 = vsel %vm3359, %v5105, %v5454
        %v5715 = vsel %vm3359, %v5117, %v5456
        %v5718 = vsel %vm3359, %v5129, %v5458
        %v5721 = vsel %vm3359, %v5141, %v5460
        %v5724 = vsel %vm3359, %v5153, %v5462
        %v5727 = vsel %vm3359, %v5165, %v5464
        %v5730 = vsel %vm3359, %v5177, %v5466
        %v5733 = vsel %vm3359, %v5189, %v5468
        %v5736 = vsel %vm3359, %v5201, %v5470
        %v5739 = vsel %vm3359, %v5213, %v5472
        %v5742 = vsel %vm3359, %v5225, %v5474
        %v5745 = vsel %vm3359, %v5436, %v5476
        %v5747 = vsel %vm3400, %v5694, %v5479
        %v5749 = vsel %vm3400, %v5697, %v5481
        %v5751 = vsel %vm3400, %v5700, %v5483
        %v5753 = vsel %vm3400, %v5703, %v5485
        %v5755 = vsel %vm3400, %v5706, %v5487
        %v5757 = vsel %vm3400, %v5709, %v5489
        %v5759 = vsel %vm3400, %v5712, %v5491
        %v5761 = vsel %vm3400, %v5715, %v5493
        %v5763 = vsel %vm3400, %v5718, %v5495
        %v5765 = vsel %vm3400, %v5721, %v5497
        %v5767 = vsel %vm3400, %v5724, %v5499
        %v5769 = vsel %vm3400, %v5727, %v5501
        %v5771 = vsel %vm3400, %v5730, %v5503
        %v5773 = vsel %vm3400, %v5733, %v5505
        %v5775 = vsel %vm3400, %v5736, %v5507
        %v5777 = vsel %vm3400, %v5739, %v5509
        %v5779 = vsel %vm3400, %v5742, %v5511
        %v5781 = vsel %vm3400, %v5745, %v5513
        %v5783 = vsel %vm3441, %v5747, %v5527
        %v5786 = vsel %vm3441, %v5749, %v5529
        %v5789 = vsel %vm3441, %v5751, %v5531
        %v5792 = vsel %vm3441, %v5753, %v5533
        %v5795 = vsel %vm3441, %v5755, %v5535
        %v5798 = vsel %vm3441, %v5757, %v5537
        %v5801 = vsel %vm3441, %v5759, %v5539
        %v5804 = vsel %vm3441, %v5761, %v5541
        %v5807 = vsel %vm3441, %v5763, %v5543
        %v5810 = vsel %vm3441, %v5765, %v5545
        %v5813 = vsel %vm3441, %v5767, %v5547
        %v5816 = vsel %vm3441, %v5769, %v5549
        %v5819 = vsel %vm3441, %v5771, %v5551
        %v5822 = vsel %vm3441, %v5773, %v5553
        %v5825 = vsel %vm3441, %v5775, %v5555
        %v5828 = vsel %vm3441, %v5777, %v5557
        %v5831 = vsel %vm3441, %v5779, %v5559
        %v5834 = vsel %vm3441, %v5781, %v5561
        %v5837 = vperm.slane %v4649, 0
        %v5875 = vunpack.c.l.b16 %v4613
        %v5876 = vunpack.c.l.b16 %v4614
        %v5877 = vunpack.c.l.b16 %v4615
        %v5878 = vunpack.c.l.b16 %v4616
        %v5879 = vunpack.c.l.b16 %v4617
        %v5880 = vunpack.c.l.b16 %v4618
        %v5881 = vunpack.c.l.b16 %v4619
        %v5882 = vunpack.c.l.b16 %v4620
        %v5883 = vunpack.c.l.b16 %v4621
        %v5884 = vunpack.c.l.b16 %v4622
        %v5885 = vunpack.c.l.b16 %v4623
        %v5886 = vunpack.c.l.b16 %v4624
        %v5887 = vunpack.c.l.b16 %v4625
        %v5888 = vunpack.c.l.b16 %v4626
        %v5889 = vunpack.c.l.b16 %v4627
        %v5890 = vunpack.c.l.b16 %v4628
        %v5891 = vunpack.c.l.b16 %v4629
        %v5892 = vunpack.c.l.b16 %v4630
        %v5893 = vunpack.c.l.b16 %v4631
        %v5894 = vunpack.c.l.b16 %v4632
        %v5895 = vunpack.c.l.b16 %v4633
        %v5896 = vunpack.c.l.b16 %v4634
        %v5897 = vunpack.c.l.b16 %v4635
        %v5898 = vunpack.c.l.b16 %v4636
        %v5899 = vunpack.c.l.b16 %v4637
        %v5900 = vunpack.c.l.b16 %v4638
        %v5901 = vunpack.c.l.b16 %v4639
        %v5902 = vunpack.c.l.b16 %v4640
        %v5903 = vunpack.c.l.b16 %v4641
        %v5904 = vunpack.c.l.b16 %v4642
        %v5905 = vunpack.c.l.b16 %v4643
        %v5906 = vunpack.c.l.b16 %v4644
        %v5907 = vunpack.c.l.b16 %v4645
        %v5908 = vunpack.c.l.b16 %v4646
        %v5909 = vunpack.c.l.b16 %v4647
        %v5910 = vunpack.c.l.b16 %v4648
        %v5911 = vpack.c.b16 %v5876, %v5875
        %v5912 = vpack.c.b16 %v5878, %v5877
        %v5913 = vpack.c.b16 %v5880, %v5879
        %v5914 = vpack.c.b16 %v5882, %v5881
        %v5915 = vpack.c.b16 %v5884, %v5883
        %v5916 = vpack.c.b16 %v5886, %v5885
        %v5917 = vpack.c.b16 %v5888, %v5887
        %v5918 = vpack.c.b16 %v5890, %v5889
        %v5919 = vpack.c.b16 %v5892, %v5891
        %v5920 = vpack.c.b16 %v5894, %v5893
        %v5921 = vpack.c.b16 %v5896, %v5895
        %v5922 = vpack.c.b16 %v5898, %v5897
        %v5923 = vpack.c.b16 %v5900, %v5899
        %v5924 = vpack.c.b16 %v5902, %v5901
        %v5925 = vpack.c.b16 %v5904, %v5903
        %v5926 = vpack.c.b16 %v5906, %v5905
        %v5927 = vpack.c.b16 %v5908, %v5907
        %v5928 = vpack.c.b16 %v5910, %v5909
        %v5948 = vsel %vm3359, %v5306, 0
        %v5951 = vsel %vm3359, %v5309, 0
        %v5954 = vsel %vm3359, %v5312, 0
        %v5957 = vsel %vm3359, %v5315, 0
        %v5960 = vsel %vm3359, %v5318, 0
        %v5963 = vsel %vm3359, %v5321, 0
        %v5966 = vsel %vm3359, %v5324, 0
        %v5969 = vsel %vm3359, %v5327, 0
        %v5972 = vsel %vm3359, %v5330, 0
        %v5975 = vsel %vm3359, %v5333, 0
        %v5978 = vsel %vm3359, %v5336, 0
        %v5981 = vsel %vm3359, %v5339, 0
        %v5984 = vsel %vm3359, %v5342, 0
        %v5987 = vsel %vm3359, %v5345, 0
        %v5990 = vsel %vm3359, %v5348, 0
        %v5993 = vsel %vm3359, %v5351, 0
        %v5996 = vsel %vm3359, %v5440, 0
        %v5999 = vsel %vm3359, %v5565, 0
        %6001 = vmatpush.bf16.msra.mxu0 %v5918
        %6002 = vmatpush.bf16.msra.mxu0 %v5917
        %6003 = vmatpush.bf16.msra.mxu0 %v5916
        %6004 = vmatpush.bf16.msra.mxu0 %v5915
        %6005 = vmatpush.bf16.msra.mxu0 %v5914
        %6006 = vmatpush.bf16.msra.mxu0 %v5913
        %6007 = vmatpush.bf16.msra.mxu0 %v5912
        %6008 = vmatpush.bf16.msra.mxu0 %v5911
        %6009 = vmatmul.bf16.gmra.mxu0 %v5639
        %v6010 = vpop.f32.mrf.mxu0
        %v6011 = vadd.f32 %v5837, %v6010
        %v6012 = vpop.f32.mrf.mxu0
        %v6013 = vadd.f32 %v5837, %v6012
        %6014 = vmatmul.bf16.gmra.mxu0 %v5642
        %v6015 = vpop.f32.mrf.mxu0
        %v6016 = vadd.f32 %v5837, %v6015
        %v6017 = vpop.f32.mrf.mxu0
        %v6018 = vadd.f32 %v5837, %v6017
        %6019 = vmatmul.bf16.gmra.mxu0 %v5645
        %v6020 = vpop.f32.mrf.mxu0
        %v6021 = vadd.f32 %v5837, %v6020
        %v6022 = vpop.f32.mrf.mxu0
        %v6023 = vadd.f32 %v5837, %v6022
        %6024 = vmatmul.bf16.gmra.mxu0 %v5648
        %v6025 = vpop.f32.mrf.mxu0
        %v6026 = vadd.f32 %v5837, %v6025
        %v6027 = vpop.f32.mrf.mxu0
        %v6028 = vadd.f32 %v5837, %v6027
        %6029 = vmatmul.bf16.gmra.mxu0 %v5651
        %v6030 = vpop.f32.mrf.mxu0
        %v6031 = vadd.f32 %v5837, %v6030
        %v6032 = vpop.f32.mrf.mxu0
        %v6033 = vadd.f32 %v5837, %v6032
        %6034 = vmatmul.bf16.gmra.mxu0 %v5654
        %v6035 = vpop.f32.mrf.mxu0
        %v6036 = vadd.f32 %v5837, %v6035
        %v6037 = vpop.f32.mrf.mxu0
        %v6038 = vadd.f32 %v5837, %v6037
        %6039 = vmatmul.bf16.gmra.mxu0 %v5657
        %v6040 = vpop.f32.mrf.mxu0
        %v6041 = vadd.f32 %v5837, %v6040
        %v6042 = vpop.f32.mrf.mxu0
        %v6043 = vadd.f32 %v5837, %v6042
        %6044 = vmatmul.bf16.gmra.mxu0 %v5660
        %v6045 = vpop.f32.mrf.mxu0
        %v6046 = vadd.f32 %v5837, %v6045
        %v6047 = vpop.f32.mrf.mxu0
        %v6048 = vadd.f32 %v5837, %v6047
        %6049 = vmatmul.bf16.gmra.mxu0 %v5663
        %v6050 = vpop.f32.mrf.mxu0
        %v6051 = vadd.f32 %v5837, %v6050
        %v6052 = vpop.f32.mrf.mxu0
        %v6053 = vadd.f32 %v5837, %v6052
        %6054 = vmatmul.bf16.gmra.mxu0 %v5666
        %v6055 = vpop.f32.mrf.mxu0
        %v6056 = vadd.f32 %v5837, %v6055
        %v6057 = vpop.f32.mrf.mxu0
        %v6058 = vadd.f32 %v5837, %v6057
        %6059 = vmatmul.bf16.gmra.mxu0 %v5669
        %v6060 = vpop.f32.mrf.mxu0
        %v6061 = vadd.f32 %v5837, %v6060
        %v6062 = vpop.f32.mrf.mxu0
        %v6063 = vadd.f32 %v5837, %v6062
        %6064 = vmatmul.bf16.gmra.mxu0 %v5672
        %v6065 = vpop.f32.mrf.mxu0
        %v6066 = vadd.f32 %v5837, %v6065
        %v6067 = vpop.f32.mrf.mxu0
        %v6068 = vadd.f32 %v5837, %v6067
        %6069 = vmatmul.bf16.gmra.mxu0 %v5675
        %v6070 = vpop.f32.mrf.mxu0
        %v6071 = vadd.f32 %v5837, %v6070
        %v6072 = vpop.f32.mrf.mxu0
        %v6073 = vadd.f32 %v5837, %v6072
        %6074 = vmatmul.bf16.gmra.mxu0 %v5678
        %v6075 = vpop.f32.mrf.mxu0
        %v6076 = vadd.f32 %v5837, %v6075
        %v6077 = vpop.f32.mrf.mxu0
        %v6078 = vadd.f32 %v5837, %v6077
        %6079 = vmatmul.bf16.gmra.mxu0 %v5681
        %v6080 = vpop.f32.mrf.mxu0
        %v6081 = vadd.f32 %v5837, %v6080
        %v6082 = vpop.f32.mrf.mxu0
        %v6083 = vadd.f32 %v5837, %v6082
        %6084 = vmatmul.bf16.gmra.mxu0 %v5684
        %v6085 = vpop.f32.mrf.mxu0
        %v6086 = vadd.f32 %v5837, %v6085
        %v6087 = vpop.f32.mrf.mxu0
        %v6088 = vadd.f32 %v5837, %v6087
        %6089 = vmatmul.bf16.gmra.mxu0 %v5687
        %v6090 = vpop.f32.mrf.mxu0
        %v6091 = vadd.f32 %v5837, %v6090
        %v6092 = vpop.f32.mrf.mxu0
        %v6093 = vadd.f32 %v5837, %v6092
        %6094 = vmatmul.bf16.gmra.mxu0 %v5690
        %v6095 = vpop.f32.mrf.mxu0
        %v6096 = vadd.f32 %v5837, %v6095
        %v6097 = vpop.f32.mrf.mxu0
        %v6098 = vadd.f32 %v5837, %v6097
        %6099 = vdwg.mxu0
        %6100 = vmatpush.bf16.msra.mxu0 %v5926
        %6101 = vmatpush.bf16.msra.mxu0 %v5925
        %6102 = vmatpush.bf16.msra.mxu0 %v5924
        %6103 = vmatpush.bf16.msra.mxu0 %v5923
        %6104 = vmatpush.bf16.msra.mxu0 %v5922
        %6105 = vmatpush.bf16.msra.mxu0 %v5921
        %6106 = vmatpush.bf16.msra.mxu0 %v5920
        %6107 = vmatpush.bf16.msra.mxu0 %v5919
        %6108 = vmatmul.bf16.gmra.mxu0 %v5783
        %v6109 = vpop.f32.mrf.mxu0
        %v6110 = vadd.f32 %v6011, %v6109
        %v6111 = vpop.f32.mrf.mxu0
        %v6112 = vadd.f32 %v6013, %v6111
        %6113 = vmatmul.bf16.gmra.mxu0 %v5786
        %v6114 = vpop.f32.mrf.mxu0
        %v6115 = vadd.f32 %v6016, %v6114
        %v6116 = vpop.f32.mrf.mxu0
        %v6117 = vadd.f32 %v6018, %v6116
        %6118 = vmatmul.bf16.gmra.mxu0 %v5789
        %v6119 = vpop.f32.mrf.mxu0
        %v6120 = vadd.f32 %v6021, %v6119
        %v6121 = vpop.f32.mrf.mxu0
        %v6122 = vadd.f32 %v6023, %v6121
        %6123 = vmatmul.bf16.gmra.mxu0 %v5792
        %v6124 = vpop.f32.mrf.mxu0
        %v6125 = vadd.f32 %v6026, %v6124
        %v6126 = vpop.f32.mrf.mxu0
        %v6127 = vadd.f32 %v6028, %v6126
        %6128 = vmatmul.bf16.gmra.mxu0 %v5795
        %v6129 = vpop.f32.mrf.mxu0
        %v6130 = vadd.f32 %v6031, %v6129
        %v6131 = vpop.f32.mrf.mxu0
        %v6132 = vadd.f32 %v6033, %v6131
        %6133 = vmatmul.bf16.gmra.mxu0 %v5798
        %v6134 = vpop.f32.mrf.mxu0
        %v6135 = vadd.f32 %v6036, %v6134
        %v6136 = vpop.f32.mrf.mxu0
        %v6137 = vadd.f32 %v6038, %v6136
        %6138 = vmatmul.bf16.gmra.mxu0 %v5801
        %v6139 = vpop.f32.mrf.mxu0
        %v6140 = vadd.f32 %v6041, %v6139
        %v6141 = vpop.f32.mrf.mxu0
        %v6142 = vadd.f32 %v6043, %v6141
        %6143 = vmatmul.bf16.gmra.mxu0 %v5804
        %v6144 = vpop.f32.mrf.mxu0
        %v6145 = vadd.f32 %v6046, %v6144
        %v6146 = vpop.f32.mrf.mxu0
        %v6147 = vadd.f32 %v6048, %v6146
        %6148 = vmatmul.bf16.gmra.mxu0 %v5807
        %v6149 = vpop.f32.mrf.mxu0
        %v6150 = vadd.f32 %v6051, %v6149
        %v6151 = vpop.f32.mrf.mxu0
        %v6152 = vadd.f32 %v6053, %v6151
        %6153 = vmatmul.bf16.gmra.mxu0 %v5810
        %v6154 = vpop.f32.mrf.mxu0
        %v6155 = vadd.f32 %v6056, %v6154
        %v6156 = vpop.f32.mrf.mxu0
        %v6157 = vadd.f32 %v6058, %v6156
        %6158 = vmatmul.bf16.gmra.mxu0 %v5813
        %v6159 = vpop.f32.mrf.mxu0
        %v6160 = vadd.f32 %v6061, %v6159
        %v6161 = vpop.f32.mrf.mxu0
        %v6162 = vadd.f32 %v6063, %v6161
        %6163 = vmatmul.bf16.gmra.mxu0 %v5816
        %v6164 = vpop.f32.mrf.mxu0
        %v6165 = vadd.f32 %v6066, %v6164
        %v6166 = vpop.f32.mrf.mxu0
        %v6167 = vadd.f32 %v6068, %v6166
        %6168 = vmatmul.bf16.gmra.mxu0 %v5819
        %v6169 = vpop.f32.mrf.mxu0
        %v6170 = vadd.f32 %v6071, %v6169
        %v6171 = vpop.f32.mrf.mxu0
        %v6172 = vadd.f32 %v6073, %v6171
        %6173 = vmatmul.bf16.gmra.mxu0 %v5822
        %v6174 = vpop.f32.mrf.mxu0
        %v6175 = vadd.f32 %v6076, %v6174
        %v6176 = vpop.f32.mrf.mxu0
        %v6177 = vadd.f32 %v6078, %v6176
        %6178 = vmatmul.bf16.gmra.mxu0 %v5825
        %v6179 = vpop.f32.mrf.mxu0
        %v6180 = vadd.f32 %v6081, %v6179
        %v6181 = vpop.f32.mrf.mxu0
        %v6182 = vadd.f32 %v6083, %v6181
        %6183 = vmatmul.bf16.gmra.mxu0 %v5828
        %v6184 = vpop.f32.mrf.mxu0
        %v6185 = vadd.f32 %v6086, %v6184
        %v6186 = vpop.f32.mrf.mxu0
        %v6187 = vadd.f32 %v6088, %v6186
        %6188 = vmatmul.bf16.gmra.mxu0 %v5831
        %v6189 = vpop.f32.mrf.mxu0
        %v6190 = vadd.f32 %v6091, %v6189
        %v6191 = vpop.f32.mrf.mxu0
        %v6192 = vadd.f32 %v6093, %v6191
        %6193 = vmatmul.bf16.gmra.mxu0 %v5834
        %v6194 = vpop.f32.mrf.mxu0
        %v6195 = vadd.f32 %v6096, %v6194
        %v6196 = vpop.f32.mrf.mxu0
        %v6197 = vadd.f32 %v6098, %v6196
        %6198 = vdwg.mxu0
        %6199 = vmatpush.bf16.msra.mxu0 0
        %6200 = vmatpush.bf16.msra.mxu0 0
        %6201 = vmatpush.bf16.msra.mxu0 0
        %6202 = vmatpush.bf16.msra.mxu0 0
        %6203 = vmatpush.bf16.msra.mxu0 0
        %6204 = vmatpush.bf16.msra.mxu0 0
        %6205 = vmatpush.bf16.msra.mxu0 %v5928
        %6206 = vmatpush.bf16.msra.mxu0 %v5927
        %6207 = vmatmul.bf16.gmra.mxu0 %v5948
        %v6208 = vpop.f32.mrf.mxu0
        %v6209 = vadd.f32 %v6110, %v6208
        %v6210 = vpop.f32.mrf.mxu0
        %v6211 = vadd.f32 %v6112, %v6210
        %6212 = vmatmul.bf16.gmra.mxu0 %v5951
        %v6213 = vpop.f32.mrf.mxu0
        %v6214 = vadd.f32 %v6115, %v6213
        %v6215 = vpop.f32.mrf.mxu0
        %v6216 = vadd.f32 %v6117, %v6215
        %6217 = vmatmul.bf16.gmra.mxu0 %v5954
        %v6218 = vpop.f32.mrf.mxu0
        %v6219 = vadd.f32 %v6120, %v6218
        %v6220 = vpop.f32.mrf.mxu0
        %v6221 = vadd.f32 %v6122, %v6220
        %6222 = vmatmul.bf16.gmra.mxu0 %v5957
        %v6223 = vpop.f32.mrf.mxu0
        %v6224 = vadd.f32 %v6125, %v6223
        %v6225 = vpop.f32.mrf.mxu0
        %v6226 = vadd.f32 %v6127, %v6225
        %6227 = vmatmul.bf16.gmra.mxu0 %v5960
        %v6228 = vpop.f32.mrf.mxu0
        %v6229 = vadd.f32 %v6130, %v6228
        %v6230 = vpop.f32.mrf.mxu0
        %v6231 = vadd.f32 %v6132, %v6230
        %6232 = vmatmul.bf16.gmra.mxu0 %v5963
        %v6233 = vpop.f32.mrf.mxu0
        %v6234 = vadd.f32 %v6135, %v6233
        %v6235 = vpop.f32.mrf.mxu0
        %v6236 = vadd.f32 %v6137, %v6235
        %6237 = vmatmul.bf16.gmra.mxu0 %v5966
        %v6238 = vpop.f32.mrf.mxu0
        %v6239 = vadd.f32 %v6140, %v6238
        %v6240 = vpop.f32.mrf.mxu0
        %v6241 = vadd.f32 %v6142, %v6240
        %6242 = vmatmul.bf16.gmra.mxu0 %v5969
        %v6243 = vpop.f32.mrf.mxu0
        %v6244 = vadd.f32 %v6145, %v6243
        %v6245 = vpop.f32.mrf.mxu0
        %v6246 = vadd.f32 %v6147, %v6245
        %6247 = vmatmul.bf16.gmra.mxu0 %v5972
        %v6248 = vpop.f32.mrf.mxu0
        %v6249 = vadd.f32 %v6150, %v6248
        %v6250 = vpop.f32.mrf.mxu0
        %v6251 = vadd.f32 %v6152, %v6250
        %6252 = vmatmul.bf16.gmra.mxu0 %v5975
        %v6253 = vpop.f32.mrf.mxu0
        %v6254 = vadd.f32 %v6155, %v6253
        %v6255 = vpop.f32.mrf.mxu0
        %v6256 = vadd.f32 %v6157, %v6255
        %6257 = vmatmul.bf16.gmra.mxu0 %v5978
        %v6258 = vpop.f32.mrf.mxu0
        %v6259 = vadd.f32 %v6160, %v6258
        %v6260 = vpop.f32.mrf.mxu0
        %v6261 = vadd.f32 %v6162, %v6260
        %6262 = vmatmul.bf16.gmra.mxu0 %v5981
        %v6263 = vpop.f32.mrf.mxu0
        %v6264 = vadd.f32 %v6165, %v6263
        %v6265 = vpop.f32.mrf.mxu0
        %v6266 = vadd.f32 %v6167, %v6265
        %6267 = vmatmul.bf16.gmra.mxu0 %v5984
        %v6268 = vpop.f32.mrf.mxu0
        %v6269 = vadd.f32 %v6170, %v6268
        %v6270 = vpop.f32.mrf.mxu0
        %v6271 = vadd.f32 %v6172, %v6270
        %6272 = vmatmul.bf16.gmra.mxu0 %v5987
        %v6273 = vpop.f32.mrf.mxu0
        %v6274 = vadd.f32 %v6175, %v6273
        %v6275 = vpop.f32.mrf.mxu0
        %v6276 = vadd.f32 %v6177, %v6275
        %6277 = vmatmul.bf16.gmra.mxu0 %v5990
        %v6278 = vpop.f32.mrf.mxu0
        %v6279 = vadd.f32 %v6180, %v6278
        %v6280 = vpop.f32.mrf.mxu0
        %v6281 = vadd.f32 %v6182, %v6280
        %6282 = vmatmul.bf16.gmra.mxu0 %v5993
        %v6283 = vpop.f32.mrf.mxu0
        %v6284 = vadd.f32 %v6185, %v6283
        %v6285 = vpop.f32.mrf.mxu0
        %v6286 = vadd.f32 %v6187, %v6285
        %6287 = vmatmul.bf16.gmra.mxu0 %v5996
        %v6288 = vpop.f32.mrf.mxu0
        %v6289 = vadd.f32 %v6190, %v6288
        %v6290 = vpop.f32.mrf.mxu0
        %v6291 = vadd.f32 %v6192, %v6290
        %6292 = vmatmul.bf16.gmra.mxu0 %v5999
        %v6293 = vpop.f32.mrf.mxu0
        %v6294 = vadd.f32 %v6195, %v6293
        %v6295 = vpop.f32.mrf.mxu0
        %v6296 = vadd.f32 %v6197, %v6295
        %6297 = vdwg.mxu0
        %v6298 = vmul.f32 %v6209, 0.1
        %v6299 = vmul.f32 %v6211, 0.1
        %v6300 = vmul.f32 %v6214, 0.1
        %v6301 = vmul.f32 %v6216, 0.1
        %v6302 = vmul.f32 %v6219, 0.1
        %v6303 = vmul.f32 %v6221, 0.1
        %v6304 = vmul.f32 %v6224, 0.1
        %v6305 = vmul.f32 %v6226, 0.1
        %v6306 = vmul.f32 %v6229, 0.1
        %v6307 = vmul.f32 %v6231, 0.1
        %v6308 = vmul.f32 %v6234, 0.1
        %v6309 = vmul.f32 %v6236, 0.1
        %v6310 = vmul.f32 %v6239, 0.1
        %v6311 = vmul.f32 %v6241, 0.1
        %v6312 = vmul.f32 %v6244, 0.1
        %v6313 = vmul.f32 %v6246, 0.1
        %v6314 = vmul.f32 %v6249, 0.1
        %v6315 = vmul.f32 %v6251, 0.1
        %v6316 = vmul.f32 %v6254, 0.1
        %v6317 = vmul.f32 %v6256, 0.1
        %v6318 = vmul.f32 %v6259, 0.1
        %v6319 = vmul.f32 %v6261, 0.1
        %v6320 = vmul.f32 %v6264, 0.1
        %v6321 = vmul.f32 %v6266, 0.1
        %v6322 = vmul.f32 %v6269, 0.1
        %v6323 = vmul.f32 %v6271, 0.1
        %v6324 = vmul.f32 %v6274, 0.1
        %v6325 = vmul.f32 %v6276, 0.1
        %v6326 = vmul.f32 %v6279, 0.1
        %v6327 = vmul.f32 %v6281, 0.1
        %v6328 = vmul.f32 %v6284, 0.1
        %v6329 = vmul.f32 %v6286, 0.1
        %v6330 = vmul.f32 %v6289, 0.1
        %v6331 = vmul.f32 %v6291, 0.1
        %v6332 = vmul.f32 %v6294, 0.1
        %v6333 = vmul.f32 %v6296, 0.1
        %v6334 = vmax.f32 %v6209, %v6298
        %v6335 = vmax.f32 %v6211, %v6299
        %v6336 = vmax.f32 %v6214, %v6300
        %v6337 = vmax.f32 %v6216, %v6301
        %v6338 = vmax.f32 %v6219, %v6302
        %v6339 = vmax.f32 %v6221, %v6303
        %v6340 = vmax.f32 %v6224, %v6304
        %v6341 = vmax.f32 %v6226, %v6305
        %v6342 = vmax.f32 %v6229, %v6306
        %v6343 = vmax.f32 %v6231, %v6307
        %v6344 = vmax.f32 %v6234, %v6308
        %v6345 = vmax.f32 %v6236, %v6309
        %v6346 = vmax.f32 %v6239, %v6310
        %v6347 = vmax.f32 %v6241, %v6311
        %v6348 = vmax.f32 %v6244, %v6312
        %v6349 = vmax.f32 %v6246, %v6313
        %v6350 = vmax.f32 %v6249, %v6314
        %v6351 = vmax.f32 %v6251, %v6315
        %v6352 = vmax.f32 %v6254, %v6316
        %v6353 = vmax.f32 %v6256, %v6317
        %v6354 = vmax.f32 %v6259, %v6318
        %v6355 = vmax.f32 %v6261, %v6319
        %v6356 = vmax.f32 %v6264, %v6320
        %v6357 = vmax.f32 %v6266, %v6321
        %v6358 = vmax.f32 %v6269, %v6322
        %v6359 = vmax.f32 %v6271, %v6323
        %v6360 = vmax.f32 %v6274, %v6324
        %v6361 = vmax.f32 %v6276, %v6325
        %v6362 = vmax.f32 %v6279, %v6326
        %v6363 = vmax.f32 %v6281, %v6327
        %v6364 = vmax.f32 %v6284, %v6328
        %v6365 = vmax.f32 %v6286, %v6329
        %v6366 = vmax.f32 %v6289, %v6330
        %v6367 = vmax.f32 %v6291, %v6331
        %v6368 = vmax.f32 %v6294, %v6332
        %v6369 = vmax.f32 %v6296, %v6333
        %s6370 = ssub.s32 %s433, 1
        %v6371 = vstv %s6370
        %v6372 = vadd.s32 %v6371, 1
        %v6373 = vadd.s32 %v6371, 2
        %v6374 = vadd.s32 %v6371, 3
        %v6375 = vadd.s32 %v6371, 4
        %v6376 = vadd.s32 %v6371, 5
        %v6377 = vadd.s32 %v6371, 6
        %v6378 = vadd.s32 %v6371, 7
        %v6379 = vadd.s32 %v6371, 8
        %v6380 = vadd.s32 %v6371, 9
        %v6381 = vadd.s32 %v6371, 10
        %v6382 = vadd.s32 %v6371, 11
        %v6383 = vadd.s32 %v6371, 12
        %v6384 = vadd.s32 %v6371, 13
        %v6385 = vadd.s32 %v6371, 14
        %v6386 = vadd.s32 %v6371, 15
        %v6387 = vadd.s32 %v6371, 16
        %v6388 = vadd.s32 %v6371, 17
        %vm6389 = vcmp.ge.s32.totalorder %v6371, 0
        %vm6390 = vcmp.ge.s32.totalorder %v6372, 0
        %vm6391 = vcmp.ge.s32.totalorder %v6373, 0
        %vm6392 = vcmp.ge.s32.totalorder %v6374, 0
        %vm6393 = vcmp.ge.s32.totalorder %v6375, 0
        %vm6394 = vcmp.ge.s32.totalorder %v6376, 0
        %vm6395 = vcmp.ge.s32.totalorder %v6377, 0
        %vm6396 = vcmp.ge.s32.totalorder %v6378, 0
        %vm6397 = vcmp.ge.s32.totalorder %v6379, 0
        %vm6398 = vcmp.ge.s32.totalorder %v6380, 0
        %vm6399 = vcmp.ge.s32.totalorder %v6381, 0
        %vm6400 = vcmp.ge.s32.totalorder %v6382, 0
        %vm6401 = vcmp.ge.s32.totalorder %v6383, 0
        %vm6402 = vcmp.ge.s32.totalorder %v6384, 0
        %vm6403 = vcmp.ge.s32.totalorder %v6385, 0
        %vm6404 = vcmp.ge.s32.totalorder %v6386, 0
        %vm6405 = vcmp.ge.s32.totalorder %v6387, 0
        %vm6406 = vcmp.ge.s32.totalorder %v6388, 0
        %vm6407 = vcmp.lt.s32.totalorder %v6371, 16
        %vm6408 = vcmp.lt.s32.totalorder %v6372, 16
        %vm6409 = vcmp.lt.s32.totalorder %v6373, 16
        %vm6410 = vcmp.lt.s32.totalorder %v6374, 16
        %vm6411 = vcmp.lt.s32.totalorder %v6375, 16
        %vm6412 = vcmp.lt.s32.totalorder %v6376, 16
        %vm6413 = vcmp.lt.s32.totalorder %v6377, 16
        %vm6414 = vcmp.lt.s32.totalorder %v6378, 16
        %vm6415 = vcmp.lt.s32.totalorder %v6379, 16
        %vm6416 = vcmp.lt.s32.totalorder %v6380, 16
        %vm6417 = vcmp.lt.s32.totalorder %v6381, 16
        %vm6418 = vcmp.lt.s32.totalorder %v6382, 16
        %vm6419 = vcmp.lt.s32.totalorder %v6383, 16
        %vm6420 = vcmp.lt.s32.totalorder %v6384, 16
        %vm6421 = vcmp.lt.s32.totalorder %v6385, 16
        %vm6422 = vcmp.lt.s32.totalorder %v6386, 16
        %vm6423 = vcmp.lt.s32.totalorder %v6387, 16
        %vm6424 = vcmp.lt.s32.totalorder %v6388, 16
        %vm6425 = vmand %vm6389, %vm6407
        %vm6426 = vmand %vm6390, %vm6408
        %vm6427 = vmand %vm6391, %vm6409
        %vm6428 = vmand %vm6392, %vm6410
        %vm6429 = vmand %vm6393, %vm6411
        %vm6430 = vmand %vm6394, %vm6412
        %vm6431 = vmand %vm6395, %vm6413
        %vm6432 = vmand %vm6396, %vm6414
        %vm6433 = vmand %vm6397, %vm6415
        %vm6434 = vmand %vm6398, %vm6416
        %vm6435 = vmand %vm6399, %vm6417
        %vm6436 = vmand %vm6400, %vm6418
        %vm6437 = vmand %vm6401, %vm6419
        %vm6438 = vmand %vm6402, %vm6420
        %vm6439 = vmand %vm6403, %vm6421
        %vm6440 = vmand %vm6404, %vm6422
        %vm6441 = vmand %vm6405, %vm6423
        %vm6442 = vmand %vm6406, %vm6424
        %v6443 = vsel %vm6425, 1, 0
        %v6444 = vsel %vm6426, 1, 0
        %v6445 = vsel %vm6427, 1, 0
        %v6446 = vsel %vm6428, 1, 0
        %v6447 = vsel %vm6429, 1, 0
        %v6448 = vsel %vm6430, 1, 0
        %v6449 = vsel %vm6431, 1, 0
        %v6450 = vsel %vm6432, 1, 0
        %v6451 = vsel %vm6433, 1, 0
        %v6452 = vsel %vm6434, 1, 0
        %v6453 = vsel %vm6435, 1, 0
        %v6454 = vsel %vm6436, 1, 0
        %v6455 = vsel %vm6437, 1, 0
        %v6456 = vsel %vm6438, 1, 0
        %v6457 = vsel %vm6439, 1, 0
        %v6458 = vsel %vm6440, 1, 0
        %v6459 = vsel %vm6441, 1, 0
        %v6460 = vsel %vm6442, 1, 0
        %vm6461 = vcmp.eq.s32.totalorder %v6443, 1
        %vm6462 = vcmp.eq.s32.totalorder %v6444, 1
        %vm6463 = vcmp.eq.s32.totalorder %v6445, 1
        %vm6464 = vcmp.eq.s32.totalorder %v6446, 1
        %vm6465 = vcmp.eq.s32.totalorder %v6447, 1
        %vm6466 = vcmp.eq.s32.totalorder %v6448, 1
        %vm6467 = vcmp.eq.s32.totalorder %v6449, 1
        %vm6468 = vcmp.eq.s32.totalorder %v6450, 1
        %vm6469 = vcmp.eq.s32.totalorder %v6451, 1
        %vm6470 = vcmp.eq.s32.totalorder %v6452, 1
        %vm6471 = vcmp.eq.s32.totalorder %v6453, 1
        %vm6472 = vcmp.eq.s32.totalorder %v6454, 1
        %vm6473 = vcmp.eq.s32.totalorder %v6455, 1
        %vm6474 = vcmp.eq.s32.totalorder %v6456, 1
        %vm6475 = vcmp.eq.s32.totalorder %v6457, 1
        %vm6476 = vcmp.eq.s32.totalorder %v6458, 1
        %vm6477 = vcmp.eq.s32.totalorder %v6459, 1
        %vm6478 = vcmp.eq.s32.totalorder %v6460, 1
        %v6479 = vsel %vm6461, %v6334, 0.0
        %v6480 = vsel %vm6461, %v6335, 0.0
        %v6481 = vsel %vm6462, %v6336, 0.0
        %v6482 = vsel %vm6462, %v6337, 0.0
        %v6483 = vsel %vm6463, %v6338, 0.0
        %v6484 = vsel %vm6463, %v6339, 0.0
        %v6485 = vsel %vm6464, %v6340, 0.0
        %v6486 = vsel %vm6464, %v6341, 0.0
        %v6487 = vsel %vm6465, %v6342, 0.0
        %v6488 = vsel %vm6465, %v6343, 0.0
        %v6489 = vsel %vm6466, %v6344, 0.0
        %v6490 = vsel %vm6466, %v6345, 0.0
        %v6491 = vsel %vm6467, %v6346, 0.0
        %v6492 = vsel %vm6467, %v6347, 0.0
        %v6493 = vsel %vm6468, %v6348, 0.0
        %v6494 = vsel %vm6468, %v6349, 0.0
        %v6495 = vsel %vm6469, %v6350, 0.0
        %v6496 = vsel %vm6469, %v6351, 0.0
        %v6497 = vsel %vm6470, %v6352, 0.0
        %v6498 = vsel %vm6470, %v6353, 0.0
        %v6499 = vsel %vm6471, %v6354, 0.0
        %v6500 = vsel %vm6471, %v6355, 0.0
        %v6501 = vsel %vm6472, %v6356, 0.0
        %v6502 = vsel %vm6472, %v6357, 0.0
        %v6503 = vsel %vm6473, %v6358, 0.0
        %v6504 = vsel %vm6473, %v6359, 0.0
        %v6505 = vsel %vm6474, %v6360, 0.0
        %v6506 = vsel %vm6474, %v6361, 0.0
        %v6507 = vsel %vm6475, %v6362, 0.0
        %v6508 = vsel %vm6475, %v6363, 0.0
        %v6509 = vsel %vm6476, %v6364, 0.0
        %v6510 = vsel %vm6476, %v6365, 0.0
        %v6511 = vsel %vm6477, %v6366, 0.0
        %v6512 = vsel %vm6477, %v6367, 0.0
        %v6513 = vsel %vm6478, %v6368, 0.0
        %v6514 = vsel %vm6478, %v6369, 0.0
        %v6515 = vld [vmem:[%s8] sm:$0xf]
        %v6516 = vld [vmem:[%s8 + $0x4] sm:$0xf]
        %v6517 = vld [vmem:[%s8 + $0x8] sm:$0xf]
        %v6518 = vld [vmem:[%s8 + $0xc] sm:$0xf]
        %v6519 = vld [vmem:[%s8 + $0x10] sm:$0xf]
        %v6520 = vld [vmem:[%s8 + $0x14] sm:$0xf]
        %v6521 = vld [vmem:[%s8 + $0x18] sm:$0xf]
        %v6522 = vld [vmem:[%s8 + $0x1c] sm:$0xf]
        %v6523 = vld [vmem:[%s8 + $0x20] sm:$0xf]
        %v6524 = vld [vmem:[%s8 + $0x24] sm:$0xf]
        %v6525 = vld [vmem:[%s8 + $0x28] sm:$0xf]
        %v6526 = vld [vmem:[%s8 + $0x2c] sm:$0xf]
        %v6527 = vld [vmem:[%s8 + $0x30] sm:$0xf]
        %v6528 = vld [vmem:[%s8 + $0x34] sm:$0xf]
        %v6529 = vld [vmem:[%s8 + $0x38] sm:$0xf]
        %v6530 = vld [vmem:[%s8 + $0x3c] sm:$0xf]
        %v6531 = vld [vmem:[%s8 + $0x40] sm:$0xf]
        %v6532 = vld [vmem:[%s8 + $0x44] sm:$0xf]
        %v6533 = vld [vmem:[%s8 + $0x48] sm:$0xf]
        %v6534 = vld [vmem:[%s8 + $0x4c] sm:$0xf]
        %v6535 = vld [vmem:[%s8 + $0x50] sm:$0xf]
        %v6536 = vld [vmem:[%s8 + $0x54] sm:$0xf]
        %v6537 = vld [vmem:[%s8 + $0x58] sm:$0xf]
        %v6538 = vld [vmem:[%s8 + $0x5c] sm:$0xf]
        %v6539 = vld [vmem:[%s8 + $0x60] sm:$0xf]
        %v6540 = vld [vmem:[%s8 + $0x64] sm:$0xf]
        %v6541 = vld [vmem:[%s8 + $0x68] sm:$0xf]
        %v6542 = vld [vmem:[%s8 + $0x6c] sm:$0xf]
        %v6543 = vld [vmem:[%s8 + $0x70] sm:$0xf]
        %v6544 = vld [vmem:[%s8 + $0x74] sm:$0xf]
        %v6545 = vld [vmem:[%s8 + $0x78] sm:$0xf]
        %v6546 = vld [vmem:[%s8 + $0x7c] sm:$0xf]
        %v6547 = vld [vmem:[%s8 + $0x80] sm:$0xf]
        %v6548 = vld [vmem:[%s8 + $0x84] sm:$0xf]
        %v6549 = vld [vmem:[%s8 + $0x88] sm:$0xf]
        %v6550 = vld [vmem:[%s8 + $0x8c] sm:$0xf]
        %v6551 = vld [vmem:[%s9] sm:$0x1]
        %v6552 = vpack.c.bf16 %v6479, %v6479
        %v6553 = vpack.c.bf16 %v6480, %v6480
        %v6554 = vpack.c.bf16 %v6481, %v6481
        %v6555 = vpack.c.bf16 %v6482, %v6482
        %v6556 = vpack.c.bf16 %v6483, %v6483
        %v6557 = vpack.c.bf16 %v6484, %v6484
        %v6558 = vpack.c.bf16 %v6485, %v6485
        %v6559 = vpack.c.bf16 %v6486, %v6486
        %v6560 = vpack.c.bf16 %v6487, %v6487
        %v6561 = vpack.c.bf16 %v6488, %v6488
        %v6562 = vpack.c.bf16 %v6489, %v6489
        %v6563 = vpack.c.bf16 %v6490, %v6490
        %v6564 = vpack.c.bf16 %v6491, %v6491
        %v6565 = vpack.c.bf16 %v6492, %v6492
        %v6566 = vpack.c.bf16 %v6493, %v6493
        %v6567 = vpack.c.bf16 %v6494, %v6494
        %v6568 = vpack.c.bf16 %v6495, %v6495
        %v6569 = vpack.c.bf16 %v6496, %v6496
        %v6570 = vpack.c.bf16 %v6497, %v6497
        %v6571 = vpack.c.bf16 %v6498, %v6498
        %v6572 = vpack.c.bf16 %v6499, %v6499
        %v6573 = vpack.c.bf16 %v6500, %v6500
        %v6574 = vpack.c.bf16 %v6501, %v6501
        %v6575 = vpack.c.bf16 %v6502, %v6502
        %v6576 = vpack.c.bf16 %v6503, %v6503
        %v6577 = vpack.c.bf16 %v6504, %v6504
        %v6578 = vpack.c.bf16 %v6505, %v6505
        %v6579 = vpack.c.bf16 %v6506, %v6506
        %v6580 = vpack.c.bf16 %v6507, %v6507
        %v6581 = vpack.c.bf16 %v6508, %v6508
        %v6582 = vpack.c.bf16 %v6509, %v6509
        %v6583 = vpack.c.bf16 %v6510, %v6510
        %v6584 = vpack.c.bf16 %v6511, %v6511
        %v6585 = vpack.c.bf16 %v6512, %v6512
        %v6586 = vpack.c.bf16 %v6513, %v6513
        %v6587 = vpack.c.bf16 %v6514, %v6514
        %v6624 = vunpack.c.l.b16 %v6552
        %v6625 = vunpack.c.l.b16 %v6553
        %v6626 = vunpack.c.l.b16 %v6554
        %v6627 = vunpack.c.l.b16 %v6555
        %v6628 = vunpack.c.l.b16 %v6556
        %v6629 = vunpack.c.l.b16 %v6557
        %v6630 = vunpack.c.l.b16 %v6558
        %v6631 = vunpack.c.l.b16 %v6559
        %v6632 = vunpack.c.l.b16 %v6560
        %v6633 = vunpack.c.l.b16 %v6561
        %v6634 = vunpack.c.l.b16 %v6562
        %v6635 = vunpack.c.l.b16 %v6563
        %v6636 = vunpack.c.l.b16 %v6564
        %v6637 = vunpack.c.l.b16 %v6565
        %v6638 = vunpack.c.l.b16 %v6566
        %v6639 = vunpack.c.l.b16 %v6567
        %v6640 = vunpack.c.l.b16 %v6568
        %v6641 = vunpack.c.l.b16 %v6569
        %v6642 = vunpack.c.l.b16 %v6570
        %v6643 = vunpack.c.l.b16 %v6571
        %v6644 = vunpack.c.l.b16 %v6572
        %v6645 = vunpack.c.l.b16 %v6573
        %v6646 = vunpack.c.l.b16 %v6574
        %v6647 = vunpack.c.l.b16 %v6575
        %v6648 = vunpack.c.l.b16 %v6576
        %v6649 = vunpack.c.l.b16 %v6577
        %v6650 = vunpack.c.l.b16 %v6578
        %v6651 = vunpack.c.l.b16 %v6579
        %v6652 = vunpack.c.l.b16 %v6580
        %v6653 = vunpack.c.l.b16 %v6581
        %v6654 = vunpack.c.l.b16 %v6582
        %v6655 = vunpack.c.l.b16 %v6583
        %v6656 = vunpack.c.l.b16 %v6584
        %v6657 = vunpack.c.l.b16 %v6585
        %v6658 = vunpack.c.l.b16 %v6586
        %v6659 = vunpack.c.l.b16 %v6587
        %v6660 = vpack.c.b16 %v6625, %v6624
        %v6661 = vpack.c.b16 %v6627, %v6626
        %v6662 = vpack.c.b16 %v6629, %v6628
        %v6663 = vpack.c.b16 %v6631, %v6630
        %v6664 = vpack.c.b16 %v6633, %v6632
        %v6665 = vpack.c.b16 %v6635, %v6634
        %v6666 = vpack.c.b16 %v6637, %v6636
        %v6667 = vpack.c.b16 %v6639, %v6638
        %v6668 = vpack.c.b16 %v6641, %v6640
        %v6669 = vpack.c.b16 %v6643, %v6642
        %v6670 = vpack.c.b16 %v6645, %v6644
        %v6671 = vpack.c.b16 %v6647, %v6646
        %v6672 = vpack.c.b16 %v6649, %v6648
        %v6673 = vpack.c.b16 %v6651, %v6650
        %v6674 = vpack.c.b16 %v6653, %v6652
        %v6675 = vpack.c.b16 %v6655, %v6654
        %v6676 = vpack.c.b16 %v6657, %v6656
        %v6677 = vpack.c.b16 %v6659, %v6658
        %v6679 = vshrl.u32 %v6660, 16
        %v6681 = vrot.slane %v6679, 7
        %v6682 = vshll.u32 %v6660, 16
        %v6684 = vor.u32 %v6681, %v6682
        %v6686 = vshrl.u32 %v6661, 16
        %v6688 = vrot.slane %v6686, 7
        %v6689 = vshll.u32 %v6661, 16
        %v6691 = vor.u32 %v6688, %v6689
        %v6693 = vshrl.u32 %v6662, 16
        %v6695 = vrot.slane %v6693, 7
        %v6696 = vshll.u32 %v6662, 16
        %v6698 = vor.u32 %v6695, %v6696
        %v6700 = vshrl.u32 %v6663, 16
        %v6702 = vrot.slane %v6700, 7
        %v6703 = vshll.u32 %v6663, 16
        %v6705 = vor.u32 %v6702, %v6703
        %v6707 = vshrl.u32 %v6664, 16
        %v6709 = vrot.slane %v6707, 7
        %v6710 = vshll.u32 %v6664, 16
        %v6712 = vor.u32 %v6709, %v6710
        %v6714 = vshrl.u32 %v6665, 16
        %v6716 = vrot.slane %v6714, 7
        %v6717 = vshll.u32 %v6665, 16
        %v6719 = vor.u32 %v6716, %v6717
        %v6721 = vshrl.u32 %v6666, 16
        %v6723 = vrot.slane %v6721, 7
        %v6724 = vshll.u32 %v6666, 16
        %v6726 = vor.u32 %v6723, %v6724
        %v6728 = vshrl.u32 %v6667, 16
        %v6730 = vrot.slane %v6728, 7
        %v6731 = vshll.u32 %v6667, 16
        %v6733 = vor.u32 %v6730, %v6731
        %v6735 = vshrl.u32 %v6668, 16
        %v6737 = vrot.slane %v6735, 7
        %v6738 = vshll.u32 %v6668, 16
        %v6740 = vor.u32 %v6737, %v6738
        %v6742 = vshrl.u32 %v6669, 16
        %v6744 = vrot.slane %v6742, 7
        %v6745 = vshll.u32 %v6669, 16
        %v6747 = vor.u32 %v6744, %v6745
        %v6749 = vshrl.u32 %v6670, 16
        %v6751 = vrot.slane %v6749, 7
        %v6752 = vshll.u32 %v6670, 16
        %v6754 = vor.u32 %v6751, %v6752
        %v6756 = vshrl.u32 %v6671, 16
        %v6758 = vrot.slane %v6756, 7
        %v6759 = vshll.u32 %v6671, 16
        %v6761 = vor.u32 %v6758, %v6759
        %v6763 = vshrl.u32 %v6672, 16
        %v6765 = vrot.slane %v6763, 7
        %v6766 = vshll.u32 %v6672, 16
        %v6768 = vor.u32 %v6765, %v6766
        %v6770 = vshrl.u32 %v6673, 16
        %v6772 = vrot.slane %v6770, 7
        %v6773 = vshll.u32 %v6673, 16
        %v6775 = vor.u32 %v6772, %v6773
        %v6777 = vshrl.u32 %v6674, 16
        %v6779 = vrot.slane %v6777, 7
        %v6780 = vshll.u32 %v6674, 16
        %v6782 = vor.u32 %v6779, %v6780
        %v6784 = vshrl.u32 %v6675, 16
        %v6786 = vrot.slane %v6784, 7
        %v6787 = vshll.u32 %v6675, 16
        %v6789 = vor.u32 %v6786, %v6787
        %v6791 = vshrl.u32 %v6676, 16
        %v6793 = vrot.slane %v6791, 7
        %v6794 = vshll.u32 %v6676, 16
        %v6796 = vor.u32 %v6793, %v6794
        %v6798 = vshrl.u32 %v6677, 16
        %v6800 = vrot.slane %v6798, 7
        %v6801 = vshll.u32 %v6677, 16
        %v6803 = vor.u32 %v6800, %v6801
        %v6840 = vsel %vm2700, 0, %v6684
        %v6841 = vsel %vm2700, 0, %v6691
        %v6842 = vsel %vm2700, 0, %v6698
        %v6843 = vsel %vm2700, 0, %v6705
        %v6844 = vsel %vm2700, 0, %v6712
        %v6845 = vsel %vm2700, 0, %v6719
        %v6846 = vsel %vm2700, 0, %v6726
        %v6847 = vsel %vm2700, 0, %v6733
        %v6848 = vsel %vm2700, 0, %v6740
        %v6849 = vsel %vm2700, 0, %v6747
        %v6850 = vsel %vm2700, 0, %v6754
        %v6851 = vsel %vm2700, 0, %v6761
        %v6852 = vsel %vm2700, 0, %v6768
        %v6853 = vsel %vm2700, 0, %v6775
        %v6854 = vsel %vm2700, 0, %v6782
        %v6855 = vsel %vm2700, 0, %v6789
        %v6856 = vsel %vm2700, 0, %v6796
        %v6857 = vsel %vm2700, 0, %v6803
        %v6858 = vsel %vm2700, %v6681, 0
        %v6859 = vsel %vm2700, %v6688, 0
        %v6860 = vsel %vm2700, %v6695, 0
        %v6861 = vsel %vm2700, %v6702, 0
        %v6862 = vsel %vm2700, %v6709, 0
        %v6863 = vsel %vm2700, %v6716, 0
        %v6864 = vsel %vm2700, %v6723, 0
        %v6865 = vsel %vm2700, %v6730, 0
        %v6866 = vsel %vm2700, %v6737, 0
        %v6867 = vsel %vm2700, %v6744, 0
        %v6868 = vsel %vm2700, %v6751, 0
        %v6869 = vsel %vm2700, %v6758, 0
        %v6870 = vsel %vm2700, %v6765, 0
        %v6871 = vsel %vm2700, %v6772, 0
        %v6872 = vsel %vm2700, %v6779, 0
        %v6873 = vsel %vm2700, %v6786, 0
        %v6874 = vsel %vm2700, %v6793, 0
        %v6875 = vsel %vm2700, %v6800, 0
        %v6877 = vshrl.u32 %v6840, 16
        %v6879 = vshll.u32 %v6840, 16
        %v6881 = vrot.slane %v6879, 1
        %v6882 = vor.u32 %v6877, %v6881
        %v6884 = vshll.u32 %v6858, 16
        %v6886 = vrot.slane %v6884, 1
        %v6887 = vsel %vm762, %v6882, %v6886
        %v6889 = vshrl.u32 %v6841, 16
        %v6891 = vshll.u32 %v6841, 16
        %v6893 = vrot.slane %v6891, 1
        %v6894 = vor.u32 %v6889, %v6893
        %v6896 = vshll.u32 %v6859, 16
        %v6898 = vrot.slane %v6896, 1
        %v6899 = vsel %vm762, %v6894, %v6898
        %v6901 = vshrl.u32 %v6842, 16
        %v6903 = vshll.u32 %v6842, 16
        %v6905 = vrot.slane %v6903, 1
        %v6906 = vor.u32 %v6901, %v6905
        %v6908 = vshll.u32 %v6860, 16
        %v6910 = vrot.slane %v6908, 1
        %v6911 = vsel %vm762, %v6906, %v6910
        %v6913 = vshrl.u32 %v6843, 16
        %v6915 = vshll.u32 %v6843, 16
        %v6917 = vrot.slane %v6915, 1
        %v6918 = vor.u32 %v6913, %v6917
        %v6920 = vshll.u32 %v6861, 16
        %v6922 = vrot.slane %v6920, 1
        %v6923 = vsel %vm762, %v6918, %v6922
        %v6925 = vshrl.u32 %v6844, 16
        %v6927 = vshll.u32 %v6844, 16
        %v6929 = vrot.slane %v6927, 1
        %v6930 = vor.u32 %v6925, %v6929
        %v6932 = vshll.u32 %v6862, 16
        %v6934 = vrot.slane %v6932, 1
        %v6935 = vsel %vm762, %v6930, %v6934
        %v6937 = vshrl.u32 %v6845, 16
        %v6939 = vshll.u32 %v6845, 16
        %v6941 = vrot.slane %v6939, 1
        %v6942 = vor.u32 %v6937, %v6941
        %v6944 = vshll.u32 %v6863, 16
        %v6946 = vrot.slane %v6944, 1
        %v6947 = vsel %vm762, %v6942, %v6946
        %v6949 = vshrl.u32 %v6846, 16
        %v6951 = vshll.u32 %v6846, 16
        %v6953 = vrot.slane %v6951, 1
        %v6954 = vor.u32 %v6949, %v6953
        %v6956 = vshll.u32 %v6864, 16
        %v6958 = vrot.slane %v6956, 1
        %v6959 = vsel %vm762, %v6954, %v6958
        %v6961 = vshrl.u32 %v6847, 16
        %v6963 = vshll.u32 %v6847, 16
        %v6965 = vrot.slane %v6963, 1
        %v6966 = vor.u32 %v6961, %v6965
        %v6968 = vshll.u32 %v6865, 16
        %v6970 = vrot.slane %v6968, 1
        %v6971 = vsel %vm762, %v6966, %v6970
        %v6973 = vshrl.u32 %v6848, 16
        %v6975 = vshll.u32 %v6848, 16
        %v6977 = vrot.slane %v6975, 1
        %v6978 = vor.u32 %v6973, %v6977
        %v6980 = vshll.u32 %v6866, 16
        %v6982 = vrot.slane %v6980, 1
        %v6983 = vsel %vm762, %v6978, %v6982
        %v6985 = vshrl.u32 %v6849, 16
        %v6987 = vshll.u32 %v6849, 16
        %v6989 = vrot.slane %v6987, 1
        %v6990 = vor.u32 %v6985, %v6989
        %v6992 = vshll.u32 %v6867, 16
        %v6994 = vrot.slane %v6992, 1
        %v6995 = vsel %vm762, %v6990, %v6994
        %v6997 = vshrl.u32 %v6850, 16
        %v6999 = vshll.u32 %v6850, 16
        %v7001 = vrot.slane %v6999, 1
        %v7002 = vor.u32 %v6997, %v7001
        %v7004 = vshll.u32 %v6868, 16
        %v7006 = vrot.slane %v7004, 1
        %v7007 = vsel %vm762, %v7002, %v7006
        %v7009 = vshrl.u32 %v6851, 16
        %v7011 = vshll.u32 %v6851, 16
        %v7013 = vrot.slane %v7011, 1
        %v7014 = vor.u32 %v7009, %v7013
        %v7016 = vshll.u32 %v6869, 16
        %v7018 = vrot.slane %v7016, 1
        %v7019 = vsel %vm762, %v7014, %v7018
        %v7021 = vshrl.u32 %v6852, 16
        %v7023 = vshll.u32 %v6852, 16
        %v7025 = vrot.slane %v7023, 1
        %v7026 = vor.u32 %v7021, %v7025
        %v7028 = vshll.u32 %v6870, 16
        %v7030 = vrot.slane %v7028, 1
        %v7031 = vsel %vm762, %v7026, %v7030
        %v7033 = vshrl.u32 %v6853, 16
        %v7035 = vshll.u32 %v6853, 16
        %v7037 = vrot.slane %v7035, 1
        %v7038 = vor.u32 %v7033, %v7037
        %v7040 = vshll.u32 %v6871, 16
        %v7042 = vrot.slane %v7040, 1
        %v7043 = vsel %vm762, %v7038, %v7042
        %v7045 = vshrl.u32 %v6854, 16
        %v7047 = vshll.u32 %v6854, 16
        %v7049 = vrot.slane %v7047, 1
        %v7050 = vor.u32 %v7045, %v7049
        %v7052 = vshll.u32 %v6872, 16
        %v7054 = vrot.slane %v7052, 1
        %v7055 = vsel %vm762, %v7050, %v7054
        %v7057 = vshrl.u32 %v6855, 16
        %v7059 = vshll.u32 %v6855, 16
        %v7061 = vrot.slane %v7059, 1
        %v7062 = vor.u32 %v7057, %v7061
        %v7064 = vshll.u32 %v6873, 16
        %v7066 = vrot.slane %v7064, 1
        %v7067 = vsel %vm762, %v7062, %v7066
        %7068 = vrot.lane.b32.xlu0 %v6887, 32
        %v7069 = vpop.permute.xlu0 %7068
        %7070 = vrot.lane.b32.xlu0 %v6899, 32
        %v7071 = vpop.permute.xlu0 %7070
        %7072 = vrot.lane.b32.xlu0 %v6911, 32
        %v7073 = vpop.permute.xlu0 %7072
        %7074 = vrot.lane.b32.xlu0 %v6923, 32
        %v7075 = vpop.permute.xlu0 %7074
        %7076 = vrot.lane.b32.xlu0 %v6935, 32
        %v7077 = vpop.permute.xlu0 %7076
        %7078 = vrot.lane.b32.xlu0 %v6947, 32
        %v7079 = vpop.permute.xlu0 %7078
        %7080 = vrot.lane.b32.xlu0 %v6959, 32
        %v7081 = vpop.permute.xlu0 %7080
        %7082 = vrot.lane.b32.xlu0 %v6971, 32
        %v7083 = vpop.permute.xlu0 %7082
        %7084 = vrot.lane.b32.xlu0 %v6983, 32
        %v7085 = vpop.permute.xlu0 %7084
        %7086 = vrot.lane.b32.xlu0 %v6995, 32
        %v7087 = vpop.permute.xlu0 %7086
        %7088 = vrot.lane.b32.xlu0 %v7007, 32
        %v7089 = vpop.permute.xlu0 %7088
        %7090 = vrot.lane.b32.xlu0 %v7019, 32
        %v7091 = vpop.permute.xlu0 %7090
        %7092 = vrot.lane.b32.xlu0 %v7031, 32
        %v7093 = vpop.permute.xlu0 %7092
        %7094 = vrot.lane.b32.xlu0 %v7043, 32
        %v7095 = vpop.permute.xlu0 %7094
        %7096 = vrot.lane.b32.xlu0 %v7055, 32
        %v7097 = vpop.permute.xlu0 %7096
        %7098 = vrot.lane.b32.xlu0 %v7067, 32
        %v7099 = vpop.permute.xlu0 %7098
        %v7132 = vrot.slane %v6840, 1
        %v7133 = vrot.slane %v6858, 1
        %v7134 = vsel %vm1071, %v7132, %v7133
        %v7135 = vrot.slane %v6841, 1
        %v7136 = vrot.slane %v6859, 1
        %v7137 = vsel %vm1071, %v7135, %v7136
        %v7138 = vrot.slane %v6842, 1
        %v7139 = vrot.slane %v6860, 1
        %v7140 = vsel %vm1071, %v7138, %v7139
        %v7141 = vrot.slane %v6843, 1
        %v7142 = vrot.slane %v6861, 1
        %v7143 = vsel %vm1071, %v7141, %v7142
        %v7144 = vrot.slane %v6844, 1
        %v7145 = vrot.slane %v6862, 1
        %v7146 = vsel %vm1071, %v7144, %v7145
        %v7147 = vrot.slane %v6845, 1
        %v7148 = vrot.slane %v6863, 1
        %v7149 = vsel %vm1071, %v7147, %v7148
        %v7150 = vrot.slane %v6846, 1
        %v7151 = vrot.slane %v6864, 1
        %v7152 = vsel %vm1071, %v7150, %v7151
        %v7153 = vrot.slane %v6847, 1
        %v7154 = vrot.slane %v6865, 1
        %v7155 = vsel %vm1071, %v7153, %v7154
        %v7156 = vrot.slane %v6848, 1
        %v7157 = vrot.slane %v6866, 1
        %v7158 = vsel %vm1071, %v7156, %v7157
        %v7159 = vrot.slane %v6849, 1
        %v7160 = vrot.slane %v6867, 1
        %v7161 = vsel %vm1071, %v7159, %v7160
        %v7162 = vrot.slane %v6850, 1
        %v7163 = vrot.slane %v6868, 1
        %v7164 = vsel %vm1071, %v7162, %v7163
        %v7165 = vrot.slane %v6851, 1
        %v7166 = vrot.slane %v6869, 1
        %v7167 = vsel %vm1071, %v7165, %v7166
        %v7168 = vrot.slane %v6852, 1
        %v7169 = vrot.slane %v6870, 1
        %v7170 = vsel %vm1071, %v7168, %v7169
        %v7171 = vrot.slane %v6853, 1
        %v7172 = vrot.slane %v6871, 1
        %v7173 = vsel %vm1071, %v7171, %v7172
        %v7174 = vrot.slane %v6854, 1
        %v7175 = vrot.slane %v6872, 1
        %v7176 = vsel %vm1071, %v7174, %v7175
        %v7177 = vrot.slane %v6855, 1
        %v7178 = vrot.slane %v6873, 1
        %v7179 = vsel %vm1071, %v7177, %v7178
        %7180 = vrot.lane.b32.xlu0 %v7134, 64
        %v7181 = vpop.permute.xlu0 %7180
        %7182 = vrot.lane.b32.xlu0 %v7137, 64
        %v7183 = vpop.permute.xlu0 %7182
        %7184 = vrot.lane.b32.xlu0 %v7140, 64
        %v7185 = vpop.permute.xlu0 %7184
        %7186 = vrot.lane.b32.xlu0 %v7143, 64
        %v7187 = vpop.permute.xlu0 %7186
        %7188 = vrot.lane.b32.xlu0 %v7146, 64
        %v7189 = vpop.permute.xlu0 %7188
        %7190 = vrot.lane.b32.xlu0 %v7149, 64
        %v7191 = vpop.permute.xlu0 %7190
        %7192 = vrot.lane.b32.xlu0 %v7152, 64
        %v7193 = vpop.permute.xlu0 %7192
        %7194 = vrot.lane.b32.xlu0 %v7155, 64
        %v7195 = vpop.permute.xlu0 %7194
        %7196 = vrot.lane.b32.xlu0 %v7158, 64
        %v7197 = vpop.permute.xlu0 %7196
        %7198 = vrot.lane.b32.xlu0 %v7161, 64
        %v7199 = vpop.permute.xlu0 %7198
        %7200 = vrot.lane.b32.xlu0 %v7164, 64
        %v7201 = vpop.permute.xlu0 %7200
        %7202 = vrot.lane.b32.xlu0 %v7167, 64
        %v7203 = vpop.permute.xlu0 %7202
        %7204 = vrot.lane.b32.xlu0 %v7170, 64
        %v7205 = vpop.permute.xlu0 %7204
        %7206 = vrot.lane.b32.xlu0 %v7173, 64
        %v7207 = vpop.permute.xlu0 %7206
        %7208 = vrot.lane.b32.xlu0 %v7176, 64
        %v7209 = vpop.permute.xlu0 %7208
        %7210 = vrot.lane.b32.xlu0 %v7179, 64
        %v7211 = vpop.permute.xlu0 %7210
        %7213 = vrot.lane.b32.xlu0 %v6841, 96
        %v7214 = vpop.permute.xlu0 %7213
        %7215 = vrot.lane.b32.xlu0 %v6842, 96
        %v7216 = vpop.permute.xlu0 %7215
        %7217 = vrot.lane.b32.xlu0 %v6843, 96
        %v7218 = vpop.permute.xlu0 %7217
        %7219 = vrot.lane.b32.xlu0 %v6844, 96
        %v7220 = vpop.permute.xlu0 %7219
        %7221 = vrot.lane.b32.xlu0 %v6845, 96
        %v7222 = vpop.permute.xlu0 %7221
        %7223 = vrot.lane.b32.xlu0 %v6846, 96
        %v7224 = vpop.permute.xlu0 %7223
        %7225 = vrot.lane.b32.xlu0 %v6847, 96
        %v7226 = vpop.permute.xlu0 %7225
        %7227 = vrot.lane.b32.xlu0 %v6848, 96
        %v7228 = vpop.permute.xlu0 %7227
        %7229 = vrot.lane.b32.xlu0 %v6849, 96
        %v7230 = vpop.permute.xlu0 %7229
        %7231 = vrot.lane.b32.xlu0 %v6850, 96
        %v7232 = vpop.permute.xlu0 %7231
        %7233 = vrot.lane.b32.xlu0 %v6851, 96
        %v7234 = vpop.permute.xlu0 %7233
        %7235 = vrot.lane.b32.xlu0 %v6852, 96
        %v7236 = vpop.permute.xlu0 %7235
        %7237 = vrot.lane.b32.xlu0 %v6853, 96
        %v7238 = vpop.permute.xlu0 %7237
        %7239 = vrot.lane.b32.xlu0 %v6854, 96
        %v7240 = vpop.permute.xlu0 %7239
        %7241 = vrot.lane.b32.xlu0 %v6855, 96
        %v7242 = vpop.permute.xlu0 %7241
        %7243 = vrot.lane.b32.xlu0 %v6856, 96
        %v7244 = vpop.permute.xlu0 %7243
        %v7246 = vshrl.u32 %v6856, 16
        %v7248 = vshll.u32 %v6856, 16
        %v7250 = vrot.slane %v7248, 1
        %v7251 = vor.u32 %v7246, %v7250
        %v7253 = vshll.u32 %v6874, 16
        %v7255 = vrot.slane %v7253, 1
        %v7256 = vsel %vm762, %v7251, %v7255
        %v7258 = vrot.slane %v6856, 1
        %v7259 = vrot.slane %v6874, 1
        %v7260 = vsel %vm1071, %v7258, %v7259
        %7261 = vrot.lane.b32.xlu0 %v7137, 32
        %v7262 = vpop.permute.xlu0 %7261
        %7263 = vrot.lane.b32.xlu0 %v7140, 32
        %v7264 = vpop.permute.xlu0 %7263
        %7265 = vrot.lane.b32.xlu0 %v7143, 32
        %v7266 = vpop.permute.xlu0 %7265
        %7267 = vrot.lane.b32.xlu0 %v7146, 32
        %v7268 = vpop.permute.xlu0 %7267
        %7269 = vrot.lane.b32.xlu0 %v7149, 32
        %v7270 = vpop.permute.xlu0 %7269
        %7271 = vrot.lane.b32.xlu0 %v7152, 32
        %v7272 = vpop.permute.xlu0 %7271
        %7273 = vrot.lane.b32.xlu0 %v7155, 32
        %v7274 = vpop.permute.xlu0 %7273
        %7275 = vrot.lane.b32.xlu0 %v7158, 32
        %v7276 = vpop.permute.xlu0 %7275
        %7277 = vrot.lane.b32.xlu0 %v7161, 32
        %v7278 = vpop.permute.xlu0 %7277
        %7279 = vrot.lane.b32.xlu0 %v7164, 32
        %v7280 = vpop.permute.xlu0 %7279
        %7281 = vrot.lane.b32.xlu0 %v7167, 32
        %v7282 = vpop.permute.xlu0 %7281
        %7283 = vrot.lane.b32.xlu0 %v7170, 32
        %v7284 = vpop.permute.xlu0 %7283
        %7285 = vrot.lane.b32.xlu0 %v7173, 32
        %v7286 = vpop.permute.xlu0 %7285
        %7287 = vrot.lane.b32.xlu0 %v7176, 32
        %v7288 = vpop.permute.xlu0 %7287
        %7289 = vrot.lane.b32.xlu0 %v7179, 32
        %v7290 = vpop.permute.xlu0 %7289
        %7291 = vrot.lane.b32.xlu0 %v7260, 32
        %v7292 = vpop.permute.xlu0 %7291
        %7294 = vrot.lane.b32.xlu0 %v6842, 64
        %v7295 = vpop.permute.xlu0 %7294
        %7296 = vrot.lane.b32.xlu0 %v6843, 64
        %v7297 = vpop.permute.xlu0 %7296
        %7298 = vrot.lane.b32.xlu0 %v6844, 64
        %v7299 = vpop.permute.xlu0 %7298
        %7300 = vrot.lane.b32.xlu0 %v6845, 64
        %v7301 = vpop.permute.xlu0 %7300
        %7302 = vrot.lane.b32.xlu0 %v6846, 64
        %v7303 = vpop.permute.xlu0 %7302
        %7304 = vrot.lane.b32.xlu0 %v6847, 64
        %v7305 = vpop.permute.xlu0 %7304
        %7306 = vrot.lane.b32.xlu0 %v6848, 64
        %v7307 = vpop.permute.xlu0 %7306
        %7308 = vrot.lane.b32.xlu0 %v6849, 64
        %v7309 = vpop.permute.xlu0 %7308
        %7310 = vrot.lane.b32.xlu0 %v6850, 64
        %v7311 = vpop.permute.xlu0 %7310
        %7312 = vrot.lane.b32.xlu0 %v6851, 64
        %v7313 = vpop.permute.xlu0 %7312
        %7314 = vrot.lane.b32.xlu0 %v6852, 64
        %v7315 = vpop.permute.xlu0 %7314
        %7316 = vrot.lane.b32.xlu0 %v6853, 64
        %v7317 = vpop.permute.xlu0 %7316
        %7318 = vrot.lane.b32.xlu0 %v6854, 64
        %v7319 = vpop.permute.xlu0 %7318
        %7320 = vrot.lane.b32.xlu0 %v6855, 64
        %v7321 = vpop.permute.xlu0 %7320
        %7322 = vrot.lane.b32.xlu0 %v6856, 64
        %v7323 = vpop.permute.xlu0 %7322
        %7324 = vrot.lane.b32.xlu0 %v6857, 64
        %v7325 = vpop.permute.xlu0 %7324
        %v7327 = vshrl.u32 %v6857, 16
        %v7329 = vshll.u32 %v6857, 16
        %v7331 = vrot.slane %v7329, 1
        %v7332 = vor.u32 %v7327, %v7331
        %v7334 = vshll.u32 %v6875, 16
        %v7336 = vrot.slane %v7334, 1
        %v7337 = vsel %vm762, %v7332, %v7336
        %7338 = vrot.lane.b32.xlu0 %v6911, 96
        %v7339 = vpop.permute.xlu0 %7338
        %7340 = vrot.lane.b32.xlu0 %v6923, 96
        %v7341 = vpop.permute.xlu0 %7340
        %7342 = vrot.lane.b32.xlu0 %v6935, 96
        %v7343 = vpop.permute.xlu0 %7342
        %7344 = vrot.lane.b32.xlu0 %v6947, 96
        %v7345 = vpop.permute.xlu0 %7344
        %7346 = vrot.lane.b32.xlu0 %v6959, 96
        %v7347 = vpop.permute.xlu0 %7346
        %7348 = vrot.lane.b32.xlu0 %v6971, 96
        %v7349 = vpop.permute.xlu0 %7348
        %7350 = vrot.lane.b32.xlu0 %v6983, 96
        %v7351 = vpop.permute.xlu0 %7350
        %7352 = vrot.lane.b32.xlu0 %v6995, 96
        %v7353 = vpop.permute.xlu0 %7352
        %7354 = vrot.lane.b32.xlu0 %v7007, 96
        %v7355 = vpop.permute.xlu0 %7354
        %7356 = vrot.lane.b32.xlu0 %v7019, 96
        %v7357 = vpop.permute.xlu0 %7356
        %7358 = vrot.lane.b32.xlu0 %v7031, 96
        %v7359 = vpop.permute.xlu0 %7358
        %7360 = vrot.lane.b32.xlu0 %v7043, 96
        %v7361 = vpop.permute.xlu0 %7360
        %7362 = vrot.lane.b32.xlu0 %v7055, 96
        %v7363 = vpop.permute.xlu0 %7362
        %7364 = vrot.lane.b32.xlu0 %v7067, 96
        %v7365 = vpop.permute.xlu0 %7364
        %7366 = vrot.lane.b32.xlu0 %v7256, 96
        %v7367 = vpop.permute.xlu0 %7366
        %7368 = vrot.lane.b32.xlu0 %v7337, 96
        %v7369 = vpop.permute.xlu0 %7368
        %v7371 = vrot.slane %v6857, 1
        %v7372 = vrot.slane %v6875, 1
        %v7373 = vsel %vm1071, %v7371, %v7372
        %v7375 = vsel %vm3359, %v6840, %v7069
        %v7377 = vsel %vm3359, %v6841, %v7071
        %v7379 = vsel %vm3359, %v6842, %v7073
        %v7381 = vsel %vm3359, %v6843, %v7075
        %v7383 = vsel %vm3359, %v6844, %v7077
        %v7385 = vsel %vm3359, %v6845, %v7079
        %v7387 = vsel %vm3359, %v6846, %v7081
        %v7389 = vsel %vm3359, %v6847, %v7083
        %v7391 = vsel %vm3359, %v6848, %v7085
        %v7393 = vsel %vm3359, %v6849, %v7087
        %v7395 = vsel %vm3359, %v6850, %v7089
        %v7397 = vsel %vm3359, %v6851, %v7091
        %v7399 = vsel %vm3359, %v6852, %v7093
        %v7401 = vsel %vm3359, %v6853, %v7095
        %v7403 = vsel %vm3359, %v6854, %v7097
        %v7405 = vsel %vm3359, %v6855, %v7099
        %v7407 = vsel %vm3400, %v7375, %v7181
        %v7409 = vsel %vm3400, %v7377, %v7183
        %v7411 = vsel %vm3400, %v7379, %v7185
        %v7413 = vsel %vm3400, %v7381, %v7187
        %v7415 = vsel %vm3400, %v7383, %v7189
        %v7417 = vsel %vm3400, %v7385, %v7191
        %v7419 = vsel %vm3400, %v7387, %v7193
        %v7421 = vsel %vm3400, %v7389, %v7195
        %v7423 = vsel %vm3400, %v7391, %v7197
        %v7425 = vsel %vm3400, %v7393, %v7199
        %v7427 = vsel %vm3400, %v7395, %v7201
        %v7429 = vsel %vm3400, %v7397, %v7203
        %v7431 = vsel %vm3400, %v7399, %v7205
        %v7433 = vsel %vm3400, %v7401, %v7207
        %v7435 = vsel %vm3400, %v7403, %v7209
        %v7437 = vsel %vm3400, %v7405, %v7211
        %v7439 = vsel %vm3441, %v7407, %v7214
        %v7442 = vsel %vm3441, %v7409, %v7216
        %v7445 = vsel %vm3441, %v7411, %v7218
        %v7448 = vsel %vm3441, %v7413, %v7220
        %v7451 = vsel %vm3441, %v7415, %v7222
        %v7454 = vsel %vm3441, %v7417, %v7224
        %v7457 = vsel %vm3441, %v7419, %v7226
        %v7460 = vsel %vm3441, %v7421, %v7228
        %v7463 = vsel %vm3441, %v7423, %v7230
        %v7466 = vsel %vm3441, %v7425, %v7232
        %v7469 = vsel %vm3441, %v7427, %v7234
        %v7472 = vsel %vm3441, %v7429, %v7236
        %v7475 = vsel %vm3441, %v7431, %v7238
        %v7478 = vsel %vm3441, %v7433, %v7240
        %v7481 = vsel %vm3441, %v7435, %v7242
        %v7484 = vsel %vm3441, %v7437, %v7244
        %v7488 = vsel %vm3359, %v6899, %v7262
        %v7491 = vsel %vm3359, %v6911, %v7264
        %v7494 = vsel %vm3359, %v6923, %v7266
        %v7497 = vsel %vm3359, %v6935, %v7268
        %v7500 = vsel %vm3359, %v6947, %v7270
        %v7503 = vsel %vm3359, %v6959, %v7272
        %v7506 = vsel %vm3359, %v6971, %v7274
        %v7509 = vsel %vm3359, %v6983, %v7276
        %v7512 = vsel %vm3359, %v6995, %v7278
        %v7515 = vsel %vm3359, %v7007, %v7280
        %v7518 = vsel %vm3359, %v7019, %v7282
        %v7521 = vsel %vm3359, %v7031, %v7284
        %v7524 = vsel %vm3359, %v7043, %v7286
        %v7527 = vsel %vm3359, %v7055, %v7288
        %v7530 = vsel %vm3359, %v7067, %v7290
        %v7533 = vsel %vm3359, %v7256, %v7292
        %v7535 = vsel %vm3400, %v7488, %v7295
        %v7537 = vsel %vm3400, %v7491, %v7297
        %v7539 = vsel %vm3400, %v7494, %v7299
        %v7541 = vsel %vm3400, %v7497, %v7301
        %v7543 = vsel %vm3400, %v7500, %v7303
        %v7545 = vsel %vm3400, %v7503, %v7305
        %v7547 = vsel %vm3400, %v7506, %v7307
        %v7549 = vsel %vm3400, %v7509, %v7309
        %v7551 = vsel %vm3400, %v7512, %v7311
        %v7553 = vsel %vm3400, %v7515, %v7313
        %v7555 = vsel %vm3400, %v7518, %v7315
        %v7557 = vsel %vm3400, %v7521, %v7317
        %v7559 = vsel %vm3400, %v7524, %v7319
        %v7561 = vsel %vm3400, %v7527, %v7321
        %v7563 = vsel %vm3400, %v7530, %v7323
        %v7565 = vsel %vm3400, %v7533, %v7325
        %v7567 = vsel %vm3441, %v7535, %v7339
        %v7570 = vsel %vm3441, %v7537, %v7341
        %v7573 = vsel %vm3441, %v7539, %v7343
        %v7576 = vsel %vm3441, %v7541, %v7345
        %v7579 = vsel %vm3441, %v7543, %v7347
        %v7582 = vsel %vm3441, %v7545, %v7349
        %v7585 = vsel %vm3441, %v7547, %v7351
        %v7588 = vsel %vm3441, %v7549, %v7353
        %v7591 = vsel %vm3441, %v7551, %v7355
        %v7594 = vsel %vm3441, %v7553, %v7357
        %v7597 = vsel %vm3441, %v7555, %v7359
        %v7600 = vsel %vm3441, %v7557, %v7361
        %v7603 = vsel %vm3441, %v7559, %v7363
        %v7606 = vsel %vm3441, %v7561, %v7365
        %v7609 = vsel %vm3441, %v7563, %v7367
        %v7612 = vsel %vm3441, %v7565, %v7369
        %v7615 = vperm.slane %v6551, 0
        %v7653 = vunpack.c.l.b16 %v6515
        %v7654 = vunpack.c.l.b16 %v6516
        %v7655 = vunpack.c.l.b16 %v6517
        %v7656 = vunpack.c.l.b16 %v6518
        %v7657 = vunpack.c.l.b16 %v6519
        %v7658 = vunpack.c.l.b16 %v6520
        %v7659 = vunpack.c.l.b16 %v6521
        %v7660 = vunpack.c.l.b16 %v6522
        %v7661 = vunpack.c.l.b16 %v6523
        %v7662 = vunpack.c.l.b16 %v6524
        %v7663 = vunpack.c.l.b16 %v6525
        %v7664 = vunpack.c.l.b16 %v6526
        %v7665 = vunpack.c.l.b16 %v6527
        %v7666 = vunpack.c.l.b16 %v6528
        %v7667 = vunpack.c.l.b16 %v6529
        %v7668 = vunpack.c.l.b16 %v6530
        %v7669 = vunpack.c.l.b16 %v6531
        %v7670 = vunpack.c.l.b16 %v6532
        %v7671 = vunpack.c.l.b16 %v6533
        %v7672 = vunpack.c.l.b16 %v6534
        %v7673 = vunpack.c.l.b16 %v6535
        %v7674 = vunpack.c.l.b16 %v6536
        %v7675 = vunpack.c.l.b16 %v6537
        %v7676 = vunpack.c.l.b16 %v6538
        %v7677 = vunpack.c.l.b16 %v6539
        %v7678 = vunpack.c.l.b16 %v6540
        %v7679 = vunpack.c.l.b16 %v6541
        %v7680 = vunpack.c.l.b16 %v6542
        %v7681 = vunpack.c.l.b16 %v6543
        %v7682 = vunpack.c.l.b16 %v6544
        %v7683 = vunpack.c.l.b16 %v6545
        %v7684 = vunpack.c.l.b16 %v6546
        %v7685 = vunpack.c.l.b16 %v6547
        %v7686 = vunpack.c.l.b16 %v6548
        %v7687 = vunpack.c.l.b16 %v6549
        %v7688 = vunpack.c.l.b16 %v6550
        %v7689 = vpack.c.b16 %v7654, %v7653
        %v7690 = vpack.c.b16 %v7656, %v7655
        %v7691 = vpack.c.b16 %v7658, %v7657
        %v7692 = vpack.c.b16 %v7660, %v7659
        %v7693 = vpack.c.b16 %v7662, %v7661
        %v7694 = vpack.c.b16 %v7664, %v7663
        %v7695 = vpack.c.b16 %v7666, %v7665
        %v7696 = vpack.c.b16 %v7668, %v7667
        %v7697 = vpack.c.b16 %v7670, %v7669
        %v7698 = vpack.c.b16 %v7672, %v7671
        %v7699 = vpack.c.b16 %v7674, %v7673
        %v7700 = vpack.c.b16 %v7676, %v7675
        %v7701 = vpack.c.b16 %v7678, %v7677
        %v7702 = vpack.c.b16 %v7680, %v7679
        %v7703 = vpack.c.b16 %v7682, %v7681
        %v7704 = vpack.c.b16 %v7684, %v7683
        %v7705 = vpack.c.b16 %v7686, %v7685
        %v7706 = vpack.c.b16 %v7688, %v7687
        %v7726 = vsel %vm3359, %v7140, 0
        %v7729 = vsel %vm3359, %v7143, 0
        %v7732 = vsel %vm3359, %v7146, 0
        %v7735 = vsel %vm3359, %v7149, 0
        %v7738 = vsel %vm3359, %v7152, 0
        %v7741 = vsel %vm3359, %v7155, 0
        %v7744 = vsel %vm3359, %v7158, 0
        %v7747 = vsel %vm3359, %v7161, 0
        %v7750 = vsel %vm3359, %v7164, 0
        %v7753 = vsel %vm3359, %v7167, 0
        %v7756 = vsel %vm3359, %v7170, 0
        %v7759 = vsel %vm3359, %v7173, 0
        %v7762 = vsel %vm3359, %v7176, 0
        %v7765 = vsel %vm3359, %v7179, 0
        %v7768 = vsel %vm3359, %v7260, 0
        %v7771 = vsel %vm3359, %v7373, 0
        %7773 = vmatpush.bf16.msra.mxu0 %v7696
        %7774 = vmatpush.bf16.msra.mxu0 %v7695
        %7775 = vmatpush.bf16.msra.mxu0 %v7694
        %7776 = vmatpush.bf16.msra.mxu0 %v7693
        %7777 = vmatpush.bf16.msra.mxu0 %v7692
        %7778 = vmatpush.bf16.msra.mxu0 %v7691
        %7779 = vmatpush.bf16.msra.mxu0 %v7690
        %7780 = vmatpush.bf16.msra.mxu0 %v7689
        %7781 = vmatmul.bf16.gmra.mxu0 %v7439
        %v7782 = vpop.f32.mrf.mxu0
        %v7783 = vadd.f32 %v7615, %v7782
        %v7784 = vpop.f32.mrf.mxu0
        %v7785 = vadd.f32 %v7615, %v7784
        %7786 = vmatmul.bf16.gmra.mxu0 %v7442
        %v7787 = vpop.f32.mrf.mxu0
        %v7788 = vadd.f32 %v7615, %v7787
        %v7789 = vpop.f32.mrf.mxu0
        %v7790 = vadd.f32 %v7615, %v7789
        %7791 = vmatmul.bf16.gmra.mxu0 %v7445
        %v7792 = vpop.f32.mrf.mxu0
        %v7793 = vadd.f32 %v7615, %v7792
        %v7794 = vpop.f32.mrf.mxu0
        %v7795 = vadd.f32 %v7615, %v7794
        %7796 = vmatmul.bf16.gmra.mxu0 %v7448
        %v7797 = vpop.f32.mrf.mxu0
        %v7798 = vadd.f32 %v7615, %v7797
        %v7799 = vpop.f32.mrf.mxu0
        %v7800 = vadd.f32 %v7615, %v7799
        %7801 = vmatmul.bf16.gmra.mxu0 %v7451
        %v7802 = vpop.f32.mrf.mxu0
        %v7803 = vadd.f32 %v7615, %v7802
        %v7804 = vpop.f32.mrf.mxu0
        %v7805 = vadd.f32 %v7615, %v7804
        %7806 = vmatmul.bf16.gmra.mxu0 %v7454
        %v7807 = vpop.f32.mrf.mxu0
        %v7808 = vadd.f32 %v7615, %v7807
        %v7809 = vpop.f32.mrf.mxu0
        %v7810 = vadd.f32 %v7615, %v7809
        %7811 = vmatmul.bf16.gmra.mxu0 %v7457
        %v7812 = vpop.f32.mrf.mxu0
        %v7813 = vadd.f32 %v7615, %v7812
        %v7814 = vpop.f32.mrf.mxu0
        %v7815 = vadd.f32 %v7615, %v7814
        %7816 = vmatmul.bf16.gmra.mxu0 %v7460
        %v7817 = vpop.f32.mrf.mxu0
        %v7818 = vadd.f32 %v7615, %v7817
        %v7819 = vpop.f32.mrf.mxu0
        %v7820 = vadd.f32 %v7615, %v7819
        %7821 = vmatmul.bf16.gmra.mxu0 %v7463
        %v7822 = vpop.f32.mrf.mxu0
        %v7823 = vadd.f32 %v7615, %v7822
        %v7824 = vpop.f32.mrf.mxu0
        %v7825 = vadd.f32 %v7615, %v7824
        %7826 = vmatmul.bf16.gmra.mxu0 %v7466
        %v7827 = vpop.f32.mrf.mxu0
        %v7828 = vadd.f32 %v7615, %v7827
        %v7829 = vpop.f32.mrf.mxu0
        %v7830 = vadd.f32 %v7615, %v7829
        %7831 = vmatmul.bf16.gmra.mxu0 %v7469
        %v7832 = vpop.f32.mrf.mxu0
        %v7833 = vadd.f32 %v7615, %v7832
        %v7834 = vpop.f32.mrf.mxu0
        %v7835 = vadd.f32 %v7615, %v7834
        %7836 = vmatmul.bf16.gmra.mxu0 %v7472
        %v7837 = vpop.f32.mrf.mxu0
        %v7838 = vadd.f32 %v7615, %v7837
        %v7839 = vpop.f32.mrf.mxu0
        %v7840 = vadd.f32 %v7615, %v7839
        %7841 = vmatmul.bf16.gmra.mxu0 %v7475
        %v7842 = vpop.f32.mrf.mxu0
        %v7843 = vadd.f32 %v7615, %v7842
        %v7844 = vpop.f32.mrf.mxu0
        %v7845 = vadd.f32 %v7615, %v7844
        %7846 = vmatmul.bf16.gmra.mxu0 %v7478
        %v7847 = vpop.f32.mrf.mxu0
        %v7848 = vadd.f32 %v7615, %v7847
        %v7849 = vpop.f32.mrf.mxu0
        %v7850 = vadd.f32 %v7615, %v7849
        %7851 = vmatmul.bf16.gmra.mxu0 %v7481
        %v7852 = vpop.f32.mrf.mxu0
        %v7853 = vadd.f32 %v7615, %v7852
        %v7854 = vpop.f32.mrf.mxu0
        %v7855 = vadd.f32 %v7615, %v7854
        %7856 = vmatmul.bf16.gmra.mxu0 %v7484
        %v7857 = vpop.f32.mrf.mxu0
        %v7858 = vadd.f32 %v7615, %v7857
        %v7859 = vpop.f32.mrf.mxu0
        %v7860 = vadd.f32 %v7615, %v7859
        %7861 = vdwg.mxu0
        %7862 = vmatpush.bf16.msra.mxu0 %v7704
        %7863 = vmatpush.bf16.msra.mxu0 %v7703
        %7864 = vmatpush.bf16.msra.mxu0 %v7702
        %7865 = vmatpush.bf16.msra.mxu0 %v7701
        %7866 = vmatpush.bf16.msra.mxu0 %v7700
        %7867 = vmatpush.bf16.msra.mxu0 %v7699
        %7868 = vmatpush.bf16.msra.mxu0 %v7698
        %7869 = vmatpush.bf16.msra.mxu0 %v7697
        %7870 = vmatmul.bf16.gmra.mxu0 %v7567
        %v7871 = vpop.f32.mrf.mxu0
        %v7872 = vadd.f32 %v7783, %v7871
        %v7873 = vpop.f32.mrf.mxu0
        %v7874 = vadd.f32 %v7785, %v7873
        %7875 = vmatmul.bf16.gmra.mxu0 %v7570
        %v7876 = vpop.f32.mrf.mxu0
        %v7877 = vadd.f32 %v7788, %v7876
        %v7878 = vpop.f32.mrf.mxu0
        %v7879 = vadd.f32 %v7790, %v7878
        %7880 = vmatmul.bf16.gmra.mxu0 %v7573
        %v7881 = vpop.f32.mrf.mxu0
        %v7882 = vadd.f32 %v7793, %v7881
        %v7883 = vpop.f32.mrf.mxu0
        %v7884 = vadd.f32 %v7795, %v7883
        %7885 = vmatmul.bf16.gmra.mxu0 %v7576
        %v7886 = vpop.f32.mrf.mxu0
        %v7887 = vadd.f32 %v7798, %v7886
        %v7888 = vpop.f32.mrf.mxu0
        %v7889 = vadd.f32 %v7800, %v7888
        %7890 = vmatmul.bf16.gmra.mxu0 %v7579
        %v7891 = vpop.f32.mrf.mxu0
        %v7892 = vadd.f32 %v7803, %v7891
        %v7893 = vpop.f32.mrf.mxu0
        %v7894 = vadd.f32 %v7805, %v7893
        %7895 = vmatmul.bf16.gmra.mxu0 %v7582
        %v7896 = vpop.f32.mrf.mxu0
        %v7897 = vadd.f32 %v7808, %v7896
        %v7898 = vpop.f32.mrf.mxu0
        %v7899 = vadd.f32 %v7810, %v7898
        %7900 = vmatmul.bf16.gmra.mxu0 %v7585
        %v7901 = vpop.f32.mrf.mxu0
        %v7902 = vadd.f32 %v7813, %v7901
        %v7903 = vpop.f32.mrf.mxu0
        %v7904 = vadd.f32 %v7815, %v7903
        %7905 = vmatmul.bf16.gmra.mxu0 %v7588
        %v7906 = vpop.f32.mrf.mxu0
        %v7907 = vadd.f32 %v7818, %v7906
        %v7908 = vpop.f32.mrf.mxu0
        %v7909 = vadd.f32 %v7820, %v7908
        %7910 = vmatmul.bf16.gmra.mxu0 %v7591
        %v7911 = vpop.f32.mrf.mxu0
        %v7912 = vadd.f32 %v7823, %v7911
        %v7913 = vpop.f32.mrf.mxu0
        %v7914 = vadd.f32 %v7825, %v7913
        %7915 = vmatmul.bf16.gmra.mxu0 %v7594
        %v7916 = vpop.f32.mrf.mxu0
        %v7917 = vadd.f32 %v7828, %v7916
        %v7918 = vpop.f32.mrf.mxu0
        %v7919 = vadd.f32 %v7830, %v7918
        %7920 = vmatmul.bf16.gmra.mxu0 %v7597
        %v7921 = vpop.f32.mrf.mxu0
        %v7922 = vadd.f32 %v7833, %v7921
        %v7923 = vpop.f32.mrf.mxu0
        %v7924 = vadd.f32 %v7835, %v7923
        %7925 = vmatmul.bf16.gmra.mxu0 %v7600
        %v7926 = vpop.f32.mrf.mxu0
        %v7927 = vadd.f32 %v7838, %v7926
        %v7928 = vpop.f32.mrf.mxu0
        %v7929 = vadd.f32 %v7840, %v7928
        %7930 = vmatmul.bf16.gmra.mxu0 %v7603
        %v7931 = vpop.f32.mrf.mxu0
        %v7932 = vadd.f32 %v7843, %v7931
        %v7933 = vpop.f32.mrf.mxu0
        %v7934 = vadd.f32 %v7845, %v7933
        %7935 = vmatmul.bf16.gmra.mxu0 %v7606
        %v7936 = vpop.f32.mrf.mxu0
        %v7937 = vadd.f32 %v7848, %v7936
        %v7938 = vpop.f32.mrf.mxu0
        %v7939 = vadd.f32 %v7850, %v7938
        %7940 = vmatmul.bf16.gmra.mxu0 %v7609
        %v7941 = vpop.f32.mrf.mxu0
        %v7942 = vadd.f32 %v7853, %v7941
        %v7943 = vpop.f32.mrf.mxu0
        %v7944 = vadd.f32 %v7855, %v7943
        %7945 = vmatmul.bf16.gmra.mxu0 %v7612
        %v7946 = vpop.f32.mrf.mxu0
        %v7947 = vadd.f32 %v7858, %v7946
        %v7948 = vpop.f32.mrf.mxu0
        %v7949 = vadd.f32 %v7860, %v7948
        %7950 = vdwg.mxu0
        %7951 = vmatpush.bf16.msra.mxu0 0
        %7952 = vmatpush.bf16.msra.mxu0 0
        %7953 = vmatpush.bf16.msra.mxu0 0
        %7954 = vmatpush.bf16.msra.mxu0 0
        %7955 = vmatpush.bf16.msra.mxu0 0
        %7956 = vmatpush.bf16.msra.mxu0 0
        %7957 = vmatpush.bf16.msra.mxu0 %v7706
        %7958 = vmatpush.bf16.msra.mxu0 %v7705
        %7959 = vmatmul.bf16.gmra.mxu0 %v7726
        %v7960 = vpop.f32.mrf.mxu0
        %v7961 = vadd.f32 %v7872, %v7960
        %v7962 = vpop.f32.mrf.mxu0
        %v7963 = vadd.f32 %v7874, %v7962
        %7964 = vmatmul.bf16.gmra.mxu0 %v7729
        %v7965 = vpop.f32.mrf.mxu0
        %v7966 = vadd.f32 %v7877, %v7965
        %v7967 = vpop.f32.mrf.mxu0
        %v7968 = vadd.f32 %v7879, %v7967
        %7969 = vmatmul.bf16.gmra.mxu0 %v7732
        %v7970 = vpop.f32.mrf.mxu0
        %v7971 = vadd.f32 %v7882, %v7970
        %v7972 = vpop.f32.mrf.mxu0
        %v7973 = vadd.f32 %v7884, %v7972
        %7974 = vmatmul.bf16.gmra.mxu0 %v7735
        %v7975 = vpop.f32.mrf.mxu0
        %v7976 = vadd.f32 %v7887, %v7975
        %v7977 = vpop.f32.mrf.mxu0
        %v7978 = vadd.f32 %v7889, %v7977
        %7979 = vmatmul.bf16.gmra.mxu0 %v7738
        %v7980 = vpop.f32.mrf.mxu0
        %v7981 = vadd.f32 %v7892, %v7980
        %v7982 = vpop.f32.mrf.mxu0
        %v7983 = vadd.f32 %v7894, %v7982
        %7984 = vmatmul.bf16.gmra.mxu0 %v7741
        %v7985 = vpop.f32.mrf.mxu0
        %v7986 = vadd.f32 %v7897, %v7985
        %v7987 = vpop.f32.mrf.mxu0
        %v7988 = vadd.f32 %v7899, %v7987
        %7989 = vmatmul.bf16.gmra.mxu0 %v7744
        %v7990 = vpop.f32.mrf.mxu0
        %v7991 = vadd.f32 %v7902, %v7990
        %v7992 = vpop.f32.mrf.mxu0
        %v7993 = vadd.f32 %v7904, %v7992
        %7994 = vmatmul.bf16.gmra.mxu0 %v7747
        %v7995 = vpop.f32.mrf.mxu0
        %v7996 = vadd.f32 %v7907, %v7995
        %v7997 = vpop.f32.mrf.mxu0
        %v7998 = vadd.f32 %v7909, %v7997
        %7999 = vmatmul.bf16.gmra.mxu0 %v7750
        %v8000 = vpop.f32.mrf.mxu0
        %v8001 = vadd.f32 %v7912, %v8000
        %v8002 = vpop.f32.mrf.mxu0
        %v8003 = vadd.f32 %v7914, %v8002
        %8004 = vmatmul.bf16.gmra.mxu0 %v7753
        %v8005 = vpop.f32.mrf.mxu0
        %v8006 = vadd.f32 %v7917, %v8005
        %v8007 = vpop.f32.mrf.mxu0
        %v8008 = vadd.f32 %v7919, %v8007
        %8009 = vmatmul.bf16.gmra.mxu0 %v7756
        %v8010 = vpop.f32.mrf.mxu0
        %v8011 = vadd.f32 %v7922, %v8010
        %v8012 = vpop.f32.mrf.mxu0
        %v8013 = vadd.f32 %v7924, %v8012
        %8014 = vmatmul.bf16.gmra.mxu0 %v7759
        %v8015 = vpop.f32.mrf.mxu0
        %v8016 = vadd.f32 %v7927, %v8015
        %v8017 = vpop.f32.mrf.mxu0
        %v8018 = vadd.f32 %v7929, %v8017
        %8019 = vmatmul.bf16.gmra.mxu0 %v7762
        %v8020 = vpop.f32.mrf.mxu0
        %v8021 = vadd.f32 %v7932, %v8020
        %v8022 = vpop.f32.mrf.mxu0
        %v8023 = vadd.f32 %v7934, %v8022
        %8024 = vmatmul.bf16.gmra.mxu0 %v7765
        %v8025 = vpop.f32.mrf.mxu0
        %v8026 = vadd.f32 %v7937, %v8025
        %v8027 = vpop.f32.mrf.mxu0
        %v8028 = vadd.f32 %v7939, %v8027
        %8029 = vmatmul.bf16.gmra.mxu0 %v7768
        %v8030 = vpop.f32.mrf.mxu0
        %v8031 = vadd.f32 %v7942, %v8030
        %v8032 = vpop.f32.mrf.mxu0
        %v8033 = vadd.f32 %v7944, %v8032
        %8034 = vmatmul.bf16.gmra.mxu0 %v7771
        %v8035 = vpop.f32.mrf.mxu0
        %v8036 = vadd.f32 %v7947, %v8035
        %v8037 = vpop.f32.mrf.mxu0
        %v8038 = vadd.f32 %v7949, %v8037
        %8039 = vdwg.mxu0
        %v8040 = vld [vmem:[%s423] sm:$0xff]
        %v8041 = vld [vmem:[%s423 + $0x8] sm:$0xff]
        %v8042 = vperm.slane %v8040, 0
        %v8043 = vlaneseq
        %v8044 = vshrl.u32 %v8043, 7
        %8046 = vset.pattern.permute.xlu0 %v8044
        %8047 = vperm.xlu0 %8046, %v8042
        %v8048 = vpop.permute.xlu0 %8047
        %v8049 = vlaneseq
        %v8050 = vshrl.u32 %v8049, 7
        %v8051 = vadd.s32 %v8050, 8
        %8052 = vset.pattern.permute.xlu0 %v8051
        %8053 = vperm.xlu0 %8052, %v8042
        %v8054 = vpop.permute.xlu0 %8053
        %v8055 = vperm.slane %v8040, 1
        %v8056 = vlaneseq
        %v8057 = vshrl.u32 %v8056, 7
        %8059 = vset.pattern.permute.xlu0 %v8057
        %8060 = vperm.xlu0 %8059, %v8055
        %v8061 = vpop.permute.xlu0 %8060
        %v8062 = vlaneseq
        %v8063 = vshrl.u32 %v8062, 7
        %v8064 = vadd.s32 %v8063, 8
        %8065 = vset.pattern.permute.xlu0 %v8064
        %8066 = vperm.xlu0 %8065, %v8055
        %v8067 = vpop.permute.xlu0 %8066
        %v8068 = vperm.slane %v8040, 2
        %v8069 = vlaneseq
        %v8070 = vshrl.u32 %v8069, 7
        %8072 = vset.pattern.permute.xlu0 %v8070
        %8073 = vperm.xlu0 %8072, %v8068
        %v8074 = vpop.permute.xlu0 %8073
        %v8075 = vlaneseq
        %v8076 = vshrl.u32 %v8075, 7
        %v8077 = vadd.s32 %v8076, 8
        %8078 = vset.pattern.permute.xlu0 %v8077
        %8079 = vperm.xlu0 %8078, %v8068
        %v8080 = vpop.permute.xlu0 %8079
        %v8081 = vperm.slane %v8040, 3
        %v8082 = vlaneseq
        %v8083 = vshrl.u32 %v8082, 7
        %8085 = vset.pattern.permute.xlu0 %v8083
        %8086 = vperm.xlu0 %8085, %v8081
        %v8087 = vpop.permute.xlu0 %8086
        %v8088 = vlaneseq
        %v8089 = vshrl.u32 %v8088, 7
        %v8090 = vadd.s32 %v8089, 8
        %8091 = vset.pattern.permute.xlu0 %v8090
        %8092 = vperm.xlu0 %8091, %v8081
        %v8093 = vpop.permute.xlu0 %8092
        %v8094 = vperm.slane %v8040, 4
        %v8095 = vlaneseq
        %v8096 = vshrl.u32 %v8095, 7
        %8098 = vset.pattern.permute.xlu0 %v8096
        %8099 = vperm.xlu0 %8098, %v8094
        %v8100 = vpop.permute.xlu0 %8099
        %v8101 = vlaneseq
        %v8102 = vshrl.u32 %v8101, 7
        %v8103 = vadd.s32 %v8102, 8
        %8104 = vset.pattern.permute.xlu0 %v8103
        %8105 = vperm.xlu0 %8104, %v8094
        %v8106 = vpop.permute.xlu0 %8105
        %v8107 = vperm.slane %v8040, 5
        %v8108 = vlaneseq
        %v8109 = vshrl.u32 %v8108, 7
        %8111 = vset.pattern.permute.xlu0 %v8109
        %8112 = vperm.xlu0 %8111, %v8107
        %v8113 = vpop.permute.xlu0 %8112
        %v8114 = vlaneseq
        %v8115 = vshrl.u32 %v8114, 7
        %v8116 = vadd.s32 %v8115, 8
        %8117 = vset.pattern.permute.xlu0 %v8116
        %8118 = vperm.xlu0 %8117, %v8107
        %v8119 = vpop.permute.xlu0 %8118
        %v8120 = vperm.slane %v8040, 6
        %v8121 = vlaneseq
        %v8122 = vshrl.u32 %v8121, 7
        %8124 = vset.pattern.permute.xlu0 %v8122
        %8125 = vperm.xlu0 %8124, %v8120
        %v8126 = vpop.permute.xlu0 %8125
        %v8127 = vlaneseq
        %v8128 = vshrl.u32 %v8127, 7
        %v8129 = vadd.s32 %v8128, 8
        %8130 = vset.pattern.permute.xlu0 %v8129
        %8131 = vperm.xlu0 %8130, %v8120
        %v8132 = vpop.permute.xlu0 %8131
        %v8133 = vperm.slane %v8040, 7
        %v8134 = vlaneseq
        %v8135 = vshrl.u32 %v8134, 7
        %8137 = vset.pattern.permute.xlu0 %v8135
        %8138 = vperm.xlu0 %8137, %v8133
        %v8139 = vpop.permute.xlu0 %8138
        %v8140 = vlaneseq
        %v8141 = vshrl.u32 %v8140, 7
        %v8142 = vadd.s32 %v8141, 8
        %8143 = vset.pattern.permute.xlu0 %v8142
        %8144 = vperm.xlu0 %8143, %v8133
        %v8145 = vpop.permute.xlu0 %8144
        %v8146 = vperm.slane %v8041, 0
        %v8147 = vlaneseq
        %v8148 = vshrl.u32 %v8147, 7
        %8150 = vset.pattern.permute.xlu0 %v8148
        %8151 = vperm.xlu0 %8150, %v8146
        %v8152 = vpop.permute.xlu0 %8151
        %v8153 = vlaneseq
        %v8154 = vshrl.u32 %v8153, 7
        %v8155 = vadd.s32 %v8154, 8
        %8156 = vset.pattern.permute.xlu0 %v8155
        %8157 = vperm.xlu0 %8156, %v8146
        %v8158 = vpop.permute.xlu0 %8157
        %v8159 = vperm.slane %v8041, 1
        %v8160 = vlaneseq
        %v8161 = vshrl.u32 %v8160, 7
        %8163 = vset.pattern.permute.xlu0 %v8161
        %8164 = vperm.xlu0 %8163, %v8159
        %v8165 = vpop.permute.xlu0 %8164
        %v8166 = vlaneseq
        %v8167 = vshrl.u32 %v8166, 7
        %v8168 = vadd.s32 %v8167, 8
        %8169 = vset.pattern.permute.xlu0 %v8168
        %8170 = vperm.xlu0 %8169, %v8159
        %v8171 = vpop.permute.xlu0 %8170
        %v8172 = vperm.slane %v8041, 2
        %v8173 = vlaneseq
        %v8174 = vshrl.u32 %v8173, 7
        %8176 = vset.pattern.permute.xlu0 %v8174
        %8177 = vperm.xlu0 %8176, %v8172
        %v8178 = vpop.permute.xlu0 %8177
        %v8179 = vlaneseq
        %v8180 = vshrl.u32 %v8179, 7
        %v8181 = vadd.s32 %v8180, 8
        %8182 = vset.pattern.permute.xlu0 %v8181
        %8183 = vperm.xlu0 %8182, %v8172
        %v8184 = vpop.permute.xlu0 %8183
        %v8185 = vperm.slane %v8041, 3
        %v8186 = vlaneseq
        %v8187 = vshrl.u32 %v8186, 7
        %8189 = vset.pattern.permute.xlu0 %v8187
        %8190 = vperm.xlu0 %8189, %v8185
        %v8191 = vpop.permute.xlu0 %8190
        %v8192 = vlaneseq
        %v8193 = vshrl.u32 %v8192, 7
        %v8194 = vadd.s32 %v8193, 8
        %8195 = vset.pattern.permute.xlu0 %v8194
        %8196 = vperm.xlu0 %8195, %v8185
        %v8197 = vpop.permute.xlu0 %8196
        %v8198 = vperm.slane %v8041, 4
        %v8199 = vlaneseq
        %v8200 = vshrl.u32 %v8199, 7
        %8202 = vset.pattern.permute.xlu0 %v8200
        %8203 = vperm.xlu0 %8202, %v8198
        %v8204 = vpop.permute.xlu0 %8203
        %v8205 = vlaneseq
        %v8206 = vshrl.u32 %v8205, 7
        %v8207 = vadd.s32 %v8206, 8
        %8208 = vset.pattern.permute.xlu0 %v8207
        %8209 = vperm.xlu0 %8208, %v8198
        %v8210 = vpop.permute.xlu0 %8209
        %v8211 = vperm.slane %v8041, 5
        %v8212 = vlaneseq
        %v8213 = vshrl.u32 %v8212, 7
        %8215 = vset.pattern.permute.xlu0 %v8213
        %8216 = vperm.xlu0 %8215, %v8211
        %v8217 = vpop.permute.xlu0 %8216
        %v8218 = vlaneseq
        %v8219 = vshrl.u32 %v8218, 7
        %v8220 = vadd.s32 %v8219, 8
        %8221 = vset.pattern.permute.xlu0 %v8220
        %8222 = vperm.xlu0 %8221, %v8211
        %v8223 = vpop.permute.xlu0 %8222
        %v8224 = vperm.slane %v8041, 6
        %v8225 = vlaneseq
        %v8226 = vshrl.u32 %v8225, 7
        %8228 = vset.pattern.permute.xlu0 %v8226
        %8229 = vperm.xlu0 %8228, %v8224
        %v8230 = vpop.permute.xlu0 %8229
        %v8231 = vlaneseq
        %v8232 = vshrl.u32 %v8231, 7
        %v8233 = vadd.s32 %v8232, 8
        %8234 = vset.pattern.permute.xlu0 %v8233
        %8235 = vperm.xlu0 %8234, %v8224
        %v8236 = vpop.permute.xlu0 %8235
        %v8237 = vperm.slane %v8041, 7
        %v8238 = vlaneseq
        %v8239 = vshrl.u32 %v8238, 7
        %8241 = vset.pattern.permute.xlu0 %v8239
        %8242 = vperm.xlu0 %8241, %v8237
        %v8243 = vpop.permute.xlu0 %8242
        %v8244 = vlaneseq
        %v8245 = vshrl.u32 %v8244, 7
        %v8246 = vadd.s32 %v8245, 8
        %8247 = vset.pattern.permute.xlu0 %v8246
        %8248 = vperm.xlu0 %8247, %v8237
        %v8249 = vpop.permute.xlu0 %8248
        %v8250 = vmul.f32 %v7961, %v8048
        %v8251 = vmul.f32 %v7963, %v8054
        %v8252 = vmul.f32 %v7966, %v8061
        %v8253 = vmul.f32 %v7968, %v8067
        %v8254 = vmul.f32 %v7971, %v8074
        %v8255 = vmul.f32 %v7973, %v8080
        %v8256 = vmul.f32 %v7976, %v8087
        %v8257 = vmul.f32 %v7978, %v8093
        %v8258 = vmul.f32 %v7981, %v8100
        %v8259 = vmul.f32 %v7983, %v8106
        %v8260 = vmul.f32 %v7986, %v8113
        %v8261 = vmul.f32 %v7988, %v8119
        %v8262 = vmul.f32 %v7991, %v8126
        %v8263 = vmul.f32 %v7993, %v8132
        %v8264 = vmul.f32 %v7996, %v8139
        %v8265 = vmul.f32 %v7998, %v8145
        %v8266 = vmul.f32 %v8001, %v8152
        %v8267 = vmul.f32 %v8003, %v8158
        %v8268 = vmul.f32 %v8006, %v8165
        %v8269 = vmul.f32 %v8008, %v8171
        %v8270 = vmul.f32 %v8011, %v8178
        %v8271 = vmul.f32 %v8013, %v8184
        %v8272 = vmul.f32 %v8016, %v8191
        %v8273 = vmul.f32 %v8018, %v8197
        %v8274 = vmul.f32 %v8021, %v8204
        %v8275 = vmul.f32 %v8023, %v8210
        %v8276 = vmul.f32 %v8026, %v8217
        %v8277 = vmul.f32 %v8028, %v8223
        %v8278 = vmul.f32 %v8031, %v8230
        %v8279 = vmul.f32 %v8033, %v8236
        %v8280 = vmul.f32 %v8036, %v8243
        %v8281 = vmul.f32 %v8038, %v8249
        %v8282 = vmul.f32 %v8250, %v8250
        %v8283 = vmul.f32 %v8251, %v8251
        %v8284 = vmul.f32 %v8252, %v8252
        %v8285 = vmul.f32 %v8253, %v8253
        %v8286 = vmul.f32 %v8254, %v8254
        %v8287 = vmul.f32 %v8255, %v8255
        %v8288 = vmul.f32 %v8256, %v8256
        %v8289 = vmul.f32 %v8257, %v8257
        %v8290 = vmul.f32 %v8258, %v8258
        %v8291 = vmul.f32 %v8259, %v8259
        %v8292 = vmul.f32 %v8260, %v8260
        %v8293 = vmul.f32 %v8261, %v8261
        %v8294 = vmul.f32 %v8262, %v8262
        %v8295 = vmul.f32 %v8263, %v8263
        %v8296 = vmul.f32 %v8264, %v8264
        %v8297 = vmul.f32 %v8265, %v8265
        %v8298 = vmul.f32 %v8266, %v8266
        %v8299 = vmul.f32 %v8267, %v8267
        %v8300 = vmul.f32 %v8268, %v8268
        %v8301 = vmul.f32 %v8269, %v8269
        %v8302 = vmul.f32 %v8270, %v8270
        %v8303 = vmul.f32 %v8271, %v8271
        %v8304 = vmul.f32 %v8272, %v8272
        %v8305 = vmul.f32 %v8273, %v8273
        %v8306 = vmul.f32 %v8274, %v8274
        %v8307 = vmul.f32 %v8275, %v8275
        %v8308 = vmul.f32 %v8276, %v8276
        %v8309 = vmul.f32 %v8277, %v8277
        %v8310 = vmul.f32 %v8278, %v8278
        %v8311 = vmul.f32 %v8279, %v8279
        %v8312 = vmul.f32 %v8280, %v8280
        %v8313 = vmul.f32 %v8281, %v8281
        %8346 = vrot.lane.b32.xlu0 %v8282, 127
        %v8347 = vpop.permute.xlu0 %8346
        %8348 = vrot.lane.b32.xlu0 %v8283, 127
        %v8349 = vpop.permute.xlu0 %8348
        %8350 = vrot.lane.b32.xlu0 %v8284, 127
        %v8351 = vpop.permute.xlu0 %8350
        %8352 = vrot.lane.b32.xlu0 %v8285, 127
        %v8353 = vpop.permute.xlu0 %8352
        %8354 = vrot.lane.b32.xlu0 %v8286, 127
        %v8355 = vpop.permute.xlu0 %8354
        %8356 = vrot.lane.b32.xlu0 %v8287, 127
        %v8357 = vpop.permute.xlu0 %8356
        %8358 = vrot.lane.b32.xlu0 %v8288, 127
        %v8359 = vpop.permute.xlu0 %8358
        %8360 = vrot.lane.b32.xlu0 %v8289, 127
        %v8361 = vpop.permute.xlu0 %8360
        %8362 = vrot.lane.b32.xlu0 %v8290, 127
        %v8363 = vpop.permute.xlu0 %8362
        %8364 = vrot.lane.b32.xlu0 %v8291, 127
        %v8365 = vpop.permute.xlu0 %8364
        %8366 = vrot.lane.b32.xlu0 %v8292, 127
        %v8367 = vpop.permute.xlu0 %8366
        %8368 = vrot.lane.b32.xlu0 %v8293, 127
        %v8369 = vpop.permute.xlu0 %8368
        %8370 = vrot.lane.b32.xlu0 %v8294, 127
        %v8371 = vpop.permute.xlu0 %8370
        %8372 = vrot.lane.b32.xlu0 %v8295, 127
        %v8373 = vpop.permute.xlu0 %8372
        %8374 = vrot.lane.b32.xlu0 %v8296, 127
        %v8375 = vpop.permute.xlu0 %8374
        %8376 = vrot.lane.b32.xlu0 %v8297, 127
        %v8377 = vpop.permute.xlu0 %8376
        %8378 = vrot.lane.b32.xlu0 %v8298, 127
        %v8379 = vpop.permute.xlu0 %8378
        %8380 = vrot.lane.b32.xlu0 %v8299, 127
        %v8381 = vpop.permute.xlu0 %8380
        %8382 = vrot.lane.b32.xlu0 %v8300, 127
        %v8383 = vpop.permute.xlu0 %8382
        %8384 = vrot.lane.b32.xlu0 %v8301, 127
        %v8385 = vpop.permute.xlu0 %8384
        %8386 = vrot.lane.b32.xlu0 %v8302, 127
        %v8387 = vpop.permute.xlu0 %8386
        %8388 = vrot.lane.b32.xlu0 %v8303, 127
        %v8389 = vpop.permute.xlu0 %8388
        %8390 = vrot.lane.b32.xlu0 %v8304, 127
        %v8391 = vpop.permute.xlu0 %8390
        %8392 = vrot.lane.b32.xlu0 %v8305, 127
        %v8393 = vpop.permute.xlu0 %8392
        %8394 = vrot.lane.b32.xlu0 %v8306, 127
        %v8395 = vpop.permute.xlu0 %8394
        %8396 = vrot.lane.b32.xlu0 %v8307, 127
        %v8397 = vpop.permute.xlu0 %8396
        %8398 = vrot.lane.b32.xlu0 %v8308, 127
        %v8399 = vpop.permute.xlu0 %8398
        %8400 = vrot.lane.b32.xlu0 %v8309, 127
        %v8401 = vpop.permute.xlu0 %8400
        %8402 = vrot.lane.b32.xlu0 %v8310, 127
        %v8403 = vpop.permute.xlu0 %8402
        %8404 = vrot.lane.b32.xlu0 %v8311, 127
        %v8405 = vpop.permute.xlu0 %8404
        %8406 = vrot.lane.b32.xlu0 %v8312, 127
        %v8407 = vpop.permute.xlu0 %8406
        %8408 = vrot.lane.b32.xlu0 %v8313, 127
        %v8409 = vpop.permute.xlu0 %8408
        %v8442 = vadd.f32 %v8282, %v8347
        %v8443 = vadd.f32 %v8283, %v8349
        %v8444 = vadd.f32 %v8284, %v8351
        %v8445 = vadd.f32 %v8285, %v8353
        %v8446 = vadd.f32 %v8286, %v8355
        %v8447 = vadd.f32 %v8287, %v8357
        %v8448 = vadd.f32 %v8288, %v8359
        %v8449 = vadd.f32 %v8289, %v8361
        %v8450 = vadd.f32 %v8290, %v8363
        %v8451 = vadd.f32 %v8291, %v8365
        %v8452 = vadd.f32 %v8292, %v8367
        %v8453 = vadd.f32 %v8293, %v8369
        %v8454 = vadd.f32 %v8294, %v8371
        %v8455 = vadd.f32 %v8295, %v8373
        %v8456 = vadd.f32 %v8296, %v8375
        %v8457 = vadd.f32 %v8297, %v8377
        %v8458 = vadd.f32 %v8298, %v8379
        %v8459 = vadd.f32 %v8299, %v8381
        %v8460 = vadd.f32 %v8300, %v8383
        %v8461 = vadd.f32 %v8301, %v8385
        %v8462 = vadd.f32 %v8302, %v8387
        %v8463 = vadd.f32 %v8303, %v8389
        %v8464 = vadd.f32 %v8304, %v8391
        %v8465 = vadd.f32 %v8305, %v8393
        %v8466 = vadd.f32 %v8306, %v8395
        %v8467 = vadd.f32 %v8307, %v8397
        %v8468 = vadd.f32 %v8308, %v8399
        %v8469 = vadd.f32 %v8309, %v8401
        %v8470 = vadd.f32 %v8310, %v8403
        %v8471 = vadd.f32 %v8311, %v8405
        %v8472 = vadd.f32 %v8312, %v8407
        %v8473 = vadd.f32 %v8313, %v8409
        %8474 = vrot.lane.b32.xlu0 %v8282, 126
        %v8475 = vpop.permute.xlu0 %8474
        %8476 = vrot.lane.b32.xlu0 %v8283, 126
        %v8477 = vpop.permute.xlu0 %8476
        %8478 = vrot.lane.b32.xlu0 %v8284, 126
        %v8479 = vpop.permute.xlu0 %8478
        %8480 = vrot.lane.b32.xlu0 %v8285, 126
        %v8481 = vpop.permute.xlu0 %8480
        %8482 = vrot.lane.b32.xlu0 %v8286, 126
        %v8483 = vpop.permute.xlu0 %8482
        %8484 = vrot.lane.b32.xlu0 %v8287, 126
        %v8485 = vpop.permute.xlu0 %8484
        %8486 = vrot.lane.b32.xlu0 %v8288, 126
        %v8487 = vpop.permute.xlu0 %8486
        %8488 = vrot.lane.b32.xlu0 %v8289, 126
        %v8489 = vpop.permute.xlu0 %8488
        %8490 = vrot.lane.b32.xlu0 %v8290, 126
        %v8491 = vpop.permute.xlu0 %8490
        %8492 = vrot.lane.b32.xlu0 %v8291, 126
        %v8493 = vpop.permute.xlu0 %8492
        %8494 = vrot.lane.b32.xlu0 %v8292, 126
        %v8495 = vpop.permute.xlu0 %8494
        %8496 = vrot.lane.b32.xlu0 %v8293, 126
        %v8497 = vpop.permute.xlu0 %8496
        %8498 = vrot.lane.b32.xlu0 %v8294, 126
        %v8499 = vpop.permute.xlu0 %8498
        %8500 = vrot.lane.b32.xlu0 %v8295, 126
        %v8501 = vpop.permute.xlu0 %8500
        %8502 = vrot.lane.b32.xlu0 %v8296, 126
        %v8503 = vpop.permute.xlu0 %8502
        %8504 = vrot.lane.b32.xlu0 %v8297, 126
        %v8505 = vpop.permute.xlu0 %8504
        %8506 = vrot.lane.b32.xlu0 %v8298, 126
        %v8507 = vpop.permute.xlu0 %8506
        %8508 = vrot.lane.b32.xlu0 %v8299, 126
        %v8509 = vpop.permute.xlu0 %8508
        %8510 = vrot.lane.b32.xlu0 %v8300, 126
        %v8511 = vpop.permute.xlu0 %8510
        %8512 = vrot.lane.b32.xlu0 %v8301, 126
        %v8513 = vpop.permute.xlu0 %8512
        %8514 = vrot.lane.b32.xlu0 %v8302, 126
        %v8515 = vpop.permute.xlu0 %8514
        %8516 = vrot.lane.b32.xlu0 %v8303, 126
        %v8517 = vpop.permute.xlu0 %8516
        %8518 = vrot.lane.b32.xlu0 %v8304, 126
        %v8519 = vpop.permute.xlu0 %8518
        %8520 = vrot.lane.b32.xlu0 %v8305, 126
        %v8521 = vpop.permute.xlu0 %8520
        %8522 = vrot.lane.b32.xlu0 %v8306, 126
        %v8523 = vpop.permute.xlu0 %8522
        %8524 = vrot.lane.b32.xlu0 %v8307, 126
        %v8525 = vpop.permute.xlu0 %8524
        %8526 = vrot.lane.b32.xlu0 %v8308, 126
        %v8527 = vpop.permute.xlu0 %8526
        %8528 = vrot.lane.b32.xlu0 %v8309, 126
        %v8529 = vpop.permute.xlu0 %8528
        %8530 = vrot.lane.b32.xlu0 %v8310, 126
        %v8531 = vpop.permute.xlu0 %8530
        %8532 = vrot.lane.b32.xlu0 %v8311, 126
        %v8533 = vpop.permute.xlu0 %8532
        %8534 = vrot.lane.b32.xlu0 %v8312, 126
        %v8535 = vpop.permute.xlu0 %8534
        %8536 = vrot.lane.b32.xlu0 %v8313, 126
        %v8537 = vpop.permute.xlu0 %8536
        %v8570 = vadd.f32 %v8442, %v8475
        %v8571 = vadd.f32 %v8443, %v8477
        %v8572 = vadd.f32 %v8444, %v8479
        %v8573 = vadd.f32 %v8445, %v8481
        %v8574 = vadd.f32 %v8446, %v8483
        %v8575 = vadd.f32 %v8447, %v8485
        %v8576 = vadd.f32 %v8448, %v8487
        %v8577 = vadd.f32 %v8449, %v8489
        %v8578 = vadd.f32 %v8450, %v8491
        %v8579 = vadd.f32 %v8451, %v8493
        %v8580 = vadd.f32 %v8452, %v8495
        %v8581 = vadd.f32 %v8453, %v8497
        %v8582 = vadd.f32 %v8454, %v8499
        %v8583 = vadd.f32 %v8455, %v8501
        %v8584 = vadd.f32 %v8456, %v8503
        %v8585 = vadd.f32 %v8457, %v8505
        %v8586 = vadd.f32 %v8458, %v8507
        %v8587 = vadd.f32 %v8459, %v8509
        %v8588 = vadd.f32 %v8460, %v8511
        %v8589 = vadd.f32 %v8461, %v8513
        %v8590 = vadd.f32 %v8462, %v8515
        %v8591 = vadd.f32 %v8463, %v8517
        %v8592 = vadd.f32 %v8464, %v8519
        %v8593 = vadd.f32 %v8465, %v8521
        %v8594 = vadd.f32 %v8466, %v8523
        %v8595 = vadd.f32 %v8467, %v8525
        %v8596 = vadd.f32 %v8468, %v8527
        %v8597 = vadd.f32 %v8469, %v8529
        %v8598 = vadd.f32 %v8470, %v8531
        %v8599 = vadd.f32 %v8471, %v8533
        %v8600 = vadd.f32 %v8472, %v8535
        %v8601 = vadd.f32 %v8473, %v8537
        %v8602 = vmax.f32 %v8570, 1e-24
        %v8603 = vmax.f32 %v8571, 1e-24
        %v8604 = vmax.f32 %v8572, 1e-24
        %v8605 = vmax.f32 %v8573, 1e-24
        %v8606 = vmax.f32 %v8574, 1e-24
        %v8607 = vmax.f32 %v8575, 1e-24
        %v8608 = vmax.f32 %v8576, 1e-24
        %v8609 = vmax.f32 %v8577, 1e-24
        %v8610 = vmax.f32 %v8578, 1e-24
        %v8611 = vmax.f32 %v8579, 1e-24
        %v8612 = vmax.f32 %v8580, 1e-24
        %v8613 = vmax.f32 %v8581, 1e-24
        %v8614 = vmax.f32 %v8582, 1e-24
        %v8615 = vmax.f32 %v8583, 1e-24
        %v8616 = vmax.f32 %v8584, 1e-24
        %v8617 = vmax.f32 %v8585, 1e-24
        %v8618 = vmax.f32 %v8586, 1e-24
        %v8619 = vmax.f32 %v8587, 1e-24
        %v8620 = vmax.f32 %v8588, 1e-24
        %v8621 = vmax.f32 %v8589, 1e-24
        %v8622 = vmax.f32 %v8590, 1e-24
        %v8623 = vmax.f32 %v8591, 1e-24
        %v8624 = vmax.f32 %v8592, 1e-24
        %v8625 = vmax.f32 %v8593, 1e-24
        %v8626 = vmax.f32 %v8594, 1e-24
        %v8627 = vmax.f32 %v8595, 1e-24
        %v8628 = vmax.f32 %v8596, 1e-24
        %v8629 = vmax.f32 %v8597, 1e-24
        %v8630 = vmax.f32 %v8598, 1e-24
        %v8631 = vmax.f32 %v8599, 1e-24
        %v8632 = vmax.f32 %v8600, 1e-24
        %v8633 = vmax.f32 %v8601, 1e-24
        %v8634 = vrsqrt.pop %v8602
        %v8635 = vmul.f32 %v8634, %v8602
        %v8636 = vmul.f32 %v8635, %v8634
        %v8637 = vmul.f32 0.5, %v8636
        %v8638 = vsub.f32 1.5, %v8637
        %v8639 = vmul.f32 %v8634, %v8638
        %vm8640 = vweird.f32 %v8602
        %vm8641 = vweird.f32 %v8634
        %vm8642 = vmor %vm8640, %vm8641
        %v8643 = vsel %vm8642, %v8634, %v8639
        %v8644 = vrsqrt.pop %v8603
        %v8645 = vmul.f32 %v8644, %v8603
        %v8646 = vmul.f32 %v8645, %v8644
        %v8647 = vmul.f32 0.5, %v8646
        %v8648 = vsub.f32 1.5, %v8647
        %v8649 = vmul.f32 %v8644, %v8648
        %vm8650 = vweird.f32 %v8603
        %vm8651 = vweird.f32 %v8644
        %vm8652 = vmor %vm8650, %vm8651
        %v8653 = vsel %vm8652, %v8644, %v8649
        %v8654 = vrsqrt.pop %v8604
        %v8655 = vmul.f32 %v8654, %v8604
        %v8656 = vmul.f32 %v8655, %v8654
        %v8657 = vmul.f32 0.5, %v8656
        %v8658 = vsub.f32 1.5, %v8657
        %v8659 = vmul.f32 %v8654, %v8658
        %vm8660 = vweird.f32 %v8604
        %vm8661 = vweird.f32 %v8654
        %vm8662 = vmor %vm8660, %vm8661
        %v8663 = vsel %vm8662, %v8654, %v8659
        %v8664 = vrsqrt.pop %v8605
        %v8665 = vmul.f32 %v8664, %v8605
        %v8666 = vmul.f32 %v8665, %v8664
        %v8667 = vmul.f32 0.5, %v8666
        %v8668 = vsub.f32 1.5, %v8667
        %v8669 = vmul.f32 %v8664, %v8668
        %vm8670 = vweird.f32 %v8605
        %vm8671 = vweird.f32 %v8664
        %vm8672 = vmor %vm8670, %vm8671
        %v8673 = vsel %vm8672, %v8664, %v8669
        %v8674 = vrsqrt.pop %v8606
        %v8675 = vmul.f32 %v8674, %v8606
        %v8676 = vmul.f32 %v8675, %v8674
        %v8677 = vmul.f32 0.5, %v8676
        %v8678 = vsub.f32 1.5, %v8677
        %v8679 = vmul.f32 %v8674, %v8678
        %vm8680 = vweird.f32 %v8606
        %vm8681 = vweird.f32 %v8674
        %vm8682 = vmor %vm8680, %vm8681
        %v8683 = vsel %vm8682, %v8674, %v8679
        %v8684 = vrsqrt.pop %v8607
        %v8685 = vmul.f32 %v8684, %v8607
        %v8686 = vmul.f32 %v8685, %v8684
        %v8687 = vmul.f32 0.5, %v8686
        %v8688 = vsub.f32 1.5, %v8687
        %v8689 = vmul.f32 %v8684, %v8688
        %vm8690 = vweird.f32 %v8607
        %vm8691 = vweird.f32 %v8684
        %vm8692 = vmor %vm8690, %vm8691
        %v8693 = vsel %vm8692, %v8684, %v8689
        %v8694 = vrsqrt.pop %v8608
        %v8695 = vmul.f32 %v8694, %v8608
        %v8696 = vmul.f32 %v8695, %v8694
        %v8697 = vmul.f32 0.5, %v8696
        %v8698 = vsub.f32 1.5, %v8697
        %v8699 = vmul.f32 %v8694, %v8698
        %vm8700 = vweird.f32 %v8608
        %vm8701 = vweird.f32 %v8694
        %vm8702 = vmor %vm8700, %vm8701
        %v8703 = vsel %vm8702, %v8694, %v8699
        %v8704 = vrsqrt.pop %v8609
        %v8705 = vmul.f32 %v8704, %v8609
        %v8706 = vmul.f32 %v8705, %v8704
        %v8707 = vmul.f32 0.5, %v8706
        %v8708 = vsub.f32 1.5, %v8707
        %v8709 = vmul.f32 %v8704, %v8708
        %vm8710 = vweird.f32 %v8609
        %vm8711 = vweird.f32 %v8704
        %vm8712 = vmor %vm8710, %vm8711
        %v8713 = vsel %vm8712, %v8704, %v8709
        %v8714 = vrsqrt.pop %v8610
        %v8715 = vmul.f32 %v8714, %v8610
        %v8716 = vmul.f32 %v8715, %v8714
        %v8717 = vmul.f32 0.5, %v8716
        %v8718 = vsub.f32 1.5, %v8717
        %v8719 = vmul.f32 %v8714, %v8718
        %vm8720 = vweird.f32 %v8610
        %vm8721 = vweird.f32 %v8714
        %vm8722 = vmor %vm8720, %vm8721
        %v8723 = vsel %vm8722, %v8714, %v8719
        %v8724 = vrsqrt.pop %v8611
        %v8725 = vmul.f32 %v8724, %v8611
        %v8726 = vmul.f32 %v8725, %v8724
        %v8727 = vmul.f32 0.5, %v8726
        %v8728 = vsub.f32 1.5, %v8727
        %v8729 = vmul.f32 %v8724, %v8728
        %vm8730 = vweird.f32 %v8611
        %vm8731 = vweird.f32 %v8724
        %vm8732 = vmor %vm8730, %vm8731
        %v8733 = vsel %vm8732, %v8724, %v8729
        %v8734 = vrsqrt.pop %v8612
        %v8735 = vmul.f32 %v8734, %v8612
        %v8736 = vmul.f32 %v8735, %v8734
        %v8737 = vmul.f32 0.5, %v8736
        %v8738 = vsub.f32 1.5, %v8737
        %v8739 = vmul.f32 %v8734, %v8738
        %vm8740 = vweird.f32 %v8612
        %vm8741 = vweird.f32 %v8734
        %vm8742 = vmor %vm8740, %vm8741
        %v8743 = vsel %vm8742, %v8734, %v8739
        %v8744 = vrsqrt.pop %v8613
        %v8745 = vmul.f32 %v8744, %v8613
        %v8746 = vmul.f32 %v8745, %v8744
        %v8747 = vmul.f32 0.5, %v8746
        %v8748 = vsub.f32 1.5, %v8747
        %v8749 = vmul.f32 %v8744, %v8748
        %vm8750 = vweird.f32 %v8613
        %vm8751 = vweird.f32 %v8744
        %vm8752 = vmor %vm8750, %vm8751
        %v8753 = vsel %vm8752, %v8744, %v8749
        %v8754 = vrsqrt.pop %v8614
        %v8755 = vmul.f32 %v8754, %v8614
        %v8756 = vmul.f32 %v8755, %v8754
        %v8757 = vmul.f32 0.5, %v8756
        %v8758 = vsub.f32 1.5, %v8757
        %v8759 = vmul.f32 %v8754, %v8758
        %vm8760 = vweird.f32 %v8614
        %vm8761 = vweird.f32 %v8754
        %vm8762 = vmor %vm8760, %vm8761
        %v8763 = vsel %vm8762, %v8754, %v8759
        %v8764 = vrsqrt.pop %v8615
        %v8765 = vmul.f32 %v8764, %v8615
        %v8766 = vmul.f32 %v8765, %v8764
        %v8767 = vmul.f32 0.5, %v8766
        %v8768 = vsub.f32 1.5, %v8767
        %v8769 = vmul.f32 %v8764, %v8768
        %vm8770 = vweird.f32 %v8615
        %vm8771 = vweird.f32 %v8764
        %vm8772 = vmor %vm8770, %vm8771
        %v8773 = vsel %vm8772, %v8764, %v8769
        %v8774 = vrsqrt.pop %v8616
        %v8775 = vmul.f32 %v8774, %v8616
        %v8776 = vmul.f32 %v8775, %v8774
        %v8777 = vmul.f32 0.5, %v8776
        %v8778 = vsub.f32 1.5, %v8777
        %v8779 = vmul.f32 %v8774, %v8778
        %vm8780 = vweird.f32 %v8616
        %vm8781 = vweird.f32 %v8774
        %vm8782 = vmor %vm8780, %vm8781
        %v8783 = vsel %vm8782, %v8774, %v8779
        %v8784 = vrsqrt.pop %v8617
        %v8785 = vmul.f32 %v8784, %v8617
        %v8786 = vmul.f32 %v8785, %v8784
        %v8787 = vmul.f32 0.5, %v8786
        %v8788 = vsub.f32 1.5, %v8787
        %v8789 = vmul.f32 %v8784, %v8788
        %vm8790 = vweird.f32 %v8617
        %vm8791 = vweird.f32 %v8784
        %vm8792 = vmor %vm8790, %vm8791
        %v8793 = vsel %vm8792, %v8784, %v8789
        %v8794 = vrsqrt.pop %v8618
        %v8795 = vmul.f32 %v8794, %v8618
        %v8796 = vmul.f32 %v8795, %v8794
        %v8797 = vmul.f32 0.5, %v8796
        %v8798 = vsub.f32 1.5, %v8797
        %v8799 = vmul.f32 %v8794, %v8798
        %vm8800 = vweird.f32 %v8618
        %vm8801 = vweird.f32 %v8794
        %vm8802 = vmor %vm8800, %vm8801
        %v8803 = vsel %vm8802, %v8794, %v8799
        %v8804 = vrsqrt.pop %v8619
        %v8805 = vmul.f32 %v8804, %v8619
        %v8806 = vmul.f32 %v8805, %v8804
        %v8807 = vmul.f32 0.5, %v8806
        %v8808 = vsub.f32 1.5, %v8807
        %v8809 = vmul.f32 %v8804, %v8808
        %vm8810 = vweird.f32 %v8619
        %vm8811 = vweird.f32 %v8804
        %vm8812 = vmor %vm8810, %vm8811
        %v8813 = vsel %vm8812, %v8804, %v8809
        %v8814 = vrsqrt.pop %v8620
        %v8815 = vmul.f32 %v8814, %v8620
        %v8816 = vmul.f32 %v8815, %v8814
        %v8817 = vmul.f32 0.5, %v8816
        %v8818 = vsub.f32 1.5, %v8817
        %v8819 = vmul.f32 %v8814, %v8818
        %vm8820 = vweird.f32 %v8620
        %vm8821 = vweird.f32 %v8814
        %vm8822 = vmor %vm8820, %vm8821
        %v8823 = vsel %vm8822, %v8814, %v8819
        %v8824 = vrsqrt.pop %v8621
        %v8825 = vmul.f32 %v8824, %v8621
        %v8826 = vmul.f32 %v8825, %v8824
        %v8827 = vmul.f32 0.5, %v8826
        %v8828 = vsub.f32 1.5, %v8827
        %v8829 = vmul.f32 %v8824, %v8828
        %vm8830 = vweird.f32 %v8621
        %vm8831 = vweird.f32 %v8824
        %vm8832 = vmor %vm8830, %vm8831
        %v8833 = vsel %vm8832, %v8824, %v8829
        %v8834 = vrsqrt.pop %v8622
        %v8835 = vmul.f32 %v8834, %v8622
        %v8836 = vmul.f32 %v8835, %v8834
        %v8837 = vmul.f32 0.5, %v8836
        %v8838 = vsub.f32 1.5, %v8837
        %v8839 = vmul.f32 %v8834, %v8838
        %vm8840 = vweird.f32 %v8622
        %vm8841 = vweird.f32 %v8834
        %vm8842 = vmor %vm8840, %vm8841
        %v8843 = vsel %vm8842, %v8834, %v8839
        %v8844 = vrsqrt.pop %v8623
        %v8845 = vmul.f32 %v8844, %v8623
        %v8846 = vmul.f32 %v8845, %v8844
        %v8847 = vmul.f32 0.5, %v8846
        %v8848 = vsub.f32 1.5, %v8847
        %v8849 = vmul.f32 %v8844, %v8848
        %vm8850 = vweird.f32 %v8623
        %vm8851 = vweird.f32 %v8844
        %vm8852 = vmor %vm8850, %vm8851
        %v8853 = vsel %vm8852, %v8844, %v8849
        %v8854 = vrsqrt.pop %v8624
        %v8855 = vmul.f32 %v8854, %v8624
        %v8856 = vmul.f32 %v8855, %v8854
        %v8857 = vmul.f32 0.5, %v8856
        %v8858 = vsub.f32 1.5, %v8857
        %v8859 = vmul.f32 %v8854, %v8858
        %vm8860 = vweird.f32 %v8624
        %vm8861 = vweird.f32 %v8854
        %vm8862 = vmor %vm8860, %vm8861
        %v8863 = vsel %vm8862, %v8854, %v8859
        %v8864 = vrsqrt.pop %v8625
        %v8865 = vmul.f32 %v8864, %v8625
        %v8866 = vmul.f32 %v8865, %v8864
        %v8867 = vmul.f32 0.5, %v8866
        %v8868 = vsub.f32 1.5, %v8867
        %v8869 = vmul.f32 %v8864, %v8868
        %vm8870 = vweird.f32 %v8625
        %vm8871 = vweird.f32 %v8864
        %vm8872 = vmor %vm8870, %vm8871
        %v8873 = vsel %vm8872, %v8864, %v8869
        %v8874 = vrsqrt.pop %v8626
        %v8875 = vmul.f32 %v8874, %v8626
        %v8876 = vmul.f32 %v8875, %v8874
        %v8877 = vmul.f32 0.5, %v8876
        %v8878 = vsub.f32 1.5, %v8877
        %v8879 = vmul.f32 %v8874, %v8878
        %vm8880 = vweird.f32 %v8626
        %vm8881 = vweird.f32 %v8874
        %vm8882 = vmor %vm8880, %vm8881
        %v8883 = vsel %vm8882, %v8874, %v8879
        %v8884 = vrsqrt.pop %v8627
        %v8885 = vmul.f32 %v8884, %v8627
        %v8886 = vmul.f32 %v8885, %v8884
        %v8887 = vmul.f32 0.5, %v8886
        %v8888 = vsub.f32 1.5, %v8887
        %v8889 = vmul.f32 %v8884, %v8888
        %vm8890 = vweird.f32 %v8627
        %vm8891 = vweird.f32 %v8884
        %vm8892 = vmor %vm8890, %vm8891
        %v8893 = vsel %vm8892, %v8884, %v8889
        %v8894 = vrsqrt.pop %v8628
        %v8895 = vmul.f32 %v8894, %v8628
        %v8896 = vmul.f32 %v8895, %v8894
        %v8897 = vmul.f32 0.5, %v8896
        %v8898 = vsub.f32 1.5, %v8897
        %v8899 = vmul.f32 %v8894, %v8898
        %vm8900 = vweird.f32 %v8628
        %vm8901 = vweird.f32 %v8894
        %vm8902 = vmor %vm8900, %vm8901
        %v8903 = vsel %vm8902, %v8894, %v8899
        %v8904 = vrsqrt.pop %v8629
        %v8905 = vmul.f32 %v8904, %v8629
        %v8906 = vmul.f32 %v8905, %v8904
        %v8907 = vmul.f32 0.5, %v8906
        %v8908 = vsub.f32 1.5, %v8907
        %v8909 = vmul.f32 %v8904, %v8908
        %vm8910 = vweird.f32 %v8629
        %vm8911 = vweird.f32 %v8904
        %vm8912 = vmor %vm8910, %vm8911
        %v8913 = vsel %vm8912, %v8904, %v8909
        %v8914 = vrsqrt.pop %v8630
        %v8915 = vmul.f32 %v8914, %v8630
        %v8916 = vmul.f32 %v8915, %v8914
        %v8917 = vmul.f32 0.5, %v8916
        %v8918 = vsub.f32 1.5, %v8917
        %v8919 = vmul.f32 %v8914, %v8918
        %vm8920 = vweird.f32 %v8630
        %vm8921 = vweird.f32 %v8914
        %vm8922 = vmor %vm8920, %vm8921
        %v8923 = vsel %vm8922, %v8914, %v8919
        %v8924 = vrsqrt.pop %v8631
        %v8925 = vmul.f32 %v8924, %v8631
        %v8926 = vmul.f32 %v8925, %v8924
        %v8927 = vmul.f32 0.5, %v8926
        %v8928 = vsub.f32 1.5, %v8927
        %v8929 = vmul.f32 %v8924, %v8928
        %vm8930 = vweird.f32 %v8631
        %vm8931 = vweird.f32 %v8924
        %vm8932 = vmor %vm8930, %vm8931
        %v8933 = vsel %vm8932, %v8924, %v8929
        %v8934 = vrsqrt.pop %v8632
        %v8935 = vmul.f32 %v8934, %v8632
        %v8936 = vmul.f32 %v8935, %v8934
        %v8937 = vmul.f32 0.5, %v8936
        %v8938 = vsub.f32 1.5, %v8937
        %v8939 = vmul.f32 %v8934, %v8938
        %vm8940 = vweird.f32 %v8632
        %vm8941 = vweird.f32 %v8934
        %vm8942 = vmor %vm8940, %vm8941
        %v8943 = vsel %vm8942, %v8934, %v8939
        %v8944 = vrsqrt.pop %v8633
        %v8945 = vmul.f32 %v8944, %v8633
        %v8946 = vmul.f32 %v8945, %v8944
        %v8947 = vmul.f32 0.5, %v8946
        %v8948 = vsub.f32 1.5, %v8947
        %v8949 = vmul.f32 %v8944, %v8948
        %vm8950 = vweird.f32 %v8633
        %vm8951 = vweird.f32 %v8944
        %vm8952 = vmor %vm8950, %vm8951
        %v8953 = vsel %vm8952, %v8944, %v8949
        %8955 = vset.pattern.permute.xlu0 0
        %8956 = vperm.xlu0 %8955, %v8643
        %v8957 = vpop.permute.xlu0 %8956
        %8960 = vset.pattern.permute.xlu0 0
        %8961 = vperm.xlu0 %8960, %v8653
        %v8962 = vpop.permute.xlu0 %8961
        %8965 = vset.pattern.permute.xlu0 0
        %8966 = vperm.xlu0 %8965, %v8663
        %v8967 = vpop.permute.xlu0 %8966
        %8970 = vset.pattern.permute.xlu0 0
        %8971 = vperm.xlu0 %8970, %v8673
        %v8972 = vpop.permute.xlu0 %8971
        %8975 = vset.pattern.permute.xlu0 0
        %8976 = vperm.xlu0 %8975, %v8683
        %v8977 = vpop.permute.xlu0 %8976
        %8980 = vset.pattern.permute.xlu0 0
        %8981 = vperm.xlu0 %8980, %v8693
        %v8982 = vpop.permute.xlu0 %8981
        %8985 = vset.pattern.permute.xlu0 0
        %8986 = vperm.xlu0 %8985, %v8703
        %v8987 = vpop.permute.xlu0 %8986
        %8990 = vset.pattern.permute.xlu0 0
        %8991 = vperm.xlu0 %8990, %v8713
        %v8992 = vpop.permute.xlu0 %8991
        %8995 = vset.pattern.permute.xlu0 0
        %8996 = vperm.xlu0 %8995, %v8723
        %v8997 = vpop.permute.xlu0 %8996
        %9000 = vset.pattern.permute.xlu0 0
        %9001 = vperm.xlu0 %9000, %v8733
        %v9002 = vpop.permute.xlu0 %9001
        %9005 = vset.pattern.permute.xlu0 0
        %9006 = vperm.xlu0 %9005, %v8743
        %v9007 = vpop.permute.xlu0 %9006
        %9010 = vset.pattern.permute.xlu0 0
        %9011 = vperm.xlu0 %9010, %v8753
        %v9012 = vpop.permute.xlu0 %9011
        %9015 = vset.pattern.permute.xlu0 0
        %9016 = vperm.xlu0 %9015, %v8763
        %v9017 = vpop.permute.xlu0 %9016
        %9020 = vset.pattern.permute.xlu0 0
        %9021 = vperm.xlu0 %9020, %v8773
        %v9022 = vpop.permute.xlu0 %9021
        %9025 = vset.pattern.permute.xlu0 0
        %9026 = vperm.xlu0 %9025, %v8783
        %v9027 = vpop.permute.xlu0 %9026
        %9030 = vset.pattern.permute.xlu0 0
        %9031 = vperm.xlu0 %9030, %v8793
        %v9032 = vpop.permute.xlu0 %9031
        %9035 = vset.pattern.permute.xlu0 0
        %9036 = vperm.xlu0 %9035, %v8803
        %v9037 = vpop.permute.xlu0 %9036
        %9040 = vset.pattern.permute.xlu0 0
        %9041 = vperm.xlu0 %9040, %v8813
        %v9042 = vpop.permute.xlu0 %9041
        %9045 = vset.pattern.permute.xlu0 0
        %9046 = vperm.xlu0 %9045, %v8823
        %v9047 = vpop.permute.xlu0 %9046
        %9050 = vset.pattern.permute.xlu0 0
        %9051 = vperm.xlu0 %9050, %v8833
        %v9052 = vpop.permute.xlu0 %9051
        %9055 = vset.pattern.permute.xlu0 0
        %9056 = vperm.xlu0 %9055, %v8843
        %v9057 = vpop.permute.xlu0 %9056
        %9060 = vset.pattern.permute.xlu0 0
        %9061 = vperm.xlu0 %9060, %v8853
        %v9062 = vpop.permute.xlu0 %9061
        %9065 = vset.pattern.permute.xlu0 0
        %9066 = vperm.xlu0 %9065, %v8863
        %v9067 = vpop.permute.xlu0 %9066
        %9070 = vset.pattern.permute.xlu0 0
        %9071 = vperm.xlu0 %9070, %v8873
        %v9072 = vpop.permute.xlu0 %9071
        %9075 = vset.pattern.permute.xlu0 0
        %9076 = vperm.xlu0 %9075, %v8883
        %v9077 = vpop.permute.xlu0 %9076
        %9080 = vset.pattern.permute.xlu0 0
        %9081 = vperm.xlu0 %9080, %v8893
        %v9082 = vpop.permute.xlu0 %9081
        %9085 = vset.pattern.permute.xlu0 0
        %9086 = vperm.xlu0 %9085, %v8903
        %v9087 = vpop.permute.xlu0 %9086
        %9090 = vset.pattern.permute.xlu0 0
        %9091 = vperm.xlu0 %9090, %v8913
        %v9092 = vpop.permute.xlu0 %9091
        %9095 = vset.pattern.permute.xlu0 0
        %9096 = vperm.xlu0 %9095, %v8923
        %v9097 = vpop.permute.xlu0 %9096
        %9100 = vset.pattern.permute.xlu0 0
        %9101 = vperm.xlu0 %9100, %v8933
        %v9102 = vpop.permute.xlu0 %9101
        %9105 = vset.pattern.permute.xlu0 0
        %9106 = vperm.xlu0 %9105, %v8943
        %v9107 = vpop.permute.xlu0 %9106
        %9110 = vset.pattern.permute.xlu0 0
        %9111 = vperm.xlu0 %9110, %v8953
        %v9112 = vpop.permute.xlu0 %9111
        %v9114 = vmul.f32 %v8250, %v8957
        %v9115 = vmul.f32 %v8251, %v8962
        %v9116 = vmul.f32 %v8252, %v8967
        %v9117 = vmul.f32 %v8253, %v8972
        %v9118 = vmul.f32 %v8254, %v8977
        %v9119 = vmul.f32 %v8255, %v8982
        %v9120 = vmul.f32 %v8256, %v8987
        %v9121 = vmul.f32 %v8257, %v8992
        %v9122 = vmul.f32 %v8258, %v8997
        %v9123 = vmul.f32 %v8259, %v9002
        %v9124 = vmul.f32 %v8260, %v9007
        %v9125 = vmul.f32 %v8261, %v9012
        %v9126 = vmul.f32 %v8262, %v9017
        %v9127 = vmul.f32 %v8263, %v9022
        %v9128 = vmul.f32 %v8264, %v9027
        %v9129 = vmul.f32 %v8265, %v9032
        %v9130 = vmul.f32 %v8266, %v9037
        %v9131 = vmul.f32 %v8267, %v9042
        %v9132 = vmul.f32 %v8268, %v9047
        %v9133 = vmul.f32 %v8269, %v9052
        %v9134 = vmul.f32 %v8270, %v9057
        %v9135 = vmul.f32 %v8271, %v9062
        %v9136 = vmul.f32 %v8272, %v9067
        %v9137 = vmul.f32 %v8273, %v9072
        %v9138 = vmul.f32 %v8274, %v9077
        %v9139 = vmul.f32 %v8275, %v9082
        %v9140 = vmul.f32 %v8276, %v9087
        %v9141 = vmul.f32 %v8277, %v9092
        %v9142 = vmul.f32 %v8278, %v9097
        %v9143 = vmul.f32 %v8279, %v9102
        %v9144 = vmul.f32 %v8280, %v9107
        %v9145 = vmul.f32 %v8281, %v9112
        %vm9146 = vcmask 23552
        %9147 = vst.msk [vmem:[%s430] sm:$0xff] %vm9146, %v9114
        %9148 = vst.msk [vmem:[%s430 + $0x8] sm:$0xff] %vm9146, %v9115
        %9149 = vst.msk [vmem:[%s430 + $0x10] sm:$0xff] %vm9146, %v9116
        %9150 = vst.msk [vmem:[%s430 + $0x18] sm:$0xff] %vm9146, %v9117
        %9151 = vst.msk [vmem:[%s430 + $0x20] sm:$0xff] %vm9146, %v9118
        %9152 = vst.msk [vmem:[%s430 + $0x28] sm:$0xff] %vm9146, %v9119
        %9153 = vst.msk [vmem:[%s430 + $0x30] sm:$0xff] %vm9146, %v9120
        %9154 = vst.msk [vmem:[%s430 + $0x38] sm:$0xff] %vm9146, %v9121
        %9155 = vst.msk [vmem:[%s430 + $0x40] sm:$0xff] %vm9146, %v9122
        %9156 = vst.msk [vmem:[%s430 + $0x48] sm:$0xff] %vm9146, %v9123
        %9157 = vst.msk [vmem:[%s430 + $0x50] sm:$0xff] %vm9146, %v9124
        %9158 = vst.msk [vmem:[%s430 + $0x58] sm:$0xff] %vm9146, %v9125
        %9159 = vst.msk [vmem:[%s430 + $0x60] sm:$0xff] %vm9146, %v9126
        %9160 = vst.msk [vmem:[%s430 + $0x68] sm:$0xff] %vm9146, %v9127
        %9161 = vst.msk [vmem:[%s430 + $0x70] sm:$0xff] %vm9146, %v9128
        %9162 = vst.msk [vmem:[%s430 + $0x78] sm:$0xff] %vm9146, %v9129
        %9163 = vst.msk [vmem:[%s430 + $0x80] sm:$0xff] %vm9146, %v9130
        %9164 = vst.msk [vmem:[%s430 + $0x88] sm:$0xff] %vm9146, %v9131
        %9165 = vst.msk [vmem:[%s430 + $0x90] sm:$0xff] %vm9146, %v9132
        %9166 = vst.msk [vmem:[%s430 + $0x98] sm:$0xff] %vm9146, %v9133
        %9167 = vst.msk [vmem:[%s430 + $0xa0] sm:$0xff] %vm9146, %v9134
        %9168 = vst.msk [vmem:[%s430 + $0xa8] sm:$0xff] %vm9146, %v9135
        %9169 = vst.msk [vmem:[%s430 + $0xb0] sm:$0xff] %vm9146, %v9136
        %9170 = vst.msk [vmem:[%s430 + $0xb8] sm:$0xff] %vm9146, %v9137
        %9171 = vst.msk [vmem:[%s430 + $0xc0] sm:$0xff] %vm9146, %v9138
        %9172 = vst.msk [vmem:[%s430 + $0xc8] sm:$0xff] %vm9146, %v9139
        %9173 = vst.msk [vmem:[%s430 + $0xd0] sm:$0xff] %vm9146, %v9140
        %9174 = vst.msk [vmem:[%s430 + $0xd8] sm:$0xff] %vm9146, %v9141
        %9175 = vst.msk [vmem:[%s430 + $0xe0] sm:$0xff] %vm9146, %v9142
        %9176 = vst.msk [vmem:[%s430 + $0xe8] sm:$0xff] %vm9146, %v9143
        %9177 = vst.msk [vmem:[%s430 + $0xf0] sm:$0xff] %vm9146, %v9144
        %9178 = vst.msk [vmem:[%s430 + $0xf8] sm:$0xff] %vm9146, %v9145
      $region72: #{tpu_custom_call.1} parent=59 // pred_fallthru
        _
      %s9179 = sadd.s32 %s26, %s27
      %p9180 = scmp.lt.s32.totalorder %s9179, 1
      %s9181 = scalar_select %p9180, %s9179, 1
      %s9182 = smul.addr %s9181, 32
      %s9183 = smul.addr %s9182, 8
      %s9184 = scalar_lea.vmem %s10, %s9183
      // Predicated region
      $region73: #{tpu_custom_call.1} parent=59 // pred_check
        %p9185 = pneg %p288
      $region74: #{tpu_custom_call.1} parent=59 // pred_check_branch
        %9187 = sbr.rel (%p9185) target = $region76
      $region75: #{tpu_custom_call.1} parent=59 // pred_region
        %s9188 = sadd.s32 %s26, %s27
      $region76: #{tpu_custom_call.1} parent=59 // pred_fallthru
        _
    $region60: #{tpu_custom_call.1} parent=5 // pred_fallthru
      _
    %p9189 = scmp.le.s32.totalorder 2, %s16
    // Predicated region
    $region77: #{tpu_custom_call.1} parent=5 // pred_check
      %p9190 = pneg %p9189
    $region78: #{tpu_custom_call.1} parent=5 // pred_check_branch
      %9192 = sbr.rel (%p9190) target = $region80
    $region79: #{tpu_custom_call.1} parent=5 // pred_region
      %s9193 = ssub.s32 %s16, 2
      // Predicated region
      $region81: #{tpu_custom_call.1} parent=79 // pred_check
        %p9194 = pneg %p294
      $region82: #{tpu_custom_call.1} parent=79 // pred_check_branch
        %9196 = sbr.rel (%p9194) target = $region84
      $region83: #{tpu_custom_call.1} parent=79 // pred_region
        %s9197 = sadd.s32 %s29, %s30
        %p9198 = scmp.lt.s32.totalorder %s9197, 1
        %s9199 = scalar_select %p9198, %s9197, 1
        %s9200 = smul.addr %s9199, 32
        %s9201 = smul.addr %s9200, 8
        %s9202 = scalar_lea.vmem %s10, %s9201
      $region84: #{tpu_custom_call.1} parent=79 // pred_fallthru
        _
    $region80: #{tpu_custom_call.1} parent=5 // pred_fallthru
      _
  $region6: #{tpu_custom_call.1} parent=0 // loop_footer
    %s20 = sadd.s32 1, %s16
  $region7: #{tpu_custom_call.1} parent=0 // loop_footer_branch
    %15 = sbr.rel target = $region3
  $region8: #{tpu_custom_call.1} parent=0 // loop_exit
    _

</llo_original>
